<compile_context>
chip_gen: v6e
topology: v6e:2x2x1
jax: 0.10.0
libtpu: 0.0.40
codegen_flags: <defaults>
</compile_context>

<pallas_src>
import functools
import math

import numpy as np
import jax
import jax.numpy as jnp
from jax.experimental import pallas as pl
from jax.experimental.pallas import tpu as pltpu

LN_EPS = 1e-5
MATMUL_DTYPE = jnp.bfloat16     # MXU operand dtype (accumulation stays f32)
_MB = 1024 * 1024


def _gelu(x):
    # TODO(synk): PyTorch nn.GELU defaults to the exact erf form; the tanh approximation is
    # used here (identically in kernel and reference).
    c = math.sqrt(2.0 / math.pi)
    return 0.5 * x * (1.0 + jnp.tanh(c * (x + 0.044715 * x * x * x)))


# ----------------------------------------------------------------------------
# Pallas kernels
# ----------------------------------------------------------------------------
def _wmsa_kernel(x_ref, g1_ref, b1_ref, wqkv_ref, bqkv_ref, wproj_ref, bproj_ref,
                 bm_ref, o_ref, *, num_heads, windows, tokens, concat_heads, eps):
    """Fused norm1 + W-MSA (+rel-pos bias / shift mask) + proj + post-attention residual.

    x_ref  : (WB*N, C) raw (un-normed) window tokens, lane-dense 2-D
    bm_ref : (nb, H, N, N) relative-position bias (+ shift mask); nb in {1, WB, nW}
    o_ref  : (WB*N, C) = x + proj(attention)
    """
    WB, N, H = windows, tokens, num_heads
    rows, C = x_ref.shape
    D = C // H
    cdt = wqkv_ref.dtype                          # matmul operand dtype (bf16)

    # --- fused LayerNorm (norm1) over channels (f32 statistics) ---
    x = x_ref[...]
    mu = jnp.mean(x, axis=-1, keepdims=True)
    xc = x - mu
    var = jnp.mean(xc * xc, axis=-1, keepdims=True)
    xn = (xc * jax.lax.rsqrt(var + eps) * g1_ref[...] + b1_ref[...]).astype(cdt)

    # --- q/k/v: three lane-aligned (rows, C) matmuls; qk scale pre-folded into w_q / b_q ---
    q = (jnp.dot(xn, wqkv_ref[0], preferred_element_type=jnp.float32)
         + bqkv_ref[0]).reshape(WB, N, C)
    k = (jnp.dot(xn, wqkv_ref[1], preferred_element_type=jnp.float32)
         + bqkv_ref[1]).reshape(WB, N, C)
    v = (jnp.dot(xn, wqkv_ref[2], preferred_element_type=jnp.float32)
         + bqkv_ref[2]).reshape(WB, N, C)

    nb = bm_ref.shape[0]
    heads = []
    for h in range(H):
        lo = h * D
        qh = q[:, :, lo:lo + D].astype(cdt)
        kh = k[:, :, lo:lo + D].astype(cdt)
        vh = v[:, :, lo:lo + D].astype(cdt)
        # scores: (WB, N, N) batched contraction over head_dim (no k.T transpose)
        s = jnp.einsum("bqd,bkd->bqk", qh, kh, preferred_element_type=jnp.float32)
        bmh = bm_ref[:, h, :, :]
        if nb == 1:
            s = s + bmh                                            # broadcast over WB windows
        else:
            # WB = m * nb consecutive windows share the nb per-window masks (free reshape)
            s = (s.reshape(WB // nb, nb, N, N) + bmh[None]).reshape(WB, N, N)
        m = jnp.max(s, axis=-1, keepdims=True)
        p = jnp.exp(s - m)
        denom = jnp.sum(p, axis=-1, keepdims=True)
        oh = jnp.einsum("bqk,bkd->bqd", p.astype(cdt), vh,
                        preferred_element_type=jnp.float32)
        # normalize after attn@v; approx reciprocal lives on the otherwise idle EUP slot
        heads.append(oh * pl.reciprocal(denom, approx=True))

    if concat_heads:
        # register-level head merge -> single lane-dense (rows, C) operand for the proj matmul
        ctx = jnp.concatenate(heads, axis=-1).reshape(rows, C).astype(cdt)
        out = jnp.dot(ctx, wproj_ref[...], preferred_element_type=jnp.float32)
    else:
        # TODO(synk): fallback when lane-dim concat is unsupported -> accumulate proj per head.
        out = jnp.zeros((rows, C), jnp.float32)
        for h in range(H):
            lo = h * D
            out = out + jnp.dot(heads[h].reshape(rows, D).astype(cdt),
                                wproj_ref[lo:lo + D, :],
                                preferred_element_type=jnp.float32)

    # fused post-attention residual: x_ref already holds the (shifted) shortcut windows
    o_ref[...] = x + out + bproj_ref[...]


def _ln_mlp_kernel(x_ref, g_ref, b_ref, w1_ref, b1_ref, w2_ref, b2_ref, o_ref, *, eps):
    """Fused norm2 + MLP(fc1 -> GELU -> fc2) + residual for a row tile (TM, C)."""
    cdt = w1_ref.dtype
    x = x_ref[...]
    mu = jnp.mean(x, axis=-1, keepdims=True)
    xc = x - mu
    var = jnp.mean(xc * xc, axis=-1, keepdims=True)
    xn = (xc * jax.lax.rsqrt(var + eps) * g_ref[...] + b_ref[...]).astype(cdt)
    h = jnp.dot(xn, w1_ref[...], preferred_element_type=jnp.float32) + b1_ref[...]
    h = _gelu(h).astype(cdt)
    y = jnp.dot(h, w2_ref[...], preferred_element_type=jnp.float32) + b2_ref[...]
    o_ref[...] = x + y


# ----------------------------------------------------------------------------
# pallas_call wrappers
# ----------------------------------------------------------------------------
@functools.lru_cache(maxsize=None)
def _vmem_budget_bytes():
    try:
        cap = int(pltpu.get_tpu_info().vmem_capacity_bytes)
    except Exception:
        cap = 64 * _MB          # v7x per-TensorCore capacity: smallest across generations
    return int(cap * 0.55)


@functools.lru_cache(maxsize=None)
def _lane_concat_supported(pieces, b, n, d):
    """Probe whether Mosaic lowers a minor-dim (lane) concatenate at these shapes."""
    def kern(x_ref, o_ref):
        o_ref[...] = jnp.concatenate([x_ref[i] for i in range(pieces)], axis=-1)
    try:
        x = jnp.arange(pieces * b * n * d, dtype=jnp.float32).reshape(pieces, b, n, d)
        out = pl.pallas_call(
            kern, out_shape=jax.ShapeDtypeStruct((b, n, pieces * d), jnp.float32))(x)
        jax.block_until_ready(out)
        return True
    except Exception:
        return False


def fused_window_attention(xw2d, g1, b1, wqkv3, bqkv3, wproj, bproj, bias_mask, *,
                           windows_per_block, window_tokens, num_heads, eps=LN_EPS):
    Mrows, C = xw2d.shape
    N = window_tokens
    WB = windows_per_block
    B_ = Mrows // N
    assert B_ % WB == 0
    grid = B_ // WB
    H = num_heads
    nWm = bias_mask.shape[0]

    if nWm == 1 or WB % nWm == 0:
        # bias(+mask) fully resident; kernel broadcasts over the WB // nWm batch replicas
        mask_block = (nWm, H, N, N)
        mask_map = lambda i: (0, 0, 0, 0)
    else:
        # WB < nW (and WB | nW): select the matching mask sub-block per grid step
        nmb = nWm // WB
        mask_block = (WB, H, N, N)
        mask_map = lambda i: (i % nmb, 0, 0, 0)

    kernel = functools.partial(
        _wmsa_kernel, num_heads=H, windows=WB, tokens=N,
        concat_heads=_lane_concat_supported(H, WB, N, C // H), eps=eps)

    wdt = jnp.dtype(wqkv3.dtype).itemsize
    flops = int(8 * Mrows * C * C + 4 * B_ * N * N * C)
    trans = int(B_ * H * N * (N + 1) + Mrows)
    bytes_acc = int(2 * Mrows * C * 4 + 4 * C * C * wdt
                    + nWm * H * N * N * 4 + 8 * C * 4)

    need = 2 * (2 * WB * N * C * 4 + 4 * C * C * wdt
                + mask_block[0] * H * N * N * 4) + 2 * _MB
    cp = dict(dimension_semantics=("parallel",))
    if need > 12 * _MB:
        cp["vmem_limit_bytes"] = int(min(max(need, 32 * _MB), 64 * _MB))

    return pl.pallas_call(
        kernel,
        out_shape=jax.ShapeDtypeStruct((Mrows, C), jnp.float32),
        grid_spec=pltpu.PrefetchScalarGridSpec(
            num_scalar_prefetch=0,
            grid=(grid,),
            in_specs=[
                pl.BlockSpec((WB * N, C), lambda i: (i, 0)),      # window tokens (lane-dense 2D)
                pl.BlockSpec((1, C), lambda i: (0, 0)),           # norm1 gamma
                pl.BlockSpec((1, C), lambda i: (0, 0)),           # norm1 beta
                pl.BlockSpec((3, C, C), lambda i: (0, 0, 0)),     # wq|wk|wv (bf16, q pre-scaled)
                pl.BlockSpec((3, 1, C), lambda i: (0, 0, 0)),     # bq|bk|bv
                pl.BlockSpec((C, C), lambda i: (0, 0)),           # proj weight (bf16)
                pl.BlockSpec((1, C), lambda i: (0, 0)),           # proj bias
                pl.BlockSpec(mask_block, mask_map),               # rel-pos bias (+ shift mask)
            ],
            out_specs=pl.BlockSpec((WB * N, C), lambda i: (i, 0)),
        ),
        compiler_params=pltpu.CompilerParams(**cp),
        cost_estimate=pl.CostEstimate(flops=flops, transcendentals=trans,
                                      bytes_accessed=bytes_acc),
    )(xw2d, g1, b1, wqkv3, bqkv3, wproj, bproj, bias_mask)


def fused_ln_mlp_residual(x2d, g, b, w1, b1, w2, b2, *, row_block, eps=LN_EPS):
    M, C = x2d.shape
    Hd = w1.shape[1]
    TM = row_block
    assert M % TM == 0
    grid = M // TM
    kernel = functools.partial(_ln_mlp_kernel, eps=eps)

    wdt = jnp.dtype(w1.dtype).itemsize
    flops = int(4 * M * C * Hd)
    trans = int(M * Hd + M)
    bytes_acc = int(2 * M * C * 4 + 2 * C * Hd * wdt + (Hd + 3 * C) * 4)

    need = 2 * (2 * TM * C * 4 + 2 * C * Hd * wdt) + TM * Hd * 4 + 2 * _MB
    cp = dict(dimension_semantics=("parallel",))
    if need > 12 * _MB:
        cp["vmem_limit_bytes"] = int(min(max(need, 32 * _MB), 64 * _MB))

    return pl.pallas_call(
        kernel,
        out_shape=jax.ShapeDtypeStruct((M, C), jnp.float32),
        grid_spec=pltpu.PrefetchScalarGridSpec(
            num_scalar_prefetch=0,
            grid=(grid,),
            in_specs=[
                pl.BlockSpec((TM, C), lambda i: (i, 0)),
                pl.BlockSpec((1, C), lambda i: (0, 0)),           # norm2 gamma
                pl.BlockSpec((1, C), lambda i: (0, 0)),           # norm2 beta
                pl.BlockSpec((C, Hd), lambda i: (0, 0)),          # fc1 weight (bf16)
                pl.BlockSpec((1, Hd), lambda i: (0, 0)),          # fc1 bias
                pl.BlockSpec((Hd, C), lambda i: (0, 0)),          # fc2 weight (bf16)
                pl.BlockSpec((1, C), lambda i: (0, 0)),           # fc2 bias
            ],
            out_specs=pl.BlockSpec((TM, C), lambda i: (i, 0)),
        ),
        compiler_params=pltpu.CompilerParams(**cp),
        cost_estimate=pl.CostEstimate(flops=flops, transcendentals=trans,
                                      bytes_accessed=bytes_acc),
    )(x2d, g, b, w1, b1, w2, b2)


# ----------------------------------------------------------------------------
# Tile pickers (VMEM-budget aware, grid >= 2 preferred)
# ----------------------------------------------------------------------------
def _choose_windows_per_block(B_, nW_mask, N, C, H, weight_bytes, budget_bytes,
                              max_rows=2048):
    best = None
    for WB in range(1, B_ + 1):
        if B_ % WB:
            continue
        if WB % nW_mask != 0 and nW_mask % WB != 0:
            continue                                  # mask must tile the window block exactly
        if (WB * N) % 8 != 0 and WB != B_:
            continue                                  # (8,128) sublane alignment of 2-D blocks
        grid = B_ // WB
        mask_rows = nW_mask if WB % nW_mask == 0 else WB
        need = 2 * (2 * WB * N * C * 4 + weight_bytes + mask_rows * H * N * N * 4) + 2 * _MB
        fits = need <= budget_bytes and WB * N <= max_rows
        key = (1 if fits else 0, 1 if grid >= 2 else 0, WB if fits else -WB)
        if best is None or key > best[0]:
            best = (key, WB)
    return best[1]


def _choose_row_block(M, C, Hd, weight_bytes, budget_bytes, max_rows=2048):
    best = None
    for TM in list(range(8, min(M, max_rows) + 1, 8)) + [M]:
        if M % TM:
            continue
        grid = M // TM
        need = 2 * (2 * TM * C * 4 + weight_bytes) + TM * Hd * 4 + 2 * _MB
        fits = need <= budget_bytes and TM <= max_rows
        key = (1 if fits else 0, 1 if grid >= 2 else 0, TM if fits else -TM)
        if best is None or key > best[0]:
            best = (key, TM)
    return best[1]


# ----------------------------------------------------------------------------
# Layout glue (pure JAX) + static setup helpers
# ----------------------------------------------------------------------------
def window_partition(x, ws):
    B, H, W, C = x.shape
    x = x.reshape(B, H // ws, ws, W // ws, ws, C)
    x = x.transpose(0, 1, 3, 2, 4, 5)
    return x.reshape(-1, ws * ws, C)


def window_reverse(windows, ws, H, W):
    C = windows.shape[-1]
    B = windows.shape[0] // ((H // ws) * (W // ws))
    x = windows.reshape(B, H // ws, W // ws, ws, ws, C)
    x = x.transpose(0, 1, 3, 2, 4, 5)
    return x.reshape(B, H, W, C)


def make_relative_position_index(Wh, Ww):
    coords = np.stack(np.meshgrid(np.arange(Wh), np.arange(Ww), indexing="ij"))
    coords_flatten = coords.reshape(2, -1)
    rel = coords_flatten[:, :, None] - coords_flatten[:, None, :]
    rel = rel.transpose(1, 2, 0).astype(np.int64)
    rel[:, :, 0] += Wh - 1
    rel[:, :, 1] += Ww - 1
    rel[:, :, 0] *= 2 * Ww - 1
    return rel.sum(-1)  # (N, N)


def build_shift_mask(Hres, Wres, ws, shift):
    """Replicates SwinTransformerBlock's attn_mask (0 / -100).  None if shift == 0."""
    if shift == 0:
        return None
    img = np.zeros((1, Hres, Wres, 1), np.float32)
    slices = (slice(0, -ws), slice(-ws, -shift), slice(-shift, None))
    cnt = 0
    for hs in slices:
        for wsl in slices:
            img[:, hs, wsl, :] = cnt
            cnt += 1
    mw = img.reshape(1, Hres // ws, ws, Wres // ws, ws, 1)
    mw = mw.transpose(0, 1, 3, 2, 4, 5).reshape(-1, ws * ws)
    am = mw[:, None, :] - mw[:, :, None]
    return np.where(am != 0, -100.0, 0.0).astype(np.float32)  # (nW, N, N)


# ----------------------------------------------------------------------------
# Stage configuration, parameters, derived state
# ----------------------------------------------------------------------------
def make_stage_config(dim, input_resolution, depth, num_heads, window_size, mlp_ratio):
    cfgs = []
    for i in range(depth):
        ws = window_size
        shift = 0 if i % 2 == 0 else window_size // 2
        if min(input_resolution) <= ws:
            shift = 0
            ws = min(input_resolution)
        cfgs.append(dict(resolution=tuple(input_resolution), window_size=ws,
                         shift_size=shift, num_heads=num_heads, dim=dim,
                         hidden=int(dim * mlp_ratio)))
    return cfgs


def init_block_params(key, cfg):
    dim, H, ws, hidden = cfg["dim"], cfg["num_heads"], cfg["window_size"], cfg["hidden"]
    ks = jax.random.split(key, 13)
    table_rows = (2 * ws - 1) * (2 * ws - 1)
    n = jax.random.normal
    return {
        "norm1_g": 1.0 + 0.05 * n(ks[0], (dim,), jnp.float32),
        "norm1_b": 0.02 * n(ks[1], (dim,), jnp.float32),
        "rel_table": 0.02 * n(ks[2], (table_rows, H), jnp.float32),
        "qkv_w": 0.06 * n(ks[3], (dim, 3 * dim), jnp.float32),
        "qkv_b": 0.01 * n(ks[4], (3 * dim,), jnp.float32),
        "proj_w": 0.06 * n(ks[5], (dim, dim), jnp.float32),
        "proj_b": 0.01 * n(ks[6], (dim,), jnp.float32),
        "norm2_g": 1.0 + 0.05 * n(ks[7], (dim,), jnp.float32),
        "norm2_b": 0.02 * n(ks[8], (dim,), jnp.float32),
        "fc1_w": 0.06 * n(ks[9], (dim, hidden), jnp.float32),
        "fc1_b": 0.01 * n(ks[10], (hidden,), jnp.float32),
        "fc2_w": 0.06 * n(ks[11], (hidden, dim), jnp.float32),
        "fc2_b": 0.01 * n(ks[12], (dim,), jnp.float32),
    }


def prepare_block_state(bp, cfg, matmul_dtype=MATMUL_DTYPE):
    """Hoisted setup: rel-pos-bias gather (+ shift mask), qk-scale fold, bf16 weight casts."""
    ws, H, C, Hd = cfg["window_size"], cfg["num_heads"], cfg["dim"], cfg["hidden"]
    D = C // H
    N = ws * ws
    scale = D ** (-0.5)

    rel_idx = make_relative_position_index(ws, ws)                 # (N, N) numpy
    rb = bp["rel_table"][rel_idx.reshape(-1)]                      # (N*N, H)
    rb = rb.reshape(N, N, H).transpose(2, 0, 1)                    # (H, N, N)
    mask = build_shift_mask(cfg["resolution"][0], cfg["resolution"][1],
                            ws, cfg["shift_size"])                 # (nW, N, N) or None
    bm = rb[None] if mask is None else rb[None] + jnp.asarray(mask)[:, None]

    wq = bp["qkv_w"][:, 0:C] * scale
    wk = bp["qkv_w"][:, C:2 * C]
    wv = bp["qkv_w"][:, 2 * C:3 * C]
    bq = bp["qkv_b"][0:C] * scale
    bk = bp["qkv_b"][C:2 * C]
    bv = bp["qkv_b"][2 * C:3 * C]

    st = dict(bp)
    st["bias_mask"] = bm.astype(jnp.float32)
    st["qkv_w3"] = jnp.stack([wq, wk, wv], 0).astype(matmul_dtype)          # (3, C, C)
    st["qkv_b3"] = jnp.stack([bq, bk, bv], 0).reshape(3, 1, C).astype(jnp.float32)
    st["proj_w_m"] = bp["proj_w"].astype(matmul_dtype)
    st["proj_b_m"] = bp["proj_b"].reshape(1, C).astype(jnp.float32)
    st["fc1_w_m"] = bp["fc1_w"].astype(matmul_dtype)
    st["fc1_b_m"] = bp["fc1_b"].reshape(1, Hd).astype(jnp.float32)
    st["fc2_w_m"] = bp["fc2_w"].astype(matmul_dtype)
    st["fc2_b_m"] = bp["fc2_b"].reshape(1, C).astype(jnp.float32)
    st["norm1_g2"] = bp["norm1_g"].reshape(1, C)
    st["norm1_b2"] = bp["norm1_b"].reshape(1, C)
    st["norm2_g2"] = bp["norm2_g"].reshape(1, C)
    st["norm2_b2"] = bp["norm2_b"].reshape(1, C)
    return st


def init_stage(key, cfgs):
    return [prepare_block_state(init_block_params(jax.random.fold_in(key, i), cfg), cfg)
            for i, cfg in enumerate(cfgs)]


# ----------------------------------------------------------------------------
# Forward (Pallas path)
# ----------------------------------------------------------------------------
def _block_forward(bp, cfg, x):
    B, L, C = x.shape
    Hres, Wres = cfg["resolution"]
    ws, shift, H = cfg["window_size"], cfg["shift_size"], cfg["num_heads"]
    N = ws * ws
    Hd = cfg["hidden"]
    budget = _vmem_budget_bytes()

    xs = x.reshape(B, Hres, Wres, C)
    if shift > 0:
        xs = jnp.roll(xs, shift=(-shift, -shift), axis=(1, 2))
    xw = window_partition(xs, ws)                        # (B_, N, C) == shifted shortcut
    B_ = xw.shape[0]

    bm = bp["bias_mask"]
    wdt = jnp.dtype(MATMUL_DTYPE).itemsize
    attn_weight_bytes = 4 * C * C * wdt + (3 * C + C + 2 * C) * 4
    WB = _choose_windows_per_block(B_, bm.shape[0], N, C, H, attn_weight_bytes, budget)

    # norm1 + W-MSA + proj + residual fused (x itself is the shortcut inside the kernel)
    x_attn = fused_window_attention(
        xw.reshape(B_ * N, C), bp["norm1_g2"], bp["norm1_b2"],
        bp["qkv_w3"], bp["qkv_b3"], bp["proj_w_m"], bp["proj_b_m"], bm,
        windows_per_block=WB, window_tokens=N, num_heads=H)
    # attn_drop / proj_drop / DropPath are identity (rate 0.0, eval mode).

    xs2 = window_reverse(x_attn.reshape(B_, N, C), ws, Hres, Wres)
    if shift > 0:
        xs2 = jnp.roll(xs2, shift=(shift, shift), axis=(1, 2))
    x = xs2.reshape(B, L, C)                             # residual already included

    M = B * L
    mlp_weight_bytes = 2 * C * Hd * wdt + (Hd + 3 * C) * 4
    TM = _choose_row_block(M, C, Hd, mlp_weight_bytes, budget)
    y = fused_ln_mlp_residual(x.reshape(M, C), bp["norm2_g2"], bp["norm2_b2"],
                              bp["fc1_w_m"], bp["fc1_b_m"], bp["fc2_w_m"], bp["fc2_b_m"],
                              row_block=TM)
    return y.reshape(B, L, C)


def make_stage_forward(cfgs):
    def forward(blocks, x):
        # BasicSwinStage with sample=None: Identity down-sample, sequential blocks.
        for bp, cfg in zip(blocks, cfgs):
            x = _block_forward(bp, cfg, x)
        return x
    return forward


# ----------------------------------------------------------------------------
# Pure-JAX reference mirroring the PyTorch forward (for verification)
# ----------------------------------------------------------------------------
def _layernorm_ref(x, g, b, eps=LN_EPS):
    mu = jnp.mean(x, axis=-1, keepdims=True)
    var = jnp.mean((x - mu) ** 2, axis=-1, keepdims=True)
    return (x - mu) * jax.lax.rsqrt(var + eps) * g + b


def reference_block_forward(bp, cfg, x):
    B, L, C = x.shape
    Hres, Wres = cfg["resolution"]
    ws, shift, H = cfg["window_size"], cfg["shift_size"], cfg["num_heads"]
    D = C // H
    scale = D ** (-0.5)

    shortcut = x
    xn = _layernorm_ref(x, bp["norm1_g"], bp["norm1_b"])
    xs = xn.reshape(B, Hres, Wres, C)
    if shift > 0:
        xs = jnp.roll(xs, shift=(-shift, -shift), axis=(1, 2))
    xw = window_partition(xs, ws)
    B_, N, _ = xw.shape

    qkv = xw @ bp["qkv_w"] + bp["qkv_b"]
    qkv = qkv.reshape(B_, N, 3, H, D).transpose(2, 0, 3, 1, 4)
    q, k, v = qkv[0] * scale, qkv[1], qkv[2]
    attn = jnp.einsum("bhnd,bhmd->bhnm", q, k)

    rel_idx = make_relative_position_index(ws, ws)
    rb = bp["rel_table"][rel_idx.reshape(-1)].reshape(N, N, H).transpose(2, 0, 1)
    attn = attn + rb[None]

    mask = build_shift_mask(Hres, Wres, ws, shift)
    if mask is not None:
        mask = jnp.asarray(mask)
        nW = mask.shape[0]
        attn = attn.reshape(B_ // nW, nW, H, N, N) + mask[None, :, None]
        attn = attn.reshape(-1, H, N, N)
    attn = jax.nn.softmax(attn, axis=-1)
    out = jnp.einsum("bhnm,bhmd->bhnd", attn, v)
    out = out.transpose(0, 2, 1, 3).reshape(B_, N, C)
    out = out @ bp["proj_w"] + bp["proj_b"]

    xs2 = window_reverse(out, ws, Hres, Wres)
    if shift > 0:
        xs2 = jnp.roll(xs2, shift=(shift, shift), axis=(1, 2))
    x = shortcut + xs2.reshape(B, L, C)

    xn2 = _layernorm_ref(x, bp["norm2_g"], bp["norm2_b"])
    h = _gelu(xn2 @ bp["fc1_w"] + bp["fc1_b"])
    y = h @ bp["fc2_w"] + bp["fc2_b"]
    return x + y


def reference_stage_forward(blocks, cfgs, x):
    for bp, cfg in zip(blocks, cfgs):
        x = reference_block_forward(bp, cfg, x)
    return x


# ----------------------------------------------------------------------------
if __name__ == "__main__":
    # Small BasicSwinStage: dim=32, 4 heads, 8x8 resolution, window 4 (N=16, nW=4),
    # depth=2 (W-MSA + SW-MSA with shift 2), mlp_ratio=4, batch 2.
    dim = 32
    num_heads = 4
    window_size = 4
    input_resolution = (8, 8)
    depth = 2
    mlp_ratio = 4.0
    B = 2
    L = input_resolution[0] * input_resolution[1]

    root = jax.random.PRNGKey(0)
    kparams, kx = jax.random.split(root)

    cfgs = make_stage_config(dim, input_resolution, depth, num_heads, window_size, mlp_ratio)
    blocks = init_stage(kparams, cfgs)
    x = jax.random.normal(kx, (B, L, dim), jnp.float32)

    stage_forward = jax.jit(make_stage_forward(cfgs))
    out = jax.block_until_ready(stage_forward(blocks, x))

    ref = jax.block_until_ready(reference_stage_forward(blocks, cfgs, x))
    # Kernel uses bf16 MXU operands (f32 accumulation) + approx EUP reciprocal,
    # so the parity check against the pure-f32 reference uses a relaxed tolerance.
    np.testing.assert_allclose(np.asarray(out), np.asarray(ref), rtol=5e-2, atol=5e-2)

    print("KERNEL_OK")
</pallas_src>

<mosaic_0001>
module attributes {stable_mosaic.version = 11 : i64} {
  func.func @_wmsa_kernel(%arg0: i32, %arg1: memref<64x32xf32, #tpu.memory_space<vmem>>, %arg2: memref<1x32xf32, #tpu.memory_space<vmem>>, %arg3: memref<1x32xf32, #tpu.memory_space<vmem>>, %arg4: memref<3x32x32xbf16, #tpu.memory_space<vmem>>, %arg5: memref<3x1x32xf32, #tpu.memory_space<vmem>>, %arg6: memref<32x32xbf16, #tpu.memory_space<vmem>>, %arg7: memref<1x32xf32, #tpu.memory_space<vmem>>, %arg8: memref<1x4x16x16xf32, #tpu.memory_space<vmem>>, %arg9: memref<64x32xf32, #tpu.memory_space<vmem>>) attributes {dimension_semantics = [#tpu.dimension_semantics<parallel>], iteration_bounds = array<i64: 2>, scalar_prefetch = 0 : i64, scratch_operands = 0 : i64, tpu.core_type = #tpu.core_type<tc>, window_params = [{transform_indices = @transform_0, window_bounds = array<i64: 64, 32>}, {pipeline_mode = #tpu.pipeline_mode<synchronous>, transform_indices = @transform_1, window_bounds = array<i64: 1, 32>}, {pipeline_mode = #tpu.pipeline_mode<synchronous>, transform_indices = @transform_2, window_bounds = array<i64: 1, 32>}, {pipeline_mode = #tpu.pipeline_mode<synchronous>, transform_indices = @transform_3, window_bounds = array<i64: 3, 32, 32>}, {pipeline_mode = #tpu.pipeline_mode<synchronous>, transform_indices = @transform_4, window_bounds = array<i64: 3, 1, 32>}, {pipeline_mode = #tpu.pipeline_mode<synchronous>, transform_indices = @transform_5, window_bounds = array<i64: 32, 32>}, {pipeline_mode = #tpu.pipeline_mode<synchronous>, transform_indices = @transform_6, window_bounds = array<i64: 1, 32>}, {pipeline_mode = #tpu.pipeline_mode<synchronous>, transform_indices = @transform_7, window_bounds = array<i64: 1, 4, 16, 16>}, {transform_indices = @transform_8, window_bounds = array<i64: 64, 32>}]} {
    %c0 = arith.constant 0 : index
    %c0_0 = arith.constant 0 : index
    %0 = vector.load %arg1[%c0, %c0_0] : memref<64x32xf32, #tpu.memory_space<vmem>>, vector<64x32xf32>
    %cst = arith.constant dense<0.000000e+00> : vector<64xf32>
    %1 = vector.multi_reduction <add>, %0, %cst [1] : vector<64x32xf32> to vector<64xf32>
    %2 = vector.shape_cast %1 : vector<64xf32> to vector<64x1xf32>
    %cst_1 = arith.constant 3.200000e+01 : f32
    %3 = vector.broadcast %cst_1 : f32 to vector<64x1xf32>
    %4 = arith.divf %2, %3 : vector<64x1xf32>
    %5 = vector.broadcast %4 : vector<64x1xf32> to vector<64x32xf32>
    %6 = arith.subf %0, %5 : vector<64x32xf32>
    %7 = arith.mulf %6, %6 : vector<64x32xf32>
    %cst_2 = arith.constant dense<0.000000e+00> : vector<64xf32>
    %8 = vector.multi_reduction <add>, %7, %cst_2 [1] : vector<64x32xf32> to vector<64xf32>
    %9 = vector.shape_cast %8 : vector<64xf32> to vector<64x1xf32>
    %cst_3 = arith.constant 3.200000e+01 : f32
    %10 = vector.broadcast %cst_3 : f32 to vector<64x1xf32>
    %11 = arith.divf %9, %10 : vector<64x1xf32>
    %cst_4 = arith.constant 9.99999974E-6 : f32
    %12 = vector.broadcast %cst_4 : f32 to vector<64x1xf32>
    %13 = arith.addf %11, %12 : vector<64x1xf32>
    %14 = math.rsqrt %13 : vector<64x1xf32>
    %15 = vector.broadcast %14 : vector<64x1xf32> to vector<64x32xf32>
    %16 = arith.mulf %6, %15 : vector<64x32xf32>
    %c0_5 = arith.constant 0 : index
    %c0_6 = arith.constant 0 : index
    %17 = vector.load %arg2[%c0_5, %c0_6] : memref<1x32xf32, #tpu.memory_space<vmem>>, vector<1x32xf32>
    %18 = vector.broadcast %17 : vector<1x32xf32> to vector<64x32xf32>
    %19 = arith.mulf %16, %18 : vector<64x32xf32>
    %c0_7 = arith.constant 0 : index
    %c0_8 = arith.constant 0 : index
    %20 = vector.load %arg3[%c0_7, %c0_8] : memref<1x32xf32, #tpu.memory_space<vmem>>, vector<1x32xf32>
    %21 = vector.broadcast %20 : vector<1x32xf32> to vector<64x32xf32>
    %22 = arith.addf %19, %21 : vector<64x32xf32>
    %23 = arith.truncf %22 : vector<64x32xf32> to vector<64x32xbf16>
    %c0_9 = arith.constant 0 : index
    %c0_10 = arith.constant 0 : index
    %c0_11 = arith.constant 0 : index
    %24 = vector.load %arg4[%c0_9, %c0_10, %c0_11] : memref<3x32x32xbf16, #tpu.memory_space<vmem>>, vector<1x32x32xbf16>
    %25 = vector.shape_cast %24 : vector<1x32x32xbf16> to vector<32x32xbf16>
    %cst_12 = arith.constant dense<0.000000e+00> : vector<64x32xf32>
    %26 = tpu.matmul %23, %25, %cst_12 {dimension_numbers = #tpu.dot_dimension_numbers<[1], [0], [0], [1], [0, 0, 1, 1], [], []>} : vector<64x32xbf16>, vector<32x32xbf16>, vector<64x32xf32> -> vector<64x32xf32>
    %c0_13 = arith.constant 0 : index
    %c0_14 = arith.constant 0 : index
    %c0_15 = arith.constant 0 : index
    %27 = vector.load %arg5[%c0_13, %c0_14, %c0_15] : memref<3x1x32xf32, #tpu.memory_space<vmem>>, vector<1x1x32xf32>
    %28 = vector.shape_cast %27 : vector<1x1x32xf32> to vector<1x32xf32>
    %29 = vector.broadcast %28 : vector<1x32xf32> to vector<64x32xf32>
    %30 = arith.addf %26, %29 : vector<64x32xf32>
    %31 = vector.shape_cast %30 : vector<64x32xf32> to vector<4x16x32xf32>
    %c1 = arith.constant 1 : index
    %c0_16 = arith.constant 0 : index
    %c0_17 = arith.constant 0 : index
    %32 = vector.load %arg4[%c1, %c0_16, %c0_17] : memref<3x32x32xbf16, #tpu.memory_space<vmem>>, vector<1x32x32xbf16>
    %33 = vector.shape_cast %32 : vector<1x32x32xbf16> to vector<32x32xbf16>
    %cst_18 = arith.constant dense<0.000000e+00> : vector<64x32xf32>
    %34 = tpu.matmul %23, %33, %cst_18 {dimension_numbers = #tpu.dot_dimension_numbers<[1], [0], [0], [1], [0, 0, 1, 1], [], []>} : vector<64x32xbf16>, vector<32x32xbf16>, vector<64x32xf32> -> vector<64x32xf32>
    %c1_19 = arith.constant 1 : index
    %c0_20 = arith.constant 0 : index
    %c0_21 = arith.constant 0 : index
    %35 = vector.load %arg5[%c1_19, %c0_20, %c0_21] : memref<3x1x32xf32, #tpu.memory_space<vmem>>, vector<1x1x32xf32>
    %36 = vector.shape_cast %35 : vector<1x1x32xf32> to vector<1x32xf32>
    %37 = vector.broadcast %36 : vector<1x32xf32> to vector<64x32xf32>
    %38 = arith.addf %34, %37 : vector<64x32xf32>
    %39 = vector.shape_cast %38 : vector<64x32xf32> to vector<4x16x32xf32>
    %c2 = arith.constant 2 : index
    %c0_22 = arith.constant 0 : index
    %c0_23 = arith.constant 0 : index
    %40 = vector.load %arg4[%c2, %c0_22, %c0_23] : memref<3x32x32xbf16, #tpu.memory_space<vmem>>, vector<1x32x32xbf16>
    %41 = vector.shape_cast %40 : vector<1x32x32xbf16> to vector<32x32xbf16>
    %cst_24 = arith.constant dense<0.000000e+00> : vector<64x32xf32>
    %42 = tpu.matmul %23, %41, %cst_24 {dimension_numbers = #tpu.dot_dimension_numbers<[1], [0], [0], [1], [0, 0, 1, 1], [], []>} : vector<64x32xbf16>, vector<32x32xbf16>, vector<64x32xf32> -> vector<64x32xf32>
    %c2_25 = arith.constant 2 : index
    %c0_26 = arith.constant 0 : index
    %c0_27 = arith.constant 0 : index
    %43 = vector.load %arg5[%c2_25, %c0_26, %c0_27] : memref<3x1x32xf32, #tpu.memory_space<vmem>>, vector<1x1x32xf32>
    %44 = vector.shape_cast %43 : vector<1x1x32xf32> to vector<1x32xf32>
    %45 = vector.broadcast %44 : vector<1x32xf32> to vector<64x32xf32>
    %46 = arith.addf %42, %45 : vector<64x32xf32>
    %47 = vector.shape_cast %46 : vector<64x32xf32> to vector<4x16x32xf32>
    %48 = vector.extract_strided_slice %31 {offsets = [0, 0, 0], sizes = [4, 16, 8], strides = [1, 1, 1]} : vector<4x16x32xf32> to vector<4x16x8xf32>
    %49 = arith.truncf %48 : vector<4x16x8xf32> to vector<4x16x8xbf16>
    %50 = vector.extract_strided_slice %39 {offsets = [0, 0, 0], sizes = [4, 16, 8], strides = [1, 1, 1]} : vector<4x16x32xf32> to vector<4x16x8xf32>
    %51 = arith.truncf %50 : vector<4x16x8xf32> to vector<4x16x8xbf16>
    %52 = vector.extract_strided_slice %47 {offsets = [0, 0, 0], sizes = [4, 16, 8], strides = [1, 1, 1]} : vector<4x16x32xf32> to vector<4x16x8xf32>
    %53 = arith.truncf %52 : vector<4x16x8xf32> to vector<4x16x8xbf16>
    "tpu.trace_start"() <{level = 10 : i32, message = "bqd,bkd->bqk"}> : () -> ()
    %cst_28 = arith.constant dense<0.000000e+00> : vector<4x16x16xf32>
    %54 = tpu.matmul %49, %51, %cst_28 {dimension_numbers = #tpu.dot_dimension_numbers<[2], [2], [1], [1], [0, 0, 0, 1, 1, 1], [0], [0]>} : vector<4x16x8xbf16>, vector<4x16x8xbf16>, vector<4x16x16xf32> -> vector<4x16x16xf32>
    "tpu.trace_stop"() : () -> ()
    %c0_29 = arith.constant 0 : index
    %c0_30 = arith.constant 0 : index
    %c0_31 = arith.constant 0 : index
    %c0_32 = arith.constant 0 : index
    %55 = vector.load %arg8[%c0_29, %c0_30, %c0_31, %c0_32] : memref<1x4x16x16xf32, #tpu.memory_space<vmem>>, vector<1x1x16x16xf32>
    %56 = vector.shape_cast %55 : vector<1x1x16x16xf32> to vector<1x16x16xf32>
    %57 = vector.broadcast %56 : vector<1x16x16xf32> to vector<4x16x16xf32>
    %58 = arith.addf %54, %57 : vector<4x16x16xf32>
    %cst_33 = arith.constant dense<0xFF800000> : vector<4x16xf32>
    %59 = vector.multi_reduction <maximumf>, %58, %cst_33 [2] : vector<4x16x16xf32> to vector<4x16xf32>
    %60 = vector.shape_cast %59 : vector<4x16xf32> to vector<4x16x1xf32>
    %61 = vector.broadcast %60 : vector<4x16x1xf32> to vector<4x16x16xf32>
    %62 = arith.subf %58, %61 : vector<4x16x16xf32>
    %63 = math.exp %62 : vector<4x16x16xf32>
    %cst_34 = arith.constant dense<0.000000e+00> : vector<4x16xf32>
    %64 = vector.multi_reduction <add>, %63, %cst_34 [2] : vector<4x16x16xf32> to vector<4x16xf32>
    %65 = vector.shape_cast %64 : vector<4x16xf32> to vector<4x16x1xf32>
    %66 = arith.truncf %63 : vector<4x16x16xf32> to vector<4x16x16xbf16>
    "tpu.trace_start"() <{level = 10 : i32, message = "bqk,bkd->bqd"}> : () -> ()
    %cst_35 = arith.constant dense<0.000000e+00> : vector<4x16x8xf32>
    %67 = tpu.matmul %66, %53, %cst_35 {dimension_numbers = #tpu.dot_dimension_numbers<[2], [1], [1], [2], [0, 0, 0, 1, 1, 2], [0], [0]>} : vector<4x16x16xbf16>, vector<4x16x8xbf16>, vector<4x16x8xf32> -> vector<4x16x8xf32>
    "tpu.trace_stop"() : () -> ()
    %68 = tpu.reciprocal %65 {approx = true} : vector<4x16x1xf32> -> vector<4x16x1xf32>
    %69 = vector.broadcast %68 : vector<4x16x1xf32> to vector<4x16x8xf32>
    %70 = arith.mulf %67, %69 : vector<4x16x8xf32>
    %71 = vector.extract_strided_slice %31 {offsets = [0, 0, 8], sizes = [4, 16, 8], strides = [1, 1, 1]} : vector<4x16x32xf32> to vector<4x16x8xf32>
    %72 = arith.truncf %71 : vector<4x16x8xf32> to vector<4x16x8xbf16>
    %73 = vector.extract_strided_slice %39 {offsets = [0, 0, 8], sizes = [4, 16, 8], strides = [1, 1, 1]} : vector<4x16x32xf32> to vector<4x16x8xf32>
    %74 = arith.truncf %73 : vector<4x16x8xf32> to vector<4x16x8xbf16>
    %75 = vector.extract_strided_slice %47 {offsets = [0, 0, 8], sizes = [4, 16, 8], strides = [1, 1, 1]} : vector<4x16x32xf32> to vector<4x16x8xf32>
    %76 = arith.truncf %75 : vector<4x16x8xf32> to vector<4x16x8xbf16>
    "tpu.trace_start"() <{level = 10 : i32, message = "bqd,bkd->bqk"}> : () -> ()
    %cst_36 = arith.constant dense<0.000000e+00> : vector<4x16x16xf32>
    %77 = tpu.matmul %72, %74, %cst_36 {dimension_numbers = #tpu.dot_dimension_numbers<[2], [2], [1], [1], [0, 0, 0, 1, 1, 1], [0], [0]>} : vector<4x16x8xbf16>, vector<4x16x8xbf16>, vector<4x16x16xf32> -> vector<4x16x16xf32>
    "tpu.trace_stop"() : () -> ()
    %c0_37 = arith.constant 0 : index
    %c1_38 = arith.constant 1 : index
    %c0_39 = arith.constant 0 : index
    %c0_40 = arith.constant 0 : index
    %78 = vector.load %arg8[%c0_37, %c1_38, %c0_39, %c0_40] : memref<1x4x16x16xf32, #tpu.memory_space<vmem>>, vector<1x1x16x16xf32>
    %79 = vector.shape_cast %78 : vector<1x1x16x16xf32> to vector<1x16x16xf32>
    %80 = vector.broadcast %79 : vector<1x16x16xf32> to vector<4x16x16xf32>
    %81 = arith.addf %77, %80 : vector<4x16x16xf32>
    %cst_41 = arith.constant dense<0xFF800000> : vector<4x16xf32>
    %82 = vector.multi_reduction <maximumf>, %81, %cst_41 [2] : vector<4x16x16xf32> to vector<4x16xf32>
    %83 = vector.shape_cast %82 : vector<4x16xf32> to vector<4x16x1xf32>
    %84 = vector.broadcast %83 : vector<4x16x1xf32> to vector<4x16x16xf32>
    %85 = arith.subf %81, %84 : vector<4x16x16xf32>
    %86 = math.exp %85 : vector<4x16x16xf32>
    %cst_42 = arith.constant dense<0.000000e+00> : vector<4x16xf32>
    %87 = vector.multi_reduction <add>, %86, %cst_42 [2] : vector<4x16x16xf32> to vector<4x16xf32>
    %88 = vector.shape_cast %87 : vector<4x16xf32> to vector<4x16x1xf32>
    %89 = arith.truncf %86 : vector<4x16x16xf32> to vector<4x16x16xbf16>
    "tpu.trace_start"() <{level = 10 : i32, message = "bqk,bkd->bqd"}> : () -> ()
    %cst_43 = arith.constant dense<0.000000e+00> : vector<4x16x8xf32>
    %90 = tpu.matmul %89, %76, %cst_43 {dimension_numbers = #tpu.dot_dimension_numbers<[2], [1], [1], [2], [0, 0, 0, 1, 1, 2], [0], [0]>} : vector<4x16x16xbf16>, vector<4x16x8xbf16>, vector<4x16x8xf32> -> vector<4x16x8xf32>
    "tpu.trace_stop"() : () -> ()
    %91 = tpu.reciprocal %88 {approx = true} : vector<4x16x1xf32> -> vector<4x16x1xf32>
    %92 = vector.broadcast %91 : vector<4x16x1xf32> to vector<4x16x8xf32>
    %93 = arith.mulf %90, %92 : vector<4x16x8xf32>
    %94 = vector.extract_strided_slice %31 {offsets = [0, 0, 16], sizes = [4, 16, 8], strides = [1, 1, 1]} : vector<4x16x32xf32> to vector<4x16x8xf32>
    %95 = arith.truncf %94 : vector<4x16x8xf32> to vector<4x16x8xbf16>
    %96 = vector.extract_strided_slice %39 {offsets = [0, 0, 16], sizes = [4, 16, 8], strides = [1, 1, 1]} : vector<4x16x32xf32> to vector<4x16x8xf32>
    %97 = arith.truncf %96 : vector<4x16x8xf32> to vector<4x16x8xbf16>
    %98 = vector.extract_strided_slice %47 {offsets = [0, 0, 16], sizes = [4, 16, 8], strides = [1, 1, 1]} : vector<4x16x32xf32> to vector<4x16x8xf32>
    %99 = arith.truncf %98 : vector<4x16x8xf32> to vector<4x16x8xbf16>
    "tpu.trace_start"() <{level = 10 : i32, message = "bqd,bkd->bqk"}> : () -> ()
    %cst_44 = arith.constant dense<0.000000e+00> : vector<4x16x16xf32>
    %100 = tpu.matmul %95, %97, %cst_44 {dimension_numbers = #tpu.dot_dimension_numbers<[2], [2], [1], [1], [0, 0, 0, 1, 1, 1], [0], [0]>} : vector<4x16x8xbf16>, vector<4x16x8xbf16>, vector<4x16x16xf32> -> vector<4x16x16xf32>
    "tpu.trace_stop"() : () -> ()
    %c0_45 = arith.constant 0 : index
    %c2_46 = arith.constant 2 : index
    %c0_47 = arith.constant 0 : index
    %c0_48 = arith.constant 0 : index
    %101 = vector.load %arg8[%c0_45, %c2_46, %c0_47, %c0_48] : memref<1x4x16x16xf32, #tpu.memory_space<vmem>>, vector<1x1x16x16xf32>
    %102 = vector.shape_cast %101 : vector<1x1x16x16xf32> to vector<1x16x16xf32>
    %103 = vector.broadcast %102 : vector<1x16x16xf32> to vector<4x16x16xf32>
    %104 = arith.addf %100, %103 : vector<4x16x16xf32>
    %cst_49 = arith.constant dense<0xFF800000> : vector<4x16xf32>
    %105 = vector.multi_reduction <maximumf>, %104, %cst_49 [2] : vector<4x16x16xf32> to vector<4x16xf32>
    %106 = vector.shape_cast %105 : vector<4x16xf32> to vector<4x16x1xf32>
    %107 = vector.broadcast %106 : vector<4x16x1xf32> to vector<4x16x16xf32>
    %108 = arith.subf %104, %107 : vector<4x16x16xf32>
    %109 = math.exp %108 : vector<4x16x16xf32>
    %cst_50 = arith.constant dense<0.000000e+00> : vector<4x16xf32>
    %110 = vector.multi_reduction <add>, %109, %cst_50 [2] : vector<4x16x16xf32> to vector<4x16xf32>
    %111 = vector.shape_cast %110 : vector<4x16xf32> to vector<4x16x1xf32>
    %112 = arith.truncf %109 : vector<4x16x16xf32> to vector<4x16x16xbf16>
    "tpu.trace_start"() <{level = 10 : i32, message = "bqk,bkd->bqd"}> : () -> ()
    %cst_51 = arith.constant dense<0.000000e+00> : vector<4x16x8xf32>
    %113 = tpu.matmul %112, %99, %cst_51 {dimension_numbers = #tpu.dot_dimension_numbers<[2], [1], [1], [2], [0, 0, 0, 1, 1, 2], [0], [0]>} : vector<4x16x16xbf16>, vector<4x16x8xbf16>, vector<4x16x8xf32> -> vector<4x16x8xf32>
    "tpu.trace_stop"() : () -> ()
    %114 = tpu.reciprocal %111 {approx = true} : vector<4x16x1xf32> -> vector<4x16x1xf32>
    %115 = vector.broadcast %114 : vector<4x16x1xf32> to vector<4x16x8xf32>
    %116 = arith.mulf %113, %115 : vector<4x16x8xf32>
    %117 = vector.extract_strided_slice %31 {offsets = [0, 0, 24], sizes = [4, 16, 8], strides = [1, 1, 1]} : vector<4x16x32xf32> to vector<4x16x8xf32>
    %118 = arith.truncf %117 : vector<4x16x8xf32> to vector<4x16x8xbf16>
    %119 = vector.extract_strided_slice %39 {offsets = [0, 0, 24], sizes = [4, 16, 8], strides = [1, 1, 1]} : vector<4x16x32xf32> to vector<4x16x8xf32>
    %120 = arith.truncf %119 : vector<4x16x8xf32> to vector<4x16x8xbf16>
    %121 = vector.extract_strided_slice %47 {offsets = [0, 0, 24], sizes = [4, 16, 8], strides = [1, 1, 1]} : vector<4x16x32xf32> to vector<4x16x8xf32>
    %122 = arith.truncf %121 : vector<4x16x8xf32> to vector<4x16x8xbf16>
    "tpu.trace_start"() <{level = 10 : i32, message = "bqd,bkd->bqk"}> : () -> ()
    %cst_52 = arith.constant dense<0.000000e+00> : vector<4x16x16xf32>
    %123 = tpu.matmul %118, %120, %cst_52 {dimension_numbers = #tpu.dot_dimension_numbers<[2], [2], [1], [1], [0, 0, 0, 1, 1, 1], [0], [0]>} : vector<4x16x8xbf16>, vector<4x16x8xbf16>, vector<4x16x16xf32> -> vector<4x16x16xf32>
    "tpu.trace_stop"() : () -> ()
    %c0_53 = arith.constant 0 : index
    %c3 = arith.constant 3 : index
    %c0_54 = arith.constant 0 : index
    %c0_55 = arith.constant 0 : index
    %124 = vector.load %arg8[%c0_53, %c3, %c0_54, %c0_55] : memref<1x4x16x16xf32, #tpu.memory_space<vmem>>, vector<1x1x16x16xf32>
    %125 = vector.shape_cast %124 : vector<1x1x16x16xf32> to vector<1x16x16xf32>
    %126 = vector.broadcast %125 : vector<1x16x16xf32> to vector<4x16x16xf32>
    %127 = arith.addf %123, %126 : vector<4x16x16xf32>
    %cst_56 = arith.constant dense<0xFF800000> : vector<4x16xf32>
    %128 = vector.multi_reduction <maximumf>, %127, %cst_56 [2] : vector<4x16x16xf32> to vector<4x16xf32>
    %129 = vector.shape_cast %128 : vector<4x16xf32> to vector<4x16x1xf32>
    %130 = vector.broadcast %129 : vector<4x16x1xf32> to vector<4x16x16xf32>
    %131 = arith.subf %127, %130 : vector<4x16x16xf32>
    %132 = math.exp %131 : vector<4x16x16xf32>
    %cst_57 = arith.constant dense<0.000000e+00> : vector<4x16xf32>
    %133 = vector.multi_reduction <add>, %132, %cst_57 [2] : vector<4x16x16xf32> to vector<4x16xf32>
    %134 = vector.shape_cast %133 : vector<4x16xf32> to vector<4x16x1xf32>
    %135 = arith.truncf %132 : vector<4x16x16xf32> to vector<4x16x16xbf16>
    "tpu.trace_start"() <{level = 10 : i32, message = "bqk,bkd->bqd"}> : () -> ()
    %cst_58 = arith.constant dense<0.000000e+00> : vector<4x16x8xf32>
    %136 = tpu.matmul %135, %122, %cst_58 {dimension_numbers = #tpu.dot_dimension_numbers<[2], [1], [1], [2], [0, 0, 0, 1, 1, 2], [0], [0]>} : vector<4x16x16xbf16>, vector<4x16x8xbf16>, vector<4x16x8xf32> -> vector<4x16x8xf32>
    "tpu.trace_stop"() : () -> ()
    %137 = tpu.reciprocal %134 {approx = true} : vector<4x16x1xf32> -> vector<4x16x1xf32>
    %138 = vector.broadcast %137 : vector<4x16x1xf32> to vector<4x16x8xf32>
    %139 = arith.mulf %136, %138 : vector<4x16x8xf32>
    %140 = tpu.concatenate %70, %93, %116, %139 in 2 : vector<4x16x8xf32>, vector<4x16x8xf32>, vector<4x16x8xf32>, vector<4x16x8xf32> -> vector<4x16x32xf32>
    %141 = vector.shape_cast %140 : vector<4x16x32xf32> to vector<64x32xf32>
    %142 = arith.truncf %141 : vector<64x32xf32> to vector<64x32xbf16>
    %c0_59 = arith.constant 0 : index
    %c0_60 = arith.constant 0 : index
    %143 = vector.load %arg6[%c0_59, %c0_60] : memref<32x32xbf16, #tpu.memory_space<vmem>>, vector<32x32xbf16>
    %cst_61 = arith.constant dense<0.000000e+00> : vector<64x32xf32>
    %144 = tpu.matmul %142, %143, %cst_61 {dimension_numbers = #tpu.dot_dimension_numbers<[1], [0], [0], [1], [0, 0, 1, 1], [], []>} : vector<64x32xbf16>, vector<32x32xbf16>, vector<64x32xf32> -> vector<64x32xf32>
    %145 = arith.addf %0, %144 : vector<64x32xf32>
    %c0_62 = arith.constant 0 : index
    %c0_63 = arith.constant 0 : index
    %146 = vector.load %arg7[%c0_62, %c0_63] : memref<1x32xf32, #tpu.memory_space<vmem>>, vector<1x32xf32>
    %147 = vector.broadcast %146 : vector<1x32xf32> to vector<64x32xf32>
    %148 = arith.addf %145, %147 : vector<64x32xf32>
    %c0_64 = arith.constant 0 : index
    %c0_65 = arith.constant 0 : index
    %149 = vector.load %arg9[%c0_64, %c0_65] : memref<64x32xf32, #tpu.memory_space<vmem>>, vector<64x32xf32>
    tpu.vector_store %arg9[%c0_64, %c0_65], %148 {strides = array<i32>} : memref<64x32xf32, #tpu.memory_space<vmem>>, vector<64x32xf32>,
    return
  }
  func.func @transform_0(%arg0: i32) -> (i32, i32) {
    %c0_i32 = arith.constant 0 : i32
    %c0_i32_0 = arith.constant 0 : i32
    return %arg0, %c0_i32 : i32, i32
  }
  func.func @transform_1(%arg0: i32) -> (i32, i32) {
    %c0_i32 = arith.constant 0 : i32
    %c0_i32_0 = arith.constant 0 : i32
    %c0_i32_1 = arith.constant 0 : i32
    return %c0_i32, %c0_i32_0 : i32, i32
  }
  func.func @transform_2(%arg0: i32) -> (i32, i32) {
    %c0_i32 = arith.constant 0 : i32
    %c0_i32_0 = arith.constant 0 : i32
    %c0_i32_1 = arith.constant 0 : i32
    return %c0_i32, %c0_i32_0 : i32, i32
  }
  func.func @transform_3(%arg0: i32) -> (i32, i32, i32) {
    %c0_i32 = arith.constant 0 : i32
    %c0_i32_0 = arith.constant 0 : i32
    %c0_i32_1 = arith.constant 0 : i32
    %c0_i32_2 = arith.constant 0 : i32
    return %c0_i32, %c0_i32_0, %c0_i32_1 : i32, i32, i32
  }
  func.func @transform_4(%arg0: i32) -> (i32, i32, i32) {
    %c0_i32 = arith.constant 0 : i32
    %c0_i32_0 = arith.constant 0 : i32
    %c0_i32_1 = arith.constant 0 : i32
    %c0_i32_2 = arith.constant 0 : i32
    return %c0_i32, %c0_i32_0, %c0_i32_1 : i32, i32, i32
  }
  func.func @transform_5(%arg0: i32) -> (i32, i32) {
    %c0_i32 = arith.constant 0 : i32
    %c0_i32_0 = arith.constant 0 : i32
    %c0_i32_1 = arith.constant 0 : i32
    return %c0_i32, %c0_i32_0 : i32, i32
  }
  func.func @transform_6(%arg0: i32) -> (i32, i32) {
    %c0_i32 = arith.constant 0 : i32
    %c0_i32_0 = arith.constant 0 : i32
    %c0_i32_1 = arith.constant 0 : i32
    return %c0_i32, %c0_i32_0 : i32, i32
  }
  func.func @transform_7(%arg0: i32) -> (i32, i32, i32, i32) {
    %c0_i32 = arith.constant 0 : i32
    %c0_i32_0 = arith.constant 0 : i32
    %c0_i32_1 = arith.constant 0 : i32
    %c0_i32_2 = arith.constant 0 : i32
    %c0_i32_3 = arith.constant 0 : i32
    return %c0_i32, %c0_i32_0, %c0_i32_1, %c0_i32_2 : i32, i32, i32, i32
  }
  func.func @transform_8(%arg0: i32) -> (i32, i32) {
    %c0_i32 = arith.constant 0 : i32
    %c0_i32_0 = arith.constant 0 : i32
    return %arg0, %c0_i32 : i32, i32
  }
}

module attributes {stable_mosaic.version = 11 : i64} {
  func.func @_ln_mlp_kernel(%arg0: i32, %arg1: memref<64x32xf32, #tpu.memory_space<vmem>>, %arg2: memref<1x32xf32, #tpu.memory_space<vmem>>, %arg3: memref<1x32xf32, #tpu.memory_space<vmem>>, %arg4: memref<32x128xbf16, #tpu.memory_space<vmem>>, %arg5: memref<1x128xf32, #tpu.memory_space<vmem>>, %arg6: memref<128x32xbf16, #tpu.memory_space<vmem>>, %arg7: memref<1x32xf32, #tpu.memory_space<vmem>>, %arg8: memref<64x32xf32, #tpu.memory_space<vmem>>) attributes {dimension_semantics = [#tpu.dimension_semantics<parallel>], iteration_bounds = array<i64: 2>, scalar_prefetch = 0 : i64, scratch_operands = 0 : i64, tpu.core_type = #tpu.core_type<tc>, window_params = [{transform_indices = @transform_0, window_bounds = array<i64: 64, 32>}, {pipeline_mode = #tpu.pipeline_mode<synchronous>, transform_indices = @transform_1, window_bounds = array<i64: 1, 32>}, {pipeline_mode = #tpu.pipeline_mode<synchronous>, transform_indices = @transform_2, window_bounds = array<i64: 1, 32>}, {pipeline_mode = #tpu.pipeline_mode<synchronous>, transform_indices = @transform_3, window_bounds = array<i64: 32, 128>}, {pipeline_mode = #tpu.pipeline_mode<synchronous>, transform_indices = @transform_4, window_bounds = array<i64: 1, 128>}, {pipeline_mode = #tpu.pipeline_mode<synchronous>, transform_indices = @transform_5, window_bounds = array<i64: 128, 32>}, {pipeline_mode = #tpu.pipeline_mode<synchronous>, transform_indices = @transform_6, window_bounds = array<i64: 1, 32>}, {transform_indices = @transform_7, window_bounds = array<i64: 64, 32>}]} {
    %c0 = arith.constant 0 : index
    %c0_0 = arith.constant 0 : index
    %0 = vector.load %arg1[%c0, %c0_0] : memref<64x32xf32, #tpu.memory_space<vmem>>, vector<64x32xf32>
    %cst = arith.constant dense<0.000000e+00> : vector<64xf32>
    %1 = vector.multi_reduction <add>, %0, %cst [1] : vector<64x32xf32> to vector<64xf32>
    %2 = vector.shape_cast %1 : vector<64xf32> to vector<64x1xf32>
    %cst_1 = arith.constant 3.200000e+01 : f32
    %3 = vector.broadcast %cst_1 : f32 to vector<64x1xf32>
    %4 = arith.divf %2, %3 : vector<64x1xf32>
    %5 = vector.broadcast %4 : vector<64x1xf32> to vector<64x32xf32>
    %6 = arith.subf %0, %5 : vector<64x32xf32>
    %7 = arith.mulf %6, %6 : vector<64x32xf32>
    %cst_2 = arith.constant dense<0.000000e+00> : vector<64xf32>
    %8 = vector.multi_reduction <add>, %7, %cst_2 [1] : vector<64x32xf32> to vector<64xf32>
    %9 = vector.shape_cast %8 : vector<64xf32> to vector<64x1xf32>
    %cst_3 = arith.constant 3.200000e+01 : f32
    %10 = vector.broadcast %cst_3 : f32 to vector<64x1xf32>
    %11 = arith.divf %9, %10 : vector<64x1xf32>
    %cst_4 = arith.constant 9.99999974E-6 : f32
    %12 = vector.broadcast %cst_4 : f32 to vector<64x1xf32>
    %13 = arith.addf %11, %12 : vector<64x1xf32>
    %14 = math.rsqrt %13 : vector<64x1xf32>
    %15 = vector.broadcast %14 : vector<64x1xf32> to vector<64x32xf32>
    %16 = arith.mulf %6, %15 : vector<64x32xf32>
    %c0_5 = arith.constant 0 : index
    %c0_6 = arith.constant 0 : index
    %17 = vector.load %arg2[%c0_5, %c0_6] : memref<1x32xf32, #tpu.memory_space<vmem>>, vector<1x32xf32>
    %18 = vector.broadcast %17 : vector<1x32xf32> to vector<64x32xf32>
    %19 = arith.mulf %16, %18 : vector<64x32xf32>
    %c0_7 = arith.constant 0 : index
    %c0_8 = arith.constant 0 : index
    %20 = vector.load %arg3[%c0_7, %c0_8] : memref<1x32xf32, #tpu.memory_space<vmem>>, vector<1x32xf32>
    %21 = vector.broadcast %20 : vector<1x32xf32> to vector<64x32xf32>
    %22 = arith.addf %19, %21 : vector<64x32xf32>
    %23 = arith.truncf %22 : vector<64x32xf32> to vector<64x32xbf16>
    %c0_9 = arith.constant 0 : index
    %c0_10 = arith.constant 0 : index
    %24 = vector.load %arg4[%c0_9, %c0_10] : memref<32x128xbf16, #tpu.memory_space<vmem>>, vector<32x128xbf16>
    %cst_11 = arith.constant dense<0.000000e+00> : vector<64x128xf32>
    %25 = tpu.matmul %23, %24, %cst_11 {dimension_numbers = #tpu.dot_dimension_numbers<[1], [0], [0], [1], [0, 0, 1, 1], [], []>} : vector<64x32xbf16>, vector<32x128xbf16>, vector<64x128xf32> -> vector<64x128xf32>
    %c0_12 = arith.constant 0 : index
    %c0_13 = arith.constant 0 : index
    %26 = vector.load %arg5[%c0_12, %c0_13] : memref<1x128xf32, #tpu.memory_space<vmem>>, vector<1x128xf32>
    %27 = vector.broadcast %26 : vector<1x128xf32> to vector<64x128xf32>
    %28 = arith.addf %25, %27 : vector<64x128xf32>
    %cst_14 = arith.constant 5.000000e-01 : f32
    %29 = vector.broadcast %cst_14 : f32 to vector<64x128xf32>
    %30 = arith.mulf %29, %28 : vector<64x128xf32>
    %cst_15 = arith.constant 4.471500e-02 : f32
    %31 = vector.broadcast %cst_15 : f32 to vector<64x128xf32>
    %32 = arith.mulf %31, %28 : vector<64x128xf32>
    %33 = arith.mulf %32, %28 : vector<64x128xf32>
    %34 = arith.mulf %33, %28 : vector<64x128xf32>
    %35 = arith.addf %28, %34 : vector<64x128xf32>
    %cst_16 = arith.constant 0.797884583 : f32
    %36 = vector.broadcast %cst_16 : f32 to vector<64x128xf32>
    %37 = arith.mulf %36, %35 : vector<64x128xf32>
    %38 = math.tanh %37 : vector<64x128xf32>
    %cst_17 = arith.constant 1.000000e+00 : f32
    %39 = vector.broadcast %cst_17 : f32 to vector<64x128xf32>
    %40 = arith.addf %39, %38 : vector<64x128xf32>
    %41 = arith.mulf %30, %40 : vector<64x128xf32>
    %42 = arith.truncf %41 : vector<64x128xf32> to vector<64x128xbf16>
    %c0_18 = arith.constant 0 : index
    %c0_19 = arith.constant 0 : index
    %43 = vector.load %arg6[%c0_18, %c0_19] : memref<128x32xbf16, #tpu.memory_space<vmem>>, vector<128x32xbf16>
    %cst_20 = arith.constant dense<0.000000e+00> : vector<64x32xf32>
    %44 = tpu.matmul %42, %43, %cst_20 {dimension_numbers = #tpu.dot_dimension_numbers<[1], [0], [0], [1], [0, 0, 1, 1], [], []>} : vector<64x128xbf16>, vector<128x32xbf16>, vector<64x32xf32> -> vector<64x32xf32>
    %c0_21 = arith.constant 0 : index
    %c0_22 = arith.constant 0 : index
    %45 = vector.load %arg7[%c0_21, %c0_22] : memref<1x32xf32, #tpu.memory_space<vmem>>, vector<1x32xf32>
    %46 = vector.broadcast %45 : vector<1x32xf32> to vector<64x32xf32>
    %47 = arith.addf %44, %46 : vector<64x32xf32>
    %48 = arith.addf %0, %47 : vector<64x32xf32>
    %c0_23 = arith.constant 0 : index
    %c0_24 = arith.constant 0 : index
    %49 = vector.load %arg8[%c0_23, %c0_24] : memref<64x32xf32, #tpu.memory_space<vmem>>, vector<64x32xf32>
    tpu.vector_store %arg8[%c0_23, %c0_24], %48 {strides = array<i32>} : memref<64x32xf32, #tpu.memory_space<vmem>>, vector<64x32xf32>,
    return
  }
  func.func @transform_0(%arg0: i32) -> (i32, i32) {
    %c0_i32 = arith.constant 0 : i32
    %c0_i32_0 = arith.constant 0 : i32
    return %arg0, %c0_i32 : i32, i32
  }
  func.func @transform_1(%arg0: i32) -> (i32, i32) {
    %c0_i32 = arith.constant 0 : i32
    %c0_i32_0 = arith.constant 0 : i32
    %c0_i32_1 = arith.constant 0 : i32
    return %c0_i32, %c0_i32_0 : i32, i32
  }
  func.func @transform_2(%arg0: i32) -> (i32, i32) {
    %c0_i32 = arith.constant 0 : i32
    %c0_i32_0 = arith.constant 0 : i32
    %c0_i32_1 = arith.constant 0 : i32
    return %c0_i32, %c0_i32_0 : i32, i32
  }
  func.func @transform_3(%arg0: i32) -> (i32, i32) {
    %c0_i32 = arith.constant 0 : i32
    %c0_i32_0 = arith.constant 0 : i32
    %c0_i32_1 = arith.constant 0 : i32
    return %c0_i32, %c0_i32_0 : i32, i32
  }
  func.func @transform_4(%arg0: i32) -> (i32, i32) {
    %c0_i32 = arith.constant 0 : i32
    %c0_i32_0 = arith.constant 0 : i32
    %c0_i32_1 = arith.constant 0 : i32
    return %c0_i32, %c0_i32_0 : i32, i32
  }
  func.func @transform_5(%arg0: i32) -> (i32, i32) {
    %c0_i32 = arith.constant 0 : i32
    %c0_i32_0 = arith.constant 0 : i32
    %c0_i32_1 = arith.constant 0 : i32
    return %c0_i32, %c0_i32_0 : i32, i32
  }
  func.func @transform_6(%arg0: i32) -> (i32, i32) {
    %c0_i32 = arith.constant 0 : i32
    %c0_i32_0 = arith.constant 0 : i32
    %c0_i32_1 = arith.constant 0 : i32
    return %c0_i32, %c0_i32_0 : i32, i32
  }
  func.func @transform_7(%arg0: i32) -> (i32, i32) {
    %c0_i32 = arith.constant 0 : i32
    %c0_i32_0 = arith.constant 0 : i32
    return %arg0, %c0_i32 : i32, i32
  }
}

module attributes {stable_mosaic.version = 11 : i64} {
  func.func @_wmsa_kernel(%arg0: i32, %arg1: memref<64x32xf32, #tpu.memory_space<vmem>>, %arg2: memref<1x32xf32, #tpu.memory_space<vmem>>, %arg3: memref<1x32xf32, #tpu.memory_space<vmem>>, %arg4: memref<3x32x32xbf16, #tpu.memory_space<vmem>>, %arg5: memref<3x1x32xf32, #tpu.memory_space<vmem>>, %arg6: memref<32x32xbf16, #tpu.memory_space<vmem>>, %arg7: memref<1x32xf32, #tpu.memory_space<vmem>>, %arg8: memref<4x4x16x16xf32, #tpu.memory_space<vmem>>, %arg9: memref<64x32xf32, #tpu.memory_space<vmem>>) attributes {dimension_semantics = [#tpu.dimension_semantics<parallel>], iteration_bounds = array<i64: 2>, scalar_prefetch = 0 : i64, scratch_operands = 0 : i64, tpu.core_type = #tpu.core_type<tc>, window_params = [{transform_indices = @transform_0, window_bounds = array<i64: 64, 32>}, {pipeline_mode = #tpu.pipeline_mode<synchronous>, transform_indices = @transform_1, window_bounds = array<i64: 1, 32>}, {pipeline_mode = #tpu.pipeline_mode<synchronous>, transform_indices = @transform_2, window_bounds = array<i64: 1, 32>}, {pipeline_mode = #tpu.pipeline_mode<synchronous>, transform_indices = @transform_3, window_bounds = array<i64: 3, 32, 32>}, {pipeline_mode = #tpu.pipeline_mode<synchronous>, transform_indices = @transform_4, window_bounds = array<i64: 3, 1, 32>}, {pipeline_mode = #tpu.pipeline_mode<synchronous>, transform_indices = @transform_5, window_bounds = array<i64: 32, 32>}, {pipeline_mode = #tpu.pipeline_mode<synchronous>, transform_indices = @transform_6, window_bounds = array<i64: 1, 32>}, {pipeline_mode = #tpu.pipeline_mode<synchronous>, transform_indices = @transform_7, window_bounds = array<i64: 4, 4, 16, 16>}, {transform_indices = @transform_8, window_bounds = array<i64: 64, 32>}]} {
    %c0 = arith.constant 0 : index
    %c0_0 = arith.constant 0 : index
    %0 = vector.load %arg1[%c0, %c0_0] : memref<64x32xf32, #tpu.memory_space<vmem>>, vector<64x32xf32>
    %cst = arith.constant dense<0.000000e+00> : vector<64xf32>
    %1 = vector.multi_reduction <add>, %0, %cst [1] : vector<64x32xf32> to vector<64xf32>
    %2 = vector.shape_cast %1 : vector<64xf32> to vector<64x1xf32>
    %cst_1 = arith.constant 3.200000e+01 : f32
    %3 = vector.broadcast %cst_1 : f32 to vector<64x1xf32>
    %4 = arith.divf %2, %3 : vector<64x1xf32>
    %5 = vector.broadcast %4 : vector<64x1xf32> to vector<64x32xf32>
    %6 = arith.subf %0, %5 : vector<64x32xf32>
    %7 = arith.mulf %6, %6 : vector<64x32xf32>
    %cst_2 = arith.constant dense<0.000000e+00> : vector<64xf32>
    %8 = vector.multi_reduction <add>, %7, %cst_2 [1] : vector<64x32xf32> to vector<64xf32>
    %9 = vector.shape_cast %8 : vector<64xf32> to vector<64x1xf32>
    %cst_3 = arith.constant 3.200000e+01 : f32
    %10 = vector.broadcast %cst_3 : f32 to vector<64x1xf32>
    %11 = arith.divf %9, %10 : vector<64x1xf32>
    %cst_4 = arith.constant 9.99999974E-6 : f32
    %12 = vector.broadcast %cst_4 : f32 to vector<64x1xf32>
    %13 = arith.addf %11, %12 : vector<64x1xf32>
    %14 = math.rsqrt %13 : vector<64x1xf32>
    %15 = vector.broadcast %14 : vector<64x1xf32> to vector<64x32xf32>
    %16 = arith.mulf %6, %15 : vector<64x32xf32>
    %c0_5 = arith.constant 0 : index
    %c0_6 = arith.constant 0 : index
    %17 = vector.load %arg2[%c0_5, %c0_6] : memref<1x32xf32, #tpu.memory_space<vmem>>, vector<1x32xf32>
    %18 = vector.broadcast %17 : vector<1x32xf32> to vector<64x32xf32>
    %19 = arith.mulf %16, %18 : vector<64x32xf32>
    %c0_7 = arith.constant 0 : index
    %c0_8 = arith.constant 0 : index
    %20 = vector.load %arg3[%c0_7, %c0_8] : memref<1x32xf32, #tpu.memory_space<vmem>>, vector<1x32xf32>
    %21 = vector.broadcast %20 : vector<1x32xf32> to vector<64x32xf32>
    %22 = arith.addf %19, %21 : vector<64x32xf32>
    %23 = arith.truncf %22 : vector<64x32xf32> to vector<64x32xbf16>
    %c0_9 = arith.constant 0 : index
    %c0_10 = arith.constant 0 : index
    %c0_11 = arith.constant 0 : index
    %24 = vector.load %arg4[%c0_9, %c0_10, %c0_11] : memref<3x32x32xbf16, #tpu.memory_space<vmem>>, vector<1x32x32xbf16>
    %25 = vector.shape_cast %24 : vector<1x32x32xbf16> to vector<32x32xbf16>
    %cst_12 = arith.constant dense<0.000000e+00> : vector<64x32xf32>
    %26 = tpu.matmul %23, %25, %cst_12 {dimension_numbers = #tpu.dot_dimension_numbers<[1], [0], [0], [1], [0, 0, 1, 1], [], []>} : vector<64x32xbf16>, vector<32x32xbf16>, vector<64x32xf32> -> vector<64x32xf32>
    %c0_13 = arith.constant 0 : index
    %c0_14 = arith.constant 0 : index
    %c0_15 = arith.constant 0 : index
    %27 = vector.load %arg5[%c0_13, %c0_14, %c0_15] : memref<3x1x32xf32, #tpu.memory_space<vmem>>, vector<1x1x32xf32>
    %28 = vector.shape_cast %27 : vector<1x1x32xf32> to vector<1x32xf32>
    %29 = vector.broadcast %28 : vector<1x32xf32> to vector<64x32xf32>
    %30 = arith.addf %26, %29 : vector<64x32xf32>
    %31 = vector.shape_cast %30 : vector<64x32xf32> to vector<4x16x32xf32>
    %c1 = arith.constant 1 : index
    %c0_16 = arith.constant 0 : index
    %c0_17 = arith.constant 0 : index
    %32 = vector.load %arg4[%c1, %c0_16, %c0_17] : memref<3x32x32xbf16, #tpu.memory_space<vmem>>, vector<1x32x32xbf16>
    %33 = vector.shape_cast %32 : vector<1x32x32xbf16> to vector<32x32xbf16>
    %cst_18 = arith.constant dense<0.000000e+00> : vector<64x32xf32>
    %34 = tpu.matmul %23, %33, %cst_18 {dimension_numbers = #tpu.dot_dimension_numbers<[1], [0], [0], [1], [0, 0, 1, 1], [], []>} : vector<64x32xbf16>, vector<32x32xbf16>, vector<64x32xf32> -> vector<64x32xf32>
    %c1_19 = arith.constant 1 : index
    %c0_20 = arith.constant 0 : index
    %c0_21 = arith.constant 0 : index
    %35 = vector.load %arg5[%c1_19, %c0_20, %c0_21] : memref<3x1x32xf32, #tpu.memory_space<vmem>>, vector<1x1x32xf32>
    %36 = vector.shape_cast %35 : vector<1x1x32xf32> to vector<1x32xf32>
    %37 = vector.broadcast %36 : vector<1x32xf32> to vector<64x32xf32>
    %38 = arith.addf %34, %37 : vector<64x32xf32>
    %39 = vector.shape_cast %38 : vector<64x32xf32> to vector<4x16x32xf32>
    %c2 = arith.constant 2 : index
    %c0_22 = arith.constant 0 : index
    %c0_23 = arith.constant 0 : index
    %40 = vector.load %arg4[%c2, %c0_22, %c0_23] : memref<3x32x32xbf16, #tpu.memory_space<vmem>>, vector<1x32x32xbf16>
    %41 = vector.shape_cast %40 : vector<1x32x32xbf16> to vector<32x32xbf16>
    %cst_24 = arith.constant dense<0.000000e+00> : vector<64x32xf32>
    %42 = tpu.matmul %23, %41, %cst_24 {dimension_numbers = #tpu.dot_dimension_numbers<[1], [0], [0], [1], [0, 0, 1, 1], [], []>} : vector<64x32xbf16>, vector<32x32xbf16>, vector<64x32xf32> -> vector<64x32xf32>
    %c2_25 = arith.constant 2 : index
    %c0_26 = arith.constant 0 : index
    %c0_27 = arith.constant 0 : index
    %43 = vector.load %arg5[%c2_25, %c0_26, %c0_27] : memref<3x1x32xf32, #tpu.memory_space<vmem>>, vector<1x1x32xf32>
    %44 = vector.shape_cast %43 : vector<1x1x32xf32> to vector<1x32xf32>
    %45 = vector.broadcast %44 : vector<1x32xf32> to vector<64x32xf32>
    %46 = arith.addf %42, %45 : vector<64x32xf32>
    %47 = vector.shape_cast %46 : vector<64x32xf32> to vector<4x16x32xf32>
    %48 = vector.extract_strided_slice %31 {offsets = [0, 0, 0], sizes = [4, 16, 8], strides = [1, 1, 1]} : vector<4x16x32xf32> to vector<4x16x8xf32>
    %49 = arith.truncf %48 : vector<4x16x8xf32> to vector<4x16x8xbf16>
    %50 = vector.extract_strided_slice %39 {offsets = [0, 0, 0], sizes = [4, 16, 8], strides = [1, 1, 1]} : vector<4x16x32xf32> to vector<4x16x8xf32>
    %51 = arith.truncf %50 : vector<4x16x8xf32> to vector<4x16x8xbf16>
    %52 = vector.extract_strided_slice %47 {offsets = [0, 0, 0], sizes = [4, 16, 8], strides = [1, 1, 1]} : vector<4x16x32xf32> to vector<4x16x8xf32>
    %53 = arith.truncf %52 : vector<4x16x8xf32> to vector<4x16x8xbf16>
    "tpu.trace_start"() <{level = 10 : i32, message = "bqd,bkd->bqk"}> : () -> ()
    %cst_28 = arith.constant dense<0.000000e+00> : vector<4x16x16xf32>
    %54 = tpu.matmul %49, %51, %cst_28 {dimension_numbers = #tpu.dot_dimension_numbers<[2], [2], [1], [1], [0, 0, 0, 1, 1, 1], [0], [0]>} : vector<4x16x8xbf16>, vector<4x16x8xbf16>, vector<4x16x16xf32> -> vector<4x16x16xf32>
    "tpu.trace_stop"() : () -> ()
    %c0_29 = arith.constant 0 : index
    %c0_30 = arith.constant 0 : index
    %c0_31 = arith.constant 0 : index
    %c0_32 = arith.constant 0 : index
    %55 = vector.load %arg8[%c0_29, %c0_30, %c0_31, %c0_32] : memref<4x4x16x16xf32, #tpu.memory_space<vmem>>, vector<4x1x16x16xf32>
    %56 = vector.shape_cast %55 : vector<4x1x16x16xf32> to vector<4x16x16xf32>
    %57 = vector.shape_cast %54 : vector<4x16x16xf32> to vector<1x4x16x16xf32>
    %58 = vector.shape_cast %56 : vector<4x16x16xf32> to vector<1x4x16x16xf32>
    %59 = arith.addf %57, %58 : vector<1x4x16x16xf32>
    %60 = vector.shape_cast %59 : vector<1x4x16x16xf32> to vector<4x16x16xf32>
    %cst_33 = arith.constant dense<0xFF800000> : vector<4x16xf32>
    %61 = vector.multi_reduction <maximumf>, %60, %cst_33 [2] : vector<4x16x16xf32> to vector<4x16xf32>
    %62 = vector.shape_cast %61 : vector<4x16xf32> to vector<4x16x1xf32>
    %63 = vector.broadcast %62 : vector<4x16x1xf32> to vector<4x16x16xf32>
    %64 = arith.subf %60, %63 : vector<4x16x16xf32>
    %65 = math.exp %64 : vector<4x16x16xf32>
    %cst_34 = arith.constant dense<0.000000e+00> : vector<4x16xf32>
    %66 = vector.multi_reduction <add>, %65, %cst_34 [2] : vector<4x16x16xf32> to vector<4x16xf32>
    %67 = vector.shape_cast %66 : vector<4x16xf32> to vector<4x16x1xf32>
    %68 = arith.truncf %65 : vector<4x16x16xf32> to vector<4x16x16xbf16>
    "tpu.trace_start"() <{level = 10 : i32, message = "bqk,bkd->bqd"}> : () -> ()
    %cst_35 = arith.constant dense<0.000000e+00> : vector<4x16x8xf32>
    %69 = tpu.matmul %68, %53, %cst_35 {dimension_numbers = #tpu.dot_dimension_numbers<[2], [1], [1], [2], [0, 0, 0, 1, 1, 2], [0], [0]>} : vector<4x16x16xbf16>, vector<4x16x8xbf16>, vector<4x16x8xf32> -> vector<4x16x8xf32>
    "tpu.trace_stop"() : () -> ()
    %70 = tpu.reciprocal %67 {approx = true} : vector<4x16x1xf32> -> vector<4x16x1xf32>
    %71 = vector.broadcast %70 : vector<4x16x1xf32> to vector<4x16x8xf32>
    %72 = arith.mulf %69, %71 : vector<4x16x8xf32>
    %73 = vector.extract_strided_slice %31 {offsets = [0, 0, 8], sizes = [4, 16, 8], strides = [1, 1, 1]} : vector<4x16x32xf32> to vector<4x16x8xf32>
    %74 = arith.truncf %73 : vector<4x16x8xf32> to vector<4x16x8xbf16>
    %75 = vector.extract_strided_slice %39 {offsets = [0, 0, 8], sizes = [4, 16, 8], strides = [1, 1, 1]} : vector<4x16x32xf32> to vector<4x16x8xf32>
    %76 = arith.truncf %75 : vector<4x16x8xf32> to vector<4x16x8xbf16>
    %77 = vector.extract_strided_slice %47 {offsets = [0, 0, 8], sizes = [4, 16, 8], strides = [1, 1, 1]} : vector<4x16x32xf32> to vector<4x16x8xf32>
    %78 = arith.truncf %77 : vector<4x16x8xf32> to vector<4x16x8xbf16>
    "tpu.trace_start"() <{level = 10 : i32, message = "bqd,bkd->bqk"}> : () -> ()
    %cst_36 = arith.constant dense<0.000000e+00> : vector<4x16x16xf32>
    %79 = tpu.matmul %74, %76, %cst_36 {dimension_numbers = #tpu.dot_dimension_numbers<[2], [2], [1], [1], [0, 0, 0, 1, 1, 1], [0], [0]>} : vector<4x16x8xbf16>, vector<4x16x8xbf16>, vector<4x16x16xf32> -> vector<4x16x16xf32>
    "tpu.trace_stop"() : () -> ()
    %c0_37 = arith.constant 0 : index
    %c1_38 = arith.constant 1 : index
    %c0_39 = arith.constant 0 : index
    %c0_40 = arith.constant 0 : index
    %80 = vector.load %arg8[%c0_37, %c1_38, %c0_39, %c0_40] : memref<4x4x16x16xf32, #tpu.memory_space<vmem>>, vector<4x1x16x16xf32>
    %81 = vector.shape_cast %80 : vector<4x1x16x16xf32> to vector<4x16x16xf32>
    %82 = vector.shape_cast %79 : vector<4x16x16xf32> to vector<1x4x16x16xf32>
    %83 = vector.shape_cast %81 : vector<4x16x16xf32> to vector<1x4x16x16xf32>
    %84 = arith.addf %82, %83 : vector<1x4x16x16xf32>
    %85 = vector.shape_cast %84 : vector<1x4x16x16xf32> to vector<4x16x16xf32>
    %cst_41 = arith.constant dense<0xFF800000> : vector<4x16xf32>
    %86 = vector.multi_reduction <maximumf>, %85, %cst_41 [2] : vector<4x16x16xf32> to vector<4x16xf32>
    %87 = vector.shape_cast %86 : vector<4x16xf32> to vector<4x16x1xf32>
    %88 = vector.broadcast %87 : vector<4x16x1xf32> to vector<4x16x16xf32>
    %89 = arith.subf %85, %88 : vector<4x16x16xf32>
    %90 = math.exp %89 : vector<4x16x16xf32>
    %cst_42 = arith.constant dense<0.000000e+00> : vector<4x16xf32>
    %91 = vector.multi_reduction <add>, %90, %cst_42 [2] : vector<4x16x16xf32> to vector<4x16xf32>
    %92 = vector.shape_cast %91 : vector<4x16xf32> to vector<4x16x1xf32>
    %93 = arith.truncf %90 : vector<4x16x16xf32> to vector<4x16x16xbf16>
    "tpu.trace_start"() <{level = 10 : i32, message = "bqk,bkd->bqd"}> : () -> ()
    %cst_43 = arith.constant dense<0.000000e+00> : vector<4x16x8xf32>
    %94 = tpu.matmul %93, %78, %cst_43 {dimension_numbers = #tpu.dot_dimension_numbers<[2], [1], [1], [2], [0, 0, 0, 1, 1, 2], [0], [0]>} : vector<4x16x16xbf16>, vector<4x16x8xbf16>, vector<4x16x8xf32> -> vector<4x16x8xf32>
    "tpu.trace_stop"() : () -> ()
    %95 = tpu.reciprocal %92 {approx = true} : vector<4x16x1xf32> -> vector<4x16x1xf32>
    %96 = vector.broadcast %95 : vector<4x16x1xf32> to vector<4x16x8xf32>
    %97 = arith.mulf %94, %96 : vector<4x16x8xf32>
    %98 = vector.extract_strided_slice %31 {offsets = [0, 0, 16], sizes = [4, 16, 8], strides = [1, 1, 1]} : vector<4x16x32xf32> to vector<4x16x8xf32>
    %99 = arith.truncf %98 : vector<4x16x8xf32> to vector<4x16x8xbf16>
    %100 = vector.extract_strided_slice %39 {offsets = [0, 0, 16], sizes = [4, 16, 8], strides = [1, 1, 1]} : vector<4x16x32xf32> to vector<4x16x8xf32>
    %101 = arith.truncf %100 : vector<4x16x8xf32> to vector<4x16x8xbf16>
    %102 = vector.extract_strided_slice %47 {offsets = [0, 0, 16], sizes = [4, 16, 8], strides = [1, 1, 1]} : vector<4x16x32xf32> to vector<4x16x8xf32>
    %103 = arith.truncf %102 : vector<4x16x8xf32> to vector<4x16x8xbf16>
    "tpu.trace_start"() <{level = 10 : i32, message = "bqd,bkd->bqk"}> : () -> ()
    %cst_44 = arith.constant dense<0.000000e+00> : vector<4x16x16xf32>
    %104 = tpu.matmul %99, %101, %cst_44 {dimension_numbers = #tpu.dot_dimension_numbers<[2], [2], [1], [1], [0, 0, 0, 1, 1, 1], [0], [0]>} : vector<4x16x8xbf16>, vector<4x16x8xbf16>, vector<4x16x16xf32> -> vector<4x16x16xf32>
    "tpu.trace_stop"() : () -> ()
    %c0_45 = arith.constant 0 : index
    %c2_46 = arith.constant 2 : index
    %c0_47 = arith.constant 0 : index
    %c0_48 = arith.constant 0 : index
    %105 = vector.load %arg8[%c0_45, %c2_46, %c0_47, %c0_48] : memref<4x4x16x16xf32, #tpu.memory_space<vmem>>, vector<4x1x16x16xf32>
    %106 = vector.shape_cast %105 : vector<4x1x16x16xf32> to vector<4x16x16xf32>
    %107 = vector.shape_cast %104 : vector<4x16x16xf32> to vector<1x4x16x16xf32>
    %108 = vector.shape_cast %106 : vector<4x16x16xf32> to vector<1x4x16x16xf32>
    %109 = arith.addf %107, %108 : vector<1x4x16x16xf32>
    %110 = vector.shape_cast %109 : vector<1x4x16x16xf32> to vector<4x16x16xf32>
    %cst_49 = arith.constant dense<0xFF800000> : vector<4x16xf32>
    %111 = vector.multi_reduction <maximumf>, %110, %cst_49 [2] : vector<4x16x16xf32> to vector<4x16xf32>
    %112 = vector.shape_cast %111 : vector<4x16xf32> to vector<4x16x1xf32>
    %113 = vector.broadcast %112 : vector<4x16x1xf32> to vector<4x16x16xf32>
    %114 = arith.subf %110, %113 : vector<4x16x16xf32>
    %115 = math.exp %114 : vector<4x16x16xf32>
    %cst_50 = arith.constant dense<0.000000e+00> : vector<4x16xf32>
    %116 = vector.multi_reduction <add>, %115, %cst_50 [2] : vector<4x16x16xf32> to vector<4x16xf32>
    %117 = vector.shape_cast %116 : vector<4x16xf32> to vector<4x16x1xf32>
    %118 = arith.truncf %115 : vector<4x16x16xf32> to vector<4x16x16xbf16>
    "tpu.trace_start"() <{level = 10 : i32, message = "bqk,bkd->bqd"}> : () -> ()
    %cst_51 = arith.constant dense<0.000000e+00> : vector<4x16x8xf32>
    %119 = tpu.matmul %118, %103, %cst_51 {dimension_numbers = #tpu.dot_dimension_numbers<[2], [1], [1], [2], [0, 0, 0, 1, 1, 2], [0], [0]>} : vector<4x16x16xbf16>, vector<4x16x8xbf16>, vector<4x16x8xf32> -> vector<4x16x8xf32>
    "tpu.trace_stop"() : () -> ()
    %120 = tpu.reciprocal %117 {approx = true} : vector<4x16x1xf32> -> vector<4x16x1xf32>
    %121 = vector.broadcast %120 : vector<4x16x1xf32> to vector<4x16x8xf32>
    %122 = arith.mulf %119, %121 : vector<4x16x8xf32>
    %123 = vector.extract_strided_slice %31 {offsets = [0, 0, 24], sizes = [4, 16, 8], strides = [1, 1, 1]} : vector<4x16x32xf32> to vector<4x16x8xf32>
    %124 = arith.truncf %123 : vector<4x16x8xf32> to vector<4x16x8xbf16>
    %125 = vector.extract_strided_slice %39 {offsets = [0, 0, 24], sizes = [4, 16, 8], strides = [1, 1, 1]} : vector<4x16x32xf32> to vector<4x16x8xf32>
    %126 = arith.truncf %125 : vector<4x16x8xf32> to vector<4x16x8xbf16>
    %127 = vector.extract_strided_slice %47 {offsets = [0, 0, 24], sizes = [4, 16, 8], strides = [1, 1, 1]} : vector<4x16x32xf32> to vector<4x16x8xf32>
    %128 = arith.truncf %127 : vector<4x16x8xf32> to vector<4x16x8xbf16>
    "tpu.trace_start"() <{level = 10 : i32, message = "bqd,bkd->bqk"}> : () -> ()
    %cst_52 = arith.constant dense<0.000000e+00> : vector<4x16x16xf32>
    %129 = tpu.matmul %124, %126, %cst_52 {dimension_numbers = #tpu.dot_dimension_numbers<[2], [2], [1], [1], [0, 0, 0, 1, 1, 1], [0], [0]>} : vector<4x16x8xbf16>, vector<4x16x8xbf16>, vector<4x16x16xf32> -> vector<4x16x16xf32>
    "tpu.trace_stop"() : () -> ()
    %c0_53 = arith.constant 0 : index
    %c3 = arith.constant 3 : index
    %c0_54 = arith.constant 0 : index
    %c0_55 = arith.constant 0 : index
    %130 = vector.load %arg8[%c0_53, %c3, %c0_54, %c0_55] : memref<4x4x16x16xf32, #tpu.memory_space<vmem>>, vector<4x1x16x16xf32>
    %131 = vector.shape_cast %130 : vector<4x1x16x16xf32> to vector<4x16x16xf32>
    %132 = vector.shape_cast %129 : vector<4x16x16xf32> to vector<1x4x16x16xf32>
    %133 = vector.shape_cast %131 : vector<4x16x16xf32> to vector<1x4x16x16xf32>
    %134 = arith.addf %132, %133 : vector<1x4x16x16xf32>
    %135 = vector.shape_cast %134 : vector<1x4x16x16xf32> to vector<4x16x16xf32>
    %cst_56 = arith.constant dense<0xFF800000> : vector<4x16xf32>
    %136 = vector.multi_reduction <maximumf>, %135, %cst_56 [2] : vector<4x16x16xf32> to vector<4x16xf32>
    %137 = vector.shape_cast %136 : vector<4x16xf32> to vector<4x16x1xf32>
    %138 = vector.broadcast %137 : vector<4x16x1xf32> to vector<4x16x16xf32>
    %139 = arith.subf %135, %138 : vector<4x16x16xf32>
    %140 = math.exp %139 : vector<4x16x16xf32>
    %cst_57 = arith.constant dense<0.000000e+00> : vector<4x16xf32>
    %141 = vector.multi_reduction <add>, %140, %cst_57 [2] : vector<4x16x16xf32> to vector<4x16xf32>
    %142 = vector.shape_cast %141 : vector<4x16xf32> to vector<4x16x1xf32>
    %143 = arith.truncf %140 : vector<4x16x16xf32> to vector<4x16x16xbf16>
    "tpu.trace_start"() <{level = 10 : i32, message = "bqk,bkd->bqd"}> : () -> ()
    %cst_58 = arith.constant dense<0.000000e+00> : vector<4x16x8xf32>
    %144 = tpu.matmul %143, %128, %cst_58 {dimension_numbers = #tpu.dot_dimension_numbers<[2], [1], [1], [2], [0, 0, 0, 1, 1, 2], [0], [0]>} : vector<4x16x16xbf16>, vector<4x16x8xbf16>, vector<4x16x8xf32> -> vector<4x16x8xf32>
    "tpu.trace_stop"() : () -> ()
    %145 = tpu.reciprocal %142 {approx = true} : vector<4x16x1xf32> -> vector<4x16x1xf32>
    %146 = vector.broadcast %145 : vector<4x16x1xf32> to vector<4x16x8xf32>
    %147 = arith.mulf %144, %146 : vector<4x16x8xf32>
    %148 = tpu.concatenate %72, %97, %122, %147 in 2 : vector<4x16x8xf32>, vector<4x16x8xf32>, vector<4x16x8xf32>, vector<4x16x8xf32> -> vector<4x16x32xf32>
    %149 = vector.shape_cast %148 : vector<4x16x32xf32> to vector<64x32xf32>
    %150 = arith.truncf %149 : vector<64x32xf32> to vector<64x32xbf16>
    %c0_59 = arith.constant 0 : index
    %c0_60 = arith.constant 0 : index
    %151 = vector.load %arg6[%c0_59, %c0_60] : memref<32x32xbf16, #tpu.memory_space<vmem>>, vector<32x32xbf16>
    %cst_61 = arith.constant dense<0.000000e+00> : vector<64x32xf32>
    %152 = tpu.matmul %150, %151, %cst_61 {dimension_numbers = #tpu.dot_dimension_numbers<[1], [0], [0], [1], [0, 0, 1, 1], [], []>} : vector<64x32xbf16>, vector<32x32xbf16>, vector<64x32xf32> -> vector<64x32xf32>
    %153 = arith.addf %0, %152 : vector<64x32xf32>
    %c0_62 = arith.constant 0 : index
    %c0_63 = arith.constant 0 : index
    %154 = vector.load %arg7[%c0_62, %c0_63] : memref<1x32xf32, #tpu.memory_space<vmem>>, vector<1x32xf32>
    %155 = vector.broadcast %154 : vector<1x32xf32> to vector<64x32xf32>
    %156 = arith.addf %153, %155 : vector<64x32xf32>
    %c0_64 = arith.constant 0 : index
    %c0_65 = arith.constant 0 : index
    %157 = vector.load %arg9[%c0_64, %c0_65] : memref<64x32xf32, #tpu.memory_space<vmem>>, vector<64x32xf32>
    tpu.vector_store %arg9[%c0_64, %c0_65], %156 {strides = array<i32>} : memref<64x32xf32, #tpu.memory_space<vmem>>, vector<64x32xf32>,
    return
  }
  func.func @transform_0(%arg0: i32) -> (i32, i32) {
    %c0_i32 = arith.constant 0 : i32
    %c0_i32_0 = arith.constant 0 : i32
    return %arg0, %c0_i32 : i32, i32
  }
  func.func @transform_1(%arg0: i32) -> (i32, i32) {
    %c0_i32 = arith.constant 0 : i32
    %c0_i32_0 = arith.constant 0 : i32
    %c0_i32_1 = arith.constant 0 : i32
    return %c0_i32, %c0_i32_0 : i32, i32
  }
  func.func @transform_2(%arg0: i32) -> (i32, i32) {
    %c0_i32 = arith.constant 0 : i32
    %c0_i32_0 = arith.constant 0 : i32
    %c0_i32_1 = arith.constant 0 : i32
    return %c0_i32, %c0_i32_0 : i32, i32
  }
  func.func @transform_3(%arg0: i32) -> (i32, i32, i32) {
    %c0_i32 = arith.constant 0 : i32
    %c0_i32_0 = arith.constant 0 : i32
    %c0_i32_1 = arith.constant 0 : i32
    %c0_i32_2 = arith.constant 0 : i32
    return %c0_i32, %c0_i32_0, %c0_i32_1 : i32, i32, i32
  }
  func.func @transform_4(%arg0: i32) -> (i32, i32, i32) {
    %c0_i32 = arith.constant 0 : i32
    %c0_i32_0 = arith.constant 0 : i32
    %c0_i32_1 = arith.constant 0 : i32
    %c0_i32_2 = arith.constant 0 : i32
    return %c0_i32, %c0_i32_0, %c0_i32_1 : i32, i32, i32
  }
  func.func @transform_5(%arg0: i32) -> (i32, i32) {
    %c0_i32 = arith.constant 0 : i32
    %c0_i32_0 = arith.constant 0 : i32
    %c0_i32_1 = arith.constant 0 : i32
    return %c0_i32, %c0_i32_0 : i32, i32
  }
  func.func @transform_6(%arg0: i32) -> (i32, i32) {
    %c0_i32 = arith.constant 0 : i32
    %c0_i32_0 = arith.constant 0 : i32
    %c0_i32_1 = arith.constant 0 : i32
    return %c0_i32, %c0_i32_0 : i32, i32
  }
  func.func @transform_7(%arg0: i32) -> (i32, i32, i32, i32) {
    %c0_i32 = arith.constant 0 : i32
    %c0_i32_0 = arith.constant 0 : i32
    %c0_i32_1 = arith.constant 0 : i32
    %c0_i32_2 = arith.constant 0 : i32
    %c0_i32_3 = arith.constant 0 : i32
    return %c0_i32, %c0_i32_0, %c0_i32_1, %c0_i32_2 : i32, i32, i32, i32
  }
  func.func @transform_8(%arg0: i32) -> (i32, i32) {
    %c0_i32 = arith.constant 0 : i32
    %c0_i32_0 = arith.constant 0 : i32
    return %arg0, %c0_i32 : i32, i32
  }
}

</mosaic_0001>

<llo_original>
// kernel: forward.5
$region0: #{forward.5}
  #allocation0 [shape = 'u32[]', space=smem, size = 0x4, offset = 0x4, fixed_abs, tag = 'smem constant byte address 0x4 - core index']
  #allocation1 [shape = 'u32[144,128]{1,0:T(1,128)}', space=vmem, size = 0x12000, scoped, tag = 'internal scratch']
  %s0 = inlined_call_operand.vmem [shape: f32[128,32], index: 0, kind: input, shape index: {}]
  %s1 = inlined_call_operand.vmem [shape: f32[1,32], index: 1, kind: input, shape index: {}]
  %s2 = inlined_call_operand.vmem [shape: f32[1,32], index: 2, kind: input, shape index: {}]
  %s3 = inlined_call_operand.vmem [shape: bf16[32,128], index: 3, kind: input, shape index: {}]
  %s4 = inlined_call_operand.vmem [shape: f32[1,128], index: 4, kind: input, shape index: {}]
  %s5 = inlined_call_operand.vmem [shape: bf16[128,32], index: 5, kind: input, shape index: {}]
  %s6 = inlined_call_operand.vmem [shape: f32[1,32], index: 6, kind: input, shape index: {}]
  %s7 = inlined_call_operand.vmem [shape: f32[128,32], index: 7, kind: output, shape index: {}]
  %s8 = sld [smem:[#allocation0]]
  $region61: #{forward.5} parent=0
    _
  %s10 = ssub.s32 1, %s8
  %s11 = scalar_select 0, %s10, %s8
  loop: start=0, step=1, limit=4
  $region2: #{forward.5} parent=0 // loop_pre_header
    _
  $region3: #{forward.5} parent=0 // loop_header
    %s13 = sphi 0, %s17
    %p14 = scmp.ge.s32.totalorder %s13, 4
    %s23 = sphi 0, %s25
    %s26 = sphi 0, %s23
    %s27 = sphi 0, %s26
    %s43 = sphi 0, %s27
    %s47 = sphi 0, %s47
    %s49 = sphi 0, %s47
    %s50 = sphi 0, %s49
    %s64 = sphi 0, %s50
    %s68 = sphi 0, %s68
    %s70 = sphi 0, %s68
    %s71 = sphi 0, %s70
    %s85 = sphi 0, %s71
    %s89 = sphi 0, %s89
    %s91 = sphi 0, %s89
    %s92 = sphi 0, %s91
    %s106 = sphi 0, %s92
    %s110 = sphi 0, %s110
    %s112 = sphi 0, %s110
    %s113 = sphi 0, %s112
    %s127 = sphi 0, %s113
    %s131 = sphi 0, %s131
    %s133 = sphi 0, %s131
    %s134 = sphi 0, %s133
    %s148 = sphi 0, %s134
    %s152 = sphi 0, %s152
    %s154 = sphi 0, %s152
    %s155 = sphi 0, %s154
    %s169 = sphi 0, %s155
    %s175 = sphi 0, %s177
    %s178 = sphi 0, %s175
    %s179 = sphi 0, %s178
    %s195 = sphi 0, %s179
  $region4: #{forward.5} parent=0 // loop_header_branch
    %16 = sbr.rel (%p14) target = $region8
  $region5: #{forward.5} parent=0 // loop_body
    %s18 = ssub.s32 %s13, 1
    %s19 = ssub.s32 %s13, 2
    %s20 = sadd.s32 %s13, 1
    %s21 = ssub.s32 %s13, %s20
    %p22 = scmp.eq.s32.totalorder %s21, 0
    %s24 = sadd.s32 %s23, 1
    %s25 = scalar_select %p22, %s23, %s24
    %p28 = pneg %p22
    %p29 = scmp.eq.s32.totalorder %s13, 1
    %p30 = por %p28, %p29
    %p31 = scmp.ne.s32.totalorder %s23, %s26
    %p32 = scmp.eq.s32.totalorder %s13, 0
    %p33 = por %p31, %p32
    %p34 = scmp.ne.s32.totalorder %s23, %s26
    %p35 = scmp.eq.s32.totalorder %s18, 1
    %p36 = por %p34, %p35
    %p37 = scmp.ne.s32.totalorder %s26, %s27
    %p38 = scmp.eq.s32.totalorder %s18, 0
    %p39 = por %p37, %p38
    %p40 = scmp.ne.s32.totalorder %s26, %s27
    %p41 = scmp.eq.s32.totalorder %s19, 1
    %p42 = por %p40, %p41
    %p44 = scmp.ne.s32.totalorder %s27, %s43
    %p45 = scmp.eq.s32.totalorder %s19, 0
    %p46 = por %p44, %p45
    %s48 = sadd.s32 %s47, 1
    %p51 = scmp.eq.s32.totalorder %s13, 1
    %p52 = scmp.ne.s32.totalorder %s47, %s49
    %p53 = scmp.eq.s32.totalorder %s13, 0
    %p54 = por %p52, %p53
    %p55 = scmp.ne.s32.totalorder %s47, %s49
    %p56 = scmp.eq.s32.totalorder %s18, 1
    %p57 = por %p55, %p56
    %p58 = scmp.ne.s32.totalorder %s49, %s50
    %p59 = scmp.eq.s32.totalorder %s18, 0
    %p60 = por %p58, %p59
    %p61 = scmp.ne.s32.totalorder %s49, %s50
    %p62 = scmp.eq.s32.totalorder %s19, 1
    %p63 = por %p61, %p62
    %p65 = scmp.ne.s32.totalorder %s50, %s64
    %p66 = scmp.eq.s32.totalorder %s19, 0
    %p67 = por %p65, %p66
    %s69 = sadd.s32 %s68, 1
    %p72 = scmp.eq.s32.totalorder %s13, 1
    %p73 = scmp.ne.s32.totalorder %s68, %s70
    %p74 = scmp.eq.s32.totalorder %s13, 0
    %p75 = por %p73, %p74
    %p76 = scmp.ne.s32.totalorder %s68, %s70
    %p77 = scmp.eq.s32.totalorder %s18, 1
    %p78 = por %p76, %p77
    %p79 = scmp.ne.s32.totalorder %s70, %s71
    %p80 = scmp.eq.s32.totalorder %s18, 0
    %p81 = por %p79, %p80
    %p82 = scmp.ne.s32.totalorder %s70, %s71
    %p83 = scmp.eq.s32.totalorder %s19, 1
    %p84 = por %p82, %p83
    %p86 = scmp.ne.s32.totalorder %s71, %s85
    %p87 = scmp.eq.s32.totalorder %s19, 0
    %p88 = por %p86, %p87
    %s90 = sadd.s32 %s89, 1
    %p93 = scmp.eq.s32.totalorder %s13, 1
    %p94 = scmp.ne.s32.totalorder %s89, %s91
    %p95 = scmp.eq.s32.totalorder %s13, 0
    %p96 = por %p94, %p95
    %p97 = scmp.ne.s32.totalorder %s89, %s91
    %p98 = scmp.eq.s32.totalorder %s18, 1
    %p99 = por %p97, %p98
    %p100 = scmp.ne.s32.totalorder %s91, %s92
    %p101 = scmp.eq.s32.totalorder %s18, 0
    %p102 = por %p100, %p101
    %p103 = scmp.ne.s32.totalorder %s91, %s92
    %p104 = scmp.eq.s32.totalorder %s19, 1
    %p105 = por %p103, %p104
    %p107 = scmp.ne.s32.totalorder %s92, %s106
    %p108 = scmp.eq.s32.totalorder %s19, 0
    %p109 = por %p107, %p108
    %s111 = sadd.s32 %s110, 1
    %p114 = scmp.eq.s32.totalorder %s13, 1
    %p115 = scmp.ne.s32.totalorder %s110, %s112
    %p116 = scmp.eq.s32.totalorder %s13, 0
    %p117 = por %p115, %p116
    %p118 = scmp.ne.s32.totalorder %s110, %s112
    %p119 = scmp.eq.s32.totalorder %s18, 1
    %p120 = por %p118, %p119
    %p121 = scmp.ne.s32.totalorder %s112, %s113
    %p122 = scmp.eq.s32.totalorder %s18, 0
    %p123 = por %p121, %p122
    %p124 = scmp.ne.s32.totalorder %s112, %s113
    %p125 = scmp.eq.s32.totalorder %s19, 1
    %p126 = por %p124, %p125
    %p128 = scmp.ne.s32.totalorder %s113, %s127
    %p129 = scmp.eq.s32.totalorder %s19, 0
    %p130 = por %p128, %p129
    %s132 = sadd.s32 %s131, 1
    %p135 = scmp.eq.s32.totalorder %s13, 1
    %p136 = scmp.ne.s32.totalorder %s131, %s133
    %p137 = scmp.eq.s32.totalorder %s13, 0
    %p138 = por %p136, %p137
    %p139 = scmp.ne.s32.totalorder %s131, %s133
    %p140 = scmp.eq.s32.totalorder %s18, 1
    %p141 = por %p139, %p140
    %p142 = scmp.ne.s32.totalorder %s133, %s134
    %p143 = scmp.eq.s32.totalorder %s18, 0
    %p144 = por %p142, %p143
    %p145 = scmp.ne.s32.totalorder %s133, %s134
    %p146 = scmp.eq.s32.totalorder %s19, 1
    %p147 = por %p145, %p146
    %p149 = scmp.ne.s32.totalorder %s134, %s148
    %p150 = scmp.eq.s32.totalorder %s19, 0
    %p151 = por %p149, %p150
    %s153 = sadd.s32 %s152, 1
    %p156 = scmp.eq.s32.totalorder %s13, 1
    %p157 = scmp.ne.s32.totalorder %s152, %s154
    %p158 = scmp.eq.s32.totalorder %s13, 0
    %p159 = por %p157, %p158
    %p160 = scmp.ne.s32.totalorder %s152, %s154
    %p161 = scmp.eq.s32.totalorder %s18, 1
    %p162 = por %p160, %p161
    %p163 = scmp.ne.s32.totalorder %s154, %s155
    %p164 = scmp.eq.s32.totalorder %s18, 0
    %p165 = por %p163, %p164
    %p166 = scmp.ne.s32.totalorder %s154, %s155
    %p167 = scmp.eq.s32.totalorder %s19, 1
    %p168 = por %p166, %p167
    %p170 = scmp.ne.s32.totalorder %s155, %s169
    %p171 = scmp.eq.s32.totalorder %s19, 0
    %p172 = por %p170, %p171
    %s173 = ssub.s32 %s13, %s20
    %p174 = scmp.eq.s32.totalorder %s173, 0
    %s176 = sadd.s32 %s175, 1
    %s177 = scalar_select %p174, %s175, %s176
    %p180 = pneg %p174
    %p181 = scmp.eq.s32.totalorder %s13, 1
    %p182 = por %p180, %p181
    %p183 = scmp.ne.s32.totalorder %s175, %s178
    %p184 = scmp.eq.s32.totalorder %s13, 0
    %p185 = por %p183, %p184
    %p186 = scmp.ne.s32.totalorder %s175, %s178
    %p187 = scmp.eq.s32.totalorder %s18, 1
    %p188 = por %p186, %p187
    %p189 = scmp.ne.s32.totalorder %s178, %s179
    %p190 = scmp.eq.s32.totalorder %s18, 0
    %p191 = por %p189, %p190
    %p192 = scmp.ne.s32.totalorder %s178, %s179
    %p193 = scmp.eq.s32.totalorder %s19, 1
    %p194 = por %p192, %p193
    %p196 = scmp.ne.s32.totalorder %s179, %s195
    %p197 = scmp.eq.s32.totalorder %s19, 0
    %p198 = por %p196, %p197
    %p199 = scmp.le.s32.totalorder 1, %s13
    %p200 = scmp.lt.s32.totalorder %s13, 3
    %p201 = pnand %p199, %p200
    %p202 = pneg %p201
    // Predicated region
    $region9: #{forward.5} parent=5 // pred_check
      _
    $region10: #{forward.5} parent=5 // pred_check_branch
      %204 = sbr.rel (%p201) target = $region12
    $region11: #{forward.5} parent=5 // pred_region
      %s205 = ssub.s32 %s13, 1
      // Predicated region
      $region13: #{forward.5} parent=11 // pred_check
        %p206 = pneg %p60
      $region14: #{forward.5} parent=11 // pred_check_branch
        %208 = sbr.rel (%p206) target = $region16
      $region15: #{forward.5} parent=11 // pred_region
        _
      $region16: #{forward.5} parent=11 // pred_fallthru
        _
      // Predicated region
      $region17: #{forward.5} parent=11 // pred_check
        %p209 = pneg %p81
      $region18: #{forward.5} parent=11 // pred_check_branch
        %211 = sbr.rel (%p209) target = $region20
      $region19: #{forward.5} parent=11 // pred_region
        _
      $region20: #{forward.5} parent=11 // pred_fallthru
        _
      // Predicated region
      $region21: #{forward.5} parent=11 // pred_check
        %p212 = pneg %p102
      $region22: #{forward.5} parent=11 // pred_check_branch
        %214 = sbr.rel (%p212) target = $region24
      $region23: #{forward.5} parent=11 // pred_region
        _
      $region24: #{forward.5} parent=11 // pred_fallthru
        _
      // Predicated region
      $region25: #{forward.5} parent=11 // pred_check
        %p215 = pneg %p123
      $region26: #{forward.5} parent=11 // pred_check_branch
        %217 = sbr.rel (%p215) target = $region28
      $region27: #{forward.5} parent=11 // pred_region
        _
      $region28: #{forward.5} parent=11 // pred_fallthru
        _
      // Predicated region
      $region29: #{forward.5} parent=11 // pred_check
        %p218 = pneg %p144
      $region30: #{forward.5} parent=11 // pred_check_branch
        %220 = sbr.rel (%p218) target = $region32
      $region31: #{forward.5} parent=11 // pred_region
        _
      $region32: #{forward.5} parent=11 // pred_fallthru
        _
      // Predicated region
      $region33: #{forward.5} parent=11 // pred_check
        %p221 = pneg %p165
      $region34: #{forward.5} parent=11 // pred_check_branch
        %223 = sbr.rel (%p221) target = $region36
      $region35: #{forward.5} parent=11 // pred_region
        _
      $region36: #{forward.5} parent=11 // pred_fallthru
        _
    $region12: #{forward.5} parent=5 // pred_fallthru
      _
    %p224 = scmp.lt.s32.totalorder %s13, 2
    // Predicated region
    $region37: #{forward.5} parent=5 // pred_check
      %p225 = pneg %p224
    $region38: #{forward.5} parent=5 // pred_check_branch
      %227 = sbr.rel (%p225) target = $region40
    $region39: #{forward.5} parent=5 // pred_region
      // Predicated region
      $region41: #{forward.5} parent=39 // pred_check
        %p228 = pneg %p33
      $region42: #{forward.5} parent=39 // pred_check_branch
        %230 = sbr.rel (%p228) target = $region44
      $region43: #{forward.5} parent=39 // pred_region
        %s231 = smul.u32 8, %s13
        %p232 = scmp.lt.s32.totalorder %s231, 15
        %s233 = scalar_select %p232, %s231, 15
        %s234 = smul.addr %s233, 8
        %s235 = scalar_lea.vmem %s0, %s234
        %s236 = smul.u32 8, %s13
      $region44: #{forward.5} parent=39 // pred_fallthru
        _
    $region40: #{forward.5} parent=5 // pred_fallthru
      _
    %p237 = scmp.le.s32.totalorder 1, %s13
    %p238 = scmp.lt.s32.totalorder %s13, 3
    %p239 = pnand %p237, %p238
    %p240 = pneg %p239
    // Predicated region
    $region45: #{forward.5} parent=5 // pred_check
      _
    $region46: #{forward.5} parent=5 // pred_check_branch
      %242 = sbr.rel (%p239) target = $region48
    $region47: #{forward.5} parent=5 // pred_region
      %s243 = ssub.s32 %s13, 1
      %s244 = smul.u32 8, %s18
      %p245 = scmp.lt.s32.totalorder %s244, 15
      %s246 = scalar_select %p245, %s244, 15
      %s247 = smul.addr %s246, 8
      %s248 = scalar_lea.vmem %s0, %s247
      %p249 = pneg %p39
      %p250 = pneg %p36
      %p251 = pneg %p60
      %p252 = pneg %p57
      %p253 = pneg %p81
      %p254 = pneg %p78
      %p255 = pneg %p102
      %p256 = pneg %p99
      %p257 = pneg %p123
      %p258 = pneg %p120
      %p259 = pneg %p144
      %p260 = pneg %p141
      %p261 = pneg %p165
      %p262 = pneg %p162
      %p263 = pneg %p191
      %p264 = pneg %p188
      %s265 = smul.u32 8, %s18
      %p266 = scmp.lt.s32.totalorder %s265, 15
      %s267 = scalar_select %p266, %s265, 15
      %s268 = smul.addr %s267, 8
      %s269 = scalar_lea.vmem %s7, %s268
      %s270 = smul.u32 8, %s18
      %p271 = scmp.lt.s32.totalorder %s270, 15
      %s272 = scalar_select %p271, %s270, 15
      %s273 = smul.addr %s272, 8
      %s274 = scalar_lea.vmem %s0, %s273
      %s275 = smul.u32 8, %s18
      %s276 = smul.u32 8, %s18
      %p277 = scmp.lt.s32.totalorder %s276, 15
      %s278 = scalar_select %p277, %s276, 15
      %s279 = smul.addr %s278, 8
      %s280 = scalar_lea.vmem %s7, %s279
      %s281 = smul.u32 8, %s18
      %v283 = vld [vmem:[%s274] sm:$0xff]
      %v284 = vld [vmem:[%s274 + $0x8] sm:$0xff]
      %v285 = vld [vmem:[%s274 + $0x10] sm:$0xff]
      %v286 = vld [vmem:[%s274 + $0x18] sm:$0xff]
      %v287 = vld [vmem:[%s274 + $0x20] sm:$0xff]
      %v288 = vld [vmem:[%s274 + $0x28] sm:$0xff]
      %v289 = vld [vmem:[%s274 + $0x30] sm:$0xff]
      %v290 = vld [vmem:[%s274 + $0x38] sm:$0xff]
      %vm291 = vcmask 261120
      %v292 = vsel %vm291, %v283, 0.0
      %293 = vadd.xlane.f32.xlu0 %v292
      %v294 = vpop.xlane.xlu0 %293
      %v295 = vsel %vm291, %v284, 0.0
      %296 = vadd.xlane.f32.xlu0 %v295
      %v297 = vpop.xlane.xlu0 %296
      %v298 = vsel %vm291, %v285, 0.0
      %299 = vadd.xlane.f32.xlu0 %v298
      %v300 = vpop.xlane.xlu0 %299
      %v301 = vsel %vm291, %v286, 0.0
      %302 = vadd.xlane.f32.xlu0 %v301
      %v303 = vpop.xlane.xlu0 %302
      %v304 = vsel %vm291, %v287, 0.0
      %305 = vadd.xlane.f32.xlu0 %v304
      %v306 = vpop.xlane.xlu0 %305
      %v307 = vsel %vm291, %v288, 0.0
      %308 = vadd.xlane.f32.xlu0 %v307
      %v309 = vpop.xlane.xlu0 %308
      %v310 = vsel %vm291, %v289, 0.0
      %311 = vadd.xlane.f32.xlu0 %v310
      %v312 = vpop.xlane.xlu0 %311
      %v313 = vsel %vm291, %v290, 0.0
      %314 = vadd.xlane.f32.xlu0 %v313
      %v315 = vpop.xlane.xlu0 %314
      %v316 = vrcp.pop 32.0
      %v317 = vmul.f32 %v294, %v316
      %v318 = vmul.f32 %v297, %v316
      %v319 = vmul.f32 %v300, %v316
      %v320 = vmul.f32 %v303, %v316
      %v321 = vmul.f32 %v306, %v316
      %v322 = vmul.f32 %v309, %v316
      %v323 = vmul.f32 %v312, %v316
      %v324 = vmul.f32 %v315, %v316
      %v325 = vsub.f32 %v283, %v317
      %v326 = vsub.f32 %v284, %v318
      %v327 = vsub.f32 %v285, %v319
      %v328 = vsub.f32 %v286, %v320
      %v329 = vsub.f32 %v287, %v321
      %v330 = vsub.f32 %v288, %v322
      %v331 = vsub.f32 %v289, %v323
      %v332 = vsub.f32 %v290, %v324
      %v333 = vmul.f32 %v325, %v325
      %v334 = vmul.f32 %v326, %v326
      %v335 = vmul.f32 %v327, %v327
      %v336 = vmul.f32 %v328, %v328
      %v337 = vmul.f32 %v329, %v329
      %v338 = vmul.f32 %v330, %v330
      %v339 = vmul.f32 %v331, %v331
      %v340 = vmul.f32 %v332, %v332
      %v341 = vsel %vm291, %v333, 0.0
      %342 = vadd.xlane.f32.xlu0 %v341
      %v343 = vpop.xlane.xlu0 %342
      %v344 = vsel %vm291, %v334, 0.0
      %345 = vadd.xlane.f32.xlu0 %v344
      %v346 = vpop.xlane.xlu0 %345
      %v347 = vsel %vm291, %v335, 0.0
      %348 = vadd.xlane.f32.xlu0 %v347
      %v349 = vpop.xlane.xlu0 %348
      %v350 = vsel %vm291, %v336, 0.0
      %351 = vadd.xlane.f32.xlu0 %v350
      %v352 = vpop.xlane.xlu0 %351
      %v353 = vsel %vm291, %v337, 0.0
      %354 = vadd.xlane.f32.xlu0 %v353
      %v355 = vpop.xlane.xlu0 %354
      %v356 = vsel %vm291, %v338, 0.0
      %357 = vadd.xlane.f32.xlu0 %v356
      %v358 = vpop.xlane.xlu0 %357
      %v359 = vsel %vm291, %v339, 0.0
      %360 = vadd.xlane.f32.xlu0 %v359
      %v361 = vpop.xlane.xlu0 %360
      %v362 = vsel %vm291, %v340, 0.0
      %363 = vadd.xlane.f32.xlu0 %v362
      %v364 = vpop.xlane.xlu0 %363
      %v365 = vmul.f32 %v343, %v316
      %v366 = vmul.f32 %v346, %v316
      %v367 = vmul.f32 %v349, %v316
      %v368 = vmul.f32 %v352, %v316
      %v369 = vmul.f32 %v355, %v316
      %v370 = vmul.f32 %v358, %v316
      %v371 = vmul.f32 %v361, %v316
      %v372 = vmul.f32 %v364, %v316
      %v373 = vadd.f32 %v365, 1e-05
      %v374 = vadd.f32 %v366, 1e-05
      %v375 = vadd.f32 %v367, 1e-05
      %v376 = vadd.f32 %v368, 1e-05
      %v377 = vadd.f32 %v369, 1e-05
      %v378 = vadd.f32 %v370, 1e-05
      %v379 = vadd.f32 %v371, 1e-05
      %v380 = vadd.f32 %v372, 1e-05
      %v381 = vrsqrt.pop %v373
      %v382 = vrsqrt.pop %v374
      %v383 = vrsqrt.pop %v375
      %v384 = vrsqrt.pop %v376
      %v385 = vrsqrt.pop %v377
      %v386 = vrsqrt.pop %v378
      %v387 = vrsqrt.pop %v379
      %v388 = vrsqrt.pop %v380
      %v389 = vmul.f32 %v325, %v381
      %v390 = vmul.f32 %v326, %v382
      %v391 = vmul.f32 %v327, %v383
      %v392 = vmul.f32 %v328, %v384
      %v393 = vmul.f32 %v329, %v385
      %v394 = vmul.f32 %v330, %v386
      %v395 = vmul.f32 %v331, %v387
      %v396 = vmul.f32 %v332, %v388
      %v397 = vld [vmem:[%s1] sm:$0x1]
      %v399 = vlaneseq
      %v400 = vshrl.u32 %v399, 7
      %v401 = vsub.s32 0, %v400
      %v402 = vrot.slane %v397, %v401
      %v404 = vmul.f32 %v389, %v402
      %v405 = vmul.f32 %v390, %v402
      %v406 = vmul.f32 %v391, %v402
      %v407 = vmul.f32 %v392, %v402
      %v408 = vmul.f32 %v393, %v402
      %v409 = vmul.f32 %v394, %v402
      %v410 = vmul.f32 %v395, %v402
      %v411 = vmul.f32 %v396, %v402
      %v412 = vld [vmem:[%s2] sm:$0x1]
      %v414 = vlaneseq
      %v415 = vshrl.u32 %v414, 7
      %v416 = vsub.s32 0, %v415
      %v417 = vrot.slane %v412, %v416
      %v419 = vadd.f32 %v404, %v417
      %v420 = vadd.f32 %v405, %v417
      %v421 = vadd.f32 %v406, %v417
      %v422 = vadd.f32 %v407, %v417
      %v423 = vadd.f32 %v408, %v417
      %v424 = vadd.f32 %v409, %v417
      %v425 = vadd.f32 %v410, %v417
      %v426 = vadd.f32 %v411, %v417
      %v427 = vpack.c.bf16 %v420, %v419
      %v428 = vpack.c.bf16 %v422, %v421
      %v429 = vpack.c.bf16 %v424, %v423
      %v430 = vpack.c.bf16 %v426, %v425
      %v431 = vld [vmem:[%s3] sm:$0xf]
      %v432 = vld [vmem:[%s3 + $0x4] sm:$0xf]
      %v433 = vld [vmem:[%s3 + $0x8] sm:$0xf]
      %v434 = vld [vmem:[%s3 + $0xc] sm:$0xf]
      %v435 = vld [vmem:[%s4] sm:$0x1]
      %v437 = vlaneseq
      %v438 = vshrl.u32 %v437, 7
      %v439 = vsub.s32 0, %v438
      %v440 = vrot.slane %v435, %v439
      %v446 = vunpack.c.l.b16 %v431
      %v447 = vunpack.c.l.b16 %v432
      %v448 = vunpack.c.l.b16 %v433
      %v449 = vunpack.c.l.b16 %v434
      %v450 = vpack.c.b16 %v447, %v446
      %v451 = vpack.c.b16 %v449, %v448
      %v455 = vsel %vm291, %v427, 0
      %v458 = vsel %vm291, %v428, 0
      %v461 = vsel %vm291, %v429, 0
      %v464 = vsel %vm291, %v430, 0
      %466 = vmatprep.subr.bf16.mxu0 0
      %467 = vmatpush1.bf16.msra.mxu0 0
      %468 = vmatprep.subr.bf16.mxu0 0
      %469 = vmatpush1.bf16.msra.mxu0 0
      %470 = vmatprep.subr.bf16.mxu0 0
      %471 = vmatpush1.bf16.msra.mxu0 0
      %472 = vmatprep.subr.bf16.mxu0 0
      %473 = vmatpush1.bf16.msra.mxu0 0
      %474 = vmatprep.subr.bf16.mxu0 0
      %475 = vmatpush1.bf16.msra.mxu0 0
      %476 = vmatprep.subr.bf16.mxu0 0
      %477 = vmatpush1.bf16.msra.mxu0 0
      %478 = vmatprep.subr.bf16.mxu0 0
      %479 = vmatpush1.bf16.msra.mxu0 %v451
      %480 = vmatprep.subr.bf16.mxu0 0
      %481 = vmatpush1.bf16.msra.mxu0 %v450
      %482 = vmatprep.subr.bf16.mxu0 0
      %483 = vmatpush2.bf16.msra.mxu0 0
      %484 = vmatprep.subr.bf16.mxu0 0
      %485 = vmatpush2.bf16.msra.mxu0 0
      %486 = vmatprep.subr.bf16.mxu0 0
      %487 = vmatpush2.bf16.msra.mxu0 0
      %488 = vmatprep.subr.bf16.mxu0 0
      %489 = vmatpush2.bf16.msra.mxu0 0
      %490 = vmatprep.subr.bf16.mxu0 0
      %491 = vmatpush2.bf16.msra.mxu0 0
      %492 = vmatprep.subr.bf16.mxu0 0
      %493 = vmatpush2.bf16.msra.mxu0 0
      %494 = vmatprep.subr.bf16.mxu0 0
      %495 = vmatpush2.bf16.msra.mxu0 0
      %496 = vmatprep.subr.bf16.mxu0 0
      %497 = vmatpush2.bf16.msra.mxu0 0
      %498 = vmatprep.mubr.bf16.mxu0 0
      %499 = vmatmul.mubr.bf16.gmra.mxu0 %v455
      %v500 = vpop.f32.mrf.mxu0
      %v501 = vadd.f32 %v440, %v500
      %v502 = vpop.f32.mrf.mxu0
      %v503 = vpop.f32.mrf.mxu0
      %v504 = vadd.f32 %v440, %v503
      %v505 = vpop.f32.mrf.mxu0
      %506 = vmatprep.mubr.bf16.mxu0 0
      %507 = vmatmul.mubr.bf16.gmra.mxu0 %v458
      %v508 = vpop.f32.mrf.mxu0
      %v509 = vadd.f32 %v440, %v508
      %v510 = vpop.f32.mrf.mxu0
      %v511 = vpop.f32.mrf.mxu0
      %v512 = vadd.f32 %v440, %v511
      %v513 = vpop.f32.mrf.mxu0
      %514 = vmatprep.mubr.bf16.mxu0 0
      %515 = vmatmul.mubr.bf16.gmra.mxu0 %v461
      %v516 = vpop.f32.mrf.mxu0
      %v517 = vadd.f32 %v440, %v516
      %v518 = vpop.f32.mrf.mxu0
      %v519 = vpop.f32.mrf.mxu0
      %v520 = vadd.f32 %v440, %v519
      %v521 = vpop.f32.mrf.mxu0
      %522 = vmatprep.mubr.bf16.mxu0 0
      %523 = vmatmul.mubr.bf16.gmra.mxu0 %v464
      %v524 = vpop.f32.mrf.mxu0
      %v525 = vadd.f32 %v440, %v524
      %v526 = vpop.f32.mrf.mxu0
      %v527 = vpop.f32.mrf.mxu0
      %v528 = vadd.f32 %v440, %v527
      %v529 = vpop.f32.mrf.mxu0
      %530 = vdwg.mxu0
      %v531 = vmul.f32 %v501, 0.5
      %v532 = vmul.f32 %v504, 0.5
      %v533 = vmul.f32 %v509, 0.5
      %v534 = vmul.f32 %v512, 0.5
      %v535 = vmul.f32 %v517, 0.5
      %v536 = vmul.f32 %v520, 0.5
      %v537 = vmul.f32 %v525, 0.5
      %v538 = vmul.f32 %v528, 0.5
      %v539 = vmul.f32 %v501, 0.044715
      %v540 = vmul.f32 %v504, 0.044715
      %v541 = vmul.f32 %v509, 0.044715
      %v542 = vmul.f32 %v512, 0.044715
      %v543 = vmul.f32 %v517, 0.044715
      %v544 = vmul.f32 %v520, 0.044715
      %v545 = vmul.f32 %v525, 0.044715
      %v546 = vmul.f32 %v528, 0.044715
      %v547 = vmul.f32 %v539, %v501
      %v548 = vmul.f32 %v540, %v504
      %v549 = vmul.f32 %v541, %v509
      %v550 = vmul.f32 %v542, %v512
      %v551 = vmul.f32 %v543, %v517
      %v552 = vmul.f32 %v544, %v520
      %v553 = vmul.f32 %v545, %v525
      %v554 = vmul.f32 %v546, %v528
      %v555 = vmul.f32 %v547, %v501
      %v556 = vmul.f32 %v548, %v504
      %v557 = vmul.f32 %v549, %v509
      %v558 = vmul.f32 %v550, %v512
      %v559 = vmul.f32 %v551, %v517
      %v560 = vmul.f32 %v552, %v520
      %v561 = vmul.f32 %v553, %v525
      %v562 = vmul.f32 %v554, %v528
      %v563 = vadd.f32 %v501, %v555
      %v564 = vadd.f32 %v504, %v556
      %v565 = vadd.f32 %v509, %v557
      %v566 = vadd.f32 %v512, %v558
      %v567 = vadd.f32 %v517, %v559
      %v568 = vadd.f32 %v520, %v560
      %v569 = vadd.f32 %v525, %v561
      %v570 = vadd.f32 %v528, %v562
      %v571 = vmul.f32 %v563, 0.7978846
      %v572 = vmul.f32 %v564, 0.7978846
      %v573 = vmul.f32 %v565, 0.7978846
      %v574 = vmul.f32 %v566, 0.7978846
      %v575 = vmul.f32 %v567, 0.7978846
      %v576 = vmul.f32 %v568, 0.7978846
      %v577 = vmul.f32 %v569, 0.7978846
      %v578 = vmul.f32 %v570, 0.7978846
      %v579 = vtanh.pop %v571
      %v580 = vtanh.pop %v572
      %v581 = vtanh.pop %v573
      %v582 = vtanh.pop %v574
      %v583 = vtanh.pop %v575
      %v584 = vtanh.pop %v576
      %v585 = vtanh.pop %v577
      %v586 = vtanh.pop %v578
      %v587 = vadd.f32 %v579, 1.0
      %v588 = vadd.f32 %v580, 1.0
      %v589 = vadd.f32 %v581, 1.0
      %v590 = vadd.f32 %v582, 1.0
      %v591 = vadd.f32 %v583, 1.0
      %v592 = vadd.f32 %v584, 1.0
      %v593 = vadd.f32 %v585, 1.0
      %v594 = vadd.f32 %v586, 1.0
      %v595 = vmul.f32 %v531, %v587
      %v596 = vmul.f32 %v532, %v588
      %v597 = vmul.f32 %v533, %v589
      %v598 = vmul.f32 %v534, %v590
      %v599 = vmul.f32 %v535, %v591
      %v600 = vmul.f32 %v536, %v592
      %v601 = vmul.f32 %v537, %v593
      %v602 = vmul.f32 %v538, %v594
      %v603 = vpack.c.bf16 %v596, %v595
      %v604 = vpack.c.bf16 %v598, %v597
      %v605 = vpack.c.bf16 %v600, %v599
      %v606 = vpack.c.bf16 %v602, %v601
      %v607 = vld [vmem:[%s5] sm:$0xf]
      %v608 = vld [vmem:[%s5 + $0x4] sm:$0xf]
      %v609 = vld [vmem:[%s5 + $0x8] sm:$0xf]
      %v610 = vld [vmem:[%s5 + $0xc] sm:$0xf]
      %v611 = vld [vmem:[%s5 + $0x10] sm:$0xf]
      %v612 = vld [vmem:[%s5 + $0x14] sm:$0xf]
      %v613 = vld [vmem:[%s5 + $0x18] sm:$0xf]
      %v614 = vld [vmem:[%s5 + $0x1c] sm:$0xf]
      %v615 = vld [vmem:[%s5 + $0x20] sm:$0xf]
      %v616 = vld [vmem:[%s5 + $0x24] sm:$0xf]
      %v617 = vld [vmem:[%s5 + $0x28] sm:$0xf]
      %v618 = vld [vmem:[%s5 + $0x2c] sm:$0xf]
      %v619 = vld [vmem:[%s5 + $0x30] sm:$0xf]
      %v620 = vld [vmem:[%s5 + $0x34] sm:$0xf]
      %v621 = vld [vmem:[%s5 + $0x38] sm:$0xf]
      %v622 = vld [vmem:[%s5 + $0x3c] sm:$0xf]
      %v623 = vld [vmem:[%s6] sm:$0x1]
      %v625 = vlaneseq
      %v626 = vshrl.u32 %v625, 7
      %v627 = vsub.s32 0, %v626
      %v628 = vrot.slane %v623, %v627
      %v646 = vunpack.c.l.b16 %v607
      %v647 = vunpack.c.l.b16 %v608
      %v648 = vunpack.c.l.b16 %v609
      %v649 = vunpack.c.l.b16 %v610
      %v650 = vunpack.c.l.b16 %v611
      %v651 = vunpack.c.l.b16 %v612
      %v652 = vunpack.c.l.b16 %v613
      %v653 = vunpack.c.l.b16 %v614
      %v654 = vunpack.c.l.b16 %v615
      %v655 = vunpack.c.l.b16 %v616
      %v656 = vunpack.c.l.b16 %v617
      %v657 = vunpack.c.l.b16 %v618
      %v658 = vunpack.c.l.b16 %v619
      %v659 = vunpack.c.l.b16 %v620
      %v660 = vunpack.c.l.b16 %v621
      %v661 = vunpack.c.l.b16 %v622
      %v662 = vpack.c.b16 %v647, %v646
      %v663 = vpack.c.b16 %v649, %v648
      %v664 = vpack.c.b16 %v651, %v650
      %v665 = vpack.c.b16 %v653, %v652
      %v666 = vpack.c.b16 %v655, %v654
      %v667 = vpack.c.b16 %v657, %v656
      %v668 = vpack.c.b16 %v659, %v658
      %v669 = vpack.c.b16 %v661, %v660
      %678 = vmatprep.subr.bf16.mxu0 0
      %679 = vmatpush1.bf16.msra.mxu0 %v669
      %680 = vmatprep.subr.bf16.mxu0 0
      %681 = vmatpush1.bf16.msra.mxu0 %v668
      %682 = vmatprep.subr.bf16.mxu0 0
      %683 = vmatpush1.bf16.msra.mxu0 %v667
      %684 = vmatprep.subr.bf16.mxu0 0
      %685 = vmatpush1.bf16.msra.mxu0 %v666
      %686 = vmatprep.subr.bf16.mxu0 0
      %687 = vmatpush1.bf16.msra.mxu0 %v665
      %688 = vmatprep.subr.bf16.mxu0 0
      %689 = vmatpush1.bf16.msra.mxu0 %v664
      %690 = vmatprep.subr.bf16.mxu0 0
      %691 = vmatpush1.bf16.msra.mxu0 %v663
      %692 = vmatprep.subr.bf16.mxu0 0
      %693 = vmatpush1.bf16.msra.mxu0 %v662
      %694 = vmatprep.subr.bf16.mxu0 0
      %695 = vmatpush2.bf16.msra.mxu0 0
      %696 = vmatprep.subr.bf16.mxu0 0
      %697 = vmatpush2.bf16.msra.mxu0 0
      %698 = vmatprep.subr.bf16.mxu0 0
      %699 = vmatpush2.bf16.msra.mxu0 0
      %700 = vmatprep.subr.bf16.mxu0 0
      %701 = vmatpush2.bf16.msra.mxu0 0
      %702 = vmatprep.subr.bf16.mxu0 0
      %703 = vmatpush2.bf16.msra.mxu0 0
      %704 = vmatprep.subr.bf16.mxu0 0
      %705 = vmatpush2.bf16.msra.mxu0 0
      %706 = vmatprep.subr.bf16.mxu0 0
      %707 = vmatpush2.bf16.msra.mxu0 0
      %708 = vmatprep.subr.bf16.mxu0 0
      %709 = vmatpush2.bf16.msra.mxu0 0
      %710 = vmatprep.mubr.bf16.mxu0 0
      %711 = vmatmul.mubr.bf16.gmra.mxu0 %v603
      %v712 = vpop.f32.mrf.mxu0
      %v713 = vadd.f32 %v628, %v712
      %v714 = vpop.f32.mrf.mxu0
      %v715 = vpop.f32.mrf.mxu0
      %v716 = vadd.f32 %v628, %v715
      %v717 = vpop.f32.mrf.mxu0
      %718 = vmatprep.mubr.bf16.mxu0 0
      %719 = vmatmul.mubr.bf16.gmra.mxu0 %v604
      %v720 = vpop.f32.mrf.mxu0
      %v721 = vadd.f32 %v628, %v720
      %v722 = vpop.f32.mrf.mxu0
      %v723 = vpop.f32.mrf.mxu0
      %v724 = vadd.f32 %v628, %v723
      %v725 = vpop.f32.mrf.mxu0
      %726 = vmatprep.mubr.bf16.mxu0 0
      %727 = vmatmul.mubr.bf16.gmra.mxu0 %v605
      %v728 = vpop.f32.mrf.mxu0
      %v729 = vadd.f32 %v628, %v728
      %v730 = vpop.f32.mrf.mxu0
      %v731 = vpop.f32.mrf.mxu0
      %v732 = vadd.f32 %v628, %v731
      %v733 = vpop.f32.mrf.mxu0
      %734 = vmatprep.mubr.bf16.mxu0 0
      %735 = vmatmul.mubr.bf16.gmra.mxu0 %v606
      %v736 = vpop.f32.mrf.mxu0
      %v737 = vadd.f32 %v628, %v736
      %v738 = vpop.f32.mrf.mxu0
      %v739 = vpop.f32.mrf.mxu0
      %v740 = vadd.f32 %v628, %v739
      %v741 = vpop.f32.mrf.mxu0
      %742 = vdwg.mxu0
      %v743 = vadd.f32 %v283, %v713
      %v744 = vadd.f32 %v284, %v716
      %v745 = vadd.f32 %v285, %v721
      %v746 = vadd.f32 %v286, %v724
      %v747 = vadd.f32 %v287, %v729
      %v748 = vadd.f32 %v288, %v732
      %v749 = vadd.f32 %v289, %v737
      %v750 = vadd.f32 %v290, %v740
      %751 = vst.msk [vmem:[%s280] sm:$0xff] %vm291, %v743
      %752 = vst.msk [vmem:[%s280 + $0x8] sm:$0xff] %vm291, %v744
      %753 = vst.msk [vmem:[%s280 + $0x10] sm:$0xff] %vm291, %v745
      %754 = vst.msk [vmem:[%s280 + $0x18] sm:$0xff] %vm291, %v746
      %755 = vst.msk [vmem:[%s280 + $0x20] sm:$0xff] %vm291, %v747
      %756 = vst.msk [vmem:[%s280 + $0x28] sm:$0xff] %vm291, %v748
      %757 = vst.msk [vmem:[%s280 + $0x30] sm:$0xff] %vm291, %v749
      %758 = vst.msk [vmem:[%s280 + $0x38] sm:$0xff] %vm291, %v750
      %s759 = smul.u32 8, %s18
      %p760 = scmp.lt.s32.totalorder %s759, 15
      %s761 = scalar_select %p760, %s759, 15
      %s762 = smul.addr %s761, 8
      %s763 = scalar_lea.vmem %s7, %s762
      // Predicated region
      $region49: #{forward.5} parent=47 // pred_check
        %p764 = pneg %p188
      $region50: #{forward.5} parent=47 // pred_check_branch
        %766 = sbr.rel (%p764) target = $region52
      $region51: #{forward.5} parent=47 // pred_region
        %s767 = smul.u32 8, %s18
      $region52: #{forward.5} parent=47 // pred_fallthru
        _
    $region48: #{forward.5} parent=5 // pred_fallthru
      _
    %p768 = scmp.le.s32.totalorder 2, %s13
    // Predicated region
    $region53: #{forward.5} parent=5 // pred_check
      %p769 = pneg %p768
    $region54: #{forward.5} parent=5 // pred_check_branch
      %771 = sbr.rel (%p769) target = $region56
    $region55: #{forward.5} parent=5 // pred_region
      %s772 = ssub.s32 %s13, 2
      // Predicated region
      $region57: #{forward.5} parent=55 // pred_check
        %p773 = pneg %p194
      $region58: #{forward.5} parent=55 // pred_check_branch
        %775 = sbr.rel (%p773) target = $region60
      $region59: #{forward.5} parent=55 // pred_region
        %s776 = smul.u32 8, %s19
        %p777 = scmp.lt.s32.totalorder %s776, 15
        %s778 = scalar_select %p777, %s776, 15
        %s779 = smul.addr %s778, 8
        %s780 = scalar_lea.vmem %s7, %s779
      $region60: #{forward.5} parent=55 // pred_fallthru
        _
    $region56: #{forward.5} parent=5 // pred_fallthru
      _
  $region6: #{forward.5} parent=0 // loop_footer
    %s17 = sadd.s32 1, %s13
  $region7: #{forward.5} parent=0 // loop_footer_branch
    %12 = sbr.rel target = $region3
  $region8: #{forward.5} parent=0 // loop_exit
    _

// kernel: forward.4
$region0: #{forward.4}
  #allocation0 [shape = 'u32[]', space=smem, size = 0x4, offset = 0x4, fixed_abs, tag = 'smem constant byte address 0x4 - core index']
  #allocation1 [shape = 'u32[144,128]{1,0:T(1,128)}', space=vmem, size = 0x12000, scoped, tag = 'internal scratch']
  %s0 = inlined_call_operand.vmem [shape: f32[128,32], index: 0, kind: input, shape index: {}]
  %s1 = inlined_call_operand.vmem [shape: f32[1,32], index: 1, kind: input, shape index: {}]
  %s2 = inlined_call_operand.vmem [shape: f32[1,32], index: 2, kind: input, shape index: {}]
  %s3 = inlined_call_operand.vmem [shape: bf16[3,32,32], index: 3, kind: input, shape index: {}]
  %s4 = inlined_call_operand.vmem [shape: f32[3,1,32], index: 4, kind: input, shape index: {}]
  %s5 = inlined_call_operand.vmem [shape: bf16[32,32], index: 5, kind: input, shape index: {}]
  %s6 = inlined_call_operand.vmem [shape: f32[1,32], index: 6, kind: input, shape index: {}]
  %s7 = inlined_call_operand.vmem [shape: f32[1,4,16,16], index: 7, kind: input, shape index: {}]
  %s8 = inlined_call_operand.vmem [shape: f32[128,32], index: 8, kind: output, shape index: {}]
  %s9 = sld [smem:[#allocation0]]
  $region65: #{forward.4} parent=0
    _
  %s11 = ssub.s32 1, %s9
  %s12 = scalar_select 0, %s11, %s9
  loop: start=0, step=1, limit=4
  $region2: #{forward.4} parent=0 // loop_pre_header
    _
  $region3: #{forward.4} parent=0 // loop_header
    %s14 = sphi 0, %s18
    %p15 = scmp.ge.s32.totalorder %s14, 4
    %s24 = sphi 0, %s26
    %s27 = sphi 0, %s24
    %s28 = sphi 0, %s27
    %s44 = sphi 0, %s28
    %s48 = sphi 0, %s48
    %s50 = sphi 0, %s48
    %s51 = sphi 0, %s50
    %s65 = sphi 0, %s51
    %s69 = sphi 0, %s69
    %s71 = sphi 0, %s69
    %s72 = sphi 0, %s71
    %s86 = sphi 0, %s72
    %s90 = sphi 0, %s90
    %s92 = sphi 0, %s90
    %s93 = sphi 0, %s92
    %s107 = sphi 0, %s93
    %s111 = sphi 0, %s111
    %s113 = sphi 0, %s111
    %s114 = sphi 0, %s113
    %s128 = sphi 0, %s114
    %s132 = sphi 0, %s132
    %s134 = sphi 0, %s132
    %s135 = sphi 0, %s134
    %s149 = sphi 0, %s135
    %s153 = sphi 0, %s153
    %s155 = sphi 0, %s153
    %s156 = sphi 0, %s155
    %s170 = sphi 0, %s156
    %s174 = sphi 0, %s174
    %s176 = sphi 0, %s174
    %s177 = sphi 0, %s176
    %s191 = sphi 0, %s177
    %s197 = sphi 0, %s199
    %s200 = sphi 0, %s197
    %s201 = sphi 0, %s200
    %s217 = sphi 0, %s201
  $region4: #{forward.4} parent=0 // loop_header_branch
    %17 = sbr.rel (%p15) target = $region8
  $region5: #{forward.4} parent=0 // loop_body
    %s19 = ssub.s32 %s14, 1
    %s20 = ssub.s32 %s14, 2
    %s21 = sadd.s32 %s14, 1
    %s22 = ssub.s32 %s14, %s21
    %p23 = scmp.eq.s32.totalorder %s22, 0
    %s25 = sadd.s32 %s24, 1
    %s26 = scalar_select %p23, %s24, %s25
    %p29 = pneg %p23
    %p30 = scmp.eq.s32.totalorder %s14, 1
    %p31 = por %p29, %p30
    %p32 = scmp.ne.s32.totalorder %s24, %s27
    %p33 = scmp.eq.s32.totalorder %s14, 0
    %p34 = por %p32, %p33
    %p35 = scmp.ne.s32.totalorder %s24, %s27
    %p36 = scmp.eq.s32.totalorder %s19, 1
    %p37 = por %p35, %p36
    %p38 = scmp.ne.s32.totalorder %s27, %s28
    %p39 = scmp.eq.s32.totalorder %s19, 0
    %p40 = por %p38, %p39
    %p41 = scmp.ne.s32.totalorder %s27, %s28
    %p42 = scmp.eq.s32.totalorder %s20, 1
    %p43 = por %p41, %p42
    %p45 = scmp.ne.s32.totalorder %s28, %s44
    %p46 = scmp.eq.s32.totalorder %s20, 0
    %p47 = por %p45, %p46
    %s49 = sadd.s32 %s48, 1
    %p52 = scmp.eq.s32.totalorder %s14, 1
    %p53 = scmp.ne.s32.totalorder %s48, %s50
    %p54 = scmp.eq.s32.totalorder %s14, 0
    %p55 = por %p53, %p54
    %p56 = scmp.ne.s32.totalorder %s48, %s50
    %p57 = scmp.eq.s32.totalorder %s19, 1
    %p58 = por %p56, %p57
    %p59 = scmp.ne.s32.totalorder %s50, %s51
    %p60 = scmp.eq.s32.totalorder %s19, 0
    %p61 = por %p59, %p60
    %p62 = scmp.ne.s32.totalorder %s50, %s51
    %p63 = scmp.eq.s32.totalorder %s20, 1
    %p64 = por %p62, %p63
    %p66 = scmp.ne.s32.totalorder %s51, %s65
    %p67 = scmp.eq.s32.totalorder %s20, 0
    %p68 = por %p66, %p67
    %s70 = sadd.s32 %s69, 1
    %p73 = scmp.eq.s32.totalorder %s14, 1
    %p74 = scmp.ne.s32.totalorder %s69, %s71
    %p75 = scmp.eq.s32.totalorder %s14, 0
    %p76 = por %p74, %p75
    %p77 = scmp.ne.s32.totalorder %s69, %s71
    %p78 = scmp.eq.s32.totalorder %s19, 1
    %p79 = por %p77, %p78
    %p80 = scmp.ne.s32.totalorder %s71, %s72
    %p81 = scmp.eq.s32.totalorder %s19, 0
    %p82 = por %p80, %p81
    %p83 = scmp.ne.s32.totalorder %s71, %s72
    %p84 = scmp.eq.s32.totalorder %s20, 1
    %p85 = por %p83, %p84
    %p87 = scmp.ne.s32.totalorder %s72, %s86
    %p88 = scmp.eq.s32.totalorder %s20, 0
    %p89 = por %p87, %p88
    %s91 = sadd.s32 %s90, 1
    %p94 = scmp.eq.s32.totalorder %s14, 1
    %p95 = scmp.ne.s32.totalorder %s90, %s92
    %p96 = scmp.eq.s32.totalorder %s14, 0
    %p97 = por %p95, %p96
    %p98 = scmp.ne.s32.totalorder %s90, %s92
    %p99 = scmp.eq.s32.totalorder %s19, 1
    %p100 = por %p98, %p99
    %p101 = scmp.ne.s32.totalorder %s92, %s93
    %p102 = scmp.eq.s32.totalorder %s19, 0
    %p103 = por %p101, %p102
    %p104 = scmp.ne.s32.totalorder %s92, %s93
    %p105 = scmp.eq.s32.totalorder %s20, 1
    %p106 = por %p104, %p105
    %p108 = scmp.ne.s32.totalorder %s93, %s107
    %p109 = scmp.eq.s32.totalorder %s20, 0
    %p110 = por %p108, %p109
    %s112 = sadd.s32 %s111, 1
    %p115 = scmp.eq.s32.totalorder %s14, 1
    %p116 = scmp.ne.s32.totalorder %s111, %s113
    %p117 = scmp.eq.s32.totalorder %s14, 0
    %p118 = por %p116, %p117
    %p119 = scmp.ne.s32.totalorder %s111, %s113
    %p120 = scmp.eq.s32.totalorder %s19, 1
    %p121 = por %p119, %p120
    %p122 = scmp.ne.s32.totalorder %s113, %s114
    %p123 = scmp.eq.s32.totalorder %s19, 0
    %p124 = por %p122, %p123
    %p125 = scmp.ne.s32.totalorder %s113, %s114
    %p126 = scmp.eq.s32.totalorder %s20, 1
    %p127 = por %p125, %p126
    %p129 = scmp.ne.s32.totalorder %s114, %s128
    %p130 = scmp.eq.s32.totalorder %s20, 0
    %p131 = por %p129, %p130
    %s133 = sadd.s32 %s132, 1
    %p136 = scmp.eq.s32.totalorder %s14, 1
    %p137 = scmp.ne.s32.totalorder %s132, %s134
    %p138 = scmp.eq.s32.totalorder %s14, 0
    %p139 = por %p137, %p138
    %p140 = scmp.ne.s32.totalorder %s132, %s134
    %p141 = scmp.eq.s32.totalorder %s19, 1
    %p142 = por %p140, %p141
    %p143 = scmp.ne.s32.totalorder %s134, %s135
    %p144 = scmp.eq.s32.totalorder %s19, 0
    %p145 = por %p143, %p144
    %p146 = scmp.ne.s32.totalorder %s134, %s135
    %p147 = scmp.eq.s32.totalorder %s20, 1
    %p148 = por %p146, %p147
    %p150 = scmp.ne.s32.totalorder %s135, %s149
    %p151 = scmp.eq.s32.totalorder %s20, 0
    %p152 = por %p150, %p151
    %s154 = sadd.s32 %s153, 1
    %p157 = scmp.eq.s32.totalorder %s14, 1
    %p158 = scmp.ne.s32.totalorder %s153, %s155
    %p159 = scmp.eq.s32.totalorder %s14, 0
    %p160 = por %p158, %p159
    %p161 = scmp.ne.s32.totalorder %s153, %s155
    %p162 = scmp.eq.s32.totalorder %s19, 1
    %p163 = por %p161, %p162
    %p164 = scmp.ne.s32.totalorder %s155, %s156
    %p165 = scmp.eq.s32.totalorder %s19, 0
    %p166 = por %p164, %p165
    %p167 = scmp.ne.s32.totalorder %s155, %s156
    %p168 = scmp.eq.s32.totalorder %s20, 1
    %p169 = por %p167, %p168
    %p171 = scmp.ne.s32.totalorder %s156, %s170
    %p172 = scmp.eq.s32.totalorder %s20, 0
    %p173 = por %p171, %p172
    %s175 = sadd.s32 %s174, 1
    %p178 = scmp.eq.s32.totalorder %s14, 1
    %p179 = scmp.ne.s32.totalorder %s174, %s176
    %p180 = scmp.eq.s32.totalorder %s14, 0
    %p181 = por %p179, %p180
    %p182 = scmp.ne.s32.totalorder %s174, %s176
    %p183 = scmp.eq.s32.totalorder %s19, 1
    %p184 = por %p182, %p183
    %p185 = scmp.ne.s32.totalorder %s176, %s177
    %p186 = scmp.eq.s32.totalorder %s19, 0
    %p187 = por %p185, %p186
    %p188 = scmp.ne.s32.totalorder %s176, %s177
    %p189 = scmp.eq.s32.totalorder %s20, 1
    %p190 = por %p188, %p189
    %p192 = scmp.ne.s32.totalorder %s177, %s191
    %p193 = scmp.eq.s32.totalorder %s20, 0
    %p194 = por %p192, %p193
    %s195 = ssub.s32 %s14, %s21
    %p196 = scmp.eq.s32.totalorder %s195, 0
    %s198 = sadd.s32 %s197, 1
    %s199 = scalar_select %p196, %s197, %s198
    %p202 = pneg %p196
    %p203 = scmp.eq.s32.totalorder %s14, 1
    %p204 = por %p202, %p203
    %p205 = scmp.ne.s32.totalorder %s197, %s200
    %p206 = scmp.eq.s32.totalorder %s14, 0
    %p207 = por %p205, %p206
    %p208 = scmp.ne.s32.totalorder %s197, %s200
    %p209 = scmp.eq.s32.totalorder %s19, 1
    %p210 = por %p208, %p209
    %p211 = scmp.ne.s32.totalorder %s200, %s201
    %p212 = scmp.eq.s32.totalorder %s19, 0
    %p213 = por %p211, %p212
    %p214 = scmp.ne.s32.totalorder %s200, %s201
    %p215 = scmp.eq.s32.totalorder %s20, 1
    %p216 = por %p214, %p215
    %p218 = scmp.ne.s32.totalorder %s201, %s217
    %p219 = scmp.eq.s32.totalorder %s20, 0
    %p220 = por %p218, %p219
    %p221 = scmp.le.s32.totalorder 1, %s14
    %p222 = scmp.lt.s32.totalorder %s14, 3
    %p223 = pnand %p221, %p222
    %p224 = pneg %p223
    // Predicated region
    $region9: #{forward.4} parent=5 // pred_check
      _
    $region10: #{forward.4} parent=5 // pred_check_branch
      %226 = sbr.rel (%p223) target = $region12
    $region11: #{forward.4} parent=5 // pred_region
      %s227 = ssub.s32 %s14, 1
      // Predicated region
      $region13: #{forward.4} parent=11 // pred_check
        %p228 = pneg %p61
      $region14: #{forward.4} parent=11 // pred_check_branch
        %230 = sbr.rel (%p228) target = $region16
      $region15: #{forward.4} parent=11 // pred_region
        _
      $region16: #{forward.4} parent=11 // pred_fallthru
        _
      // Predicated region
      $region17: #{forward.4} parent=11 // pred_check
        %p231 = pneg %p82
      $region18: #{forward.4} parent=11 // pred_check_branch
        %233 = sbr.rel (%p231) target = $region20
      $region19: #{forward.4} parent=11 // pred_region
        _
      $region20: #{forward.4} parent=11 // pred_fallthru
        _
      // Predicated region
      $region21: #{forward.4} parent=11 // pred_check
        %p234 = pneg %p103
      $region22: #{forward.4} parent=11 // pred_check_branch
        %236 = sbr.rel (%p234) target = $region24
      $region23: #{forward.4} parent=11 // pred_region
        _
      $region24: #{forward.4} parent=11 // pred_fallthru
        _
      // Predicated region
      $region25: #{forward.4} parent=11 // pred_check
        %p237 = pneg %p124
      $region26: #{forward.4} parent=11 // pred_check_branch
        %239 = sbr.rel (%p237) target = $region28
      $region27: #{forward.4} parent=11 // pred_region
        _
      $region28: #{forward.4} parent=11 // pred_fallthru
        _
      // Predicated region
      $region29: #{forward.4} parent=11 // pred_check
        %p240 = pneg %p145
      $region30: #{forward.4} parent=11 // pred_check_branch
        %242 = sbr.rel (%p240) target = $region32
      $region31: #{forward.4} parent=11 // pred_region
        _
      $region32: #{forward.4} parent=11 // pred_fallthru
        _
      // Predicated region
      $region33: #{forward.4} parent=11 // pred_check
        %p243 = pneg %p166
      $region34: #{forward.4} parent=11 // pred_check_branch
        %245 = sbr.rel (%p243) target = $region36
      $region35: #{forward.4} parent=11 // pred_region
        _
      $region36: #{forward.4} parent=11 // pred_fallthru
        _
      // Predicated region
      $region37: #{forward.4} parent=11 // pred_check
        %p246 = pneg %p187
      $region38: #{forward.4} parent=11 // pred_check_branch
        %248 = sbr.rel (%p246) target = $region40
      $region39: #{forward.4} parent=11 // pred_region
        _
      $region40: #{forward.4} parent=11 // pred_fallthru
        _
    $region12: #{forward.4} parent=5 // pred_fallthru
      _
    %p249 = scmp.lt.s32.totalorder %s14, 2
    // Predicated region
    $region41: #{forward.4} parent=5 // pred_check
      %p250 = pneg %p249
    $region42: #{forward.4} parent=5 // pred_check_branch
      %252 = sbr.rel (%p250) target = $region44
    $region43: #{forward.4} parent=5 // pred_region
      // Predicated region
      $region45: #{forward.4} parent=43 // pred_check
        %p253 = pneg %p34
      $region46: #{forward.4} parent=43 // pred_check_branch
        %255 = sbr.rel (%p253) target = $region48
      $region47: #{forward.4} parent=43 // pred_region
        %s256 = smul.u32 8, %s14
        %p257 = scmp.lt.s32.totalorder %s256, 15
        %s258 = scalar_select %p257, %s256, 15
        %s259 = smul.addr %s258, 8
        %s260 = scalar_lea.vmem %s0, %s259
        %s261 = smul.u32 8, %s14
      $region48: #{forward.4} parent=43 // pred_fallthru
        _
    $region44: #{forward.4} parent=5 // pred_fallthru
      _
    %p262 = scmp.le.s32.totalorder 1, %s14
    %p263 = scmp.lt.s32.totalorder %s14, 3
    %p264 = pnand %p262, %p263
    %p265 = pneg %p264
    // Predicated region
    $region49: #{forward.4} parent=5 // pred_check
      _
    $region50: #{forward.4} parent=5 // pred_check_branch
      %267 = sbr.rel (%p264) target = $region52
    $region51: #{forward.4} parent=5 // pred_region
      %s268 = ssub.s32 %s14, 1
      %s269 = smul.u32 8, %s19
      %p270 = scmp.lt.s32.totalorder %s269, 15
      %s271 = scalar_select %p270, %s269, 15
      %s272 = smul.addr %s271, 8
      %s273 = scalar_lea.vmem %s0, %s272
      %p274 = pneg %p40
      %p275 = pneg %p37
      %p276 = pneg %p61
      %p277 = pneg %p58
      %p278 = pneg %p82
      %p279 = pneg %p79
      %p280 = pneg %p103
      %p281 = pneg %p100
      %p282 = pneg %p124
      %p283 = pneg %p121
      %p284 = pneg %p145
      %p285 = pneg %p142
      %p286 = pneg %p166
      %p287 = pneg %p163
      %p288 = pneg %p187
      %p289 = pneg %p184
      %p290 = pneg %p213
      %p291 = pneg %p210
      %s292 = smul.u32 8, %s19
      %p293 = scmp.lt.s32.totalorder %s292, 15
      %s294 = scalar_select %p293, %s292, 15
      %s295 = smul.addr %s294, 8
      %s296 = scalar_lea.vmem %s8, %s295
      %s297 = smul.u32 8, %s19
      %p298 = scmp.lt.s32.totalorder %s297, 15
      %s299 = scalar_select %p298, %s297, 15
      %s300 = smul.addr %s299, 8
      %s301 = scalar_lea.vmem %s0, %s300
      %s302 = smul.u32 8, %s19
      %s303 = smul.u32 8, %s19
      %p304 = scmp.lt.s32.totalorder %s303, 15
      %s305 = scalar_select %p304, %s303, 15
      %s306 = smul.addr %s305, 8
      %s307 = scalar_lea.vmem %s8, %s306
      %s308 = smul.u32 8, %s19
      %v310 = vld [vmem:[%s301] sm:$0xff]
      %v311 = vld [vmem:[%s301 + $0x8] sm:$0xff]
      %v312 = vld [vmem:[%s301 + $0x10] sm:$0xff]
      %v313 = vld [vmem:[%s301 + $0x18] sm:$0xff]
      %v314 = vld [vmem:[%s301 + $0x20] sm:$0xff]
      %v315 = vld [vmem:[%s301 + $0x28] sm:$0xff]
      %v316 = vld [vmem:[%s301 + $0x30] sm:$0xff]
      %v317 = vld [vmem:[%s301 + $0x38] sm:$0xff]
      %vm318 = vcmask 261120
      %v319 = vsel %vm318, %v310, 0.0
      %320 = vadd.xlane.f32.xlu0 %v319
      %v321 = vpop.xlane.xlu0 %320
      %v322 = vsel %vm318, %v311, 0.0
      %323 = vadd.xlane.f32.xlu0 %v322
      %v324 = vpop.xlane.xlu0 %323
      %v325 = vsel %vm318, %v312, 0.0
      %326 = vadd.xlane.f32.xlu0 %v325
      %v327 = vpop.xlane.xlu0 %326
      %v328 = vsel %vm318, %v313, 0.0
      %329 = vadd.xlane.f32.xlu0 %v328
      %v330 = vpop.xlane.xlu0 %329
      %v331 = vsel %vm318, %v314, 0.0
      %332 = vadd.xlane.f32.xlu0 %v331
      %v333 = vpop.xlane.xlu0 %332
      %v334 = vsel %vm318, %v315, 0.0
      %335 = vadd.xlane.f32.xlu0 %v334
      %v336 = vpop.xlane.xlu0 %335
      %v337 = vsel %vm318, %v316, 0.0
      %338 = vadd.xlane.f32.xlu0 %v337
      %v339 = vpop.xlane.xlu0 %338
      %v340 = vsel %vm318, %v317, 0.0
      %341 = vadd.xlane.f32.xlu0 %v340
      %v342 = vpop.xlane.xlu0 %341
      %v343 = vrcp.pop 32.0
      %v344 = vmul.f32 %v321, %v343
      %v345 = vmul.f32 %v324, %v343
      %v346 = vmul.f32 %v327, %v343
      %v347 = vmul.f32 %v330, %v343
      %v348 = vmul.f32 %v333, %v343
      %v349 = vmul.f32 %v336, %v343
      %v350 = vmul.f32 %v339, %v343
      %v351 = vmul.f32 %v342, %v343
      %v352 = vsub.f32 %v310, %v344
      %v353 = vsub.f32 %v311, %v345
      %v354 = vsub.f32 %v312, %v346
      %v355 = vsub.f32 %v313, %v347
      %v356 = vsub.f32 %v314, %v348
      %v357 = vsub.f32 %v315, %v349
      %v358 = vsub.f32 %v316, %v350
      %v359 = vsub.f32 %v317, %v351
      %v360 = vmul.f32 %v352, %v352
      %v361 = vmul.f32 %v353, %v353
      %v362 = vmul.f32 %v354, %v354
      %v363 = vmul.f32 %v355, %v355
      %v364 = vmul.f32 %v356, %v356
      %v365 = vmul.f32 %v357, %v357
      %v366 = vmul.f32 %v358, %v358
      %v367 = vmul.f32 %v359, %v359
      %v368 = vsel %vm318, %v360, 0.0
      %369 = vadd.xlane.f32.xlu0 %v368
      %v370 = vpop.xlane.xlu0 %369
      %v371 = vsel %vm318, %v361, 0.0
      %372 = vadd.xlane.f32.xlu0 %v371
      %v373 = vpop.xlane.xlu0 %372
      %v374 = vsel %vm318, %v362, 0.0
      %375 = vadd.xlane.f32.xlu0 %v374
      %v376 = vpop.xlane.xlu0 %375
      %v377 = vsel %vm318, %v363, 0.0
      %378 = vadd.xlane.f32.xlu0 %v377
      %v379 = vpop.xlane.xlu0 %378
      %v380 = vsel %vm318, %v364, 0.0
      %381 = vadd.xlane.f32.xlu0 %v380
      %v382 = vpop.xlane.xlu0 %381
      %v383 = vsel %vm318, %v365, 0.0
      %384 = vadd.xlane.f32.xlu0 %v383
      %v385 = vpop.xlane.xlu0 %384
      %v386 = vsel %vm318, %v366, 0.0
      %387 = vadd.xlane.f32.xlu0 %v386
      %v388 = vpop.xlane.xlu0 %387
      %v389 = vsel %vm318, %v367, 0.0
      %390 = vadd.xlane.f32.xlu0 %v389
      %v391 = vpop.xlane.xlu0 %390
      %v392 = vmul.f32 %v370, %v343
      %v393 = vmul.f32 %v373, %v343
      %v394 = vmul.f32 %v376, %v343
      %v395 = vmul.f32 %v379, %v343
      %v396 = vmul.f32 %v382, %v343
      %v397 = vmul.f32 %v385, %v343
      %v398 = vmul.f32 %v388, %v343
      %v399 = vmul.f32 %v391, %v343
      %v400 = vadd.f32 %v392, 1e-05
      %v401 = vadd.f32 %v393, 1e-05
      %v402 = vadd.f32 %v394, 1e-05
      %v403 = vadd.f32 %v395, 1e-05
      %v404 = vadd.f32 %v396, 1e-05
      %v405 = vadd.f32 %v397, 1e-05
      %v406 = vadd.f32 %v398, 1e-05
      %v407 = vadd.f32 %v399, 1e-05
      %v408 = vrsqrt.pop %v400
      %v409 = vrsqrt.pop %v401
      %v410 = vrsqrt.pop %v402
      %v411 = vrsqrt.pop %v403
      %v412 = vrsqrt.pop %v404
      %v413 = vrsqrt.pop %v405
      %v414 = vrsqrt.pop %v406
      %v415 = vrsqrt.pop %v407
      %v416 = vmul.f32 %v352, %v408
      %v417 = vmul.f32 %v353, %v409
      %v418 = vmul.f32 %v354, %v410
      %v419 = vmul.f32 %v355, %v411
      %v420 = vmul.f32 %v356, %v412
      %v421 = vmul.f32 %v357, %v413
      %v422 = vmul.f32 %v358, %v414
      %v423 = vmul.f32 %v359, %v415
      %v424 = vld [vmem:[%s1] sm:$0x1]
      %v426 = vlaneseq
      %v427 = vshrl.u32 %v426, 7
      %v428 = vsub.s32 0, %v427
      %v429 = vrot.slane %v424, %v428
      %v431 = vmul.f32 %v416, %v429
      %v432 = vmul.f32 %v417, %v429
      %v433 = vmul.f32 %v418, %v429
      %v434 = vmul.f32 %v419, %v429
      %v435 = vmul.f32 %v420, %v429
      %v436 = vmul.f32 %v421, %v429
      %v437 = vmul.f32 %v422, %v429
      %v438 = vmul.f32 %v423, %v429
      %v439 = vld [vmem:[%s2] sm:$0x1]
      %v441 = vlaneseq
      %v442 = vshrl.u32 %v441, 7
      %v443 = vsub.s32 0, %v442
      %v444 = vrot.slane %v439, %v443
      %v446 = vadd.f32 %v431, %v444
      %v447 = vadd.f32 %v432, %v444
      %v448 = vadd.f32 %v433, %v444
      %v449 = vadd.f32 %v434, %v444
      %v450 = vadd.f32 %v435, %v444
      %v451 = vadd.f32 %v436, %v444
      %v452 = vadd.f32 %v437, %v444
      %v453 = vadd.f32 %v438, %v444
      %v454 = vpack.c.bf16 %v447, %v446
      %v455 = vpack.c.bf16 %v449, %v448
      %v456 = vpack.c.bf16 %v451, %v450
      %v457 = vpack.c.bf16 %v453, %v452
      %v458 = vld [vmem:[%s3] sm:$0xf]
      %v459 = vld [vmem:[%s3 + $0x4] sm:$0xf]
      %v460 = vld [vmem:[%s3 + $0x8] sm:$0xf]
      %v461 = vld [vmem:[%s3 + $0xc] sm:$0xf]
      %v462 = vld [vmem:[%s4] sm:$0x1]
      %v464 = vlaneseq
      %v465 = vshrl.u32 %v464, 7
      %v466 = vsub.s32 0, %v465
      %v467 = vrot.slane %v462, %v466
      %v473 = vunpack.c.l.b16 %v458
      %v474 = vunpack.c.l.b16 %v459
      %v475 = vunpack.c.l.b16 %v460
      %v476 = vunpack.c.l.b16 %v461
      %v477 = vpack.c.b16 %v474, %v473
      %v478 = vpack.c.b16 %v476, %v475
      %v482 = vsel %vm318, %v454, 0
      %v485 = vsel %vm318, %v455, 0
      %v488 = vsel %vm318, %v456, 0
      %v491 = vsel %vm318, %v457, 0
      %493 = vmatprep.subr.bf16.mxu0 0
      %494 = vmatpush1.bf16.msra.mxu0 0
      %495 = vmatprep.subr.bf16.mxu0 0
      %496 = vmatpush1.bf16.msra.mxu0 0
      %497 = vmatprep.subr.bf16.mxu0 0
      %498 = vmatpush1.bf16.msra.mxu0 0
      %499 = vmatprep.subr.bf16.mxu0 0
      %500 = vmatpush1.bf16.msra.mxu0 0
      %501 = vmatprep.subr.bf16.mxu0 0
      %502 = vmatpush1.bf16.msra.mxu0 0
      %503 = vmatprep.subr.bf16.mxu0 0
      %504 = vmatpush1.bf16.msra.mxu0 0
      %505 = vmatprep.subr.bf16.mxu0 0
      %506 = vmatpush1.bf16.msra.mxu0 %v478
      %507 = vmatprep.subr.bf16.mxu0 0
      %508 = vmatpush1.bf16.msra.mxu0 %v477
      %509 = vmatprep.subr.bf16.mxu0 0
      %510 = vmatpush2.bf16.msra.mxu0 0
      %511 = vmatprep.subr.bf16.mxu0 0
      %512 = vmatpush2.bf16.msra.mxu0 0
      %513 = vmatprep.subr.bf16.mxu0 0
      %514 = vmatpush2.bf16.msra.mxu0 0
      %515 = vmatprep.subr.bf16.mxu0 0
      %516 = vmatpush2.bf16.msra.mxu0 0
      %517 = vmatprep.subr.bf16.mxu0 0
      %518 = vmatpush2.bf16.msra.mxu0 0
      %519 = vmatprep.subr.bf16.mxu0 0
      %520 = vmatpush2.bf16.msra.mxu0 0
      %521 = vmatprep.subr.bf16.mxu0 0
      %522 = vmatpush2.bf16.msra.mxu0 0
      %523 = vmatprep.subr.bf16.mxu0 0
      %524 = vmatpush2.bf16.msra.mxu0 0
      %525 = vmatprep.mubr.bf16.mxu0 0
      %526 = vmatmul.mubr.bf16.gmra.mxu0 %v482
      %v527 = vpop.f32.mrf.mxu0
      %v528 = vadd.f32 %v467, %v527
      %v529 = vpop.f32.mrf.mxu0
      %v530 = vpop.f32.mrf.mxu0
      %v531 = vadd.f32 %v467, %v530
      %v532 = vpop.f32.mrf.mxu0
      %533 = vmatprep.mubr.bf16.mxu0 0
      %534 = vmatmul.mubr.bf16.gmra.mxu0 %v485
      %v535 = vpop.f32.mrf.mxu0
      %v536 = vadd.f32 %v467, %v535
      %v537 = vpop.f32.mrf.mxu0
      %v538 = vpop.f32.mrf.mxu0
      %v539 = vadd.f32 %v467, %v538
      %v540 = vpop.f32.mrf.mxu0
      %541 = vmatprep.mubr.bf16.mxu0 0
      %542 = vmatmul.mubr.bf16.gmra.mxu0 %v488
      %v543 = vpop.f32.mrf.mxu0
      %v544 = vadd.f32 %v467, %v543
      %v545 = vpop.f32.mrf.mxu0
      %v546 = vpop.f32.mrf.mxu0
      %v547 = vadd.f32 %v467, %v546
      %v548 = vpop.f32.mrf.mxu0
      %549 = vmatprep.mubr.bf16.mxu0 0
      %550 = vmatmul.mubr.bf16.gmra.mxu0 %v491
      %v551 = vpop.f32.mrf.mxu0
      %v552 = vadd.f32 %v467, %v551
      %v553 = vpop.f32.mrf.mxu0
      %v554 = vpop.f32.mrf.mxu0
      %v555 = vadd.f32 %v467, %v554
      %v556 = vpop.f32.mrf.mxu0
      %557 = vdwg.mxu0
      %s558 = scalar_lea.vmem %s3, 16
      %v559 = vld [vmem:[%s558] sm:$0xf]
      %v560 = vld [vmem:[%s558 + $0x4] sm:$0xf]
      %v561 = vld [vmem:[%s558 + $0x8] sm:$0xf]
      %v562 = vld [vmem:[%s558 + $0xc] sm:$0xf]
      %s563 = scalar_lea.vmem %s4, 1
      %v564 = vld [vmem:[%s563] sm:$0x1]
      %v566 = vlaneseq
      %v567 = vshrl.u32 %v566, 7
      %v568 = vsub.s32 0, %v567
      %v569 = vrot.slane %v564, %v568
      %v575 = vunpack.c.l.b16 %v559
      %v576 = vunpack.c.l.b16 %v560
      %v577 = vunpack.c.l.b16 %v561
      %v578 = vunpack.c.l.b16 %v562
      %v579 = vpack.c.b16 %v576, %v575
      %v580 = vpack.c.b16 %v578, %v577
      %583 = vmatprep.subr.bf16.mxu0 0
      %584 = vmatpush1.bf16.msra.mxu0 0
      %585 = vmatprep.subr.bf16.mxu0 0
      %586 = vmatpush1.bf16.msra.mxu0 0
      %587 = vmatprep.subr.bf16.mxu0 0
      %588 = vmatpush1.bf16.msra.mxu0 0
      %589 = vmatprep.subr.bf16.mxu0 0
      %590 = vmatpush1.bf16.msra.mxu0 0
      %591 = vmatprep.subr.bf16.mxu0 0
      %592 = vmatpush1.bf16.msra.mxu0 0
      %593 = vmatprep.subr.bf16.mxu0 0
      %594 = vmatpush1.bf16.msra.mxu0 0
      %595 = vmatprep.subr.bf16.mxu0 0
      %596 = vmatpush1.bf16.msra.mxu0 %v580
      %597 = vmatprep.subr.bf16.mxu0 0
      %598 = vmatpush1.bf16.msra.mxu0 %v579
      %599 = vmatprep.subr.bf16.mxu0 0
      %600 = vmatpush2.bf16.msra.mxu0 0
      %601 = vmatprep.subr.bf16.mxu0 0
      %602 = vmatpush2.bf16.msra.mxu0 0
      %603 = vmatprep.subr.bf16.mxu0 0
      %604 = vmatpush2.bf16.msra.mxu0 0
      %605 = vmatprep.subr.bf16.mxu0 0
      %606 = vmatpush2.bf16.msra.mxu0 0
      %607 = vmatprep.subr.bf16.mxu0 0
      %608 = vmatpush2.bf16.msra.mxu0 0
      %609 = vmatprep.subr.bf16.mxu0 0
      %610 = vmatpush2.bf16.msra.mxu0 0
      %611 = vmatprep.subr.bf16.mxu0 0
      %612 = vmatpush2.bf16.msra.mxu0 0
      %613 = vmatprep.subr.bf16.mxu0 0
      %614 = vmatpush2.bf16.msra.mxu0 0
      %615 = vmatprep.mubr.bf16.mxu0 0
      %616 = vmatmul.mubr.bf16.gmra.mxu0 %v482
      %v617 = vpop.f32.mrf.mxu0
      %v618 = vadd.f32 %v569, %v617
      %v619 = vpop.f32.mrf.mxu0
      %v620 = vpop.f32.mrf.mxu0
      %v621 = vadd.f32 %v569, %v620
      %v622 = vpop.f32.mrf.mxu0
      %623 = vmatprep.mubr.bf16.mxu0 0
      %624 = vmatmul.mubr.bf16.gmra.mxu0 %v485
      %v625 = vpop.f32.mrf.mxu0
      %v626 = vadd.f32 %v569, %v625
      %v627 = vpop.f32.mrf.mxu0
      %v628 = vpop.f32.mrf.mxu0
      %v629 = vadd.f32 %v569, %v628
      %v630 = vpop.f32.mrf.mxu0
      %631 = vmatprep.mubr.bf16.mxu0 0
      %632 = vmatmul.mubr.bf16.gmra.mxu0 %v488
      %v633 = vpop.f32.mrf.mxu0
      %v634 = vadd.f32 %v569, %v633
      %v635 = vpop.f32.mrf.mxu0
      %v636 = vpop.f32.mrf.mxu0
      %v637 = vadd.f32 %v569, %v636
      %v638 = vpop.f32.mrf.mxu0
      %639 = vmatprep.mubr.bf16.mxu0 0
      %640 = vmatmul.mubr.bf16.gmra.mxu0 %v491
      %v641 = vpop.f32.mrf.mxu0
      %v642 = vadd.f32 %v569, %v641
      %v643 = vpop.f32.mrf.mxu0
      %v644 = vpop.f32.mrf.mxu0
      %v645 = vadd.f32 %v569, %v644
      %v646 = vpop.f32.mrf.mxu0
      %647 = vdwg.mxu0
      %s648 = scalar_lea.vmem %s3, 32
      %v649 = vld [vmem:[%s648] sm:$0xf]
      %v650 = vld [vmem:[%s648 + $0x4] sm:$0xf]
      %v651 = vld [vmem:[%s648 + $0x8] sm:$0xf]
      %v652 = vld [vmem:[%s648 + $0xc] sm:$0xf]
      %s653 = scalar_lea.vmem %s4, 2
      %v654 = vld [vmem:[%s653] sm:$0x1]
      %v656 = vlaneseq
      %v657 = vshrl.u32 %v656, 7
      %v658 = vsub.s32 0, %v657
      %v659 = vrot.slane %v654, %v658
      %v665 = vunpack.c.l.b16 %v649
      %v666 = vunpack.c.l.b16 %v650
      %v667 = vunpack.c.l.b16 %v651
      %v668 = vunpack.c.l.b16 %v652
      %v669 = vpack.c.b16 %v666, %v665
      %v670 = vpack.c.b16 %v668, %v667
      %673 = vmatprep.subr.bf16.mxu0 0
      %674 = vmatpush1.bf16.msra.mxu0 0
      %675 = vmatprep.subr.bf16.mxu0 0
      %676 = vmatpush1.bf16.msra.mxu0 0
      %677 = vmatprep.subr.bf16.mxu0 0
      %678 = vmatpush1.bf16.msra.mxu0 0
      %679 = vmatprep.subr.bf16.mxu0 0
      %680 = vmatpush1.bf16.msra.mxu0 0
      %681 = vmatprep.subr.bf16.mxu0 0
      %682 = vmatpush1.bf16.msra.mxu0 0
      %683 = vmatprep.subr.bf16.mxu0 0
      %684 = vmatpush1.bf16.msra.mxu0 0
      %685 = vmatprep.subr.bf16.mxu0 0
      %686 = vmatpush1.bf16.msra.mxu0 %v670
      %687 = vmatprep.subr.bf16.mxu0 0
      %688 = vmatpush1.bf16.msra.mxu0 %v669
      %689 = vmatprep.subr.bf16.mxu0 0
      %690 = vmatpush2.bf16.msra.mxu0 0
      %691 = vmatprep.subr.bf16.mxu0 0
      %692 = vmatpush2.bf16.msra.mxu0 0
      %693 = vmatprep.subr.bf16.mxu0 0
      %694 = vmatpush2.bf16.msra.mxu0 0
      %695 = vmatprep.subr.bf16.mxu0 0
      %696 = vmatpush2.bf16.msra.mxu0 0
      %697 = vmatprep.subr.bf16.mxu0 0
      %698 = vmatpush2.bf16.msra.mxu0 0
      %699 = vmatprep.subr.bf16.mxu0 0
      %700 = vmatpush2.bf16.msra.mxu0 0
      %701 = vmatprep.subr.bf16.mxu0 0
      %702 = vmatpush2.bf16.msra.mxu0 0
      %703 = vmatprep.subr.bf16.mxu0 0
      %704 = vmatpush2.bf16.msra.mxu0 0
      %705 = vmatprep.mubr.bf16.mxu0 0
      %706 = vmatmul.mubr.bf16.gmra.mxu0 %v482
      %v707 = vpop.f32.mrf.mxu0
      %v708 = vadd.f32 %v659, %v707
      %v709 = vpop.f32.mrf.mxu0
      %v710 = vpop.f32.mrf.mxu0
      %v711 = vadd.f32 %v659, %v710
      %v712 = vpop.f32.mrf.mxu0
      %713 = vmatprep.mubr.bf16.mxu0 0
      %714 = vmatmul.mubr.bf16.gmra.mxu0 %v485
      %v715 = vpop.f32.mrf.mxu0
      %v716 = vadd.f32 %v659, %v715
      %v717 = vpop.f32.mrf.mxu0
      %v718 = vpop.f32.mrf.mxu0
      %v719 = vadd.f32 %v659, %v718
      %v720 = vpop.f32.mrf.mxu0
      %721 = vmatprep.mubr.bf16.mxu0 0
      %722 = vmatmul.mubr.bf16.gmra.mxu0 %v488
      %v723 = vpop.f32.mrf.mxu0
      %v724 = vadd.f32 %v659, %v723
      %v725 = vpop.f32.mrf.mxu0
      %v726 = vpop.f32.mrf.mxu0
      %v727 = vadd.f32 %v659, %v726
      %v728 = vpop.f32.mrf.mxu0
      %729 = vmatprep.mubr.bf16.mxu0 0
      %730 = vmatmul.mubr.bf16.gmra.mxu0 %v491
      %v731 = vpop.f32.mrf.mxu0
      %v732 = vadd.f32 %v659, %v731
      %v733 = vpop.f32.mrf.mxu0
      %v734 = vpop.f32.mrf.mxu0
      %v735 = vadd.f32 %v659, %v734
      %v736 = vpop.f32.mrf.mxu0
      %737 = vdwg.mxu0
      %v738 = vpack.c.bf16 %v531, %v528
      %v739 = vpack.c.bf16 %v539, %v536
      %v740 = vpack.c.bf16 %v547, %v544
      %v741 = vpack.c.bf16 %v555, %v552
      %v742 = vpack.c.bf16 %v621, %v618
      %v743 = vpack.c.bf16 %v629, %v626
      %v744 = vpack.c.bf16 %v637, %v634
      %v745 = vpack.c.bf16 %v645, %v642
      %v746 = vpack.c.bf16 %v711, %v708
      %v747 = vpack.c.bf16 %v719, %v716
      %v748 = vpack.c.bf16 %v727, %v724
      %v749 = vpack.c.bf16 %v735, %v732
      %v750 = vld [vmem:[%s7] sm:$0xff]
      %v751 = vld [vmem:[%s7 + $0x8] sm:$0xff]
      %vm752 = vcmask 64512
      %v754 = vsel %vm752, %v738, 0
      %v757 = vsel %vm752, %v742, 0
      %759 = vmatprep.subr.bf16.mxu0 0
      %760 = vmatpush1.bf16.xpose.msra.mxu0 0
      %761 = vmatprep.subr.bf16.mxu0 0
      %762 = vmatpush1.bf16.xpose.msra.mxu0 0
      %763 = vmatprep.subr.bf16.mxu0 0
      %764 = vmatpush1.bf16.xpose.msra.mxu0 0
      %765 = vmatprep.subr.bf16.mxu0 0
      %766 = vmatpush1.bf16.xpose.msra.mxu0 0
      %767 = vmatprep.subr.bf16.mxu0 0
      %768 = vmatpush1.bf16.xpose.msra.mxu0 0
      %769 = vmatprep.subr.bf16.mxu0 0
      %770 = vmatpush1.bf16.xpose.msra.mxu0 0
      %771 = vmatprep.subr.bf16.mxu0 0
      %772 = vmatpush1.bf16.xpose.msra.mxu0 0
      %773 = vmatprep.subr.bf16.mxu0 0
      %774 = vmatpush1.bf16.xpose.msra.mxu0 %v757
      %775 = vmatprep.subr.bf16.mxu0 0
      %776 = vmatpush2.bf16.xpose.msra.mxu0 0
      %777 = vmatprep.subr.bf16.mxu0 0
      %778 = vmatpush2.bf16.xpose.msra.mxu0 0
      %779 = vmatprep.subr.bf16.mxu0 0
      %780 = vmatpush2.bf16.xpose.msra.mxu0 0
      %781 = vmatprep.subr.bf16.mxu0 0
      %782 = vmatpush2.bf16.xpose.msra.mxu0 0
      %783 = vmatprep.subr.bf16.mxu0 0
      %784 = vmatpush2.bf16.xpose.msra.mxu0 0
      %785 = vmatprep.subr.bf16.mxu0 0
      %786 = vmatpush2.bf16.xpose.msra.mxu0 0
      %787 = vmatprep.subr.bf16.mxu0 0
      %788 = vmatpush2.bf16.xpose.msra.mxu0 0
      %789 = vmatprep.subr.bf16.mxu0 0
      %790 = vmatpush2.bf16.xpose.msra.mxu0 0
      %791 = vmatprep.mubr.bf16.mxu0 0
      %792 = vmatmul.mubr.bf16.gmra.mxu0 %v754
      %v793 = vpop.f32.mrf.mxu0
      %v794 = vadd.f32 %v750, %v793
      %v795 = vpop.f32.mrf.mxu0
      %v796 = vpop.f32.mrf.mxu0
      %v797 = vadd.f32 %v751, %v796
      %v798 = vpop.f32.mrf.mxu0
      %799 = vdwg.mxu0
      %v801 = vsel %vm752, %v739, 0
      %v804 = vsel %vm752, %v743, 0
      %806 = vmatprep.subr.bf16.mxu0 0
      %807 = vmatpush1.bf16.xpose.msra.mxu0 0
      %808 = vmatprep.subr.bf16.mxu0 0
      %809 = vmatpush1.bf16.xpose.msra.mxu0 0
      %810 = vmatprep.subr.bf16.mxu0 0
      %811 = vmatpush1.bf16.xpose.msra.mxu0 0
      %812 = vmatprep.subr.bf16.mxu0 0
      %813 = vmatpush1.bf16.xpose.msra.mxu0 0
      %814 = vmatprep.subr.bf16.mxu0 0
      %815 = vmatpush1.bf16.xpose.msra.mxu0 0
      %816 = vmatprep.subr.bf16.mxu0 0
      %817 = vmatpush1.bf16.xpose.msra.mxu0 0
      %818 = vmatprep.subr.bf16.mxu0 0
      %819 = vmatpush1.bf16.xpose.msra.mxu0 0
      %820 = vmatprep.subr.bf16.mxu0 0
      %821 = vmatpush1.bf16.xpose.msra.mxu0 %v804
      %822 = vmatprep.subr.bf16.mxu0 0
      %823 = vmatpush2.bf16.xpose.msra.mxu0 0
      %824 = vmatprep.subr.bf16.mxu0 0
      %825 = vmatpush2.bf16.xpose.msra.mxu0 0
      %826 = vmatprep.subr.bf16.mxu0 0
      %827 = vmatpush2.bf16.xpose.msra.mxu0 0
      %828 = vmatprep.subr.bf16.mxu0 0
      %829 = vmatpush2.bf16.xpose.msra.mxu0 0
      %830 = vmatprep.subr.bf16.mxu0 0
      %831 = vmatpush2.bf16.xpose.msra.mxu0 0
      %832 = vmatprep.subr.bf16.mxu0 0
      %833 = vmatpush2.bf16.xpose.msra.mxu0 0
      %834 = vmatprep.subr.bf16.mxu0 0
      %835 = vmatpush2.bf16.xpose.msra.mxu0 0
      %836 = vmatprep.subr.bf16.mxu0 0
      %837 = vmatpush2.bf16.xpose.msra.mxu0 0
      %838 = vmatprep.mubr.bf16.mxu0 0
      %839 = vmatmul.mubr.bf16.gmra.mxu0 %v801
      %v840 = vpop.f32.mrf.mxu0
      %v841 = vadd.f32 %v750, %v840
      %v842 = vpop.f32.mrf.mxu0
      %v843 = vpop.f32.mrf.mxu0
      %v844 = vadd.f32 %v751, %v843
      %v845 = vpop.f32.mrf.mxu0
      %846 = vdwg.mxu0
      %v848 = vsel %vm752, %v740, 0
      %v851 = vsel %vm752, %v744, 0
      %853 = vmatprep.subr.bf16.mxu0 0
      %854 = vmatpush1.bf16.xpose.msra.mxu0 0
      %855 = vmatprep.subr.bf16.mxu0 0
      %856 = vmatpush1.bf16.xpose.msra.mxu0 0
      %857 = vmatprep.subr.bf16.mxu0 0
      %858 = vmatpush1.bf16.xpose.msra.mxu0 0
      %859 = vmatprep.subr.bf16.mxu0 0
      %860 = vmatpush1.bf16.xpose.msra.mxu0 0
      %861 = vmatprep.subr.bf16.mxu0 0
      %862 = vmatpush1.bf16.xpose.msra.mxu0 0
      %863 = vmatprep.subr.bf16.mxu0 0
      %864 = vmatpush1.bf16.xpose.msra.mxu0 0
      %865 = vmatprep.subr.bf16.mxu0 0
      %866 = vmatpush1.bf16.xpose.msra.mxu0 0
      %867 = vmatprep.subr.bf16.mxu0 0
      %868 = vmatpush1.bf16.xpose.msra.mxu0 %v851
      %869 = vmatprep.subr.bf16.mxu0 0
      %870 = vmatpush2.bf16.xpose.msra.mxu0 0
      %871 = vmatprep.subr.bf16.mxu0 0
      %872 = vmatpush2.bf16.xpose.msra.mxu0 0
      %873 = vmatprep.subr.bf16.mxu0 0
      %874 = vmatpush2.bf16.xpose.msra.mxu0 0
      %875 = vmatprep.subr.bf16.mxu0 0
      %876 = vmatpush2.bf16.xpose.msra.mxu0 0
      %877 = vmatprep.subr.bf16.mxu0 0
      %878 = vmatpush2.bf16.xpose.msra.mxu0 0
      %879 = vmatprep.subr.bf16.mxu0 0
      %880 = vmatpush2.bf16.xpose.msra.mxu0 0
      %881 = vmatprep.subr.bf16.mxu0 0
      %882 = vmatpush2.bf16.xpose.msra.mxu0 0
      %883 = vmatprep.subr.bf16.mxu0 0
      %884 = vmatpush2.bf16.xpose.msra.mxu0 0
      %885 = vmatprep.mubr.bf16.mxu0 0
      %886 = vmatmul.mubr.bf16.gmra.mxu0 %v848
      %v887 = vpop.f32.mrf.mxu0
      %v888 = vadd.f32 %v750, %v887
      %v889 = vpop.f32.mrf.mxu0
      %v890 = vpop.f32.mrf.mxu0
      %v891 = vadd.f32 %v751, %v890
      %v892 = vpop.f32.mrf.mxu0
      %893 = vdwg.mxu0
      %v895 = vsel %vm752, %v741, 0
      %v898 = vsel %vm752, %v745, 0
      %900 = vmatprep.subr.bf16.mxu0 0
      %901 = vmatpush1.bf16.xpose.msra.mxu0 0
      %902 = vmatprep.subr.bf16.mxu0 0
      %903 = vmatpush1.bf16.xpose.msra.mxu0 0
      %904 = vmatprep.subr.bf16.mxu0 0
      %905 = vmatpush1.bf16.xpose.msra.mxu0 0
      %906 = vmatprep.subr.bf16.mxu0 0
      %907 = vmatpush1.bf16.xpose.msra.mxu0 0
      %908 = vmatprep.subr.bf16.mxu0 0
      %909 = vmatpush1.bf16.xpose.msra.mxu0 0
      %910 = vmatprep.subr.bf16.mxu0 0
      %911 = vmatpush1.bf16.xpose.msra.mxu0 0
      %912 = vmatprep.subr.bf16.mxu0 0
      %913 = vmatpush1.bf16.xpose.msra.mxu0 0
      %914 = vmatprep.subr.bf16.mxu0 0
      %915 = vmatpush1.bf16.xpose.msra.mxu0 %v898
      %916 = vmatprep.subr.bf16.mxu0 0
      %917 = vmatpush2.bf16.xpose.msra.mxu0 0
      %918 = vmatprep.subr.bf16.mxu0 0
      %919 = vmatpush2.bf16.xpose.msra.mxu0 0
      %920 = vmatprep.subr.bf16.mxu0 0
      %921 = vmatpush2.bf16.xpose.msra.mxu0 0
      %922 = vmatprep.subr.bf16.mxu0 0
      %923 = vmatpush2.bf16.xpose.msra.mxu0 0
      %924 = vmatprep.subr.bf16.mxu0 0
      %925 = vmatpush2.bf16.xpose.msra.mxu0 0
      %926 = vmatprep.subr.bf16.mxu0 0
      %927 = vmatpush2.bf16.xpose.msra.mxu0 0
      %928 = vmatprep.subr.bf16.mxu0 0
      %929 = vmatpush2.bf16.xpose.msra.mxu0 0
      %930 = vmatprep.subr.bf16.mxu0 0
      %931 = vmatpush2.bf16.xpose.msra.mxu0 0
      %932 = vmatprep.mubr.bf16.mxu0 0
      %933 = vmatmul.mubr.bf16.gmra.mxu0 %v895
      %v934 = vpop.f32.mrf.mxu0
      %v935 = vadd.f32 %v750, %v934
      %v936 = vpop.f32.mrf.mxu0
      %v937 = vpop.f32.mrf.mxu0
      %v938 = vadd.f32 %v751, %v937
      %v939 = vpop.f32.mrf.mxu0
      %940 = vdwg.mxu0
      %vm941 = vcmask 130048
      %v942 = vsel %vm941, %v794, -inf
      %943 = vmax.xlane.f32.xlu0 %v942
      %v944 = vpop.xlane.xlu0 %943
      %v945 = vsel %vm941, %v797, -inf
      %946 = vmax.xlane.f32.xlu0 %v945
      %v947 = vpop.xlane.xlu0 %946
      %v948 = vsel %vm941, %v841, -inf
      %949 = vmax.xlane.f32.xlu0 %v948
      %v950 = vpop.xlane.xlu0 %949
      %v951 = vsel %vm941, %v844, -inf
      %952 = vmax.xlane.f32.xlu0 %v951
      %v953 = vpop.xlane.xlu0 %952
      %v954 = vsel %vm941, %v888, -inf
      %955 = vmax.xlane.f32.xlu0 %v954
      %v956 = vpop.xlane.xlu0 %955
      %v957 = vsel %vm941, %v891, -inf
      %958 = vmax.xlane.f32.xlu0 %v957
      %v959 = vpop.xlane.xlu0 %958
      %v960 = vsel %vm941, %v935, -inf
      %961 = vmax.xlane.f32.xlu0 %v960
      %v962 = vpop.xlane.xlu0 %961
      %v963 = vsel %vm941, %v938, -inf
      %964 = vmax.xlane.f32.xlu0 %v963
      %v965 = vpop.xlane.xlu0 %964
      %v966 = vsub.f32 %v794, %v944
      %v967 = vsub.f32 %v797, %v947
      %v968 = vsub.f32 %v841, %v950
      %v969 = vsub.f32 %v844, %v953
      %v970 = vsub.f32 %v888, %v956
      %v971 = vsub.f32 %v891, %v959
      %v972 = vsub.f32 %v935, %v962
      %v973 = vsub.f32 %v938, %v965
      %v974 = vmul.f32 %v966, 1.442695
      %v975 = vpow.pop %v974
      %v976 = vmul.f32 %v967, 1.442695
      %v977 = vpow.pop %v976
      %v978 = vmul.f32 %v968, 1.442695
      %v979 = vpow.pop %v978
      %v980 = vmul.f32 %v969, 1.442695
      %v981 = vpow.pop %v980
      %v982 = vmul.f32 %v970, 1.442695
      %v983 = vpow.pop %v982
      %v984 = vmul.f32 %v971, 1.442695
      %v985 = vpow.pop %v984
      %v986 = vmul.f32 %v972, 1.442695
      %v987 = vpow.pop %v986
      %v988 = vmul.f32 %v973, 1.442695
      %v989 = vpow.pop %v988
      %v990 = vsel %vm941, %v975, 0.0
      %991 = vadd.xlane.f32.xlu0 %v990
      %v992 = vpop.xlane.xlu0 %991
      %v993 = vsel %vm941, %v977, 0.0
      %994 = vadd.xlane.f32.xlu0 %v993
      %v995 = vpop.xlane.xlu0 %994
      %v996 = vsel %vm941, %v979, 0.0
      %997 = vadd.xlane.f32.xlu0 %v996
      %v998 = vpop.xlane.xlu0 %997
      %v999 = vsel %vm941, %v981, 0.0
      %1000 = vadd.xlane.f32.xlu0 %v999
      %v1001 = vpop.xlane.xlu0 %1000
      %v1002 = vsel %vm941, %v983, 0.0
      %1003 = vadd.xlane.f32.xlu0 %v1002
      %v1004 = vpop.xlane.xlu0 %1003
      %v1005 = vsel %vm941, %v985, 0.0
      %1006 = vadd.xlane.f32.xlu0 %v1005
      %v1007 = vpop.xlane.xlu0 %1006
      %v1008 = vsel %vm941, %v987, 0.0
      %1009 = vadd.xlane.f32.xlu0 %v1008
      %v1010 = vpop.xlane.xlu0 %1009
      %v1011 = vsel %vm941, %v989, 0.0
      %1012 = vadd.xlane.f32.xlu0 %v1011
      %v1013 = vpop.xlane.xlu0 %1012
      %v1014 = vpack.c.bf16 %v977, %v975
      %v1015 = vpack.c.bf16 %v981, %v979
      %v1016 = vpack.c.bf16 %v985, %v983
      %v1017 = vpack.c.bf16 %v989, %v987
      %v1019 = vsel %vm941, %v1014, 0
      %1021 = vmatprep.subr.bf16.mxu0 0
      %1022 = vmatpush1.bf16.msra.mxu0 0
      %1023 = vmatprep.subr.bf16.mxu0 0
      %1024 = vmatpush1.bf16.msra.mxu0 0
      %1025 = vmatprep.subr.bf16.mxu0 0
      %1026 = vmatpush1.bf16.msra.mxu0 0
      %1027 = vmatprep.subr.bf16.mxu0 0
      %1028 = vmatpush1.bf16.msra.mxu0 0
      %1029 = vmatprep.subr.bf16.mxu0 0
      %1030 = vmatpush1.bf16.msra.mxu0 0
      %1031 = vmatprep.subr.bf16.mxu0 0
      %1032 = vmatpush1.bf16.msra.mxu0 0
      %1033 = vmatprep.subr.bf16.mxu0 0
      %1034 = vmatpush1.bf16.msra.mxu0 0
      %1035 = vmatprep.subr.bf16.mxu0 0
      %1036 = vmatpush1.bf16.msra.mxu0 %v746
      %1037 = vmatprep.subr.bf16.mxu0 0
      %1038 = vmatpush2.bf16.msra.mxu0 0
      %1039 = vmatprep.subr.bf16.mxu0 0
      %1040 = vmatpush2.bf16.msra.mxu0 0
      %1041 = vmatprep.subr.bf16.mxu0 0
      %1042 = vmatpush2.bf16.msra.mxu0 0
      %1043 = vmatprep.subr.bf16.mxu0 0
      %1044 = vmatpush2.bf16.msra.mxu0 0
      %1045 = vmatprep.subr.bf16.mxu0 0
      %1046 = vmatpush2.bf16.msra.mxu0 0
      %1047 = vmatprep.subr.bf16.mxu0 0
      %1048 = vmatpush2.bf16.msra.mxu0 0
      %1049 = vmatprep.subr.bf16.mxu0 0
      %1050 = vmatpush2.bf16.msra.mxu0 0
      %1051 = vmatprep.subr.bf16.mxu0 0
      %1052 = vmatpush2.bf16.msra.mxu0 0
      %1053 = vmatprep.mubr.bf16.mxu0 0
      %1054 = vmatmul.mubr.bf16.gmra.mxu0 %v1019
      %v1055 = vpop.f32.mrf.mxu0
      %v1056 = vadd.f32 0.0, %v1055
      %v1057 = vpop.f32.mrf.mxu0
      %v1058 = vpop.f32.mrf.mxu0
      %v1059 = vadd.f32 0.0, %v1058
      %v1060 = vpop.f32.mrf.mxu0
      %1061 = vdwg.mxu0
      %v1063 = vsel %vm941, %v1015, 0
      %1065 = vmatprep.subr.bf16.mxu0 0
      %1066 = vmatpush1.bf16.msra.mxu0 0
      %1067 = vmatprep.subr.bf16.mxu0 0
      %1068 = vmatpush1.bf16.msra.mxu0 0
      %1069 = vmatprep.subr.bf16.mxu0 0
      %1070 = vmatpush1.bf16.msra.mxu0 0
      %1071 = vmatprep.subr.bf16.mxu0 0
      %1072 = vmatpush1.bf16.msra.mxu0 0
      %1073 = vmatprep.subr.bf16.mxu0 0
      %1074 = vmatpush1.bf16.msra.mxu0 0
      %1075 = vmatprep.subr.bf16.mxu0 0
      %1076 = vmatpush1.bf16.msra.mxu0 0
      %1077 = vmatprep.subr.bf16.mxu0 0
      %1078 = vmatpush1.bf16.msra.mxu0 0
      %1079 = vmatprep.subr.bf16.mxu0 0
      %1080 = vmatpush1.bf16.msra.mxu0 %v747
      %1081 = vmatprep.subr.bf16.mxu0 0
      %1082 = vmatpush2.bf16.msra.mxu0 0
      %1083 = vmatprep.subr.bf16.mxu0 0
      %1084 = vmatpush2.bf16.msra.mxu0 0
      %1085 = vmatprep.subr.bf16.mxu0 0
      %1086 = vmatpush2.bf16.msra.mxu0 0
      %1087 = vmatprep.subr.bf16.mxu0 0
      %1088 = vmatpush2.bf16.msra.mxu0 0
      %1089 = vmatprep.subr.bf16.mxu0 0
      %1090 = vmatpush2.bf16.msra.mxu0 0
      %1091 = vmatprep.subr.bf16.mxu0 0
      %1092 = vmatpush2.bf16.msra.mxu0 0
      %1093 = vmatprep.subr.bf16.mxu0 0
      %1094 = vmatpush2.bf16.msra.mxu0 0
      %1095 = vmatprep.subr.bf16.mxu0 0
      %1096 = vmatpush2.bf16.msra.mxu0 0
      %1097 = vmatprep.mubr.bf16.mxu0 0
      %1098 = vmatmul.mubr.bf16.gmra.mxu0 %v1063
      %v1099 = vpop.f32.mrf.mxu0
      %v1100 = vadd.f32 0.0, %v1099
      %v1101 = vpop.f32.mrf.mxu0
      %v1102 = vpop.f32.mrf.mxu0
      %v1103 = vadd.f32 0.0, %v1102
      %v1104 = vpop.f32.mrf.mxu0
      %1105 = vdwg.mxu0
      %v1107 = vsel %vm941, %v1016, 0
      %1109 = vmatprep.subr.bf16.mxu0 0
      %1110 = vmatpush1.bf16.msra.mxu0 0
      %1111 = vmatprep.subr.bf16.mxu0 0
      %1112 = vmatpush1.bf16.msra.mxu0 0
      %1113 = vmatprep.subr.bf16.mxu0 0
      %1114 = vmatpush1.bf16.msra.mxu0 0
      %1115 = vmatprep.subr.bf16.mxu0 0
      %1116 = vmatpush1.bf16.msra.mxu0 0
      %1117 = vmatprep.subr.bf16.mxu0 0
      %1118 = vmatpush1.bf16.msra.mxu0 0
      %1119 = vmatprep.subr.bf16.mxu0 0
      %1120 = vmatpush1.bf16.msra.mxu0 0
      %1121 = vmatprep.subr.bf16.mxu0 0
      %1122 = vmatpush1.bf16.msra.mxu0 0
      %1123 = vmatprep.subr.bf16.mxu0 0
      %1124 = vmatpush1.bf16.msra.mxu0 %v748
      %1125 = vmatprep.subr.bf16.mxu0 0
      %1126 = vmatpush2.bf16.msra.mxu0 0
      %1127 = vmatprep.subr.bf16.mxu0 0
      %1128 = vmatpush2.bf16.msra.mxu0 0
      %1129 = vmatprep.subr.bf16.mxu0 0
      %1130 = vmatpush2.bf16.msra.mxu0 0
      %1131 = vmatprep.subr.bf16.mxu0 0
      %1132 = vmatpush2.bf16.msra.mxu0 0
      %1133 = vmatprep.subr.bf16.mxu0 0
      %1134 = vmatpush2.bf16.msra.mxu0 0
      %1135 = vmatprep.subr.bf16.mxu0 0
      %1136 = vmatpush2.bf16.msra.mxu0 0
      %1137 = vmatprep.subr.bf16.mxu0 0
      %1138 = vmatpush2.bf16.msra.mxu0 0
      %1139 = vmatprep.subr.bf16.mxu0 0
      %1140 = vmatpush2.bf16.msra.mxu0 0
      %1141 = vmatprep.mubr.bf16.mxu0 0
      %1142 = vmatmul.mubr.bf16.gmra.mxu0 %v1107
      %v1143 = vpop.f32.mrf.mxu0
      %v1144 = vadd.f32 0.0, %v1143
      %v1145 = vpop.f32.mrf.mxu0
      %v1146 = vpop.f32.mrf.mxu0
      %v1147 = vadd.f32 0.0, %v1146
      %v1148 = vpop.f32.mrf.mxu0
      %1149 = vdwg.mxu0
      %v1151 = vsel %vm941, %v1017, 0
      %1153 = vmatprep.subr.bf16.mxu0 0
      %1154 = vmatpush1.bf16.msra.mxu0 0
      %1155 = vmatprep.subr.bf16.mxu0 0
      %1156 = vmatpush1.bf16.msra.mxu0 0
      %1157 = vmatprep.subr.bf16.mxu0 0
      %1158 = vmatpush1.bf16.msra.mxu0 0
      %1159 = vmatprep.subr.bf16.mxu0 0
      %1160 = vmatpush1.bf16.msra.mxu0 0
      %1161 = vmatprep.subr.bf16.mxu0 0
      %1162 = vmatpush1.bf16.msra.mxu0 0
      %1163 = vmatprep.subr.bf16.mxu0 0
      %1164 = vmatpush1.bf16.msra.mxu0 0
      %1165 = vmatprep.subr.bf16.mxu0 0
      %1166 = vmatpush1.bf16.msra.mxu0 0
      %1167 = vmatprep.subr.bf16.mxu0 0
      %1168 = vmatpush1.bf16.msra.mxu0 %v749
      %1169 = vmatprep.subr.bf16.mxu0 0
      %1170 = vmatpush2.bf16.msra.mxu0 0
      %1171 = vmatprep.subr.bf16.mxu0 0
      %1172 = vmatpush2.bf16.msra.mxu0 0
      %1173 = vmatprep.subr.bf16.mxu0 0
      %1174 = vmatpush2.bf16.msra.mxu0 0
      %1175 = vmatprep.subr.bf16.mxu0 0
      %1176 = vmatpush2.bf16.msra.mxu0 0
      %1177 = vmatprep.subr.bf16.mxu0 0
      %1178 = vmatpush2.bf16.msra.mxu0 0
      %1179 = vmatprep.subr.bf16.mxu0 0
      %1180 = vmatpush2.bf16.msra.mxu0 0
      %1181 = vmatprep.subr.bf16.mxu0 0
      %1182 = vmatpush2.bf16.msra.mxu0 0
      %1183 = vmatprep.subr.bf16.mxu0 0
      %1184 = vmatpush2.bf16.msra.mxu0 0
      %1185 = vmatprep.mubr.bf16.mxu0 0
      %1186 = vmatmul.mubr.bf16.gmra.mxu0 %v1151
      %v1187 = vpop.f32.mrf.mxu0
      %v1188 = vadd.f32 0.0, %v1187
      %v1189 = vpop.f32.mrf.mxu0
      %v1190 = vpop.f32.mrf.mxu0
      %v1191 = vadd.f32 0.0, %v1190
      %v1192 = vpop.f32.mrf.mxu0
      %1193 = vdwg.mxu0
      %v1194 = vrcp.pop %v992
      %v1195 = vrcp.pop %v995
      %v1196 = vrcp.pop %v998
      %v1197 = vrcp.pop %v1001
      %v1198 = vrcp.pop %v1004
      %v1199 = vrcp.pop %v1007
      %v1200 = vrcp.pop %v1010
      %v1201 = vrcp.pop %v1013
      %v1202 = vmul.f32 %v1056, %v1194
      %v1203 = vmul.f32 %v1059, %v1195
      %v1204 = vmul.f32 %v1100, %v1196
      %v1205 = vmul.f32 %v1103, %v1197
      %v1206 = vmul.f32 %v1144, %v1198
      %v1207 = vmul.f32 %v1147, %v1199
      %v1208 = vmul.f32 %v1188, %v1200
      %v1209 = vmul.f32 %v1191, %v1201
      %s1210 = scalar_lea.vmem %s7, 16
      %v1211 = vld [vmem:[%s1210] sm:$0xff]
      %v1212 = vld [vmem:[%s1210 + $0x8] sm:$0xff]
      %1214 = vrot.lane.b32.xlu0 %v738, 120
      %v1215 = vpop.permute.xlu0 %1214
      %1217 = vrot.lane.b32.xlu0 %v742, 120
      %v1218 = vpop.permute.xlu0 %1217
      %v1220 = vsel %vm752, %v1215, 0
      %v1223 = vsel %vm752, %v1218, 0
      %1225 = vmatprep.subr.bf16.mxu0 0
      %1226 = vmatpush1.bf16.xpose.msra.mxu0 0
      %1227 = vmatprep.subr.bf16.mxu0 0
      %1228 = vmatpush1.bf16.xpose.msra.mxu0 0
      %1229 = vmatprep.subr.bf16.mxu0 0
      %1230 = vmatpush1.bf16.xpose.msra.mxu0 0
      %1231 = vmatprep.subr.bf16.mxu0 0
      %1232 = vmatpush1.bf16.xpose.msra.mxu0 0
      %1233 = vmatprep.subr.bf16.mxu0 0
      %1234 = vmatpush1.bf16.xpose.msra.mxu0 0
      %1235 = vmatprep.subr.bf16.mxu0 0
      %1236 = vmatpush1.bf16.xpose.msra.mxu0 0
      %1237 = vmatprep.subr.bf16.mxu0 0
      %1238 = vmatpush1.bf16.xpose.msra.mxu0 0
      %1239 = vmatprep.subr.bf16.mxu0 0
      %1240 = vmatpush1.bf16.xpose.msra.mxu0 %v1223
      %1241 = vmatprep.subr.bf16.mxu0 0
      %1242 = vmatpush2.bf16.xpose.msra.mxu0 0
      %1243 = vmatprep.subr.bf16.mxu0 0
      %1244 = vmatpush2.bf16.xpose.msra.mxu0 0
      %1245 = vmatprep.subr.bf16.mxu0 0
      %1246 = vmatpush2.bf16.xpose.msra.mxu0 0
      %1247 = vmatprep.subr.bf16.mxu0 0
      %1248 = vmatpush2.bf16.xpose.msra.mxu0 0
      %1249 = vmatprep.subr.bf16.mxu0 0
      %1250 = vmatpush2.bf16.xpose.msra.mxu0 0
      %1251 = vmatprep.subr.bf16.mxu0 0
      %1252 = vmatpush2.bf16.xpose.msra.mxu0 0
      %1253 = vmatprep.subr.bf16.mxu0 0
      %1254 = vmatpush2.bf16.xpose.msra.mxu0 0
      %1255 = vmatprep.subr.bf16.mxu0 0
      %1256 = vmatpush2.bf16.xpose.msra.mxu0 0
      %1257 = vmatprep.mubr.bf16.mxu0 0
      %1258 = vmatmul.mubr.bf16.gmra.mxu0 %v1220
      %v1259 = vpop.f32.mrf.mxu0
      %v1260 = vadd.f32 %v1211, %v1259
      %v1261 = vpop.f32.mrf.mxu0
      %v1262 = vpop.f32.mrf.mxu0
      %v1263 = vadd.f32 %v1212, %v1262
      %v1264 = vpop.f32.mrf.mxu0
      %1265 = vdwg.mxu0
      %1267 = vrot.lane.b32.xlu0 %v739, 120
      %v1268 = vpop.permute.xlu0 %1267
      %1270 = vrot.lane.b32.xlu0 %v743, 120
      %v1271 = vpop.permute.xlu0 %1270
      %v1273 = vsel %vm752, %v1268, 0
      %v1276 = vsel %vm752, %v1271, 0
      %1278 = vmatprep.subr.bf16.mxu0 0
      %1279 = vmatpush1.bf16.xpose.msra.mxu0 0
      %1280 = vmatprep.subr.bf16.mxu0 0
      %1281 = vmatpush1.bf16.xpose.msra.mxu0 0
      %1282 = vmatprep.subr.bf16.mxu0 0
      %1283 = vmatpush1.bf16.xpose.msra.mxu0 0
      %1284 = vmatprep.subr.bf16.mxu0 0
      %1285 = vmatpush1.bf16.xpose.msra.mxu0 0
      %1286 = vmatprep.subr.bf16.mxu0 0
      %1287 = vmatpush1.bf16.xpose.msra.mxu0 0
      %1288 = vmatprep.subr.bf16.mxu0 0
      %1289 = vmatpush1.bf16.xpose.msra.mxu0 0
      %1290 = vmatprep.subr.bf16.mxu0 0
      %1291 = vmatpush1.bf16.xpose.msra.mxu0 0
      %1292 = vmatprep.subr.bf16.mxu0 0
      %1293 = vmatpush1.bf16.xpose.msra.mxu0 %v1276
      %1294 = vmatprep.subr.bf16.mxu0 0
      %1295 = vmatpush2.bf16.xpose.msra.mxu0 0
      %1296 = vmatprep.subr.bf16.mxu0 0
      %1297 = vmatpush2.bf16.xpose.msra.mxu0 0
      %1298 = vmatprep.subr.bf16.mxu0 0
      %1299 = vmatpush2.bf16.xpose.msra.mxu0 0
      %1300 = vmatprep.subr.bf16.mxu0 0
      %1301 = vmatpush2.bf16.xpose.msra.mxu0 0
      %1302 = vmatprep.subr.bf16.mxu0 0
      %1303 = vmatpush2.bf16.xpose.msra.mxu0 0
      %1304 = vmatprep.subr.bf16.mxu0 0
      %1305 = vmatpush2.bf16.xpose.msra.mxu0 0
      %1306 = vmatprep.subr.bf16.mxu0 0
      %1307 = vmatpush2.bf16.xpose.msra.mxu0 0
      %1308 = vmatprep.subr.bf16.mxu0 0
      %1309 = vmatpush2.bf16.xpose.msra.mxu0 0
      %1310 = vmatprep.mubr.bf16.mxu0 0
      %1311 = vmatmul.mubr.bf16.gmra.mxu0 %v1273
      %v1312 = vpop.f32.mrf.mxu0
      %v1313 = vadd.f32 %v1211, %v1312
      %v1314 = vpop.f32.mrf.mxu0
      %v1315 = vpop.f32.mrf.mxu0
      %v1316 = vadd.f32 %v1212, %v1315
      %v1317 = vpop.f32.mrf.mxu0
      %1318 = vdwg.mxu0
      %1320 = vrot.lane.b32.xlu0 %v740, 120
      %v1321 = vpop.permute.xlu0 %1320
      %1323 = vrot.lane.b32.xlu0 %v744, 120
      %v1324 = vpop.permute.xlu0 %1323
      %v1326 = vsel %vm752, %v1321, 0
      %v1329 = vsel %vm752, %v1324, 0
      %1331 = vmatprep.subr.bf16.mxu0 0
      %1332 = vmatpush1.bf16.xpose.msra.mxu0 0
      %1333 = vmatprep.subr.bf16.mxu0 0
      %1334 = vmatpush1.bf16.xpose.msra.mxu0 0
      %1335 = vmatprep.subr.bf16.mxu0 0
      %1336 = vmatpush1.bf16.xpose.msra.mxu0 0
      %1337 = vmatprep.subr.bf16.mxu0 0
      %1338 = vmatpush1.bf16.xpose.msra.mxu0 0
      %1339 = vmatprep.subr.bf16.mxu0 0
      %1340 = vmatpush1.bf16.xpose.msra.mxu0 0
      %1341 = vmatprep.subr.bf16.mxu0 0
      %1342 = vmatpush1.bf16.xpose.msra.mxu0 0
      %1343 = vmatprep.subr.bf16.mxu0 0
      %1344 = vmatpush1.bf16.xpose.msra.mxu0 0
      %1345 = vmatprep.subr.bf16.mxu0 0
      %1346 = vmatpush1.bf16.xpose.msra.mxu0 %v1329
      %1347 = vmatprep.subr.bf16.mxu0 0
      %1348 = vmatpush2.bf16.xpose.msra.mxu0 0
      %1349 = vmatprep.subr.bf16.mxu0 0
      %1350 = vmatpush2.bf16.xpose.msra.mxu0 0
      %1351 = vmatprep.subr.bf16.mxu0 0
      %1352 = vmatpush2.bf16.xpose.msra.mxu0 0
      %1353 = vmatprep.subr.bf16.mxu0 0
      %1354 = vmatpush2.bf16.xpose.msra.mxu0 0
      %1355 = vmatprep.subr.bf16.mxu0 0
      %1356 = vmatpush2.bf16.xpose.msra.mxu0 0
      %1357 = vmatprep.subr.bf16.mxu0 0
      %1358 = vmatpush2.bf16.xpose.msra.mxu0 0
      %1359 = vmatprep.subr.bf16.mxu0 0
      %1360 = vmatpush2.bf16.xpose.msra.mxu0 0
      %1361 = vmatprep.subr.bf16.mxu0 0
      %1362 = vmatpush2.bf16.xpose.msra.mxu0 0
      %1363 = vmatprep.mubr.bf16.mxu0 0
      %1364 = vmatmul.mubr.bf16.gmra.mxu0 %v1326
      %v1365 = vpop.f32.mrf.mxu0
      %v1366 = vadd.f32 %v1211, %v1365
      %v1367 = vpop.f32.mrf.mxu0
      %v1368 = vpop.f32.mrf.mxu0
      %v1369 = vadd.f32 %v1212, %v1368
      %v1370 = vpop.f32.mrf.mxu0
      %1371 = vdwg.mxu0
      %1373 = vrot.lane.b32.xlu0 %v741, 120
      %v1374 = vpop.permute.xlu0 %1373
      %1376 = vrot.lane.b32.xlu0 %v745, 120
      %v1377 = vpop.permute.xlu0 %1376
      %v1379 = vsel %vm752, %v1374, 0
      %v1382 = vsel %vm752, %v1377, 0
      %1384 = vmatprep.subr.bf16.mxu0 0
      %1385 = vmatpush1.bf16.xpose.msra.mxu0 0
      %1386 = vmatprep.subr.bf16.mxu0 0
      %1387 = vmatpush1.bf16.xpose.msra.mxu0 0
      %1388 = vmatprep.subr.bf16.mxu0 0
      %1389 = vmatpush1.bf16.xpose.msra.mxu0 0
      %1390 = vmatprep.subr.bf16.mxu0 0
      %1391 = vmatpush1.bf16.xpose.msra.mxu0 0
      %1392 = vmatprep.subr.bf16.mxu0 0
      %1393 = vmatpush1.bf16.xpose.msra.mxu0 0
      %1394 = vmatprep.subr.bf16.mxu0 0
      %1395 = vmatpush1.bf16.xpose.msra.mxu0 0
      %1396 = vmatprep.subr.bf16.mxu0 0
      %1397 = vmatpush1.bf16.xpose.msra.mxu0 0
      %1398 = vmatprep.subr.bf16.mxu0 0
      %1399 = vmatpush1.bf16.xpose.msra.mxu0 %v1382
      %1400 = vmatprep.subr.bf16.mxu0 0
      %1401 = vmatpush2.bf16.xpose.msra.mxu0 0
      %1402 = vmatprep.subr.bf16.mxu0 0
      %1403 = vmatpush2.bf16.xpose.msra.mxu0 0
      %1404 = vmatprep.subr.bf16.mxu0 0
      %1405 = vmatpush2.bf16.xpose.msra.mxu0 0
      %1406 = vmatprep.subr.bf16.mxu0 0
      %1407 = vmatpush2.bf16.xpose.msra.mxu0 0
      %1408 = vmatprep.subr.bf16.mxu0 0
      %1409 = vmatpush2.bf16.xpose.msra.mxu0 0
      %1410 = vmatprep.subr.bf16.mxu0 0
      %1411 = vmatpush2.bf16.xpose.msra.mxu0 0
      %1412 = vmatprep.subr.bf16.mxu0 0
      %1413 = vmatpush2.bf16.xpose.msra.mxu0 0
      %1414 = vmatprep.subr.bf16.mxu0 0
      %1415 = vmatpush2.bf16.xpose.msra.mxu0 0
      %1416 = vmatprep.mubr.bf16.mxu0 0
      %1417 = vmatmul.mubr.bf16.gmra.mxu0 %v1379
      %v1418 = vpop.f32.mrf.mxu0
      %v1419 = vadd.f32 %v1211, %v1418
      %v1420 = vpop.f32.mrf.mxu0
      %v1421 = vpop.f32.mrf.mxu0
      %v1422 = vadd.f32 %v1212, %v1421
      %v1423 = vpop.f32.mrf.mxu0
      %1424 = vdwg.mxu0
      %v1425 = vsel %vm941, %v1260, -inf
      %1426 = vmax.xlane.f32.xlu0 %v1425
      %v1427 = vpop.xlane.xlu0 %1426
      %v1428 = vsel %vm941, %v1263, -inf
      %1429 = vmax.xlane.f32.xlu0 %v1428
      %v1430 = vpop.xlane.xlu0 %1429
      %v1431 = vsel %vm941, %v1313, -inf
      %1432 = vmax.xlane.f32.xlu0 %v1431
      %v1433 = vpop.xlane.xlu0 %1432
      %v1434 = vsel %vm941, %v1316, -inf
      %1435 = vmax.xlane.f32.xlu0 %v1434
      %v1436 = vpop.xlane.xlu0 %1435
      %v1437 = vsel %vm941, %v1366, -inf
      %1438 = vmax.xlane.f32.xlu0 %v1437
      %v1439 = vpop.xlane.xlu0 %1438
      %v1440 = vsel %vm941, %v1369, -inf
      %1441 = vmax.xlane.f32.xlu0 %v1440
      %v1442 = vpop.xlane.xlu0 %1441
      %v1443 = vsel %vm941, %v1419, -inf
      %1444 = vmax.xlane.f32.xlu0 %v1443
      %v1445 = vpop.xlane.xlu0 %1444
      %v1446 = vsel %vm941, %v1422, -inf
      %1447 = vmax.xlane.f32.xlu0 %v1446
      %v1448 = vpop.xlane.xlu0 %1447
      %v1449 = vsub.f32 %v1260, %v1427
      %v1450 = vsub.f32 %v1263, %v1430
      %v1451 = vsub.f32 %v1313, %v1433
      %v1452 = vsub.f32 %v1316, %v1436
      %v1453 = vsub.f32 %v1366, %v1439
      %v1454 = vsub.f32 %v1369, %v1442
      %v1455 = vsub.f32 %v1419, %v1445
      %v1456 = vsub.f32 %v1422, %v1448
      %v1457 = vmul.f32 %v1449, 1.442695
      %v1458 = vpow.pop %v1457
      %v1459 = vmul.f32 %v1450, 1.442695
      %v1460 = vpow.pop %v1459
      %v1461 = vmul.f32 %v1451, 1.442695
      %v1462 = vpow.pop %v1461
      %v1463 = vmul.f32 %v1452, 1.442695
      %v1464 = vpow.pop %v1463
      %v1465 = vmul.f32 %v1453, 1.442695
      %v1466 = vpow.pop %v1465
      %v1467 = vmul.f32 %v1454, 1.442695
      %v1468 = vpow.pop %v1467
      %v1469 = vmul.f32 %v1455, 1.442695
      %v1470 = vpow.pop %v1469
      %v1471 = vmul.f32 %v1456, 1.442695
      %v1472 = vpow.pop %v1471
      %v1473 = vsel %vm941, %v1458, 0.0
      %1474 = vadd.xlane.f32.xlu0 %v1473
      %v1475 = vpop.xlane.xlu0 %1474
      %v1476 = vsel %vm941, %v1460, 0.0
      %1477 = vadd.xlane.f32.xlu0 %v1476
      %v1478 = vpop.xlane.xlu0 %1477
      %v1479 = vsel %vm941, %v1462, 0.0
      %1480 = vadd.xlane.f32.xlu0 %v1479
      %v1481 = vpop.xlane.xlu0 %1480
      %v1482 = vsel %vm941, %v1464, 0.0
      %1483 = vadd.xlane.f32.xlu0 %v1482
      %v1484 = vpop.xlane.xlu0 %1483
      %v1485 = vsel %vm941, %v1466, 0.0
      %1486 = vadd.xlane.f32.xlu0 %v1485
      %v1487 = vpop.xlane.xlu0 %1486
      %v1488 = vsel %vm941, %v1468, 0.0
      %1489 = vadd.xlane.f32.xlu0 %v1488
      %v1490 = vpop.xlane.xlu0 %1489
      %v1491 = vsel %vm941, %v1470, 0.0
      %1492 = vadd.xlane.f32.xlu0 %v1491
      %v1493 = vpop.xlane.xlu0 %1492
      %v1494 = vsel %vm941, %v1472, 0.0
      %1495 = vadd.xlane.f32.xlu0 %v1494
      %v1496 = vpop.xlane.xlu0 %1495
      %v1497 = vpack.c.bf16 %v1460, %v1458
      %v1498 = vpack.c.bf16 %v1464, %v1462
      %v1499 = vpack.c.bf16 %v1468, %v1466
      %v1500 = vpack.c.bf16 %v1472, %v1470
      %1502 = vrot.lane.b32.xlu0 %v746, 120
      %v1503 = vpop.permute.xlu0 %1502
      %v1506 = vsel %vm941, %v1497, 0
      %1508 = vmatprep.subr.bf16.mxu0 0
      %1509 = vmatpush1.bf16.msra.mxu0 0
      %1510 = vmatprep.subr.bf16.mxu0 0
      %1511 = vmatpush1.bf16.msra.mxu0 0
      %1512 = vmatprep.subr.bf16.mxu0 0
      %1513 = vmatpush1.bf16.msra.mxu0 0
      %1514 = vmatprep.subr.bf16.mxu0 0
      %1515 = vmatpush1.bf16.msra.mxu0 0
      %1516 = vmatprep.subr.bf16.mxu0 0
      %1517 = vmatpush1.bf16.msra.mxu0 0
      %1518 = vmatprep.subr.bf16.mxu0 0
      %1519 = vmatpush1.bf16.msra.mxu0 0
      %1520 = vmatprep.subr.bf16.mxu0 0
      %1521 = vmatpush1.bf16.msra.mxu0 0
      %1522 = vmatprep.subr.bf16.mxu0 0
      %1523 = vmatpush1.bf16.msra.mxu0 %v1503
      %1524 = vmatprep.subr.bf16.mxu0 0
      %1525 = vmatpush2.bf16.msra.mxu0 0
      %1526 = vmatprep.subr.bf16.mxu0 0
      %1527 = vmatpush2.bf16.msra.mxu0 0
      %1528 = vmatprep.subr.bf16.mxu0 0
      %1529 = vmatpush2.bf16.msra.mxu0 0
      %1530 = vmatprep.subr.bf16.mxu0 0
      %1531 = vmatpush2.bf16.msra.mxu0 0
      %1532 = vmatprep.subr.bf16.mxu0 0
      %1533 = vmatpush2.bf16.msra.mxu0 0
      %1534 = vmatprep.subr.bf16.mxu0 0
      %1535 = vmatpush2.bf16.msra.mxu0 0
      %1536 = vmatprep.subr.bf16.mxu0 0
      %1537 = vmatpush2.bf16.msra.mxu0 0
      %1538 = vmatprep.subr.bf16.mxu0 0
      %1539 = vmatpush2.bf16.msra.mxu0 0
      %1540 = vmatprep.mubr.bf16.mxu0 0
      %1541 = vmatmul.mubr.bf16.gmra.mxu0 %v1506
      %v1542 = vpop.f32.mrf.mxu0
      %v1543 = vadd.f32 0.0, %v1542
      %v1544 = vpop.f32.mrf.mxu0
      %v1545 = vpop.f32.mrf.mxu0
      %v1546 = vadd.f32 0.0, %v1545
      %v1547 = vpop.f32.mrf.mxu0
      %1548 = vdwg.mxu0
      %1550 = vrot.lane.b32.xlu0 %v747, 120
      %v1551 = vpop.permute.xlu0 %1550
      %v1554 = vsel %vm941, %v1498, 0
      %1556 = vmatprep.subr.bf16.mxu0 0
      %1557 = vmatpush1.bf16.msra.mxu0 0
      %1558 = vmatprep.subr.bf16.mxu0 0
      %1559 = vmatpush1.bf16.msra.mxu0 0
      %1560 = vmatprep.subr.bf16.mxu0 0
      %1561 = vmatpush1.bf16.msra.mxu0 0
      %1562 = vmatprep.subr.bf16.mxu0 0
      %1563 = vmatpush1.bf16.msra.mxu0 0
      %1564 = vmatprep.subr.bf16.mxu0 0
      %1565 = vmatpush1.bf16.msra.mxu0 0
      %1566 = vmatprep.subr.bf16.mxu0 0
      %1567 = vmatpush1.bf16.msra.mxu0 0
      %1568 = vmatprep.subr.bf16.mxu0 0
      %1569 = vmatpush1.bf16.msra.mxu0 0
      %1570 = vmatprep.subr.bf16.mxu0 0
      %1571 = vmatpush1.bf16.msra.mxu0 %v1551
      %1572 = vmatprep.subr.bf16.mxu0 0
      %1573 = vmatpush2.bf16.msra.mxu0 0
      %1574 = vmatprep.subr.bf16.mxu0 0
      %1575 = vmatpush2.bf16.msra.mxu0 0
      %1576 = vmatprep.subr.bf16.mxu0 0
      %1577 = vmatpush2.bf16.msra.mxu0 0
      %1578 = vmatprep.subr.bf16.mxu0 0
      %1579 = vmatpush2.bf16.msra.mxu0 0
      %1580 = vmatprep.subr.bf16.mxu0 0
      %1581 = vmatpush2.bf16.msra.mxu0 0
      %1582 = vmatprep.subr.bf16.mxu0 0
      %1583 = vmatpush2.bf16.msra.mxu0 0
      %1584 = vmatprep.subr.bf16.mxu0 0
      %1585 = vmatpush2.bf16.msra.mxu0 0
      %1586 = vmatprep.subr.bf16.mxu0 0
      %1587 = vmatpush2.bf16.msra.mxu0 0
      %1588 = vmatprep.mubr.bf16.mxu0 0
      %1589 = vmatmul.mubr.bf16.gmra.mxu0 %v1554
      %v1590 = vpop.f32.mrf.mxu0
      %v1591 = vadd.f32 0.0, %v1590
      %v1592 = vpop.f32.mrf.mxu0
      %v1593 = vpop.f32.mrf.mxu0
      %v1594 = vadd.f32 0.0, %v1593
      %v1595 = vpop.f32.mrf.mxu0
      %1596 = vdwg.mxu0
      %1598 = vrot.lane.b32.xlu0 %v748, 120
      %v1599 = vpop.permute.xlu0 %1598
      %v1602 = vsel %vm941, %v1499, 0
      %1604 = vmatprep.subr.bf16.mxu0 0
      %1605 = vmatpush1.bf16.msra.mxu0 0
      %1606 = vmatprep.subr.bf16.mxu0 0
      %1607 = vmatpush1.bf16.msra.mxu0 0
      %1608 = vmatprep.subr.bf16.mxu0 0
      %1609 = vmatpush1.bf16.msra.mxu0 0
      %1610 = vmatprep.subr.bf16.mxu0 0
      %1611 = vmatpush1.bf16.msra.mxu0 0
      %1612 = vmatprep.subr.bf16.mxu0 0
      %1613 = vmatpush1.bf16.msra.mxu0 0
      %1614 = vmatprep.subr.bf16.mxu0 0
      %1615 = vmatpush1.bf16.msra.mxu0 0
      %1616 = vmatprep.subr.bf16.mxu0 0
      %1617 = vmatpush1.bf16.msra.mxu0 0
      %1618 = vmatprep.subr.bf16.mxu0 0
      %1619 = vmatpush1.bf16.msra.mxu0 %v1599
      %1620 = vmatprep.subr.bf16.mxu0 0
      %1621 = vmatpush2.bf16.msra.mxu0 0
      %1622 = vmatprep.subr.bf16.mxu0 0
      %1623 = vmatpush2.bf16.msra.mxu0 0
      %1624 = vmatprep.subr.bf16.mxu0 0
      %1625 = vmatpush2.bf16.msra.mxu0 0
      %1626 = vmatprep.subr.bf16.mxu0 0
      %1627 = vmatpush2.bf16.msra.mxu0 0
      %1628 = vmatprep.subr.bf16.mxu0 0
      %1629 = vmatpush2.bf16.msra.mxu0 0
      %1630 = vmatprep.subr.bf16.mxu0 0
      %1631 = vmatpush2.bf16.msra.mxu0 0
      %1632 = vmatprep.subr.bf16.mxu0 0
      %1633 = vmatpush2.bf16.msra.mxu0 0
      %1634 = vmatprep.subr.bf16.mxu0 0
      %1635 = vmatpush2.bf16.msra.mxu0 0
      %1636 = vmatprep.mubr.bf16.mxu0 0
      %1637 = vmatmul.mubr.bf16.gmra.mxu0 %v1602
      %v1638 = vpop.f32.mrf.mxu0
      %v1639 = vadd.f32 0.0, %v1638
      %v1640 = vpop.f32.mrf.mxu0
      %v1641 = vpop.f32.mrf.mxu0
      %v1642 = vadd.f32 0.0, %v1641
      %v1643 = vpop.f32.mrf.mxu0
      %1644 = vdwg.mxu0
      %1646 = vrot.lane.b32.xlu0 %v749, 120
      %v1647 = vpop.permute.xlu0 %1646
      %v1650 = vsel %vm941, %v1500, 0
      %1652 = vmatprep.subr.bf16.mxu0 0
      %1653 = vmatpush1.bf16.msra.mxu0 0
      %1654 = vmatprep.subr.bf16.mxu0 0
      %1655 = vmatpush1.bf16.msra.mxu0 0
      %1656 = vmatprep.subr.bf16.mxu0 0
      %1657 = vmatpush1.bf16.msra.mxu0 0
      %1658 = vmatprep.subr.bf16.mxu0 0
      %1659 = vmatpush1.bf16.msra.mxu0 0
      %1660 = vmatprep.subr.bf16.mxu0 0
      %1661 = vmatpush1.bf16.msra.mxu0 0
      %1662 = vmatprep.subr.bf16.mxu0 0
      %1663 = vmatpush1.bf16.msra.mxu0 0
      %1664 = vmatprep.subr.bf16.mxu0 0
      %1665 = vmatpush1.bf16.msra.mxu0 0
      %1666 = vmatprep.subr.bf16.mxu0 0
      %1667 = vmatpush1.bf16.msra.mxu0 %v1647
      %1668 = vmatprep.subr.bf16.mxu0 0
      %1669 = vmatpush2.bf16.msra.mxu0 0
      %1670 = vmatprep.subr.bf16.mxu0 0
      %1671 = vmatpush2.bf16.msra.mxu0 0
      %1672 = vmatprep.subr.bf16.mxu0 0
      %1673 = vmatpush2.bf16.msra.mxu0 0
      %1674 = vmatprep.subr.bf16.mxu0 0
      %1675 = vmatpush2.bf16.msra.mxu0 0
      %1676 = vmatprep.subr.bf16.mxu0 0
      %1677 = vmatpush2.bf16.msra.mxu0 0
      %1678 = vmatprep.subr.bf16.mxu0 0
      %1679 = vmatpush2.bf16.msra.mxu0 0
      %1680 = vmatprep.subr.bf16.mxu0 0
      %1681 = vmatpush2.bf16.msra.mxu0 0
      %1682 = vmatprep.subr.bf16.mxu0 0
      %1683 = vmatpush2.bf16.msra.mxu0 0
      %1684 = vmatprep.mubr.bf16.mxu0 0
      %1685 = vmatmul.mubr.bf16.gmra.mxu0 %v1650
      %v1686 = vpop.f32.mrf.mxu0
      %v1687 = vadd.f32 0.0, %v1686
      %v1688 = vpop.f32.mrf.mxu0
      %v1689 = vpop.f32.mrf.mxu0
      %v1690 = vadd.f32 0.0, %v1689
      %v1691 = vpop.f32.mrf.mxu0
      %1692 = vdwg.mxu0
      %v1693 = vrcp.pop %v1475
      %v1694 = vrcp.pop %v1478
      %v1695 = vrcp.pop %v1481
      %v1696 = vrcp.pop %v1484
      %v1697 = vrcp.pop %v1487
      %v1698 = vrcp.pop %v1490
      %v1699 = vrcp.pop %v1493
      %v1700 = vrcp.pop %v1496
      %v1701 = vmul.f32 %v1543, %v1693
      %v1702 = vmul.f32 %v1546, %v1694
      %v1703 = vmul.f32 %v1591, %v1695
      %v1704 = vmul.f32 %v1594, %v1696
      %v1705 = vmul.f32 %v1639, %v1697
      %v1706 = vmul.f32 %v1642, %v1698
      %v1707 = vmul.f32 %v1687, %v1699
      %v1708 = vmul.f32 %v1690, %v1700
      %s1709 = scalar_lea.vmem %s7, 32
      %v1710 = vld [vmem:[%s1709] sm:$0xff]
      %v1711 = vld [vmem:[%s1709 + $0x8] sm:$0xff]
      %1712 = vrot.lane.b32.xlu0 %v738, 112
      %v1713 = vpop.permute.xlu0 %1712
      %1714 = vrot.lane.b32.xlu0 %v742, 112
      %v1715 = vpop.permute.xlu0 %1714
      %v1717 = vsel %vm752, %v1713, 0
      %v1720 = vsel %vm752, %v1715, 0
      %1722 = vmatprep.subr.bf16.mxu0 0
      %1723 = vmatpush1.bf16.xpose.msra.mxu0 0
      %1724 = vmatprep.subr.bf16.mxu0 0
      %1725 = vmatpush1.bf16.xpose.msra.mxu0 0
      %1726 = vmatprep.subr.bf16.mxu0 0
      %1727 = vmatpush1.bf16.xpose.msra.mxu0 0
      %1728 = vmatprep.subr.bf16.mxu0 0
      %1729 = vmatpush1.bf16.xpose.msra.mxu0 0
      %1730 = vmatprep.subr.bf16.mxu0 0
      %1731 = vmatpush1.bf16.xpose.msra.mxu0 0
      %1732 = vmatprep.subr.bf16.mxu0 0
      %1733 = vmatpush1.bf16.xpose.msra.mxu0 0
      %1734 = vmatprep.subr.bf16.mxu0 0
      %1735 = vmatpush1.bf16.xpose.msra.mxu0 0
      %1736 = vmatprep.subr.bf16.mxu0 0
      %1737 = vmatpush1.bf16.xpose.msra.mxu0 %v1720
      %1738 = vmatprep.subr.bf16.mxu0 0
      %1739 = vmatpush2.bf16.xpose.msra.mxu0 0
      %1740 = vmatprep.subr.bf16.mxu0 0
      %1741 = vmatpush2.bf16.xpose.msra.mxu0 0
      %1742 = vmatprep.subr.bf16.mxu0 0
      %1743 = vmatpush2.bf16.xpose.msra.mxu0 0
      %1744 = vmatprep.subr.bf16.mxu0 0
      %1745 = vmatpush2.bf16.xpose.msra.mxu0 0
      %1746 = vmatprep.subr.bf16.mxu0 0
      %1747 = vmatpush2.bf16.xpose.msra.mxu0 0
      %1748 = vmatprep.subr.bf16.mxu0 0
      %1749 = vmatpush2.bf16.xpose.msra.mxu0 0
      %1750 = vmatprep.subr.bf16.mxu0 0
      %1751 = vmatpush2.bf16.xpose.msra.mxu0 0
      %1752 = vmatprep.subr.bf16.mxu0 0
      %1753 = vmatpush2.bf16.xpose.msra.mxu0 0
      %1754 = vmatprep.mubr.bf16.mxu0 0
      %1755 = vmatmul.mubr.bf16.gmra.mxu0 %v1717
      %v1756 = vpop.f32.mrf.mxu0
      %v1757 = vadd.f32 %v1710, %v1756
      %v1758 = vpop.f32.mrf.mxu0
      %v1759 = vpop.f32.mrf.mxu0
      %v1760 = vadd.f32 %v1711, %v1759
      %v1761 = vpop.f32.mrf.mxu0
      %1762 = vdwg.mxu0
      %1763 = vrot.lane.b32.xlu0 %v739, 112
      %v1764 = vpop.permute.xlu0 %1763
      %1765 = vrot.lane.b32.xlu0 %v743, 112
      %v1766 = vpop.permute.xlu0 %1765
      %v1768 = vsel %vm752, %v1764, 0
      %v1771 = vsel %vm752, %v1766, 0
      %1773 = vmatprep.subr.bf16.mxu0 0
      %1774 = vmatpush1.bf16.xpose.msra.mxu0 0
      %1775 = vmatprep.subr.bf16.mxu0 0
      %1776 = vmatpush1.bf16.xpose.msra.mxu0 0
      %1777 = vmatprep.subr.bf16.mxu0 0
      %1778 = vmatpush1.bf16.xpose.msra.mxu0 0
      %1779 = vmatprep.subr.bf16.mxu0 0
      %1780 = vmatpush1.bf16.xpose.msra.mxu0 0
      %1781 = vmatprep.subr.bf16.mxu0 0
      %1782 = vmatpush1.bf16.xpose.msra.mxu0 0
      %1783 = vmatprep.subr.bf16.mxu0 0
      %1784 = vmatpush1.bf16.xpose.msra.mxu0 0
      %1785 = vmatprep.subr.bf16.mxu0 0
      %1786 = vmatpush1.bf16.xpose.msra.mxu0 0
      %1787 = vmatprep.subr.bf16.mxu0 0
      %1788 = vmatpush1.bf16.xpose.msra.mxu0 %v1771
      %1789 = vmatprep.subr.bf16.mxu0 0
      %1790 = vmatpush2.bf16.xpose.msra.mxu0 0
      %1791 = vmatprep.subr.bf16.mxu0 0
      %1792 = vmatpush2.bf16.xpose.msra.mxu0 0
      %1793 = vmatprep.subr.bf16.mxu0 0
      %1794 = vmatpush2.bf16.xpose.msra.mxu0 0
      %1795 = vmatprep.subr.bf16.mxu0 0
      %1796 = vmatpush2.bf16.xpose.msra.mxu0 0
      %1797 = vmatprep.subr.bf16.mxu0 0
      %1798 = vmatpush2.bf16.xpose.msra.mxu0 0
      %1799 = vmatprep.subr.bf16.mxu0 0
      %1800 = vmatpush2.bf16.xpose.msra.mxu0 0
      %1801 = vmatprep.subr.bf16.mxu0 0
      %1802 = vmatpush2.bf16.xpose.msra.mxu0 0
      %1803 = vmatprep.subr.bf16.mxu0 0
      %1804 = vmatpush2.bf16.xpose.msra.mxu0 0
      %1805 = vmatprep.mubr.bf16.mxu0 0
      %1806 = vmatmul.mubr.bf16.gmra.mxu0 %v1768
      %v1807 = vpop.f32.mrf.mxu0
      %v1808 = vadd.f32 %v1710, %v1807
      %v1809 = vpop.f32.mrf.mxu0
      %v1810 = vpop.f32.mrf.mxu0
      %v1811 = vadd.f32 %v1711, %v1810
      %v1812 = vpop.f32.mrf.mxu0
      %1813 = vdwg.mxu0
      %1814 = vrot.lane.b32.xlu0 %v740, 112
      %v1815 = vpop.permute.xlu0 %1814
      %1816 = vrot.lane.b32.xlu0 %v744, 112
      %v1817 = vpop.permute.xlu0 %1816
      %v1819 = vsel %vm752, %v1815, 0
      %v1822 = vsel %vm752, %v1817, 0
      %1824 = vmatprep.subr.bf16.mxu0 0
      %1825 = vmatpush1.bf16.xpose.msra.mxu0 0
      %1826 = vmatprep.subr.bf16.mxu0 0
      %1827 = vmatpush1.bf16.xpose.msra.mxu0 0
      %1828 = vmatprep.subr.bf16.mxu0 0
      %1829 = vmatpush1.bf16.xpose.msra.mxu0 0
      %1830 = vmatprep.subr.bf16.mxu0 0
      %1831 = vmatpush1.bf16.xpose.msra.mxu0 0
      %1832 = vmatprep.subr.bf16.mxu0 0
      %1833 = vmatpush1.bf16.xpose.msra.mxu0 0
      %1834 = vmatprep.subr.bf16.mxu0 0
      %1835 = vmatpush1.bf16.xpose.msra.mxu0 0
      %1836 = vmatprep.subr.bf16.mxu0 0
      %1837 = vmatpush1.bf16.xpose.msra.mxu0 0
      %1838 = vmatprep.subr.bf16.mxu0 0
      %1839 = vmatpush1.bf16.xpose.msra.mxu0 %v1822
      %1840 = vmatprep.subr.bf16.mxu0 0
      %1841 = vmatpush2.bf16.xpose.msra.mxu0 0
      %1842 = vmatprep.subr.bf16.mxu0 0
      %1843 = vmatpush2.bf16.xpose.msra.mxu0 0
      %1844 = vmatprep.subr.bf16.mxu0 0
      %1845 = vmatpush2.bf16.xpose.msra.mxu0 0
      %1846 = vmatprep.subr.bf16.mxu0 0
      %1847 = vmatpush2.bf16.xpose.msra.mxu0 0
      %1848 = vmatprep.subr.bf16.mxu0 0
      %1849 = vmatpush2.bf16.xpose.msra.mxu0 0
      %1850 = vmatprep.subr.bf16.mxu0 0
      %1851 = vmatpush2.bf16.xpose.msra.mxu0 0
      %1852 = vmatprep.subr.bf16.mxu0 0
      %1853 = vmatpush2.bf16.xpose.msra.mxu0 0
      %1854 = vmatprep.subr.bf16.mxu0 0
      %1855 = vmatpush2.bf16.xpose.msra.mxu0 0
      %1856 = vmatprep.mubr.bf16.mxu0 0
      %1857 = vmatmul.mubr.bf16.gmra.mxu0 %v1819
      %v1858 = vpop.f32.mrf.mxu0
      %v1859 = vadd.f32 %v1710, %v1858
      %v1860 = vpop.f32.mrf.mxu0
      %v1861 = vpop.f32.mrf.mxu0
      %v1862 = vadd.f32 %v1711, %v1861
      %v1863 = vpop.f32.mrf.mxu0
      %1864 = vdwg.mxu0
      %1865 = vrot.lane.b32.xlu0 %v741, 112
      %v1866 = vpop.permute.xlu0 %1865
      %1867 = vrot.lane.b32.xlu0 %v745, 112
      %v1868 = vpop.permute.xlu0 %1867
      %v1870 = vsel %vm752, %v1866, 0
      %v1873 = vsel %vm752, %v1868, 0
      %1875 = vmatprep.subr.bf16.mxu0 0
      %1876 = vmatpush1.bf16.xpose.msra.mxu0 0
      %1877 = vmatprep.subr.bf16.mxu0 0
      %1878 = vmatpush1.bf16.xpose.msra.mxu0 0
      %1879 = vmatprep.subr.bf16.mxu0 0
      %1880 = vmatpush1.bf16.xpose.msra.mxu0 0
      %1881 = vmatprep.subr.bf16.mxu0 0
      %1882 = vmatpush1.bf16.xpose.msra.mxu0 0
      %1883 = vmatprep.subr.bf16.mxu0 0
      %1884 = vmatpush1.bf16.xpose.msra.mxu0 0
      %1885 = vmatprep.subr.bf16.mxu0 0
      %1886 = vmatpush1.bf16.xpose.msra.mxu0 0
      %1887 = vmatprep.subr.bf16.mxu0 0
      %1888 = vmatpush1.bf16.xpose.msra.mxu0 0
      %1889 = vmatprep.subr.bf16.mxu0 0
      %1890 = vmatpush1.bf16.xpose.msra.mxu0 %v1873
      %1891 = vmatprep.subr.bf16.mxu0 0
      %1892 = vmatpush2.bf16.xpose.msra.mxu0 0
      %1893 = vmatprep.subr.bf16.mxu0 0
      %1894 = vmatpush2.bf16.xpose.msra.mxu0 0
      %1895 = vmatprep.subr.bf16.mxu0 0
      %1896 = vmatpush2.bf16.xpose.msra.mxu0 0
      %1897 = vmatprep.subr.bf16.mxu0 0
      %1898 = vmatpush2.bf16.xpose.msra.mxu0 0
      %1899 = vmatprep.subr.bf16.mxu0 0
      %1900 = vmatpush2.bf16.xpose.msra.mxu0 0
      %1901 = vmatprep.subr.bf16.mxu0 0
      %1902 = vmatpush2.bf16.xpose.msra.mxu0 0
      %1903 = vmatprep.subr.bf16.mxu0 0
      %1904 = vmatpush2.bf16.xpose.msra.mxu0 0
      %1905 = vmatprep.subr.bf16.mxu0 0
      %1906 = vmatpush2.bf16.xpose.msra.mxu0 0
      %1907 = vmatprep.mubr.bf16.mxu0 0
      %1908 = vmatmul.mubr.bf16.gmra.mxu0 %v1870
      %v1909 = vpop.f32.mrf.mxu0
      %v1910 = vadd.f32 %v1710, %v1909
      %v1911 = vpop.f32.mrf.mxu0
      %v1912 = vpop.f32.mrf.mxu0
      %v1913 = vadd.f32 %v1711, %v1912
      %v1914 = vpop.f32.mrf.mxu0
      %1915 = vdwg.mxu0
      %v1916 = vsel %vm941, %v1757, -inf
      %1917 = vmax.xlane.f32.xlu0 %v1916
      %v1918 = vpop.xlane.xlu0 %1917
      %v1919 = vsel %vm941, %v1760, -inf
      %1920 = vmax.xlane.f32.xlu0 %v1919
      %v1921 = vpop.xlane.xlu0 %1920
      %v1922 = vsel %vm941, %v1808, -inf
      %1923 = vmax.xlane.f32.xlu0 %v1922
      %v1924 = vpop.xlane.xlu0 %1923
      %v1925 = vsel %vm941, %v1811, -inf
      %1926 = vmax.xlane.f32.xlu0 %v1925
      %v1927 = vpop.xlane.xlu0 %1926
      %v1928 = vsel %vm941, %v1859, -inf
      %1929 = vmax.xlane.f32.xlu0 %v1928
      %v1930 = vpop.xlane.xlu0 %1929
      %v1931 = vsel %vm941, %v1862, -inf
      %1932 = vmax.xlane.f32.xlu0 %v1931
      %v1933 = vpop.xlane.xlu0 %1932
      %v1934 = vsel %vm941, %v1910, -inf
      %1935 = vmax.xlane.f32.xlu0 %v1934
      %v1936 = vpop.xlane.xlu0 %1935
      %v1937 = vsel %vm941, %v1913, -inf
      %1938 = vmax.xlane.f32.xlu0 %v1937
      %v1939 = vpop.xlane.xlu0 %1938
      %v1940 = vsub.f32 %v1757, %v1918
      %v1941 = vsub.f32 %v1760, %v1921
      %v1942 = vsub.f32 %v1808, %v1924
      %v1943 = vsub.f32 %v1811, %v1927
      %v1944 = vsub.f32 %v1859, %v1930
      %v1945 = vsub.f32 %v1862, %v1933
      %v1946 = vsub.f32 %v1910, %v1936
      %v1947 = vsub.f32 %v1913, %v1939
      %v1948 = vmul.f32 %v1940, 1.442695
      %v1949 = vpow.pop %v1948
      %v1950 = vmul.f32 %v1941, 1.442695
      %v1951 = vpow.pop %v1950
      %v1952 = vmul.f32 %v1942, 1.442695
      %v1953 = vpow.pop %v1952
      %v1954 = vmul.f32 %v1943, 1.442695
      %v1955 = vpow.pop %v1954
      %v1956 = vmul.f32 %v1944, 1.442695
      %v1957 = vpow.pop %v1956
      %v1958 = vmul.f32 %v1945, 1.442695
      %v1959 = vpow.pop %v1958
      %v1960 = vmul.f32 %v1946, 1.442695
      %v1961 = vpow.pop %v1960
      %v1962 = vmul.f32 %v1947, 1.442695
      %v1963 = vpow.pop %v1962
      %v1964 = vsel %vm941, %v1949, 0.0
      %1965 = vadd.xlane.f32.xlu0 %v1964
      %v1966 = vpop.xlane.xlu0 %1965
      %v1967 = vsel %vm941, %v1951, 0.0
      %1968 = vadd.xlane.f32.xlu0 %v1967
      %v1969 = vpop.xlane.xlu0 %1968
      %v1970 = vsel %vm941, %v1953, 0.0
      %1971 = vadd.xlane.f32.xlu0 %v1970
      %v1972 = vpop.xlane.xlu0 %1971
      %v1973 = vsel %vm941, %v1955, 0.0
      %1974 = vadd.xlane.f32.xlu0 %v1973
      %v1975 = vpop.xlane.xlu0 %1974
      %v1976 = vsel %vm941, %v1957, 0.0
      %1977 = vadd.xlane.f32.xlu0 %v1976
      %v1978 = vpop.xlane.xlu0 %1977
      %v1979 = vsel %vm941, %v1959, 0.0
      %1980 = vadd.xlane.f32.xlu0 %v1979
      %v1981 = vpop.xlane.xlu0 %1980
      %v1982 = vsel %vm941, %v1961, 0.0
      %1983 = vadd.xlane.f32.xlu0 %v1982
      %v1984 = vpop.xlane.xlu0 %1983
      %v1985 = vsel %vm941, %v1963, 0.0
      %1986 = vadd.xlane.f32.xlu0 %v1985
      %v1987 = vpop.xlane.xlu0 %1986
      %v1988 = vpack.c.bf16 %v1951, %v1949
      %v1989 = vpack.c.bf16 %v1955, %v1953
      %v1990 = vpack.c.bf16 %v1959, %v1957
      %v1991 = vpack.c.bf16 %v1963, %v1961
      %1992 = vrot.lane.b32.xlu0 %v746, 112
      %v1993 = vpop.permute.xlu0 %1992
      %v1996 = vsel %vm941, %v1988, 0
      %1998 = vmatprep.subr.bf16.mxu0 0
      %1999 = vmatpush1.bf16.msra.mxu0 0
      %2000 = vmatprep.subr.bf16.mxu0 0
      %2001 = vmatpush1.bf16.msra.mxu0 0
      %2002 = vmatprep.subr.bf16.mxu0 0
      %2003 = vmatpush1.bf16.msra.mxu0 0
      %2004 = vmatprep.subr.bf16.mxu0 0
      %2005 = vmatpush1.bf16.msra.mxu0 0
      %2006 = vmatprep.subr.bf16.mxu0 0
      %2007 = vmatpush1.bf16.msra.mxu0 0
      %2008 = vmatprep.subr.bf16.mxu0 0
      %2009 = vmatpush1.bf16.msra.mxu0 0
      %2010 = vmatprep.subr.bf16.mxu0 0
      %2011 = vmatpush1.bf16.msra.mxu0 0
      %2012 = vmatprep.subr.bf16.mxu0 0
      %2013 = vmatpush1.bf16.msra.mxu0 %v1993
      %2014 = vmatprep.subr.bf16.mxu0 0
      %2015 = vmatpush2.bf16.msra.mxu0 0
      %2016 = vmatprep.subr.bf16.mxu0 0
      %2017 = vmatpush2.bf16.msra.mxu0 0
      %2018 = vmatprep.subr.bf16.mxu0 0
      %2019 = vmatpush2.bf16.msra.mxu0 0
      %2020 = vmatprep.subr.bf16.mxu0 0
      %2021 = vmatpush2.bf16.msra.mxu0 0
      %2022 = vmatprep.subr.bf16.mxu0 0
      %2023 = vmatpush2.bf16.msra.mxu0 0
      %2024 = vmatprep.subr.bf16.mxu0 0
      %2025 = vmatpush2.bf16.msra.mxu0 0
      %2026 = vmatprep.subr.bf16.mxu0 0
      %2027 = vmatpush2.bf16.msra.mxu0 0
      %2028 = vmatprep.subr.bf16.mxu0 0
      %2029 = vmatpush2.bf16.msra.mxu0 0
      %2030 = vmatprep.mubr.bf16.mxu0 0
      %2031 = vmatmul.mubr.bf16.gmra.mxu0 %v1996
      %v2032 = vpop.f32.mrf.mxu0
      %v2033 = vadd.f32 0.0, %v2032
      %v2034 = vpop.f32.mrf.mxu0
      %v2035 = vpop.f32.mrf.mxu0
      %v2036 = vadd.f32 0.0, %v2035
      %v2037 = vpop.f32.mrf.mxu0
      %2038 = vdwg.mxu0
      %2039 = vrot.lane.b32.xlu0 %v747, 112
      %v2040 = vpop.permute.xlu0 %2039
      %v2043 = vsel %vm941, %v1989, 0
      %2045 = vmatprep.subr.bf16.mxu0 0
      %2046 = vmatpush1.bf16.msra.mxu0 0
      %2047 = vmatprep.subr.bf16.mxu0 0
      %2048 = vmatpush1.bf16.msra.mxu0 0
      %2049 = vmatprep.subr.bf16.mxu0 0
      %2050 = vmatpush1.bf16.msra.mxu0 0
      %2051 = vmatprep.subr.bf16.mxu0 0
      %2052 = vmatpush1.bf16.msra.mxu0 0
      %2053 = vmatprep.subr.bf16.mxu0 0
      %2054 = vmatpush1.bf16.msra.mxu0 0
      %2055 = vmatprep.subr.bf16.mxu0 0
      %2056 = vmatpush1.bf16.msra.mxu0 0
      %2057 = vmatprep.subr.bf16.mxu0 0
      %2058 = vmatpush1.bf16.msra.mxu0 0
      %2059 = vmatprep.subr.bf16.mxu0 0
      %2060 = vmatpush1.bf16.msra.mxu0 %v2040
      %2061 = vmatprep.subr.bf16.mxu0 0
      %2062 = vmatpush2.bf16.msra.mxu0 0
      %2063 = vmatprep.subr.bf16.mxu0 0
      %2064 = vmatpush2.bf16.msra.mxu0 0
      %2065 = vmatprep.subr.bf16.mxu0 0
      %2066 = vmatpush2.bf16.msra.mxu0 0
      %2067 = vmatprep.subr.bf16.mxu0 0
      %2068 = vmatpush2.bf16.msra.mxu0 0
      %2069 = vmatprep.subr.bf16.mxu0 0
      %2070 = vmatpush2.bf16.msra.mxu0 0
      %2071 = vmatprep.subr.bf16.mxu0 0
      %2072 = vmatpush2.bf16.msra.mxu0 0
      %2073 = vmatprep.subr.bf16.mxu0 0
      %2074 = vmatpush2.bf16.msra.mxu0 0
      %2075 = vmatprep.subr.bf16.mxu0 0
      %2076 = vmatpush2.bf16.msra.mxu0 0
      %2077 = vmatprep.mubr.bf16.mxu0 0
      %2078 = vmatmul.mubr.bf16.gmra.mxu0 %v2043
      %v2079 = vpop.f32.mrf.mxu0
      %v2080 = vadd.f32 0.0, %v2079
      %v2081 = vpop.f32.mrf.mxu0
      %v2082 = vpop.f32.mrf.mxu0
      %v2083 = vadd.f32 0.0, %v2082
      %v2084 = vpop.f32.mrf.mxu0
      %2085 = vdwg.mxu0
      %2086 = vrot.lane.b32.xlu0 %v748, 112
      %v2087 = vpop.permute.xlu0 %2086
      %v2090 = vsel %vm941, %v1990, 0
      %2092 = vmatprep.subr.bf16.mxu0 0
      %2093 = vmatpush1.bf16.msra.mxu0 0
      %2094 = vmatprep.subr.bf16.mxu0 0
      %2095 = vmatpush1.bf16.msra.mxu0 0
      %2096 = vmatprep.subr.bf16.mxu0 0
      %2097 = vmatpush1.bf16.msra.mxu0 0
      %2098 = vmatprep.subr.bf16.mxu0 0
      %2099 = vmatpush1.bf16.msra.mxu0 0
      %2100 = vmatprep.subr.bf16.mxu0 0
      %2101 = vmatpush1.bf16.msra.mxu0 0
      %2102 = vmatprep.subr.bf16.mxu0 0
      %2103 = vmatpush1.bf16.msra.mxu0 0
      %2104 = vmatprep.subr.bf16.mxu0 0
      %2105 = vmatpush1.bf16.msra.mxu0 0
      %2106 = vmatprep.subr.bf16.mxu0 0
      %2107 = vmatpush1.bf16.msra.mxu0 %v2087
      %2108 = vmatprep.subr.bf16.mxu0 0
      %2109 = vmatpush2.bf16.msra.mxu0 0
      %2110 = vmatprep.subr.bf16.mxu0 0
      %2111 = vmatpush2.bf16.msra.mxu0 0
      %2112 = vmatprep.subr.bf16.mxu0 0
      %2113 = vmatpush2.bf16.msra.mxu0 0
      %2114 = vmatprep.subr.bf16.mxu0 0
      %2115 = vmatpush2.bf16.msra.mxu0 0
      %2116 = vmatprep.subr.bf16.mxu0 0
      %2117 = vmatpush2.bf16.msra.mxu0 0
      %2118 = vmatprep.subr.bf16.mxu0 0
      %2119 = vmatpush2.bf16.msra.mxu0 0
      %2120 = vmatprep.subr.bf16.mxu0 0
      %2121 = vmatpush2.bf16.msra.mxu0 0
      %2122 = vmatprep.subr.bf16.mxu0 0
      %2123 = vmatpush2.bf16.msra.mxu0 0
      %2124 = vmatprep.mubr.bf16.mxu0 0
      %2125 = vmatmul.mubr.bf16.gmra.mxu0 %v2090
      %v2126 = vpop.f32.mrf.mxu0
      %v2127 = vadd.f32 0.0, %v2126
      %v2128 = vpop.f32.mrf.mxu0
      %v2129 = vpop.f32.mrf.mxu0
      %v2130 = vadd.f32 0.0, %v2129
      %v2131 = vpop.f32.mrf.mxu0
      %2132 = vdwg.mxu0
      %2133 = vrot.lane.b32.xlu0 %v749, 112
      %v2134 = vpop.permute.xlu0 %2133
      %v2137 = vsel %vm941, %v1991, 0
      %2139 = vmatprep.subr.bf16.mxu0 0
      %2140 = vmatpush1.bf16.msra.mxu0 0
      %2141 = vmatprep.subr.bf16.mxu0 0
      %2142 = vmatpush1.bf16.msra.mxu0 0
      %2143 = vmatprep.subr.bf16.mxu0 0
      %2144 = vmatpush1.bf16.msra.mxu0 0
      %2145 = vmatprep.subr.bf16.mxu0 0
      %2146 = vmatpush1.bf16.msra.mxu0 0
      %2147 = vmatprep.subr.bf16.mxu0 0
      %2148 = vmatpush1.bf16.msra.mxu0 0
      %2149 = vmatprep.subr.bf16.mxu0 0
      %2150 = vmatpush1.bf16.msra.mxu0 0
      %2151 = vmatprep.subr.bf16.mxu0 0
      %2152 = vmatpush1.bf16.msra.mxu0 0
      %2153 = vmatprep.subr.bf16.mxu0 0
      %2154 = vmatpush1.bf16.msra.mxu0 %v2134
      %2155 = vmatprep.subr.bf16.mxu0 0
      %2156 = vmatpush2.bf16.msra.mxu0 0
      %2157 = vmatprep.subr.bf16.mxu0 0
      %2158 = vmatpush2.bf16.msra.mxu0 0
      %2159 = vmatprep.subr.bf16.mxu0 0
      %2160 = vmatpush2.bf16.msra.mxu0 0
      %2161 = vmatprep.subr.bf16.mxu0 0
      %2162 = vmatpush2.bf16.msra.mxu0 0
      %2163 = vmatprep.subr.bf16.mxu0 0
      %2164 = vmatpush2.bf16.msra.mxu0 0
      %2165 = vmatprep.subr.bf16.mxu0 0
      %2166 = vmatpush2.bf16.msra.mxu0 0
      %2167 = vmatprep.subr.bf16.mxu0 0
      %2168 = vmatpush2.bf16.msra.mxu0 0
      %2169 = vmatprep.subr.bf16.mxu0 0
      %2170 = vmatpush2.bf16.msra.mxu0 0
      %2171 = vmatprep.mubr.bf16.mxu0 0
      %2172 = vmatmul.mubr.bf16.gmra.mxu0 %v2137
      %v2173 = vpop.f32.mrf.mxu0
      %v2174 = vadd.f32 0.0, %v2173
      %v2175 = vpop.f32.mrf.mxu0
      %v2176 = vpop.f32.mrf.mxu0
      %v2177 = vadd.f32 0.0, %v2176
      %v2178 = vpop.f32.mrf.mxu0
      %2179 = vdwg.mxu0
      %v2180 = vrcp.pop %v1966
      %v2181 = vrcp.pop %v1969
      %v2182 = vrcp.pop %v1972
      %v2183 = vrcp.pop %v1975
      %v2184 = vrcp.pop %v1978
      %v2185 = vrcp.pop %v1981
      %v2186 = vrcp.pop %v1984
      %v2187 = vrcp.pop %v1987
      %v2188 = vmul.f32 %v2033, %v2180
      %v2189 = vmul.f32 %v2036, %v2181
      %v2190 = vmul.f32 %v2080, %v2182
      %v2191 = vmul.f32 %v2083, %v2183
      %v2192 = vmul.f32 %v2127, %v2184
      %v2193 = vmul.f32 %v2130, %v2185
      %v2194 = vmul.f32 %v2174, %v2186
      %v2195 = vmul.f32 %v2177, %v2187
      %s2196 = scalar_lea.vmem %s7, 48
      %v2197 = vld [vmem:[%s2196] sm:$0xff]
      %v2198 = vld [vmem:[%s2196 + $0x8] sm:$0xff]
      %2199 = vrot.lane.b32.xlu0 %v738, 104
      %v2200 = vpop.permute.xlu0 %2199
      %2201 = vrot.lane.b32.xlu0 %v742, 104
      %v2202 = vpop.permute.xlu0 %2201
      %v2204 = vsel %vm752, %v2200, 0
      %v2207 = vsel %vm752, %v2202, 0
      %2209 = vmatprep.subr.bf16.mxu0 0
      %2210 = vmatpush1.bf16.xpose.msra.mxu0 0
      %2211 = vmatprep.subr.bf16.mxu0 0
      %2212 = vmatpush1.bf16.xpose.msra.mxu0 0
      %2213 = vmatprep.subr.bf16.mxu0 0
      %2214 = vmatpush1.bf16.xpose.msra.mxu0 0
      %2215 = vmatprep.subr.bf16.mxu0 0
      %2216 = vmatpush1.bf16.xpose.msra.mxu0 0
      %2217 = vmatprep.subr.bf16.mxu0 0
      %2218 = vmatpush1.bf16.xpose.msra.mxu0 0
      %2219 = vmatprep.subr.bf16.mxu0 0
      %2220 = vmatpush1.bf16.xpose.msra.mxu0 0
      %2221 = vmatprep.subr.bf16.mxu0 0
      %2222 = vmatpush1.bf16.xpose.msra.mxu0 0
      %2223 = vmatprep.subr.bf16.mxu0 0
      %2224 = vmatpush1.bf16.xpose.msra.mxu0 %v2207
      %2225 = vmatprep.subr.bf16.mxu0 0
      %2226 = vmatpush2.bf16.xpose.msra.mxu0 0
      %2227 = vmatprep.subr.bf16.mxu0 0
      %2228 = vmatpush2.bf16.xpose.msra.mxu0 0
      %2229 = vmatprep.subr.bf16.mxu0 0
      %2230 = vmatpush2.bf16.xpose.msra.mxu0 0
      %2231 = vmatprep.subr.bf16.mxu0 0
      %2232 = vmatpush2.bf16.xpose.msra.mxu0 0
      %2233 = vmatprep.subr.bf16.mxu0 0
      %2234 = vmatpush2.bf16.xpose.msra.mxu0 0
      %2235 = vmatprep.subr.bf16.mxu0 0
      %2236 = vmatpush2.bf16.xpose.msra.mxu0 0
      %2237 = vmatprep.subr.bf16.mxu0 0
      %2238 = vmatpush2.bf16.xpose.msra.mxu0 0
      %2239 = vmatprep.subr.bf16.mxu0 0
      %2240 = vmatpush2.bf16.xpose.msra.mxu0 0
      %2241 = vmatprep.mubr.bf16.mxu0 0
      %2242 = vmatmul.mubr.bf16.gmra.mxu0 %v2204
      %v2243 = vpop.f32.mrf.mxu0
      %v2244 = vadd.f32 %v2197, %v2243
      %v2245 = vpop.f32.mrf.mxu0
      %v2246 = vpop.f32.mrf.mxu0
      %v2247 = vadd.f32 %v2198, %v2246
      %v2248 = vpop.f32.mrf.mxu0
      %2249 = vdwg.mxu0
      %2250 = vrot.lane.b32.xlu0 %v739, 104
      %v2251 = vpop.permute.xlu0 %2250
      %2252 = vrot.lane.b32.xlu0 %v743, 104
      %v2253 = vpop.permute.xlu0 %2252
      %v2255 = vsel %vm752, %v2251, 0
      %v2258 = vsel %vm752, %v2253, 0
      %2260 = vmatprep.subr.bf16.mxu0 0
      %2261 = vmatpush1.bf16.xpose.msra.mxu0 0
      %2262 = vmatprep.subr.bf16.mxu0 0
      %2263 = vmatpush1.bf16.xpose.msra.mxu0 0
      %2264 = vmatprep.subr.bf16.mxu0 0
      %2265 = vmatpush1.bf16.xpose.msra.mxu0 0
      %2266 = vmatprep.subr.bf16.mxu0 0
      %2267 = vmatpush1.bf16.xpose.msra.mxu0 0
      %2268 = vmatprep.subr.bf16.mxu0 0
      %2269 = vmatpush1.bf16.xpose.msra.mxu0 0
      %2270 = vmatprep.subr.bf16.mxu0 0
      %2271 = vmatpush1.bf16.xpose.msra.mxu0 0
      %2272 = vmatprep.subr.bf16.mxu0 0
      %2273 = vmatpush1.bf16.xpose.msra.mxu0 0
      %2274 = vmatprep.subr.bf16.mxu0 0
      %2275 = vmatpush1.bf16.xpose.msra.mxu0 %v2258
      %2276 = vmatprep.subr.bf16.mxu0 0
      %2277 = vmatpush2.bf16.xpose.msra.mxu0 0
      %2278 = vmatprep.subr.bf16.mxu0 0
      %2279 = vmatpush2.bf16.xpose.msra.mxu0 0
      %2280 = vmatprep.subr.bf16.mxu0 0
      %2281 = vmatpush2.bf16.xpose.msra.mxu0 0
      %2282 = vmatprep.subr.bf16.mxu0 0
      %2283 = vmatpush2.bf16.xpose.msra.mxu0 0
      %2284 = vmatprep.subr.bf16.mxu0 0
      %2285 = vmatpush2.bf16.xpose.msra.mxu0 0
      %2286 = vmatprep.subr.bf16.mxu0 0
      %2287 = vmatpush2.bf16.xpose.msra.mxu0 0
      %2288 = vmatprep.subr.bf16.mxu0 0
      %2289 = vmatpush2.bf16.xpose.msra.mxu0 0
      %2290 = vmatprep.subr.bf16.mxu0 0
      %2291 = vmatpush2.bf16.xpose.msra.mxu0 0
      %2292 = vmatprep.mubr.bf16.mxu0 0
      %2293 = vmatmul.mubr.bf16.gmra.mxu0 %v2255
      %v2294 = vpop.f32.mrf.mxu0
      %v2295 = vadd.f32 %v2197, %v2294
      %v2296 = vpop.f32.mrf.mxu0
      %v2297 = vpop.f32.mrf.mxu0
      %v2298 = vadd.f32 %v2198, %v2297
      %v2299 = vpop.f32.mrf.mxu0
      %2300 = vdwg.mxu0
      %2301 = vrot.lane.b32.xlu0 %v740, 104
      %v2302 = vpop.permute.xlu0 %2301
      %2303 = vrot.lane.b32.xlu0 %v744, 104
      %v2304 = vpop.permute.xlu0 %2303
      %v2306 = vsel %vm752, %v2302, 0
      %v2309 = vsel %vm752, %v2304, 0
      %2311 = vmatprep.subr.bf16.mxu0 0
      %2312 = vmatpush1.bf16.xpose.msra.mxu0 0
      %2313 = vmatprep.subr.bf16.mxu0 0
      %2314 = vmatpush1.bf16.xpose.msra.mxu0 0
      %2315 = vmatprep.subr.bf16.mxu0 0
      %2316 = vmatpush1.bf16.xpose.msra.mxu0 0
      %2317 = vmatprep.subr.bf16.mxu0 0
      %2318 = vmatpush1.bf16.xpose.msra.mxu0 0
      %2319 = vmatprep.subr.bf16.mxu0 0
      %2320 = vmatpush1.bf16.xpose.msra.mxu0 0
      %2321 = vmatprep.subr.bf16.mxu0 0
      %2322 = vmatpush1.bf16.xpose.msra.mxu0 0
      %2323 = vmatprep.subr.bf16.mxu0 0
      %2324 = vmatpush1.bf16.xpose.msra.mxu0 0
      %2325 = vmatprep.subr.bf16.mxu0 0
      %2326 = vmatpush1.bf16.xpose.msra.mxu0 %v2309
      %2327 = vmatprep.subr.bf16.mxu0 0
      %2328 = vmatpush2.bf16.xpose.msra.mxu0 0
      %2329 = vmatprep.subr.bf16.mxu0 0
      %2330 = vmatpush2.bf16.xpose.msra.mxu0 0
      %2331 = vmatprep.subr.bf16.mxu0 0
      %2332 = vmatpush2.bf16.xpose.msra.mxu0 0
      %2333 = vmatprep.subr.bf16.mxu0 0
      %2334 = vmatpush2.bf16.xpose.msra.mxu0 0
      %2335 = vmatprep.subr.bf16.mxu0 0
      %2336 = vmatpush2.bf16.xpose.msra.mxu0 0
      %2337 = vmatprep.subr.bf16.mxu0 0
      %2338 = vmatpush2.bf16.xpose.msra.mxu0 0
      %2339 = vmatprep.subr.bf16.mxu0 0
      %2340 = vmatpush2.bf16.xpose.msra.mxu0 0
      %2341 = vmatprep.subr.bf16.mxu0 0
      %2342 = vmatpush2.bf16.xpose.msra.mxu0 0
      %2343 = vmatprep.mubr.bf16.mxu0 0
      %2344 = vmatmul.mubr.bf16.gmra.mxu0 %v2306
      %v2345 = vpop.f32.mrf.mxu0
      %v2346 = vadd.f32 %v2197, %v2345
      %v2347 = vpop.f32.mrf.mxu0
      %v2348 = vpop.f32.mrf.mxu0
      %v2349 = vadd.f32 %v2198, %v2348
      %v2350 = vpop.f32.mrf.mxu0
      %2351 = vdwg.mxu0
      %2352 = vrot.lane.b32.xlu0 %v741, 104
      %v2353 = vpop.permute.xlu0 %2352
      %2354 = vrot.lane.b32.xlu0 %v745, 104
      %v2355 = vpop.permute.xlu0 %2354
      %v2357 = vsel %vm752, %v2353, 0
      %v2360 = vsel %vm752, %v2355, 0
      %2362 = vmatprep.subr.bf16.mxu0 0
      %2363 = vmatpush1.bf16.xpose.msra.mxu0 0
      %2364 = vmatprep.subr.bf16.mxu0 0
      %2365 = vmatpush1.bf16.xpose.msra.mxu0 0
      %2366 = vmatprep.subr.bf16.mxu0 0
      %2367 = vmatpush1.bf16.xpose.msra.mxu0 0
      %2368 = vmatprep.subr.bf16.mxu0 0
      %2369 = vmatpush1.bf16.xpose.msra.mxu0 0
      %2370 = vmatprep.subr.bf16.mxu0 0
      %2371 = vmatpush1.bf16.xpose.msra.mxu0 0
      %2372 = vmatprep.subr.bf16.mxu0 0
      %2373 = vmatpush1.bf16.xpose.msra.mxu0 0
      %2374 = vmatprep.subr.bf16.mxu0 0
      %2375 = vmatpush1.bf16.xpose.msra.mxu0 0
      %2376 = vmatprep.subr.bf16.mxu0 0
      %2377 = vmatpush1.bf16.xpose.msra.mxu0 %v2360
      %2378 = vmatprep.subr.bf16.mxu0 0
      %2379 = vmatpush2.bf16.xpose.msra.mxu0 0
      %2380 = vmatprep.subr.bf16.mxu0 0
      %2381 = vmatpush2.bf16.xpose.msra.mxu0 0
      %2382 = vmatprep.subr.bf16.mxu0 0
      %2383 = vmatpush2.bf16.xpose.msra.mxu0 0
      %2384 = vmatprep.subr.bf16.mxu0 0
      %2385 = vmatpush2.bf16.xpose.msra.mxu0 0
      %2386 = vmatprep.subr.bf16.mxu0 0
      %2387 = vmatpush2.bf16.xpose.msra.mxu0 0
      %2388 = vmatprep.subr.bf16.mxu0 0
      %2389 = vmatpush2.bf16.xpose.msra.mxu0 0
      %2390 = vmatprep.subr.bf16.mxu0 0
      %2391 = vmatpush2.bf16.xpose.msra.mxu0 0
      %2392 = vmatprep.subr.bf16.mxu0 0
      %2393 = vmatpush2.bf16.xpose.msra.mxu0 0
      %2394 = vmatprep.mubr.bf16.mxu0 0
      %2395 = vmatmul.mubr.bf16.gmra.mxu0 %v2357
      %v2396 = vpop.f32.mrf.mxu0
      %v2397 = vadd.f32 %v2197, %v2396
      %v2398 = vpop.f32.mrf.mxu0
      %v2399 = vpop.f32.mrf.mxu0
      %v2400 = vadd.f32 %v2198, %v2399
      %v2401 = vpop.f32.mrf.mxu0
      %2402 = vdwg.mxu0
      %v2403 = vsel %vm941, %v2244, -inf
      %2404 = vmax.xlane.f32.xlu0 %v2403
      %v2405 = vpop.xlane.xlu0 %2404
      %v2406 = vsel %vm941, %v2247, -inf
      %2407 = vmax.xlane.f32.xlu0 %v2406
      %v2408 = vpop.xlane.xlu0 %2407
      %v2409 = vsel %vm941, %v2295, -inf
      %2410 = vmax.xlane.f32.xlu0 %v2409
      %v2411 = vpop.xlane.xlu0 %2410
      %v2412 = vsel %vm941, %v2298, -inf
      %2413 = vmax.xlane.f32.xlu0 %v2412
      %v2414 = vpop.xlane.xlu0 %2413
      %v2415 = vsel %vm941, %v2346, -inf
      %2416 = vmax.xlane.f32.xlu0 %v2415
      %v2417 = vpop.xlane.xlu0 %2416
      %v2418 = vsel %vm941, %v2349, -inf
      %2419 = vmax.xlane.f32.xlu0 %v2418
      %v2420 = vpop.xlane.xlu0 %2419
      %v2421 = vsel %vm941, %v2397, -inf
      %2422 = vmax.xlane.f32.xlu0 %v2421
      %v2423 = vpop.xlane.xlu0 %2422
      %v2424 = vsel %vm941, %v2400, -inf
      %2425 = vmax.xlane.f32.xlu0 %v2424
      %v2426 = vpop.xlane.xlu0 %2425
      %v2427 = vsub.f32 %v2244, %v2405
      %v2428 = vsub.f32 %v2247, %v2408
      %v2429 = vsub.f32 %v2295, %v2411
      %v2430 = vsub.f32 %v2298, %v2414
      %v2431 = vsub.f32 %v2346, %v2417
      %v2432 = vsub.f32 %v2349, %v2420
      %v2433 = vsub.f32 %v2397, %v2423
      %v2434 = vsub.f32 %v2400, %v2426
      %v2435 = vmul.f32 %v2427, 1.442695
      %v2436 = vpow.pop %v2435
      %v2437 = vmul.f32 %v2428, 1.442695
      %v2438 = vpow.pop %v2437
      %v2439 = vmul.f32 %v2429, 1.442695
      %v2440 = vpow.pop %v2439
      %v2441 = vmul.f32 %v2430, 1.442695
      %v2442 = vpow.pop %v2441
      %v2443 = vmul.f32 %v2431, 1.442695
      %v2444 = vpow.pop %v2443
      %v2445 = vmul.f32 %v2432, 1.442695
      %v2446 = vpow.pop %v2445
      %v2447 = vmul.f32 %v2433, 1.442695
      %v2448 = vpow.pop %v2447
      %v2449 = vmul.f32 %v2434, 1.442695
      %v2450 = vpow.pop %v2449
      %v2451 = vsel %vm941, %v2436, 0.0
      %2452 = vadd.xlane.f32.xlu0 %v2451
      %v2453 = vpop.xlane.xlu0 %2452
      %v2454 = vsel %vm941, %v2438, 0.0
      %2455 = vadd.xlane.f32.xlu0 %v2454
      %v2456 = vpop.xlane.xlu0 %2455
      %v2457 = vsel %vm941, %v2440, 0.0
      %2458 = vadd.xlane.f32.xlu0 %v2457
      %v2459 = vpop.xlane.xlu0 %2458
      %v2460 = vsel %vm941, %v2442, 0.0
      %2461 = vadd.xlane.f32.xlu0 %v2460
      %v2462 = vpop.xlane.xlu0 %2461
      %v2463 = vsel %vm941, %v2444, 0.0
      %2464 = vadd.xlane.f32.xlu0 %v2463
      %v2465 = vpop.xlane.xlu0 %2464
      %v2466 = vsel %vm941, %v2446, 0.0
      %2467 = vadd.xlane.f32.xlu0 %v2466
      %v2468 = vpop.xlane.xlu0 %2467
      %v2469 = vsel %vm941, %v2448, 0.0
      %2470 = vadd.xlane.f32.xlu0 %v2469
      %v2471 = vpop.xlane.xlu0 %2470
      %v2472 = vsel %vm941, %v2450, 0.0
      %2473 = vadd.xlane.f32.xlu0 %v2472
      %v2474 = vpop.xlane.xlu0 %2473
      %v2475 = vpack.c.bf16 %v2438, %v2436
      %v2476 = vpack.c.bf16 %v2442, %v2440
      %v2477 = vpack.c.bf16 %v2446, %v2444
      %v2478 = vpack.c.bf16 %v2450, %v2448
      %2479 = vrot.lane.b32.xlu0 %v746, 104
      %v2480 = vpop.permute.xlu0 %2479
      %v2483 = vsel %vm941, %v2475, 0
      %2485 = vmatprep.subr.bf16.mxu0 0
      %2486 = vmatpush1.bf16.msra.mxu0 0
      %2487 = vmatprep.subr.bf16.mxu0 0
      %2488 = vmatpush1.bf16.msra.mxu0 0
      %2489 = vmatprep.subr.bf16.mxu0 0
      %2490 = vmatpush1.bf16.msra.mxu0 0
      %2491 = vmatprep.subr.bf16.mxu0 0
      %2492 = vmatpush1.bf16.msra.mxu0 0
      %2493 = vmatprep.subr.bf16.mxu0 0
      %2494 = vmatpush1.bf16.msra.mxu0 0
      %2495 = vmatprep.subr.bf16.mxu0 0
      %2496 = vmatpush1.bf16.msra.mxu0 0
      %2497 = vmatprep.subr.bf16.mxu0 0
      %2498 = vmatpush1.bf16.msra.mxu0 0
      %2499 = vmatprep.subr.bf16.mxu0 0
      %2500 = vmatpush1.bf16.msra.mxu0 %v2480
      %2501 = vmatprep.subr.bf16.mxu0 0
      %2502 = vmatpush2.bf16.msra.mxu0 0
      %2503 = vmatprep.subr.bf16.mxu0 0
      %2504 = vmatpush2.bf16.msra.mxu0 0
      %2505 = vmatprep.subr.bf16.mxu0 0
      %2506 = vmatpush2.bf16.msra.mxu0 0
      %2507 = vmatprep.subr.bf16.mxu0 0
      %2508 = vmatpush2.bf16.msra.mxu0 0
      %2509 = vmatprep.subr.bf16.mxu0 0
      %2510 = vmatpush2.bf16.msra.mxu0 0
      %2511 = vmatprep.subr.bf16.mxu0 0
      %2512 = vmatpush2.bf16.msra.mxu0 0
      %2513 = vmatprep.subr.bf16.mxu0 0
      %2514 = vmatpush2.bf16.msra.mxu0 0
      %2515 = vmatprep.subr.bf16.mxu0 0
      %2516 = vmatpush2.bf16.msra.mxu0 0
      %2517 = vmatprep.mubr.bf16.mxu0 0
      %2518 = vmatmul.mubr.bf16.gmra.mxu0 %v2483
      %v2519 = vpop.f32.mrf.mxu0
      %v2520 = vadd.f32 0.0, %v2519
      %v2521 = vpop.f32.mrf.mxu0
      %v2522 = vpop.f32.mrf.mxu0
      %v2523 = vadd.f32 0.0, %v2522
      %v2524 = vpop.f32.mrf.mxu0
      %2525 = vdwg.mxu0
      %2526 = vrot.lane.b32.xlu0 %v747, 104
      %v2527 = vpop.permute.xlu0 %2526
      %v2530 = vsel %vm941, %v2476, 0
      %2532 = vmatprep.subr.bf16.mxu0 0
      %2533 = vmatpush1.bf16.msra.mxu0 0
      %2534 = vmatprep.subr.bf16.mxu0 0
      %2535 = vmatpush1.bf16.msra.mxu0 0
      %2536 = vmatprep.subr.bf16.mxu0 0
      %2537 = vmatpush1.bf16.msra.mxu0 0
      %2538 = vmatprep.subr.bf16.mxu0 0
      %2539 = vmatpush1.bf16.msra.mxu0 0
      %2540 = vmatprep.subr.bf16.mxu0 0
      %2541 = vmatpush1.bf16.msra.mxu0 0
      %2542 = vmatprep.subr.bf16.mxu0 0
      %2543 = vmatpush1.bf16.msra.mxu0 0
      %2544 = vmatprep.subr.bf16.mxu0 0
      %2545 = vmatpush1.bf16.msra.mxu0 0
      %2546 = vmatprep.subr.bf16.mxu0 0
      %2547 = vmatpush1.bf16.msra.mxu0 %v2527
      %2548 = vmatprep.subr.bf16.mxu0 0
      %2549 = vmatpush2.bf16.msra.mxu0 0
      %2550 = vmatprep.subr.bf16.mxu0 0
      %2551 = vmatpush2.bf16.msra.mxu0 0
      %2552 = vmatprep.subr.bf16.mxu0 0
      %2553 = vmatpush2.bf16.msra.mxu0 0
      %2554 = vmatprep.subr.bf16.mxu0 0
      %2555 = vmatpush2.bf16.msra.mxu0 0
      %2556 = vmatprep.subr.bf16.mxu0 0
      %2557 = vmatpush2.bf16.msra.mxu0 0
      %2558 = vmatprep.subr.bf16.mxu0 0
      %2559 = vmatpush2.bf16.msra.mxu0 0
      %2560 = vmatprep.subr.bf16.mxu0 0
      %2561 = vmatpush2.bf16.msra.mxu0 0
      %2562 = vmatprep.subr.bf16.mxu0 0
      %2563 = vmatpush2.bf16.msra.mxu0 0
      %2564 = vmatprep.mubr.bf16.mxu0 0
      %2565 = vmatmul.mubr.bf16.gmra.mxu0 %v2530
      %v2566 = vpop.f32.mrf.mxu0
      %v2567 = vadd.f32 0.0, %v2566
      %v2568 = vpop.f32.mrf.mxu0
      %v2569 = vpop.f32.mrf.mxu0
      %v2570 = vadd.f32 0.0, %v2569
      %v2571 = vpop.f32.mrf.mxu0
      %2572 = vdwg.mxu0
      %2573 = vrot.lane.b32.xlu0 %v748, 104
      %v2574 = vpop.permute.xlu0 %2573
      %v2577 = vsel %vm941, %v2477, 0
      %2579 = vmatprep.subr.bf16.mxu0 0
      %2580 = vmatpush1.bf16.msra.mxu0 0
      %2581 = vmatprep.subr.bf16.mxu0 0
      %2582 = vmatpush1.bf16.msra.mxu0 0
      %2583 = vmatprep.subr.bf16.mxu0 0
      %2584 = vmatpush1.bf16.msra.mxu0 0
      %2585 = vmatprep.subr.bf16.mxu0 0
      %2586 = vmatpush1.bf16.msra.mxu0 0
      %2587 = vmatprep.subr.bf16.mxu0 0
      %2588 = vmatpush1.bf16.msra.mxu0 0
      %2589 = vmatprep.subr.bf16.mxu0 0
      %2590 = vmatpush1.bf16.msra.mxu0 0
      %2591 = vmatprep.subr.bf16.mxu0 0
      %2592 = vmatpush1.bf16.msra.mxu0 0
      %2593 = vmatprep.subr.bf16.mxu0 0
      %2594 = vmatpush1.bf16.msra.mxu0 %v2574
      %2595 = vmatprep.subr.bf16.mxu0 0
      %2596 = vmatpush2.bf16.msra.mxu0 0
      %2597 = vmatprep.subr.bf16.mxu0 0
      %2598 = vmatpush2.bf16.msra.mxu0 0
      %2599 = vmatprep.subr.bf16.mxu0 0
      %2600 = vmatpush2.bf16.msra.mxu0 0
      %2601 = vmatprep.subr.bf16.mxu0 0
      %2602 = vmatpush2.bf16.msra.mxu0 0
      %2603 = vmatprep.subr.bf16.mxu0 0
      %2604 = vmatpush2.bf16.msra.mxu0 0
      %2605 = vmatprep.subr.bf16.mxu0 0
      %2606 = vmatpush2.bf16.msra.mxu0 0
      %2607 = vmatprep.subr.bf16.mxu0 0
      %2608 = vmatpush2.bf16.msra.mxu0 0
      %2609 = vmatprep.subr.bf16.mxu0 0
      %2610 = vmatpush2.bf16.msra.mxu0 0
      %2611 = vmatprep.mubr.bf16.mxu0 0
      %2612 = vmatmul.mubr.bf16.gmra.mxu0 %v2577
      %v2613 = vpop.f32.mrf.mxu0
      %v2614 = vadd.f32 0.0, %v2613
      %v2615 = vpop.f32.mrf.mxu0
      %v2616 = vpop.f32.mrf.mxu0
      %v2617 = vadd.f32 0.0, %v2616
      %v2618 = vpop.f32.mrf.mxu0
      %2619 = vdwg.mxu0
      %2620 = vrot.lane.b32.xlu0 %v749, 104
      %v2621 = vpop.permute.xlu0 %2620
      %v2624 = vsel %vm941, %v2478, 0
      %2626 = vmatprep.subr.bf16.mxu0 0
      %2627 = vmatpush1.bf16.msra.mxu0 0
      %2628 = vmatprep.subr.bf16.mxu0 0
      %2629 = vmatpush1.bf16.msra.mxu0 0
      %2630 = vmatprep.subr.bf16.mxu0 0
      %2631 = vmatpush1.bf16.msra.mxu0 0
      %2632 = vmatprep.subr.bf16.mxu0 0
      %2633 = vmatpush1.bf16.msra.mxu0 0
      %2634 = vmatprep.subr.bf16.mxu0 0
      %2635 = vmatpush1.bf16.msra.mxu0 0
      %2636 = vmatprep.subr.bf16.mxu0 0
      %2637 = vmatpush1.bf16.msra.mxu0 0
      %2638 = vmatprep.subr.bf16.mxu0 0
      %2639 = vmatpush1.bf16.msra.mxu0 0
      %2640 = vmatprep.subr.bf16.mxu0 0
      %2641 = vmatpush1.bf16.msra.mxu0 %v2621
      %2642 = vmatprep.subr.bf16.mxu0 0
      %2643 = vmatpush2.bf16.msra.mxu0 0
      %2644 = vmatprep.subr.bf16.mxu0 0
      %2645 = vmatpush2.bf16.msra.mxu0 0
      %2646 = vmatprep.subr.bf16.mxu0 0
      %2647 = vmatpush2.bf16.msra.mxu0 0
      %2648 = vmatprep.subr.bf16.mxu0 0
      %2649 = vmatpush2.bf16.msra.mxu0 0
      %2650 = vmatprep.subr.bf16.mxu0 0
      %2651 = vmatpush2.bf16.msra.mxu0 0
      %2652 = vmatprep.subr.bf16.mxu0 0
      %2653 = vmatpush2.bf16.msra.mxu0 0
      %2654 = vmatprep.subr.bf16.mxu0 0
      %2655 = vmatpush2.bf16.msra.mxu0 0
      %2656 = vmatprep.subr.bf16.mxu0 0
      %2657 = vmatpush2.bf16.msra.mxu0 0
      %2658 = vmatprep.mubr.bf16.mxu0 0
      %2659 = vmatmul.mubr.bf16.gmra.mxu0 %v2624
      %v2660 = vpop.f32.mrf.mxu0
      %v2661 = vadd.f32 0.0, %v2660
      %v2662 = vpop.f32.mrf.mxu0
      %v2663 = vpop.f32.mrf.mxu0
      %v2664 = vadd.f32 0.0, %v2663
      %v2665 = vpop.f32.mrf.mxu0
      %2666 = vdwg.mxu0
      %v2667 = vrcp.pop %v2453
      %v2668 = vrcp.pop %v2456
      %v2669 = vrcp.pop %v2459
      %v2670 = vrcp.pop %v2462
      %v2671 = vrcp.pop %v2465
      %v2672 = vrcp.pop %v2468
      %v2673 = vrcp.pop %v2471
      %v2674 = vrcp.pop %v2474
      %v2675 = vmul.f32 %v2520, %v2667
      %v2676 = vmul.f32 %v2523, %v2668
      %v2677 = vmul.f32 %v2567, %v2669
      %v2678 = vmul.f32 %v2570, %v2670
      %v2679 = vmul.f32 %v2614, %v2671
      %v2680 = vmul.f32 %v2617, %v2672
      %v2681 = vmul.f32 %v2661, %v2673
      %v2682 = vmul.f32 %v2664, %v2674
      %2691 = vrot.lane.b32.xlu0 %v1701, 8
      %v2692 = vpop.permute.xlu0 %2691
      %2693 = vrot.lane.b32.xlu0 %v1702, 8
      %v2694 = vpop.permute.xlu0 %2693
      %2695 = vrot.lane.b32.xlu0 %v1703, 8
      %v2696 = vpop.permute.xlu0 %2695
      %2697 = vrot.lane.b32.xlu0 %v1704, 8
      %v2698 = vpop.permute.xlu0 %2697
      %2699 = vrot.lane.b32.xlu0 %v1705, 8
      %v2700 = vpop.permute.xlu0 %2699
      %2701 = vrot.lane.b32.xlu0 %v1706, 8
      %v2702 = vpop.permute.xlu0 %2701
      %2703 = vrot.lane.b32.xlu0 %v1707, 8
      %v2704 = vpop.permute.xlu0 %2703
      %2705 = vrot.lane.b32.xlu0 %v1708, 8
      %v2706 = vpop.permute.xlu0 %2705
      %2723 = vrot.lane.b32.xlu0 %v2188, 16
      %v2724 = vpop.permute.xlu0 %2723
      %2725 = vrot.lane.b32.xlu0 %v2189, 16
      %v2726 = vpop.permute.xlu0 %2725
      %2727 = vrot.lane.b32.xlu0 %v2190, 16
      %v2728 = vpop.permute.xlu0 %2727
      %2729 = vrot.lane.b32.xlu0 %v2191, 16
      %v2730 = vpop.permute.xlu0 %2729
      %2731 = vrot.lane.b32.xlu0 %v2192, 16
      %v2732 = vpop.permute.xlu0 %2731
      %2733 = vrot.lane.b32.xlu0 %v2193, 16
      %v2734 = vpop.permute.xlu0 %2733
      %2735 = vrot.lane.b32.xlu0 %v2194, 16
      %v2736 = vpop.permute.xlu0 %2735
      %2737 = vrot.lane.b32.xlu0 %v2195, 16
      %v2738 = vpop.permute.xlu0 %2737
      %2755 = vrot.lane.b32.xlu0 %v2675, 24
      %v2756 = vpop.permute.xlu0 %2755
      %2757 = vrot.lane.b32.xlu0 %v2676, 24
      %v2758 = vpop.permute.xlu0 %2757
      %2759 = vrot.lane.b32.xlu0 %v2677, 24
      %v2760 = vpop.permute.xlu0 %2759
      %2761 = vrot.lane.b32.xlu0 %v2678, 24
      %v2762 = vpop.permute.xlu0 %2761
      %2763 = vrot.lane.b32.xlu0 %v2679, 24
      %v2764 = vpop.permute.xlu0 %2763
      %2765 = vrot.lane.b32.xlu0 %v2680, 24
      %v2766 = vpop.permute.xlu0 %2765
      %2767 = vrot.lane.b32.xlu0 %v2681, 24
      %v2768 = vpop.permute.xlu0 %2767
      %2769 = vrot.lane.b32.xlu0 %v2682, 24
      %v2770 = vpop.permute.xlu0 %2769
      %v2779 = vsel %vm752, %v1202, %v2692
      %v2780 = vsel %vm752, %v1203, %v2694
      %v2781 = vsel %vm752, %v1204, %v2696
      %v2782 = vsel %vm752, %v1205, %v2698
      %v2783 = vsel %vm752, %v1206, %v2700
      %v2784 = vsel %vm752, %v1207, %v2702
      %v2785 = vsel %vm752, %v1208, %v2704
      %v2786 = vsel %vm752, %v1209, %v2706
      %v2787 = vsel %vm941, %v2779, %v2724
      %v2788 = vsel %vm941, %v2780, %v2726
      %v2789 = vsel %vm941, %v2781, %v2728
      %v2790 = vsel %vm941, %v2782, %v2730
      %v2791 = vsel %vm941, %v2783, %v2732
      %v2792 = vsel %vm941, %v2784, %v2734
      %v2793 = vsel %vm941, %v2785, %v2736
      %v2794 = vsel %vm941, %v2786, %v2738
      %vm2795 = vcmask 195584
      %v2796 = vsel %vm2795, %v2787, %v2756
      %v2797 = vsel %vm2795, %v2788, %v2758
      %v2798 = vsel %vm2795, %v2789, %v2760
      %v2799 = vsel %vm2795, %v2790, %v2762
      %v2800 = vsel %vm2795, %v2791, %v2764
      %v2801 = vsel %vm2795, %v2792, %v2766
      %v2802 = vsel %vm2795, %v2793, %v2768
      %v2803 = vsel %vm2795, %v2794, %v2770
      %v2804 = vpack.c.bf16 %v2797, %v2796
      %v2805 = vpack.c.bf16 %v2799, %v2798
      %v2806 = vpack.c.bf16 %v2801, %v2800
      %v2807 = vpack.c.bf16 %v2803, %v2802
      %v2808 = vld [vmem:[%s5] sm:$0xf]
      %v2809 = vld [vmem:[%s5 + $0x4] sm:$0xf]
      %v2810 = vld [vmem:[%s5 + $0x8] sm:$0xf]
      %v2811 = vld [vmem:[%s5 + $0xc] sm:$0xf]
      %v2816 = vunpack.c.l.b16 %v2808
      %v2817 = vunpack.c.l.b16 %v2809
      %v2818 = vunpack.c.l.b16 %v2810
      %v2819 = vunpack.c.l.b16 %v2811
      %v2820 = vpack.c.b16 %v2817, %v2816
      %v2821 = vpack.c.b16 %v2819, %v2818
      %v2825 = vsel %vm318, %v2804, 0
      %v2828 = vsel %vm318, %v2805, 0
      %v2831 = vsel %vm318, %v2806, 0
      %v2834 = vsel %vm318, %v2807, 0
      %2836 = vmatprep.subr.bf16.mxu0 0
      %2837 = vmatpush1.bf16.msra.mxu0 0
      %2838 = vmatprep.subr.bf16.mxu0 0
      %2839 = vmatpush1.bf16.msra.mxu0 0
      %2840 = vmatprep.subr.bf16.mxu0 0
      %2841 = vmatpush1.bf16.msra.mxu0 0
      %2842 = vmatprep.subr.bf16.mxu0 0
      %2843 = vmatpush1.bf16.msra.mxu0 0
      %2844 = vmatprep.subr.bf16.mxu0 0
      %2845 = vmatpush1.bf16.msra.mxu0 0
      %2846 = vmatprep.subr.bf16.mxu0 0
      %2847 = vmatpush1.bf16.msra.mxu0 0
      %2848 = vmatprep.subr.bf16.mxu0 0
      %2849 = vmatpush1.bf16.msra.mxu0 %v2821
      %2850 = vmatprep.subr.bf16.mxu0 0
      %2851 = vmatpush1.bf16.msra.mxu0 %v2820
      %2852 = vmatprep.subr.bf16.mxu0 0
      %2853 = vmatpush2.bf16.msra.mxu0 0
      %2854 = vmatprep.subr.bf16.mxu0 0
      %2855 = vmatpush2.bf16.msra.mxu0 0
      %2856 = vmatprep.subr.bf16.mxu0 0
      %2857 = vmatpush2.bf16.msra.mxu0 0
      %2858 = vmatprep.subr.bf16.mxu0 0
      %2859 = vmatpush2.bf16.msra.mxu0 0
      %2860 = vmatprep.subr.bf16.mxu0 0
      %2861 = vmatpush2.bf16.msra.mxu0 0
      %2862 = vmatprep.subr.bf16.mxu0 0
      %2863 = vmatpush2.bf16.msra.mxu0 0
      %2864 = vmatprep.subr.bf16.mxu0 0
      %2865 = vmatpush2.bf16.msra.mxu0 0
      %2866 = vmatprep.subr.bf16.mxu0 0
      %2867 = vmatpush2.bf16.msra.mxu0 0
      %2868 = vmatprep.mubr.bf16.mxu0 0
      %2869 = vmatmul.mubr.bf16.gmra.mxu0 %v2825
      %v2870 = vpop.f32.mrf.mxu0
      %v2871 = vadd.f32 0.0, %v2870
      %v2872 = vpop.f32.mrf.mxu0
      %v2873 = vpop.f32.mrf.mxu0
      %v2874 = vadd.f32 0.0, %v2873
      %v2875 = vpop.f32.mrf.mxu0
      %2876 = vmatprep.mubr.bf16.mxu0 0
      %2877 = vmatmul.mubr.bf16.gmra.mxu0 %v2828
      %v2878 = vpop.f32.mrf.mxu0
      %v2879 = vadd.f32 0.0, %v2878
      %v2880 = vpop.f32.mrf.mxu0
      %v2881 = vpop.f32.mrf.mxu0
      %v2882 = vadd.f32 0.0, %v2881
      %v2883 = vpop.f32.mrf.mxu0
      %2884 = vmatprep.mubr.bf16.mxu0 0
      %2885 = vmatmul.mubr.bf16.gmra.mxu0 %v2831
      %v2886 = vpop.f32.mrf.mxu0
      %v2887 = vadd.f32 0.0, %v2886
      %v2888 = vpop.f32.mrf.mxu0
      %v2889 = vpop.f32.mrf.mxu0
      %v2890 = vadd.f32 0.0, %v2889
      %v2891 = vpop.f32.mrf.mxu0
      %2892 = vmatprep.mubr.bf16.mxu0 0
      %2893 = vmatmul.mubr.bf16.gmra.mxu0 %v2834
      %v2894 = vpop.f32.mrf.mxu0
      %v2895 = vadd.f32 0.0, %v2894
      %v2896 = vpop.f32.mrf.mxu0
      %v2897 = vpop.f32.mrf.mxu0
      %v2898 = vadd.f32 0.0, %v2897
      %v2899 = vpop.f32.mrf.mxu0
      %2900 = vdwg.mxu0
      %v2901 = vadd.f32 %v310, %v2871
      %v2902 = vadd.f32 %v311, %v2874
      %v2903 = vadd.f32 %v312, %v2879
      %v2904 = vadd.f32 %v313, %v2882
      %v2905 = vadd.f32 %v314, %v2887
      %v2906 = vadd.f32 %v315, %v2890
      %v2907 = vadd.f32 %v316, %v2895
      %v2908 = vadd.f32 %v317, %v2898
      %v2909 = vld [vmem:[%s6] sm:$0x1]
      %v2911 = vlaneseq
      %v2912 = vshrl.u32 %v2911, 7
      %v2913 = vsub.s32 0, %v2912
      %v2914 = vrot.slane %v2909, %v2913
      %v2916 = vadd.f32 %v2901, %v2914
      %v2917 = vadd.f32 %v2902, %v2914
      %v2918 = vadd.f32 %v2903, %v2914
      %v2919 = vadd.f32 %v2904, %v2914
      %v2920 = vadd.f32 %v2905, %v2914
      %v2921 = vadd.f32 %v2906, %v2914
      %v2922 = vadd.f32 %v2907, %v2914
      %v2923 = vadd.f32 %v2908, %v2914
      %2924 = vst.msk [vmem:[%s307] sm:$0xff] %vm318, %v2916
      %2925 = vst.msk [vmem:[%s307 + $0x8] sm:$0xff] %vm318, %v2917
      %2926 = vst.msk [vmem:[%s307 + $0x10] sm:$0xff] %vm318, %v2918
      %2927 = vst.msk [vmem:[%s307 + $0x18] sm:$0xff] %vm318, %v2919
      %2928 = vst.msk [vmem:[%s307 + $0x20] sm:$0xff] %vm318, %v2920
      %2929 = vst.msk [vmem:[%s307 + $0x28] sm:$0xff] %vm318, %v2921
      %2930 = vst.msk [vmem:[%s307 + $0x30] sm:$0xff] %vm318, %v2922
      %2931 = vst.msk [vmem:[%s307 + $0x38] sm:$0xff] %vm318, %v2923
      %s2932 = smul.u32 8, %s19
      %p2933 = scmp.lt.s32.totalorder %s2932, 15
      %s2934 = scalar_select %p2933, %s2932, 15
      %s2935 = smul.addr %s2934, 8
      %s2936 = scalar_lea.vmem %s8, %s2935
      // Predicated region
      $region53: #{forward.4} parent=51 // pred_check
        %p2937 = pneg %p210
      $region54: #{forward.4} parent=51 // pred_check_branch
        %2939 = sbr.rel (%p2937) target = $region56
      $region55: #{forward.4} parent=51 // pred_region
        %s2940 = smul.u32 8, %s19
      $region56: #{forward.4} parent=51 // pred_fallthru
        _
    $region52: #{forward.4} parent=5 // pred_fallthru
      _
    %p2941 = scmp.le.s32.totalorder 2, %s14
    // Predicated region
    $region57: #{forward.4} parent=5 // pred_check
      %p2942 = pneg %p2941
    $region58: #{forward.4} parent=5 // pred_check_branch
      %2944 = sbr.rel (%p2942) target = $region60
    $region59: #{forward.4} parent=5 // pred_region
      %s2945 = ssub.s32 %s14, 2
      // Predicated region
      $region61: #{forward.4} parent=59 // pred_check
        %p2946 = pneg %p216
      $region62: #{forward.4} parent=59 // pred_check_branch
        %2948 = sbr.rel (%p2946) target = $region64
      $region63: #{forward.4} parent=59 // pred_region
        %s2949 = smul.u32 8, %s20
        %p2950 = scmp.lt.s32.totalorder %s2949, 15
        %s2951 = scalar_select %p2950, %s2949, 15
        %s2952 = smul.addr %s2951, 8
        %s2953 = scalar_lea.vmem %s8, %s2952
      $region64: #{forward.4} parent=59 // pred_fallthru
        _
    $region60: #{forward.4} parent=5 // pred_fallthru
      _
  $region6: #{forward.4} parent=0 // loop_footer
    %s18 = sadd.s32 1, %s14
  $region7: #{forward.4} parent=0 // loop_footer_branch
    %13 = sbr.rel target = $region3
  $region8: #{forward.4} parent=0 // loop_exit
    _

// kernel: forward.6
$region0: #{forward.6}
  #allocation0 [shape = 'u32[]', space=smem, size = 0x4, offset = 0x4, fixed_abs, tag = 'smem constant byte address 0x4 - core index']
  #allocation1 [shape = 'u32[144,128]{1,0:T(1,128)}', space=vmem, size = 0x12000, scoped, tag = 'internal scratch']
  %s0 = inlined_call_operand.vmem [shape: f32[128,32], index: 0, kind: input, shape index: {}]
  %s1 = inlined_call_operand.vmem [shape: f32[1,32], index: 1, kind: input, shape index: {}]
  %s2 = inlined_call_operand.vmem [shape: f32[1,32], index: 2, kind: input, shape index: {}]
  %s3 = inlined_call_operand.vmem [shape: bf16[3,32,32], index: 3, kind: input, shape index: {}]
  %s4 = inlined_call_operand.vmem [shape: f32[3,1,32], index: 4, kind: input, shape index: {}]
  %s5 = inlined_call_operand.vmem [shape: bf16[32,32], index: 5, kind: input, shape index: {}]
  %s6 = inlined_call_operand.vmem [shape: f32[1,32], index: 6, kind: input, shape index: {}]
  %s7 = inlined_call_operand.vmem [shape: f32[4,4,16,16], index: 7, kind: input, shape index: {}]
  %s8 = inlined_call_operand.vmem [shape: f32[128,32], index: 8, kind: output, shape index: {}]
  %s9 = sld [smem:[#allocation0]]
  $region65: #{forward.6} parent=0
    _
  %s11 = ssub.s32 1, %s9
  %s12 = scalar_select 0, %s11, %s9
  loop: start=0, step=1, limit=4
  $region2: #{forward.6} parent=0 // loop_pre_header
    _
  $region3: #{forward.6} parent=0 // loop_header
    %s14 = sphi 0, %s18
    %p15 = scmp.ge.s32.totalorder %s14, 4
    %s24 = sphi 0, %s26
    %s27 = sphi 0, %s24
    %s28 = sphi 0, %s27
    %s44 = sphi 0, %s28
    %s48 = sphi 0, %s48
    %s50 = sphi 0, %s48
    %s51 = sphi 0, %s50
    %s65 = sphi 0, %s51
    %s69 = sphi 0, %s69
    %s71 = sphi 0, %s69
    %s72 = sphi 0, %s71
    %s86 = sphi 0, %s72
    %s90 = sphi 0, %s90
    %s92 = sphi 0, %s90
    %s93 = sphi 0, %s92
    %s107 = sphi 0, %s93
    %s111 = sphi 0, %s111
    %s113 = sphi 0, %s111
    %s114 = sphi 0, %s113
    %s128 = sphi 0, %s114
    %s132 = sphi 0, %s132
    %s134 = sphi 0, %s132
    %s135 = sphi 0, %s134
    %s149 = sphi 0, %s135
    %s153 = sphi 0, %s153
    %s155 = sphi 0, %s153
    %s156 = sphi 0, %s155
    %s170 = sphi 0, %s156
    %s174 = sphi 0, %s174
    %s176 = sphi 0, %s174
    %s177 = sphi 0, %s176
    %s191 = sphi 0, %s177
    %s197 = sphi 0, %s199
    %s200 = sphi 0, %s197
    %s201 = sphi 0, %s200
    %s217 = sphi 0, %s201
  $region4: #{forward.6} parent=0 // loop_header_branch
    %17 = sbr.rel (%p15) target = $region8
  $region5: #{forward.6} parent=0 // loop_body
    %s19 = ssub.s32 %s14, 1
    %s20 = ssub.s32 %s14, 2
    %s21 = sadd.s32 %s14, 1
    %s22 = ssub.s32 %s14, %s21
    %p23 = scmp.eq.s32.totalorder %s22, 0
    %s25 = sadd.s32 %s24, 1
    %s26 = scalar_select %p23, %s24, %s25
    %p29 = pneg %p23
    %p30 = scmp.eq.s32.totalorder %s14, 1
    %p31 = por %p29, %p30
    %p32 = scmp.ne.s32.totalorder %s24, %s27
    %p33 = scmp.eq.s32.totalorder %s14, 0
    %p34 = por %p32, %p33
    %p35 = scmp.ne.s32.totalorder %s24, %s27
    %p36 = scmp.eq.s32.totalorder %s19, 1
    %p37 = por %p35, %p36
    %p38 = scmp.ne.s32.totalorder %s27, %s28
    %p39 = scmp.eq.s32.totalorder %s19, 0
    %p40 = por %p38, %p39
    %p41 = scmp.ne.s32.totalorder %s27, %s28
    %p42 = scmp.eq.s32.totalorder %s20, 1
    %p43 = por %p41, %p42
    %p45 = scmp.ne.s32.totalorder %s28, %s44
    %p46 = scmp.eq.s32.totalorder %s20, 0
    %p47 = por %p45, %p46
    %s49 = sadd.s32 %s48, 1
    %p52 = scmp.eq.s32.totalorder %s14, 1
    %p53 = scmp.ne.s32.totalorder %s48, %s50
    %p54 = scmp.eq.s32.totalorder %s14, 0
    %p55 = por %p53, %p54
    %p56 = scmp.ne.s32.totalorder %s48, %s50
    %p57 = scmp.eq.s32.totalorder %s19, 1
    %p58 = por %p56, %p57
    %p59 = scmp.ne.s32.totalorder %s50, %s51
    %p60 = scmp.eq.s32.totalorder %s19, 0
    %p61 = por %p59, %p60
    %p62 = scmp.ne.s32.totalorder %s50, %s51
    %p63 = scmp.eq.s32.totalorder %s20, 1
    %p64 = por %p62, %p63
    %p66 = scmp.ne.s32.totalorder %s51, %s65
    %p67 = scmp.eq.s32.totalorder %s20, 0
    %p68 = por %p66, %p67
    %s70 = sadd.s32 %s69, 1
    %p73 = scmp.eq.s32.totalorder %s14, 1
    %p74 = scmp.ne.s32.totalorder %s69, %s71
    %p75 = scmp.eq.s32.totalorder %s14, 0
    %p76 = por %p74, %p75
    %p77 = scmp.ne.s32.totalorder %s69, %s71
    %p78 = scmp.eq.s32.totalorder %s19, 1
    %p79 = por %p77, %p78
    %p80 = scmp.ne.s32.totalorder %s71, %s72
    %p81 = scmp.eq.s32.totalorder %s19, 0
    %p82 = por %p80, %p81
    %p83 = scmp.ne.s32.totalorder %s71, %s72
    %p84 = scmp.eq.s32.totalorder %s20, 1
    %p85 = por %p83, %p84
    %p87 = scmp.ne.s32.totalorder %s72, %s86
    %p88 = scmp.eq.s32.totalorder %s20, 0
    %p89 = por %p87, %p88
    %s91 = sadd.s32 %s90, 1
    %p94 = scmp.eq.s32.totalorder %s14, 1
    %p95 = scmp.ne.s32.totalorder %s90, %s92
    %p96 = scmp.eq.s32.totalorder %s14, 0
    %p97 = por %p95, %p96
    %p98 = scmp.ne.s32.totalorder %s90, %s92
    %p99 = scmp.eq.s32.totalorder %s19, 1
    %p100 = por %p98, %p99
    %p101 = scmp.ne.s32.totalorder %s92, %s93
    %p102 = scmp.eq.s32.totalorder %s19, 0
    %p103 = por %p101, %p102
    %p104 = scmp.ne.s32.totalorder %s92, %s93
    %p105 = scmp.eq.s32.totalorder %s20, 1
    %p106 = por %p104, %p105
    %p108 = scmp.ne.s32.totalorder %s93, %s107
    %p109 = scmp.eq.s32.totalorder %s20, 0
    %p110 = por %p108, %p109
    %s112 = sadd.s32 %s111, 1
    %p115 = scmp.eq.s32.totalorder %s14, 1
    %p116 = scmp.ne.s32.totalorder %s111, %s113
    %p117 = scmp.eq.s32.totalorder %s14, 0
    %p118 = por %p116, %p117
    %p119 = scmp.ne.s32.totalorder %s111, %s113
    %p120 = scmp.eq.s32.totalorder %s19, 1
    %p121 = por %p119, %p120
    %p122 = scmp.ne.s32.totalorder %s113, %s114
    %p123 = scmp.eq.s32.totalorder %s19, 0
    %p124 = por %p122, %p123
    %p125 = scmp.ne.s32.totalorder %s113, %s114
    %p126 = scmp.eq.s32.totalorder %s20, 1
    %p127 = por %p125, %p126
    %p129 = scmp.ne.s32.totalorder %s114, %s128
    %p130 = scmp.eq.s32.totalorder %s20, 0
    %p131 = por %p129, %p130
    %s133 = sadd.s32 %s132, 1
    %p136 = scmp.eq.s32.totalorder %s14, 1
    %p137 = scmp.ne.s32.totalorder %s132, %s134
    %p138 = scmp.eq.s32.totalorder %s14, 0
    %p139 = por %p137, %p138
    %p140 = scmp.ne.s32.totalorder %s132, %s134
    %p141 = scmp.eq.s32.totalorder %s19, 1
    %p142 = por %p140, %p141
    %p143 = scmp.ne.s32.totalorder %s134, %s135
    %p144 = scmp.eq.s32.totalorder %s19, 0
    %p145 = por %p143, %p144
    %p146 = scmp.ne.s32.totalorder %s134, %s135
    %p147 = scmp.eq.s32.totalorder %s20, 1
    %p148 = por %p146, %p147
    %p150 = scmp.ne.s32.totalorder %s135, %s149
    %p151 = scmp.eq.s32.totalorder %s20, 0
    %p152 = por %p150, %p151
    %s154 = sadd.s32 %s153, 1
    %p157 = scmp.eq.s32.totalorder %s14, 1
    %p158 = scmp.ne.s32.totalorder %s153, %s155
    %p159 = scmp.eq.s32.totalorder %s14, 0
    %p160 = por %p158, %p159
    %p161 = scmp.ne.s32.totalorder %s153, %s155
    %p162 = scmp.eq.s32.totalorder %s19, 1
    %p163 = por %p161, %p162
    %p164 = scmp.ne.s32.totalorder %s155, %s156
    %p165 = scmp.eq.s32.totalorder %s19, 0
    %p166 = por %p164, %p165
    %p167 = scmp.ne.s32.totalorder %s155, %s156
    %p168 = scmp.eq.s32.totalorder %s20, 1
    %p169 = por %p167, %p168
    %p171 = scmp.ne.s32.totalorder %s156, %s170
    %p172 = scmp.eq.s32.totalorder %s20, 0
    %p173 = por %p171, %p172
    %s175 = sadd.s32 %s174, 1
    %p178 = scmp.eq.s32.totalorder %s14, 1
    %p179 = scmp.ne.s32.totalorder %s174, %s176
    %p180 = scmp.eq.s32.totalorder %s14, 0
    %p181 = por %p179, %p180
    %p182 = scmp.ne.s32.totalorder %s174, %s176
    %p183 = scmp.eq.s32.totalorder %s19, 1
    %p184 = por %p182, %p183
    %p185 = scmp.ne.s32.totalorder %s176, %s177
    %p186 = scmp.eq.s32.totalorder %s19, 0
    %p187 = por %p185, %p186
    %p188 = scmp.ne.s32.totalorder %s176, %s177
    %p189 = scmp.eq.s32.totalorder %s20, 1
    %p190 = por %p188, %p189
    %p192 = scmp.ne.s32.totalorder %s177, %s191
    %p193 = scmp.eq.s32.totalorder %s20, 0
    %p194 = por %p192, %p193
    %s195 = ssub.s32 %s14, %s21
    %p196 = scmp.eq.s32.totalorder %s195, 0
    %s198 = sadd.s32 %s197, 1
    %s199 = scalar_select %p196, %s197, %s198
    %p202 = pneg %p196
    %p203 = scmp.eq.s32.totalorder %s14, 1
    %p204 = por %p202, %p203
    %p205 = scmp.ne.s32.totalorder %s197, %s200
    %p206 = scmp.eq.s32.totalorder %s14, 0
    %p207 = por %p205, %p206
    %p208 = scmp.ne.s32.totalorder %s197, %s200
    %p209 = scmp.eq.s32.totalorder %s19, 1
    %p210 = por %p208, %p209
    %p211 = scmp.ne.s32.totalorder %s200, %s201
    %p212 = scmp.eq.s32.totalorder %s19, 0
    %p213 = por %p211, %p212
    %p214 = scmp.ne.s32.totalorder %s200, %s201
    %p215 = scmp.eq.s32.totalorder %s20, 1
    %p216 = por %p214, %p215
    %p218 = scmp.ne.s32.totalorder %s201, %s217
    %p219 = scmp.eq.s32.totalorder %s20, 0
    %p220 = por %p218, %p219
    %p221 = scmp.le.s32.totalorder 1, %s14
    %p222 = scmp.lt.s32.totalorder %s14, 3
    %p223 = pnand %p221, %p222
    %p224 = pneg %p223
    // Predicated region
    $region9: #{forward.6} parent=5 // pred_check
      _
    $region10: #{forward.6} parent=5 // pred_check_branch
      %226 = sbr.rel (%p223) target = $region12
    $region11: #{forward.6} parent=5 // pred_region
      %s227 = ssub.s32 %s14, 1
      // Predicated region
      $region13: #{forward.6} parent=11 // pred_check
        %p228 = pneg %p61
      $region14: #{forward.6} parent=11 // pred_check_branch
        %230 = sbr.rel (%p228) target = $region16
      $region15: #{forward.6} parent=11 // pred_region
        _
      $region16: #{forward.6} parent=11 // pred_fallthru
        _
      // Predicated region
      $region17: #{forward.6} parent=11 // pred_check
        %p231 = pneg %p82
      $region18: #{forward.6} parent=11 // pred_check_branch
        %233 = sbr.rel (%p231) target = $region20
      $region19: #{forward.6} parent=11 // pred_region
        _
      $region20: #{forward.6} parent=11 // pred_fallthru
        _
      // Predicated region
      $region21: #{forward.6} parent=11 // pred_check
        %p234 = pneg %p103
      $region22: #{forward.6} parent=11 // pred_check_branch
        %236 = sbr.rel (%p234) target = $region24
      $region23: #{forward.6} parent=11 // pred_region
        _
      $region24: #{forward.6} parent=11 // pred_fallthru
        _
      // Predicated region
      $region25: #{forward.6} parent=11 // pred_check
        %p237 = pneg %p124
      $region26: #{forward.6} parent=11 // pred_check_branch
        %239 = sbr.rel (%p237) target = $region28
      $region27: #{forward.6} parent=11 // pred_region
        _
      $region28: #{forward.6} parent=11 // pred_fallthru
        _
      // Predicated region
      $region29: #{forward.6} parent=11 // pred_check
        %p240 = pneg %p145
      $region30: #{forward.6} parent=11 // pred_check_branch
        %242 = sbr.rel (%p240) target = $region32
      $region31: #{forward.6} parent=11 // pred_region
        _
      $region32: #{forward.6} parent=11 // pred_fallthru
        _
      // Predicated region
      $region33: #{forward.6} parent=11 // pred_check
        %p243 = pneg %p166
      $region34: #{forward.6} parent=11 // pred_check_branch
        %245 = sbr.rel (%p243) target = $region36
      $region35: #{forward.6} parent=11 // pred_region
        _
      $region36: #{forward.6} parent=11 // pred_fallthru
        _
      // Predicated region
      $region37: #{forward.6} parent=11 // pred_check
        %p246 = pneg %p187
      $region38: #{forward.6} parent=11 // pred_check_branch
        %248 = sbr.rel (%p246) target = $region40
      $region39: #{forward.6} parent=11 // pred_region
        _
      $region40: #{forward.6} parent=11 // pred_fallthru
        _
    $region12: #{forward.6} parent=5 // pred_fallthru
      _
    %p249 = scmp.lt.s32.totalorder %s14, 2
    // Predicated region
    $region41: #{forward.6} parent=5 // pred_check
      %p250 = pneg %p249
    $region42: #{forward.6} parent=5 // pred_check_branch
      %252 = sbr.rel (%p250) target = $region44
    $region43: #{forward.6} parent=5 // pred_region
      // Predicated region
      $region45: #{forward.6} parent=43 // pred_check
        %p253 = pneg %p34
      $region46: #{forward.6} parent=43 // pred_check_branch
        %255 = sbr.rel (%p253) target = $region48
      $region47: #{forward.6} parent=43 // pred_region
        %s256 = smul.u32 8, %s14
        %p257 = scmp.lt.s32.totalorder %s256, 15
        %s258 = scalar_select %p257, %s256, 15
        %s259 = smul.addr %s258, 8
        %s260 = scalar_lea.vmem %s0, %s259
        %s261 = smul.u32 8, %s14
      $region48: #{forward.6} parent=43 // pred_fallthru
        _
    $region44: #{forward.6} parent=5 // pred_fallthru
      _
    %p262 = scmp.le.s32.totalorder 1, %s14
    %p263 = scmp.lt.s32.totalorder %s14, 3
    %p264 = pnand %p262, %p263
    %p265 = pneg %p264
    // Predicated region
    $region49: #{forward.6} parent=5 // pred_check
      _
    $region50: #{forward.6} parent=5 // pred_check_branch
      %267 = sbr.rel (%p264) target = $region52
    $region51: #{forward.6} parent=5 // pred_region
      %s268 = ssub.s32 %s14, 1
      %s269 = smul.u32 8, %s19
      %p270 = scmp.lt.s32.totalorder %s269, 15
      %s271 = scalar_select %p270, %s269, 15
      %s272 = smul.addr %s271, 8
      %s273 = scalar_lea.vmem %s0, %s272
      %p274 = pneg %p40
      %p275 = pneg %p37
      %p276 = pneg %p61
      %p277 = pneg %p58
      %p278 = pneg %p82
      %p279 = pneg %p79
      %p280 = pneg %p103
      %p281 = pneg %p100
      %p282 = pneg %p124
      %p283 = pneg %p121
      %p284 = pneg %p145
      %p285 = pneg %p142
      %p286 = pneg %p166
      %p287 = pneg %p163
      %p288 = pneg %p187
      %p289 = pneg %p184
      %p290 = pneg %p213
      %p291 = pneg %p210
      %s292 = smul.u32 8, %s19
      %p293 = scmp.lt.s32.totalorder %s292, 15
      %s294 = scalar_select %p293, %s292, 15
      %s295 = smul.addr %s294, 8
      %s296 = scalar_lea.vmem %s8, %s295
      %s297 = smul.u32 8, %s19
      %p298 = scmp.lt.s32.totalorder %s297, 15
      %s299 = scalar_select %p298, %s297, 15
      %s300 = smul.addr %s299, 8
      %s301 = scalar_lea.vmem %s0, %s300
      %s302 = smul.u32 8, %s19
      %s303 = smul.u32 8, %s19
      %p304 = scmp.lt.s32.totalorder %s303, 15
      %s305 = scalar_select %p304, %s303, 15
      %s306 = smul.addr %s305, 8
      %s307 = scalar_lea.vmem %s8, %s306
      %s308 = smul.u32 8, %s19
      %v310 = vld [vmem:[%s301] sm:$0xff]
      %v311 = vld [vmem:[%s301 + $0x8] sm:$0xff]
      %v312 = vld [vmem:[%s301 + $0x10] sm:$0xff]
      %v313 = vld [vmem:[%s301 + $0x18] sm:$0xff]
      %v314 = vld [vmem:[%s301 + $0x20] sm:$0xff]
      %v315 = vld [vmem:[%s301 + $0x28] sm:$0xff]
      %v316 = vld [vmem:[%s301 + $0x30] sm:$0xff]
      %v317 = vld [vmem:[%s301 + $0x38] sm:$0xff]
      %vm318 = vcmask 261120
      %v319 = vsel %vm318, %v310, 0.0
      %320 = vadd.xlane.f32.xlu0 %v319
      %v321 = vpop.xlane.xlu0 %320
      %v322 = vsel %vm318, %v311, 0.0
      %323 = vadd.xlane.f32.xlu0 %v322
      %v324 = vpop.xlane.xlu0 %323
      %v325 = vsel %vm318, %v312, 0.0
      %326 = vadd.xlane.f32.xlu0 %v325
      %v327 = vpop.xlane.xlu0 %326
      %v328 = vsel %vm318, %v313, 0.0
      %329 = vadd.xlane.f32.xlu0 %v328
      %v330 = vpop.xlane.xlu0 %329
      %v331 = vsel %vm318, %v314, 0.0
      %332 = vadd.xlane.f32.xlu0 %v331
      %v333 = vpop.xlane.xlu0 %332
      %v334 = vsel %vm318, %v315, 0.0
      %335 = vadd.xlane.f32.xlu0 %v334
      %v336 = vpop.xlane.xlu0 %335
      %v337 = vsel %vm318, %v316, 0.0
      %338 = vadd.xlane.f32.xlu0 %v337
      %v339 = vpop.xlane.xlu0 %338
      %v340 = vsel %vm318, %v317, 0.0
      %341 = vadd.xlane.f32.xlu0 %v340
      %v342 = vpop.xlane.xlu0 %341
      %v343 = vrcp.pop 32.0
      %v344 = vmul.f32 %v321, %v343
      %v345 = vmul.f32 %v324, %v343
      %v346 = vmul.f32 %v327, %v343
      %v347 = vmul.f32 %v330, %v343
      %v348 = vmul.f32 %v333, %v343
      %v349 = vmul.f32 %v336, %v343
      %v350 = vmul.f32 %v339, %v343
      %v351 = vmul.f32 %v342, %v343
      %v352 = vsub.f32 %v310, %v344
      %v353 = vsub.f32 %v311, %v345
      %v354 = vsub.f32 %v312, %v346
      %v355 = vsub.f32 %v313, %v347
      %v356 = vsub.f32 %v314, %v348
      %v357 = vsub.f32 %v315, %v349
      %v358 = vsub.f32 %v316, %v350
      %v359 = vsub.f32 %v317, %v351
      %v360 = vmul.f32 %v352, %v352
      %v361 = vmul.f32 %v353, %v353
      %v362 = vmul.f32 %v354, %v354
      %v363 = vmul.f32 %v355, %v355
      %v364 = vmul.f32 %v356, %v356
      %v365 = vmul.f32 %v357, %v357
      %v366 = vmul.f32 %v358, %v358
      %v367 = vmul.f32 %v359, %v359
      %v368 = vsel %vm318, %v360, 0.0
      %369 = vadd.xlane.f32.xlu0 %v368
      %v370 = vpop.xlane.xlu0 %369
      %v371 = vsel %vm318, %v361, 0.0
      %372 = vadd.xlane.f32.xlu0 %v371
      %v373 = vpop.xlane.xlu0 %372
      %v374 = vsel %vm318, %v362, 0.0
      %375 = vadd.xlane.f32.xlu0 %v374
      %v376 = vpop.xlane.xlu0 %375
      %v377 = vsel %vm318, %v363, 0.0
      %378 = vadd.xlane.f32.xlu0 %v377
      %v379 = vpop.xlane.xlu0 %378
      %v380 = vsel %vm318, %v364, 0.0
      %381 = vadd.xlane.f32.xlu0 %v380
      %v382 = vpop.xlane.xlu0 %381
      %v383 = vsel %vm318, %v365, 0.0
      %384 = vadd.xlane.f32.xlu0 %v383
      %v385 = vpop.xlane.xlu0 %384
      %v386 = vsel %vm318, %v366, 0.0
      %387 = vadd.xlane.f32.xlu0 %v386
      %v388 = vpop.xlane.xlu0 %387
      %v389 = vsel %vm318, %v367, 0.0
      %390 = vadd.xlane.f32.xlu0 %v389
      %v391 = vpop.xlane.xlu0 %390
      %v392 = vmul.f32 %v370, %v343
      %v393 = vmul.f32 %v373, %v343
      %v394 = vmul.f32 %v376, %v343
      %v395 = vmul.f32 %v379, %v343
      %v396 = vmul.f32 %v382, %v343
      %v397 = vmul.f32 %v385, %v343
      %v398 = vmul.f32 %v388, %v343
      %v399 = vmul.f32 %v391, %v343
      %v400 = vadd.f32 %v392, 1e-05
      %v401 = vadd.f32 %v393, 1e-05
      %v402 = vadd.f32 %v394, 1e-05
      %v403 = vadd.f32 %v395, 1e-05
      %v404 = vadd.f32 %v396, 1e-05
      %v405 = vadd.f32 %v397, 1e-05
      %v406 = vadd.f32 %v398, 1e-05
      %v407 = vadd.f32 %v399, 1e-05
      %v408 = vrsqrt.pop %v400
      %v409 = vrsqrt.pop %v401
      %v410 = vrsqrt.pop %v402
      %v411 = vrsqrt.pop %v403
      %v412 = vrsqrt.pop %v404
      %v413 = vrsqrt.pop %v405
      %v414 = vrsqrt.pop %v406
      %v415 = vrsqrt.pop %v407
      %v416 = vmul.f32 %v352, %v408
      %v417 = vmul.f32 %v353, %v409
      %v418 = vmul.f32 %v354, %v410
      %v419 = vmul.f32 %v355, %v411
      %v420 = vmul.f32 %v356, %v412
      %v421 = vmul.f32 %v357, %v413
      %v422 = vmul.f32 %v358, %v414
      %v423 = vmul.f32 %v359, %v415
      %v424 = vld [vmem:[%s1] sm:$0x1]
      %v426 = vlaneseq
      %v427 = vshrl.u32 %v426, 7
      %v428 = vsub.s32 0, %v427
      %v429 = vrot.slane %v424, %v428
      %v431 = vmul.f32 %v416, %v429
      %v432 = vmul.f32 %v417, %v429
      %v433 = vmul.f32 %v418, %v429
      %v434 = vmul.f32 %v419, %v429
      %v435 = vmul.f32 %v420, %v429
      %v436 = vmul.f32 %v421, %v429
      %v437 = vmul.f32 %v422, %v429
      %v438 = vmul.f32 %v423, %v429
      %v439 = vld [vmem:[%s2] sm:$0x1]
      %v441 = vlaneseq
      %v442 = vshrl.u32 %v441, 7
      %v443 = vsub.s32 0, %v442
      %v444 = vrot.slane %v439, %v443
      %v446 = vadd.f32 %v431, %v444
      %v447 = vadd.f32 %v432, %v444
      %v448 = vadd.f32 %v433, %v444
      %v449 = vadd.f32 %v434, %v444
      %v450 = vadd.f32 %v435, %v444
      %v451 = vadd.f32 %v436, %v444
      %v452 = vadd.f32 %v437, %v444
      %v453 = vadd.f32 %v438, %v444
      %v454 = vpack.c.bf16 %v447, %v446
      %v455 = vpack.c.bf16 %v449, %v448
      %v456 = vpack.c.bf16 %v451, %v450
      %v457 = vpack.c.bf16 %v453, %v452
      %v458 = vld [vmem:[%s3] sm:$0xf]
      %v459 = vld [vmem:[%s3 + $0x4] sm:$0xf]
      %v460 = vld [vmem:[%s3 + $0x8] sm:$0xf]
      %v461 = vld [vmem:[%s3 + $0xc] sm:$0xf]
      %v462 = vld [vmem:[%s4] sm:$0x1]
      %v464 = vlaneseq
      %v465 = vshrl.u32 %v464, 7
      %v466 = vsub.s32 0, %v465
      %v467 = vrot.slane %v462, %v466
      %v473 = vunpack.c.l.b16 %v458
      %v474 = vunpack.c.l.b16 %v459
      %v475 = vunpack.c.l.b16 %v460
      %v476 = vunpack.c.l.b16 %v461
      %v477 = vpack.c.b16 %v474, %v473
      %v478 = vpack.c.b16 %v476, %v475
      %v482 = vsel %vm318, %v454, 0
      %v485 = vsel %vm318, %v455, 0
      %v488 = vsel %vm318, %v456, 0
      %v491 = vsel %vm318, %v457, 0
      %493 = vmatprep.subr.bf16.mxu0 0
      %494 = vmatpush1.bf16.msra.mxu0 0
      %495 = vmatprep.subr.bf16.mxu0 0
      %496 = vmatpush1.bf16.msra.mxu0 0
      %497 = vmatprep.subr.bf16.mxu0 0
      %498 = vmatpush1.bf16.msra.mxu0 0
      %499 = vmatprep.subr.bf16.mxu0 0
      %500 = vmatpush1.bf16.msra.mxu0 0
      %501 = vmatprep.subr.bf16.mxu0 0
      %502 = vmatpush1.bf16.msra.mxu0 0
      %503 = vmatprep.subr.bf16.mxu0 0
      %504 = vmatpush1.bf16.msra.mxu0 0
      %505 = vmatprep.subr.bf16.mxu0 0
      %506 = vmatpush1.bf16.msra.mxu0 %v478
      %507 = vmatprep.subr.bf16.mxu0 0
      %508 = vmatpush1.bf16.msra.mxu0 %v477
      %509 = vmatprep.subr.bf16.mxu0 0
      %510 = vmatpush2.bf16.msra.mxu0 0
      %511 = vmatprep.subr.bf16.mxu0 0
      %512 = vmatpush2.bf16.msra.mxu0 0
      %513 = vmatprep.subr.bf16.mxu0 0
      %514 = vmatpush2.bf16.msra.mxu0 0
      %515 = vmatprep.subr.bf16.mxu0 0
      %516 = vmatpush2.bf16.msra.mxu0 0
      %517 = vmatprep.subr.bf16.mxu0 0
      %518 = vmatpush2.bf16.msra.mxu0 0
      %519 = vmatprep.subr.bf16.mxu0 0
      %520 = vmatpush2.bf16.msra.mxu0 0
      %521 = vmatprep.subr.bf16.mxu0 0
      %522 = vmatpush2.bf16.msra.mxu0 0
      %523 = vmatprep.subr.bf16.mxu0 0
      %524 = vmatpush2.bf16.msra.mxu0 0
      %525 = vmatprep.mubr.bf16.mxu0 0
      %526 = vmatmul.mubr.bf16.gmra.mxu0 %v482
      %v527 = vpop.f32.mrf.mxu0
      %v528 = vadd.f32 %v467, %v527
      %v529 = vpop.f32.mrf.mxu0
      %v530 = vpop.f32.mrf.mxu0
      %v531 = vadd.f32 %v467, %v530
      %v532 = vpop.f32.mrf.mxu0
      %533 = vmatprep.mubr.bf16.mxu0 0
      %534 = vmatmul.mubr.bf16.gmra.mxu0 %v485
      %v535 = vpop.f32.mrf.mxu0
      %v536 = vadd.f32 %v467, %v535
      %v537 = vpop.f32.mrf.mxu0
      %v538 = vpop.f32.mrf.mxu0
      %v539 = vadd.f32 %v467, %v538
      %v540 = vpop.f32.mrf.mxu0
      %541 = vmatprep.mubr.bf16.mxu0 0
      %542 = vmatmul.mubr.bf16.gmra.mxu0 %v488
      %v543 = vpop.f32.mrf.mxu0
      %v544 = vadd.f32 %v467, %v543
      %v545 = vpop.f32.mrf.mxu0
      %v546 = vpop.f32.mrf.mxu0
      %v547 = vadd.f32 %v467, %v546
      %v548 = vpop.f32.mrf.mxu0
      %549 = vmatprep.mubr.bf16.mxu0 0
      %550 = vmatmul.mubr.bf16.gmra.mxu0 %v491
      %v551 = vpop.f32.mrf.mxu0
      %v552 = vadd.f32 %v467, %v551
      %v553 = vpop.f32.mrf.mxu0
      %v554 = vpop.f32.mrf.mxu0
      %v555 = vadd.f32 %v467, %v554
      %v556 = vpop.f32.mrf.mxu0
      %557 = vdwg.mxu0
      %s558 = scalar_lea.vmem %s3, 16
      %v559 = vld [vmem:[%s558] sm:$0xf]
      %v560 = vld [vmem:[%s558 + $0x4] sm:$0xf]
      %v561 = vld [vmem:[%s558 + $0x8] sm:$0xf]
      %v562 = vld [vmem:[%s558 + $0xc] sm:$0xf]
      %s563 = scalar_lea.vmem %s4, 1
      %v564 = vld [vmem:[%s563] sm:$0x1]
      %v566 = vlaneseq
      %v567 = vshrl.u32 %v566, 7
      %v568 = vsub.s32 0, %v567
      %v569 = vrot.slane %v564, %v568
      %v575 = vunpack.c.l.b16 %v559
      %v576 = vunpack.c.l.b16 %v560
      %v577 = vunpack.c.l.b16 %v561
      %v578 = vunpack.c.l.b16 %v562
      %v579 = vpack.c.b16 %v576, %v575
      %v580 = vpack.c.b16 %v578, %v577
      %583 = vmatprep.subr.bf16.mxu0 0
      %584 = vmatpush1.bf16.msra.mxu0 0
      %585 = vmatprep.subr.bf16.mxu0 0
      %586 = vmatpush1.bf16.msra.mxu0 0
      %587 = vmatprep.subr.bf16.mxu0 0
      %588 = vmatpush1.bf16.msra.mxu0 0
      %589 = vmatprep.subr.bf16.mxu0 0
      %590 = vmatpush1.bf16.msra.mxu0 0
      %591 = vmatprep.subr.bf16.mxu0 0
      %592 = vmatpush1.bf16.msra.mxu0 0
      %593 = vmatprep.subr.bf16.mxu0 0
      %594 = vmatpush1.bf16.msra.mxu0 0
      %595 = vmatprep.subr.bf16.mxu0 0
      %596 = vmatpush1.bf16.msra.mxu0 %v580
      %597 = vmatprep.subr.bf16.mxu0 0
      %598 = vmatpush1.bf16.msra.mxu0 %v579
      %599 = vmatprep.subr.bf16.mxu0 0
      %600 = vmatpush2.bf16.msra.mxu0 0
      %601 = vmatprep.subr.bf16.mxu0 0
      %602 = vmatpush2.bf16.msra.mxu0 0
      %603 = vmatprep.subr.bf16.mxu0 0
      %604 = vmatpush2.bf16.msra.mxu0 0
      %605 = vmatprep.subr.bf16.mxu0 0
      %606 = vmatpush2.bf16.msra.mxu0 0
      %607 = vmatprep.subr.bf16.mxu0 0
      %608 = vmatpush2.bf16.msra.mxu0 0
      %609 = vmatprep.subr.bf16.mxu0 0
      %610 = vmatpush2.bf16.msra.mxu0 0
      %611 = vmatprep.subr.bf16.mxu0 0
      %612 = vmatpush2.bf16.msra.mxu0 0
      %613 = vmatprep.subr.bf16.mxu0 0
      %614 = vmatpush2.bf16.msra.mxu0 0
      %615 = vmatprep.mubr.bf16.mxu0 0
      %616 = vmatmul.mubr.bf16.gmra.mxu0 %v482
      %v617 = vpop.f32.mrf.mxu0
      %v618 = vadd.f32 %v569, %v617
      %v619 = vpop.f32.mrf.mxu0
      %v620 = vpop.f32.mrf.mxu0
      %v621 = vadd.f32 %v569, %v620
      %v622 = vpop.f32.mrf.mxu0
      %623 = vmatprep.mubr.bf16.mxu0 0
      %624 = vmatmul.mubr.bf16.gmra.mxu0 %v485
      %v625 = vpop.f32.mrf.mxu0
      %v626 = vadd.f32 %v569, %v625
      %v627 = vpop.f32.mrf.mxu0
      %v628 = vpop.f32.mrf.mxu0
      %v629 = vadd.f32 %v569, %v628
      %v630 = vpop.f32.mrf.mxu0
      %631 = vmatprep.mubr.bf16.mxu0 0
      %632 = vmatmul.mubr.bf16.gmra.mxu0 %v488
      %v633 = vpop.f32.mrf.mxu0
      %v634 = vadd.f32 %v569, %v633
      %v635 = vpop.f32.mrf.mxu0
      %v636 = vpop.f32.mrf.mxu0
      %v637 = vadd.f32 %v569, %v636
      %v638 = vpop.f32.mrf.mxu0
      %639 = vmatprep.mubr.bf16.mxu0 0
      %640 = vmatmul.mubr.bf16.gmra.mxu0 %v491
      %v641 = vpop.f32.mrf.mxu0
      %v642 = vadd.f32 %v569, %v641
      %v643 = vpop.f32.mrf.mxu0
      %v644 = vpop.f32.mrf.mxu0
      %v645 = vadd.f32 %v569, %v644
      %v646 = vpop.f32.mrf.mxu0
      %647 = vdwg.mxu0
      %s648 = scalar_lea.vmem %s3, 32
      %v649 = vld [vmem:[%s648] sm:$0xf]
      %v650 = vld [vmem:[%s648 + $0x4] sm:$0xf]
      %v651 = vld [vmem:[%s648 + $0x8] sm:$0xf]
      %v652 = vld [vmem:[%s648 + $0xc] sm:$0xf]
      %s653 = scalar_lea.vmem %s4, 2
      %v654 = vld [vmem:[%s653] sm:$0x1]
      %v656 = vlaneseq
      %v657 = vshrl.u32 %v656, 7
      %v658 = vsub.s32 0, %v657
      %v659 = vrot.slane %v654, %v658
      %v665 = vunpack.c.l.b16 %v649
      %v666 = vunpack.c.l.b16 %v650
      %v667 = vunpack.c.l.b16 %v651
      %v668 = vunpack.c.l.b16 %v652
      %v669 = vpack.c.b16 %v666, %v665
      %v670 = vpack.c.b16 %v668, %v667
      %673 = vmatprep.subr.bf16.mxu0 0
      %674 = vmatpush1.bf16.msra.mxu0 0
      %675 = vmatprep.subr.bf16.mxu0 0
      %676 = vmatpush1.bf16.msra.mxu0 0
      %677 = vmatprep.subr.bf16.mxu0 0
      %678 = vmatpush1.bf16.msra.mxu0 0
      %679 = vmatprep.subr.bf16.mxu0 0
      %680 = vmatpush1.bf16.msra.mxu0 0
      %681 = vmatprep.subr.bf16.mxu0 0
      %682 = vmatpush1.bf16.msra.mxu0 0
      %683 = vmatprep.subr.bf16.mxu0 0
      %684 = vmatpush1.bf16.msra.mxu0 0
      %685 = vmatprep.subr.bf16.mxu0 0
      %686 = vmatpush1.bf16.msra.mxu0 %v670
      %687 = vmatprep.subr.bf16.mxu0 0
      %688 = vmatpush1.bf16.msra.mxu0 %v669
      %689 = vmatprep.subr.bf16.mxu0 0
      %690 = vmatpush2.bf16.msra.mxu0 0
      %691 = vmatprep.subr.bf16.mxu0 0
      %692 = vmatpush2.bf16.msra.mxu0 0
      %693 = vmatprep.subr.bf16.mxu0 0
      %694 = vmatpush2.bf16.msra.mxu0 0
      %695 = vmatprep.subr.bf16.mxu0 0
      %696 = vmatpush2.bf16.msra.mxu0 0
      %697 = vmatprep.subr.bf16.mxu0 0
      %698 = vmatpush2.bf16.msra.mxu0 0
      %699 = vmatprep.subr.bf16.mxu0 0
      %700 = vmatpush2.bf16.msra.mxu0 0
      %701 = vmatprep.subr.bf16.mxu0 0
      %702 = vmatpush2.bf16.msra.mxu0 0
      %703 = vmatprep.subr.bf16.mxu0 0
      %704 = vmatpush2.bf16.msra.mxu0 0
      %705 = vmatprep.mubr.bf16.mxu0 0
      %706 = vmatmul.mubr.bf16.gmra.mxu0 %v482
      %v707 = vpop.f32.mrf.mxu0
      %v708 = vadd.f32 %v659, %v707
      %v709 = vpop.f32.mrf.mxu0
      %v710 = vpop.f32.mrf.mxu0
      %v711 = vadd.f32 %v659, %v710
      %v712 = vpop.f32.mrf.mxu0
      %713 = vmatprep.mubr.bf16.mxu0 0
      %714 = vmatmul.mubr.bf16.gmra.mxu0 %v485
      %v715 = vpop.f32.mrf.mxu0
      %v716 = vadd.f32 %v659, %v715
      %v717 = vpop.f32.mrf.mxu0
      %v718 = vpop.f32.mrf.mxu0
      %v719 = vadd.f32 %v659, %v718
      %v720 = vpop.f32.mrf.mxu0
      %721 = vmatprep.mubr.bf16.mxu0 0
      %722 = vmatmul.mubr.bf16.gmra.mxu0 %v488
      %v723 = vpop.f32.mrf.mxu0
      %v724 = vadd.f32 %v659, %v723
      %v725 = vpop.f32.mrf.mxu0
      %v726 = vpop.f32.mrf.mxu0
      %v727 = vadd.f32 %v659, %v726
      %v728 = vpop.f32.mrf.mxu0
      %729 = vmatprep.mubr.bf16.mxu0 0
      %730 = vmatmul.mubr.bf16.gmra.mxu0 %v491
      %v731 = vpop.f32.mrf.mxu0
      %v732 = vadd.f32 %v659, %v731
      %v733 = vpop.f32.mrf.mxu0
      %v734 = vpop.f32.mrf.mxu0
      %v735 = vadd.f32 %v659, %v734
      %v736 = vpop.f32.mrf.mxu0
      %737 = vdwg.mxu0
      %v738 = vpack.c.bf16 %v531, %v528
      %v739 = vpack.c.bf16 %v539, %v536
      %v740 = vpack.c.bf16 %v547, %v544
      %v741 = vpack.c.bf16 %v555, %v552
      %v742 = vpack.c.bf16 %v621, %v618
      %v743 = vpack.c.bf16 %v629, %v626
      %v744 = vpack.c.bf16 %v637, %v634
      %v745 = vpack.c.bf16 %v645, %v642
      %v746 = vpack.c.bf16 %v711, %v708
      %v747 = vpack.c.bf16 %v719, %v716
      %v748 = vpack.c.bf16 %v727, %v724
      %v749 = vpack.c.bf16 %v735, %v732
      %vm750 = vcmask 64512
      %v752 = vsel %vm750, %v738, 0
      %v755 = vsel %vm750, %v742, 0
      %757 = vmatprep.subr.bf16.mxu0 0
      %758 = vmatpush1.bf16.xpose.msra.mxu0 0
      %759 = vmatprep.subr.bf16.mxu0 0
      %760 = vmatpush1.bf16.xpose.msra.mxu0 0
      %761 = vmatprep.subr.bf16.mxu0 0
      %762 = vmatpush1.bf16.xpose.msra.mxu0 0
      %763 = vmatprep.subr.bf16.mxu0 0
      %764 = vmatpush1.bf16.xpose.msra.mxu0 0
      %765 = vmatprep.subr.bf16.mxu0 0
      %766 = vmatpush1.bf16.xpose.msra.mxu0 0
      %767 = vmatprep.subr.bf16.mxu0 0
      %768 = vmatpush1.bf16.xpose.msra.mxu0 0
      %769 = vmatprep.subr.bf16.mxu0 0
      %770 = vmatpush1.bf16.xpose.msra.mxu0 0
      %771 = vmatprep.subr.bf16.mxu0 0
      %772 = vmatpush1.bf16.xpose.msra.mxu0 %v755
      %773 = vmatprep.subr.bf16.mxu0 0
      %774 = vmatpush2.bf16.xpose.msra.mxu0 0
      %775 = vmatprep.subr.bf16.mxu0 0
      %776 = vmatpush2.bf16.xpose.msra.mxu0 0
      %777 = vmatprep.subr.bf16.mxu0 0
      %778 = vmatpush2.bf16.xpose.msra.mxu0 0
      %779 = vmatprep.subr.bf16.mxu0 0
      %780 = vmatpush2.bf16.xpose.msra.mxu0 0
      %781 = vmatprep.subr.bf16.mxu0 0
      %782 = vmatpush2.bf16.xpose.msra.mxu0 0
      %783 = vmatprep.subr.bf16.mxu0 0
      %784 = vmatpush2.bf16.xpose.msra.mxu0 0
      %785 = vmatprep.subr.bf16.mxu0 0
      %786 = vmatpush2.bf16.xpose.msra.mxu0 0
      %787 = vmatprep.subr.bf16.mxu0 0
      %788 = vmatpush2.bf16.xpose.msra.mxu0 0
      %789 = vmatprep.mubr.bf16.mxu0 0
      %790 = vmatmul.mubr.bf16.gmra.mxu0 %v752
      %v791 = vpop.f32.mrf.mxu0
      %v792 = vadd.f32 0.0, %v791
      %v793 = vpop.f32.mrf.mxu0
      %v794 = vpop.f32.mrf.mxu0
      %v795 = vadd.f32 0.0, %v794
      %v796 = vpop.f32.mrf.mxu0
      %797 = vdwg.mxu0
      %v799 = vsel %vm750, %v739, 0
      %v802 = vsel %vm750, %v743, 0
      %804 = vmatprep.subr.bf16.mxu0 0
      %805 = vmatpush1.bf16.xpose.msra.mxu0 0
      %806 = vmatprep.subr.bf16.mxu0 0
      %807 = vmatpush1.bf16.xpose.msra.mxu0 0
      %808 = vmatprep.subr.bf16.mxu0 0
      %809 = vmatpush1.bf16.xpose.msra.mxu0 0
      %810 = vmatprep.subr.bf16.mxu0 0
      %811 = vmatpush1.bf16.xpose.msra.mxu0 0
      %812 = vmatprep.subr.bf16.mxu0 0
      %813 = vmatpush1.bf16.xpose.msra.mxu0 0
      %814 = vmatprep.subr.bf16.mxu0 0
      %815 = vmatpush1.bf16.xpose.msra.mxu0 0
      %816 = vmatprep.subr.bf16.mxu0 0
      %817 = vmatpush1.bf16.xpose.msra.mxu0 0
      %818 = vmatprep.subr.bf16.mxu0 0
      %819 = vmatpush1.bf16.xpose.msra.mxu0 %v802
      %820 = vmatprep.subr.bf16.mxu0 0
      %821 = vmatpush2.bf16.xpose.msra.mxu0 0
      %822 = vmatprep.subr.bf16.mxu0 0
      %823 = vmatpush2.bf16.xpose.msra.mxu0 0
      %824 = vmatprep.subr.bf16.mxu0 0
      %825 = vmatpush2.bf16.xpose.msra.mxu0 0
      %826 = vmatprep.subr.bf16.mxu0 0
      %827 = vmatpush2.bf16.xpose.msra.mxu0 0
      %828 = vmatprep.subr.bf16.mxu0 0
      %829 = vmatpush2.bf16.xpose.msra.mxu0 0
      %830 = vmatprep.subr.bf16.mxu0 0
      %831 = vmatpush2.bf16.xpose.msra.mxu0 0
      %832 = vmatprep.subr.bf16.mxu0 0
      %833 = vmatpush2.bf16.xpose.msra.mxu0 0
      %834 = vmatprep.subr.bf16.mxu0 0
      %835 = vmatpush2.bf16.xpose.msra.mxu0 0
      %836 = vmatprep.mubr.bf16.mxu0 0
      %837 = vmatmul.mubr.bf16.gmra.mxu0 %v799
      %v838 = vpop.f32.mrf.mxu0
      %v839 = vadd.f32 0.0, %v838
      %v840 = vpop.f32.mrf.mxu0
      %v841 = vpop.f32.mrf.mxu0
      %v842 = vadd.f32 0.0, %v841
      %v843 = vpop.f32.mrf.mxu0
      %844 = vdwg.mxu0
      %v846 = vsel %vm750, %v740, 0
      %v849 = vsel %vm750, %v744, 0
      %851 = vmatprep.subr.bf16.mxu0 0
      %852 = vmatpush1.bf16.xpose.msra.mxu0 0
      %853 = vmatprep.subr.bf16.mxu0 0
      %854 = vmatpush1.bf16.xpose.msra.mxu0 0
      %855 = vmatprep.subr.bf16.mxu0 0
      %856 = vmatpush1.bf16.xpose.msra.mxu0 0
      %857 = vmatprep.subr.bf16.mxu0 0
      %858 = vmatpush1.bf16.xpose.msra.mxu0 0
      %859 = vmatprep.subr.bf16.mxu0 0
      %860 = vmatpush1.bf16.xpose.msra.mxu0 0
      %861 = vmatprep.subr.bf16.mxu0 0
      %862 = vmatpush1.bf16.xpose.msra.mxu0 0
      %863 = vmatprep.subr.bf16.mxu0 0
      %864 = vmatpush1.bf16.xpose.msra.mxu0 0
      %865 = vmatprep.subr.bf16.mxu0 0
      %866 = vmatpush1.bf16.xpose.msra.mxu0 %v849
      %867 = vmatprep.subr.bf16.mxu0 0
      %868 = vmatpush2.bf16.xpose.msra.mxu0 0
      %869 = vmatprep.subr.bf16.mxu0 0
      %870 = vmatpush2.bf16.xpose.msra.mxu0 0
      %871 = vmatprep.subr.bf16.mxu0 0
      %872 = vmatpush2.bf16.xpose.msra.mxu0 0
      %873 = vmatprep.subr.bf16.mxu0 0
      %874 = vmatpush2.bf16.xpose.msra.mxu0 0
      %875 = vmatprep.subr.bf16.mxu0 0
      %876 = vmatpush2.bf16.xpose.msra.mxu0 0
      %877 = vmatprep.subr.bf16.mxu0 0
      %878 = vmatpush2.bf16.xpose.msra.mxu0 0
      %879 = vmatprep.subr.bf16.mxu0 0
      %880 = vmatpush2.bf16.xpose.msra.mxu0 0
      %881 = vmatprep.subr.bf16.mxu0 0
      %882 = vmatpush2.bf16.xpose.msra.mxu0 0
      %883 = vmatprep.mubr.bf16.mxu0 0
      %884 = vmatmul.mubr.bf16.gmra.mxu0 %v846
      %v885 = vpop.f32.mrf.mxu0
      %v886 = vadd.f32 0.0, %v885
      %v887 = vpop.f32.mrf.mxu0
      %v888 = vpop.f32.mrf.mxu0
      %v889 = vadd.f32 0.0, %v888
      %v890 = vpop.f32.mrf.mxu0
      %891 = vdwg.mxu0
      %v893 = vsel %vm750, %v741, 0
      %v896 = vsel %vm750, %v745, 0
      %898 = vmatprep.subr.bf16.mxu0 0
      %899 = vmatpush1.bf16.xpose.msra.mxu0 0
      %900 = vmatprep.subr.bf16.mxu0 0
      %901 = vmatpush1.bf16.xpose.msra.mxu0 0
      %902 = vmatprep.subr.bf16.mxu0 0
      %903 = vmatpush1.bf16.xpose.msra.mxu0 0
      %904 = vmatprep.subr.bf16.mxu0 0
      %905 = vmatpush1.bf16.xpose.msra.mxu0 0
      %906 = vmatprep.subr.bf16.mxu0 0
      %907 = vmatpush1.bf16.xpose.msra.mxu0 0
      %908 = vmatprep.subr.bf16.mxu0 0
      %909 = vmatpush1.bf16.xpose.msra.mxu0 0
      %910 = vmatprep.subr.bf16.mxu0 0
      %911 = vmatpush1.bf16.xpose.msra.mxu0 0
      %912 = vmatprep.subr.bf16.mxu0 0
      %913 = vmatpush1.bf16.xpose.msra.mxu0 %v896
      %914 = vmatprep.subr.bf16.mxu0 0
      %915 = vmatpush2.bf16.xpose.msra.mxu0 0
      %916 = vmatprep.subr.bf16.mxu0 0
      %917 = vmatpush2.bf16.xpose.msra.mxu0 0
      %918 = vmatprep.subr.bf16.mxu0 0
      %919 = vmatpush2.bf16.xpose.msra.mxu0 0
      %920 = vmatprep.subr.bf16.mxu0 0
      %921 = vmatpush2.bf16.xpose.msra.mxu0 0
      %922 = vmatprep.subr.bf16.mxu0 0
      %923 = vmatpush2.bf16.xpose.msra.mxu0 0
      %924 = vmatprep.subr.bf16.mxu0 0
      %925 = vmatpush2.bf16.xpose.msra.mxu0 0
      %926 = vmatprep.subr.bf16.mxu0 0
      %927 = vmatpush2.bf16.xpose.msra.mxu0 0
      %928 = vmatprep.subr.bf16.mxu0 0
      %929 = vmatpush2.bf16.xpose.msra.mxu0 0
      %930 = vmatprep.mubr.bf16.mxu0 0
      %931 = vmatmul.mubr.bf16.gmra.mxu0 %v893
      %v932 = vpop.f32.mrf.mxu0
      %v933 = vadd.f32 0.0, %v932
      %v934 = vpop.f32.mrf.mxu0
      %v935 = vpop.f32.mrf.mxu0
      %v936 = vadd.f32 0.0, %v935
      %v937 = vpop.f32.mrf.mxu0
      %938 = vdwg.mxu0
      %v939 = vld [vmem:[%s7] sm:$0xff]
      %v940 = vld [vmem:[%s7 + $0x8] sm:$0xff]
      %v941 = vld [vmem:[%s7 + $0x40] sm:$0xff]
      %v942 = vld [vmem:[%s7 + $0x48] sm:$0xff]
      %v943 = vld [vmem:[%s7 + $0x80] sm:$0xff]
      %v944 = vld [vmem:[%s7 + $0x88] sm:$0xff]
      %v945 = vld [vmem:[%s7 + $0xc0] sm:$0xff]
      %v946 = vld [vmem:[%s7 + $0xc8] sm:$0xff]
      %v947 = vadd.f32 %v792, %v939
      %v948 = vadd.f32 %v795, %v940
      %v949 = vadd.f32 %v839, %v941
      %v950 = vadd.f32 %v842, %v942
      %v951 = vadd.f32 %v886, %v943
      %v952 = vadd.f32 %v889, %v944
      %v953 = vadd.f32 %v933, %v945
      %v954 = vadd.f32 %v936, %v946
      %vm955 = vcmask 130048
      %v956 = vsel %vm955, %v947, -inf
      %957 = vmax.xlane.f32.xlu0 %v956
      %v958 = vpop.xlane.xlu0 %957
      %v959 = vsel %vm955, %v948, -inf
      %960 = vmax.xlane.f32.xlu0 %v959
      %v961 = vpop.xlane.xlu0 %960
      %v962 = vsel %vm955, %v949, -inf
      %963 = vmax.xlane.f32.xlu0 %v962
      %v964 = vpop.xlane.xlu0 %963
      %v965 = vsel %vm955, %v950, -inf
      %966 = vmax.xlane.f32.xlu0 %v965
      %v967 = vpop.xlane.xlu0 %966
      %v968 = vsel %vm955, %v951, -inf
      %969 = vmax.xlane.f32.xlu0 %v968
      %v970 = vpop.xlane.xlu0 %969
      %v971 = vsel %vm955, %v952, -inf
      %972 = vmax.xlane.f32.xlu0 %v971
      %v973 = vpop.xlane.xlu0 %972
      %v974 = vsel %vm955, %v953, -inf
      %975 = vmax.xlane.f32.xlu0 %v974
      %v976 = vpop.xlane.xlu0 %975
      %v977 = vsel %vm955, %v954, -inf
      %978 = vmax.xlane.f32.xlu0 %v977
      %v979 = vpop.xlane.xlu0 %978
      %v980 = vsub.f32 %v947, %v958
      %v981 = vsub.f32 %v948, %v961
      %v982 = vsub.f32 %v949, %v964
      %v983 = vsub.f32 %v950, %v967
      %v984 = vsub.f32 %v951, %v970
      %v985 = vsub.f32 %v952, %v973
      %v986 = vsub.f32 %v953, %v976
      %v987 = vsub.f32 %v954, %v979
      %v988 = vmul.f32 %v980, 1.442695
      %v989 = vpow.pop %v988
      %v990 = vmul.f32 %v981, 1.442695
      %v991 = vpow.pop %v990
      %v992 = vmul.f32 %v982, 1.442695
      %v993 = vpow.pop %v992
      %v994 = vmul.f32 %v983, 1.442695
      %v995 = vpow.pop %v994
      %v996 = vmul.f32 %v984, 1.442695
      %v997 = vpow.pop %v996
      %v998 = vmul.f32 %v985, 1.442695
      %v999 = vpow.pop %v998
      %v1000 = vmul.f32 %v986, 1.442695
      %v1001 = vpow.pop %v1000
      %v1002 = vmul.f32 %v987, 1.442695
      %v1003 = vpow.pop %v1002
      %v1004 = vsel %vm955, %v989, 0.0
      %1005 = vadd.xlane.f32.xlu0 %v1004
      %v1006 = vpop.xlane.xlu0 %1005
      %v1007 = vsel %vm955, %v991, 0.0
      %1008 = vadd.xlane.f32.xlu0 %v1007
      %v1009 = vpop.xlane.xlu0 %1008
      %v1010 = vsel %vm955, %v993, 0.0
      %1011 = vadd.xlane.f32.xlu0 %v1010
      %v1012 = vpop.xlane.xlu0 %1011
      %v1013 = vsel %vm955, %v995, 0.0
      %1014 = vadd.xlane.f32.xlu0 %v1013
      %v1015 = vpop.xlane.xlu0 %1014
      %v1016 = vsel %vm955, %v997, 0.0
      %1017 = vadd.xlane.f32.xlu0 %v1016
      %v1018 = vpop.xlane.xlu0 %1017
      %v1019 = vsel %vm955, %v999, 0.0
      %1020 = vadd.xlane.f32.xlu0 %v1019
      %v1021 = vpop.xlane.xlu0 %1020
      %v1022 = vsel %vm955, %v1001, 0.0
      %1023 = vadd.xlane.f32.xlu0 %v1022
      %v1024 = vpop.xlane.xlu0 %1023
      %v1025 = vsel %vm955, %v1003, 0.0
      %1026 = vadd.xlane.f32.xlu0 %v1025
      %v1027 = vpop.xlane.xlu0 %1026
      %v1028 = vpack.c.bf16 %v991, %v989
      %v1029 = vpack.c.bf16 %v995, %v993
      %v1030 = vpack.c.bf16 %v999, %v997
      %v1031 = vpack.c.bf16 %v1003, %v1001
      %v1033 = vsel %vm955, %v1028, 0
      %1035 = vmatprep.subr.bf16.mxu0 0
      %1036 = vmatpush1.bf16.msra.mxu0 0
      %1037 = vmatprep.subr.bf16.mxu0 0
      %1038 = vmatpush1.bf16.msra.mxu0 0
      %1039 = vmatprep.subr.bf16.mxu0 0
      %1040 = vmatpush1.bf16.msra.mxu0 0
      %1041 = vmatprep.subr.bf16.mxu0 0
      %1042 = vmatpush1.bf16.msra.mxu0 0
      %1043 = vmatprep.subr.bf16.mxu0 0
      %1044 = vmatpush1.bf16.msra.mxu0 0
      %1045 = vmatprep.subr.bf16.mxu0 0
      %1046 = vmatpush1.bf16.msra.mxu0 0
      %1047 = vmatprep.subr.bf16.mxu0 0
      %1048 = vmatpush1.bf16.msra.mxu0 0
      %1049 = vmatprep.subr.bf16.mxu0 0
      %1050 = vmatpush1.bf16.msra.mxu0 %v746
      %1051 = vmatprep.subr.bf16.mxu0 0
      %1052 = vmatpush2.bf16.msra.mxu0 0
      %1053 = vmatprep.subr.bf16.mxu0 0
      %1054 = vmatpush2.bf16.msra.mxu0 0
      %1055 = vmatprep.subr.bf16.mxu0 0
      %1056 = vmatpush2.bf16.msra.mxu0 0
      %1057 = vmatprep.subr.bf16.mxu0 0
      %1058 = vmatpush2.bf16.msra.mxu0 0
      %1059 = vmatprep.subr.bf16.mxu0 0
      %1060 = vmatpush2.bf16.msra.mxu0 0
      %1061 = vmatprep.subr.bf16.mxu0 0
      %1062 = vmatpush2.bf16.msra.mxu0 0
      %1063 = vmatprep.subr.bf16.mxu0 0
      %1064 = vmatpush2.bf16.msra.mxu0 0
      %1065 = vmatprep.subr.bf16.mxu0 0
      %1066 = vmatpush2.bf16.msra.mxu0 0
      %1067 = vmatprep.mubr.bf16.mxu0 0
      %1068 = vmatmul.mubr.bf16.gmra.mxu0 %v1033
      %v1069 = vpop.f32.mrf.mxu0
      %v1070 = vadd.f32 0.0, %v1069
      %v1071 = vpop.f32.mrf.mxu0
      %v1072 = vpop.f32.mrf.mxu0
      %v1073 = vadd.f32 0.0, %v1072
      %v1074 = vpop.f32.mrf.mxu0
      %1075 = vdwg.mxu0
      %v1077 = vsel %vm955, %v1029, 0
      %1079 = vmatprep.subr.bf16.mxu0 0
      %1080 = vmatpush1.bf16.msra.mxu0 0
      %1081 = vmatprep.subr.bf16.mxu0 0
      %1082 = vmatpush1.bf16.msra.mxu0 0
      %1083 = vmatprep.subr.bf16.mxu0 0
      %1084 = vmatpush1.bf16.msra.mxu0 0
      %1085 = vmatprep.subr.bf16.mxu0 0
      %1086 = vmatpush1.bf16.msra.mxu0 0
      %1087 = vmatprep.subr.bf16.mxu0 0
      %1088 = vmatpush1.bf16.msra.mxu0 0
      %1089 = vmatprep.subr.bf16.mxu0 0
      %1090 = vmatpush1.bf16.msra.mxu0 0
      %1091 = vmatprep.subr.bf16.mxu0 0
      %1092 = vmatpush1.bf16.msra.mxu0 0
      %1093 = vmatprep.subr.bf16.mxu0 0
      %1094 = vmatpush1.bf16.msra.mxu0 %v747
      %1095 = vmatprep.subr.bf16.mxu0 0
      %1096 = vmatpush2.bf16.msra.mxu0 0
      %1097 = vmatprep.subr.bf16.mxu0 0
      %1098 = vmatpush2.bf16.msra.mxu0 0
      %1099 = vmatprep.subr.bf16.mxu0 0
      %1100 = vmatpush2.bf16.msra.mxu0 0
      %1101 = vmatprep.subr.bf16.mxu0 0
      %1102 = vmatpush2.bf16.msra.mxu0 0
      %1103 = vmatprep.subr.bf16.mxu0 0
      %1104 = vmatpush2.bf16.msra.mxu0 0
      %1105 = vmatprep.subr.bf16.mxu0 0
      %1106 = vmatpush2.bf16.msra.mxu0 0
      %1107 = vmatprep.subr.bf16.mxu0 0
      %1108 = vmatpush2.bf16.msra.mxu0 0
      %1109 = vmatprep.subr.bf16.mxu0 0
      %1110 = vmatpush2.bf16.msra.mxu0 0
      %1111 = vmatprep.mubr.bf16.mxu0 0
      %1112 = vmatmul.mubr.bf16.gmra.mxu0 %v1077
      %v1113 = vpop.f32.mrf.mxu0
      %v1114 = vadd.f32 0.0, %v1113
      %v1115 = vpop.f32.mrf.mxu0
      %v1116 = vpop.f32.mrf.mxu0
      %v1117 = vadd.f32 0.0, %v1116
      %v1118 = vpop.f32.mrf.mxu0
      %1119 = vdwg.mxu0
      %v1121 = vsel %vm955, %v1030, 0
      %1123 = vmatprep.subr.bf16.mxu0 0
      %1124 = vmatpush1.bf16.msra.mxu0 0
      %1125 = vmatprep.subr.bf16.mxu0 0
      %1126 = vmatpush1.bf16.msra.mxu0 0
      %1127 = vmatprep.subr.bf16.mxu0 0
      %1128 = vmatpush1.bf16.msra.mxu0 0
      %1129 = vmatprep.subr.bf16.mxu0 0
      %1130 = vmatpush1.bf16.msra.mxu0 0
      %1131 = vmatprep.subr.bf16.mxu0 0
      %1132 = vmatpush1.bf16.msra.mxu0 0
      %1133 = vmatprep.subr.bf16.mxu0 0
      %1134 = vmatpush1.bf16.msra.mxu0 0
      %1135 = vmatprep.subr.bf16.mxu0 0
      %1136 = vmatpush1.bf16.msra.mxu0 0
      %1137 = vmatprep.subr.bf16.mxu0 0
      %1138 = vmatpush1.bf16.msra.mxu0 %v748
      %1139 = vmatprep.subr.bf16.mxu0 0
      %1140 = vmatpush2.bf16.msra.mxu0 0
      %1141 = vmatprep.subr.bf16.mxu0 0
      %1142 = vmatpush2.bf16.msra.mxu0 0
      %1143 = vmatprep.subr.bf16.mxu0 0
      %1144 = vmatpush2.bf16.msra.mxu0 0
      %1145 = vmatprep.subr.bf16.mxu0 0
      %1146 = vmatpush2.bf16.msra.mxu0 0
      %1147 = vmatprep.subr.bf16.mxu0 0
      %1148 = vmatpush2.bf16.msra.mxu0 0
      %1149 = vmatprep.subr.bf16.mxu0 0
      %1150 = vmatpush2.bf16.msra.mxu0 0
      %1151 = vmatprep.subr.bf16.mxu0 0
      %1152 = vmatpush2.bf16.msra.mxu0 0
      %1153 = vmatprep.subr.bf16.mxu0 0
      %1154 = vmatpush2.bf16.msra.mxu0 0
      %1155 = vmatprep.mubr.bf16.mxu0 0
      %1156 = vmatmul.mubr.bf16.gmra.mxu0 %v1121
      %v1157 = vpop.f32.mrf.mxu0
      %v1158 = vadd.f32 0.0, %v1157
      %v1159 = vpop.f32.mrf.mxu0
      %v1160 = vpop.f32.mrf.mxu0
      %v1161 = vadd.f32 0.0, %v1160
      %v1162 = vpop.f32.mrf.mxu0
      %1163 = vdwg.mxu0
      %v1165 = vsel %vm955, %v1031, 0
      %1167 = vmatprep.subr.bf16.mxu0 0
      %1168 = vmatpush1.bf16.msra.mxu0 0
      %1169 = vmatprep.subr.bf16.mxu0 0
      %1170 = vmatpush1.bf16.msra.mxu0 0
      %1171 = vmatprep.subr.bf16.mxu0 0
      %1172 = vmatpush1.bf16.msra.mxu0 0
      %1173 = vmatprep.subr.bf16.mxu0 0
      %1174 = vmatpush1.bf16.msra.mxu0 0
      %1175 = vmatprep.subr.bf16.mxu0 0
      %1176 = vmatpush1.bf16.msra.mxu0 0
      %1177 = vmatprep.subr.bf16.mxu0 0
      %1178 = vmatpush1.bf16.msra.mxu0 0
      %1179 = vmatprep.subr.bf16.mxu0 0
      %1180 = vmatpush1.bf16.msra.mxu0 0
      %1181 = vmatprep.subr.bf16.mxu0 0
      %1182 = vmatpush1.bf16.msra.mxu0 %v749
      %1183 = vmatprep.subr.bf16.mxu0 0
      %1184 = vmatpush2.bf16.msra.mxu0 0
      %1185 = vmatprep.subr.bf16.mxu0 0
      %1186 = vmatpush2.bf16.msra.mxu0 0
      %1187 = vmatprep.subr.bf16.mxu0 0
      %1188 = vmatpush2.bf16.msra.mxu0 0
      %1189 = vmatprep.subr.bf16.mxu0 0
      %1190 = vmatpush2.bf16.msra.mxu0 0
      %1191 = vmatprep.subr.bf16.mxu0 0
      %1192 = vmatpush2.bf16.msra.mxu0 0
      %1193 = vmatprep.subr.bf16.mxu0 0
      %1194 = vmatpush2.bf16.msra.mxu0 0
      %1195 = vmatprep.subr.bf16.mxu0 0
      %1196 = vmatpush2.bf16.msra.mxu0 0
      %1197 = vmatprep.subr.bf16.mxu0 0
      %1198 = vmatpush2.bf16.msra.mxu0 0
      %1199 = vmatprep.mubr.bf16.mxu0 0
      %1200 = vmatmul.mubr.bf16.gmra.mxu0 %v1165
      %v1201 = vpop.f32.mrf.mxu0
      %v1202 = vadd.f32 0.0, %v1201
      %v1203 = vpop.f32.mrf.mxu0
      %v1204 = vpop.f32.mrf.mxu0
      %v1205 = vadd.f32 0.0, %v1204
      %v1206 = vpop.f32.mrf.mxu0
      %1207 = vdwg.mxu0
      %v1208 = vrcp.pop %v1006
      %v1209 = vrcp.pop %v1009
      %v1210 = vrcp.pop %v1012
      %v1211 = vrcp.pop %v1015
      %v1212 = vrcp.pop %v1018
      %v1213 = vrcp.pop %v1021
      %v1214 = vrcp.pop %v1024
      %v1215 = vrcp.pop %v1027
      %v1216 = vmul.f32 %v1070, %v1208
      %v1217 = vmul.f32 %v1073, %v1209
      %v1218 = vmul.f32 %v1114, %v1210
      %v1219 = vmul.f32 %v1117, %v1211
      %v1220 = vmul.f32 %v1158, %v1212
      %v1221 = vmul.f32 %v1161, %v1213
      %v1222 = vmul.f32 %v1202, %v1214
      %v1223 = vmul.f32 %v1205, %v1215
      %1225 = vrot.lane.b32.xlu0 %v738, 120
      %v1226 = vpop.permute.xlu0 %1225
      %1228 = vrot.lane.b32.xlu0 %v742, 120
      %v1229 = vpop.permute.xlu0 %1228
      %v1231 = vsel %vm750, %v1226, 0
      %v1234 = vsel %vm750, %v1229, 0
      %1236 = vmatprep.subr.bf16.mxu0 0
      %1237 = vmatpush1.bf16.xpose.msra.mxu0 0
      %1238 = vmatprep.subr.bf16.mxu0 0
      %1239 = vmatpush1.bf16.xpose.msra.mxu0 0
      %1240 = vmatprep.subr.bf16.mxu0 0
      %1241 = vmatpush1.bf16.xpose.msra.mxu0 0
      %1242 = vmatprep.subr.bf16.mxu0 0
      %1243 = vmatpush1.bf16.xpose.msra.mxu0 0
      %1244 = vmatprep.subr.bf16.mxu0 0
      %1245 = vmatpush1.bf16.xpose.msra.mxu0 0
      %1246 = vmatprep.subr.bf16.mxu0 0
      %1247 = vmatpush1.bf16.xpose.msra.mxu0 0
      %1248 = vmatprep.subr.bf16.mxu0 0
      %1249 = vmatpush1.bf16.xpose.msra.mxu0 0
      %1250 = vmatprep.subr.bf16.mxu0 0
      %1251 = vmatpush1.bf16.xpose.msra.mxu0 %v1234
      %1252 = vmatprep.subr.bf16.mxu0 0
      %1253 = vmatpush2.bf16.xpose.msra.mxu0 0
      %1254 = vmatprep.subr.bf16.mxu0 0
      %1255 = vmatpush2.bf16.xpose.msra.mxu0 0
      %1256 = vmatprep.subr.bf16.mxu0 0
      %1257 = vmatpush2.bf16.xpose.msra.mxu0 0
      %1258 = vmatprep.subr.bf16.mxu0 0
      %1259 = vmatpush2.bf16.xpose.msra.mxu0 0
      %1260 = vmatprep.subr.bf16.mxu0 0
      %1261 = vmatpush2.bf16.xpose.msra.mxu0 0
      %1262 = vmatprep.subr.bf16.mxu0 0
      %1263 = vmatpush2.bf16.xpose.msra.mxu0 0
      %1264 = vmatprep.subr.bf16.mxu0 0
      %1265 = vmatpush2.bf16.xpose.msra.mxu0 0
      %1266 = vmatprep.subr.bf16.mxu0 0
      %1267 = vmatpush2.bf16.xpose.msra.mxu0 0
      %1268 = vmatprep.mubr.bf16.mxu0 0
      %1269 = vmatmul.mubr.bf16.gmra.mxu0 %v1231
      %v1270 = vpop.f32.mrf.mxu0
      %v1271 = vadd.f32 0.0, %v1270
      %v1272 = vpop.f32.mrf.mxu0
      %v1273 = vpop.f32.mrf.mxu0
      %v1274 = vadd.f32 0.0, %v1273
      %v1275 = vpop.f32.mrf.mxu0
      %1276 = vdwg.mxu0
      %1278 = vrot.lane.b32.xlu0 %v739, 120
      %v1279 = vpop.permute.xlu0 %1278
      %1281 = vrot.lane.b32.xlu0 %v743, 120
      %v1282 = vpop.permute.xlu0 %1281
      %v1284 = vsel %vm750, %v1279, 0
      %v1287 = vsel %vm750, %v1282, 0
      %1289 = vmatprep.subr.bf16.mxu0 0
      %1290 = vmatpush1.bf16.xpose.msra.mxu0 0
      %1291 = vmatprep.subr.bf16.mxu0 0
      %1292 = vmatpush1.bf16.xpose.msra.mxu0 0
      %1293 = vmatprep.subr.bf16.mxu0 0
      %1294 = vmatpush1.bf16.xpose.msra.mxu0 0
      %1295 = vmatprep.subr.bf16.mxu0 0
      %1296 = vmatpush1.bf16.xpose.msra.mxu0 0
      %1297 = vmatprep.subr.bf16.mxu0 0
      %1298 = vmatpush1.bf16.xpose.msra.mxu0 0
      %1299 = vmatprep.subr.bf16.mxu0 0
      %1300 = vmatpush1.bf16.xpose.msra.mxu0 0
      %1301 = vmatprep.subr.bf16.mxu0 0
      %1302 = vmatpush1.bf16.xpose.msra.mxu0 0
      %1303 = vmatprep.subr.bf16.mxu0 0
      %1304 = vmatpush1.bf16.xpose.msra.mxu0 %v1287
      %1305 = vmatprep.subr.bf16.mxu0 0
      %1306 = vmatpush2.bf16.xpose.msra.mxu0 0
      %1307 = vmatprep.subr.bf16.mxu0 0
      %1308 = vmatpush2.bf16.xpose.msra.mxu0 0
      %1309 = vmatprep.subr.bf16.mxu0 0
      %1310 = vmatpush2.bf16.xpose.msra.mxu0 0
      %1311 = vmatprep.subr.bf16.mxu0 0
      %1312 = vmatpush2.bf16.xpose.msra.mxu0 0
      %1313 = vmatprep.subr.bf16.mxu0 0
      %1314 = vmatpush2.bf16.xpose.msra.mxu0 0
      %1315 = vmatprep.subr.bf16.mxu0 0
      %1316 = vmatpush2.bf16.xpose.msra.mxu0 0
      %1317 = vmatprep.subr.bf16.mxu0 0
      %1318 = vmatpush2.bf16.xpose.msra.mxu0 0
      %1319 = vmatprep.subr.bf16.mxu0 0
      %1320 = vmatpush2.bf16.xpose.msra.mxu0 0
      %1321 = vmatprep.mubr.bf16.mxu0 0
      %1322 = vmatmul.mubr.bf16.gmra.mxu0 %v1284
      %v1323 = vpop.f32.mrf.mxu0
      %v1324 = vadd.f32 0.0, %v1323
      %v1325 = vpop.f32.mrf.mxu0
      %v1326 = vpop.f32.mrf.mxu0
      %v1327 = vadd.f32 0.0, %v1326
      %v1328 = vpop.f32.mrf.mxu0
      %1329 = vdwg.mxu0
      %1331 = vrot.lane.b32.xlu0 %v740, 120
      %v1332 = vpop.permute.xlu0 %1331
      %1334 = vrot.lane.b32.xlu0 %v744, 120
      %v1335 = vpop.permute.xlu0 %1334
      %v1337 = vsel %vm750, %v1332, 0
      %v1340 = vsel %vm750, %v1335, 0
      %1342 = vmatprep.subr.bf16.mxu0 0
      %1343 = vmatpush1.bf16.xpose.msra.mxu0 0
      %1344 = vmatprep.subr.bf16.mxu0 0
      %1345 = vmatpush1.bf16.xpose.msra.mxu0 0
      %1346 = vmatprep.subr.bf16.mxu0 0
      %1347 = vmatpush1.bf16.xpose.msra.mxu0 0
      %1348 = vmatprep.subr.bf16.mxu0 0
      %1349 = vmatpush1.bf16.xpose.msra.mxu0 0
      %1350 = vmatprep.subr.bf16.mxu0 0
      %1351 = vmatpush1.bf16.xpose.msra.mxu0 0
      %1352 = vmatprep.subr.bf16.mxu0 0
      %1353 = vmatpush1.bf16.xpose.msra.mxu0 0
      %1354 = vmatprep.subr.bf16.mxu0 0
      %1355 = vmatpush1.bf16.xpose.msra.mxu0 0
      %1356 = vmatprep.subr.bf16.mxu0 0
      %1357 = vmatpush1.bf16.xpose.msra.mxu0 %v1340
      %1358 = vmatprep.subr.bf16.mxu0 0
      %1359 = vmatpush2.bf16.xpose.msra.mxu0 0
      %1360 = vmatprep.subr.bf16.mxu0 0
      %1361 = vmatpush2.bf16.xpose.msra.mxu0 0
      %1362 = vmatprep.subr.bf16.mxu0 0
      %1363 = vmatpush2.bf16.xpose.msra.mxu0 0
      %1364 = vmatprep.subr.bf16.mxu0 0
      %1365 = vmatpush2.bf16.xpose.msra.mxu0 0
      %1366 = vmatprep.subr.bf16.mxu0 0
      %1367 = vmatpush2.bf16.xpose.msra.mxu0 0
      %1368 = vmatprep.subr.bf16.mxu0 0
      %1369 = vmatpush2.bf16.xpose.msra.mxu0 0
      %1370 = vmatprep.subr.bf16.mxu0 0
      %1371 = vmatpush2.bf16.xpose.msra.mxu0 0
      %1372 = vmatprep.subr.bf16.mxu0 0
      %1373 = vmatpush2.bf16.xpose.msra.mxu0 0
      %1374 = vmatprep.mubr.bf16.mxu0 0
      %1375 = vmatmul.mubr.bf16.gmra.mxu0 %v1337
      %v1376 = vpop.f32.mrf.mxu0
      %v1377 = vadd.f32 0.0, %v1376
      %v1378 = vpop.f32.mrf.mxu0
      %v1379 = vpop.f32.mrf.mxu0
      %v1380 = vadd.f32 0.0, %v1379
      %v1381 = vpop.f32.mrf.mxu0
      %1382 = vdwg.mxu0
      %1384 = vrot.lane.b32.xlu0 %v741, 120
      %v1385 = vpop.permute.xlu0 %1384
      %1387 = vrot.lane.b32.xlu0 %v745, 120
      %v1388 = vpop.permute.xlu0 %1387
      %v1390 = vsel %vm750, %v1385, 0
      %v1393 = vsel %vm750, %v1388, 0
      %1395 = vmatprep.subr.bf16.mxu0 0
      %1396 = vmatpush1.bf16.xpose.msra.mxu0 0
      %1397 = vmatprep.subr.bf16.mxu0 0
      %1398 = vmatpush1.bf16.xpose.msra.mxu0 0
      %1399 = vmatprep.subr.bf16.mxu0 0
      %1400 = vmatpush1.bf16.xpose.msra.mxu0 0
      %1401 = vmatprep.subr.bf16.mxu0 0
      %1402 = vmatpush1.bf16.xpose.msra.mxu0 0
      %1403 = vmatprep.subr.bf16.mxu0 0
      %1404 = vmatpush1.bf16.xpose.msra.mxu0 0
      %1405 = vmatprep.subr.bf16.mxu0 0
      %1406 = vmatpush1.bf16.xpose.msra.mxu0 0
      %1407 = vmatprep.subr.bf16.mxu0 0
      %1408 = vmatpush1.bf16.xpose.msra.mxu0 0
      %1409 = vmatprep.subr.bf16.mxu0 0
      %1410 = vmatpush1.bf16.xpose.msra.mxu0 %v1393
      %1411 = vmatprep.subr.bf16.mxu0 0
      %1412 = vmatpush2.bf16.xpose.msra.mxu0 0
      %1413 = vmatprep.subr.bf16.mxu0 0
      %1414 = vmatpush2.bf16.xpose.msra.mxu0 0
      %1415 = vmatprep.subr.bf16.mxu0 0
      %1416 = vmatpush2.bf16.xpose.msra.mxu0 0
      %1417 = vmatprep.subr.bf16.mxu0 0
      %1418 = vmatpush2.bf16.xpose.msra.mxu0 0
      %1419 = vmatprep.subr.bf16.mxu0 0
      %1420 = vmatpush2.bf16.xpose.msra.mxu0 0
      %1421 = vmatprep.subr.bf16.mxu0 0
      %1422 = vmatpush2.bf16.xpose.msra.mxu0 0
      %1423 = vmatprep.subr.bf16.mxu0 0
      %1424 = vmatpush2.bf16.xpose.msra.mxu0 0
      %1425 = vmatprep.subr.bf16.mxu0 0
      %1426 = vmatpush2.bf16.xpose.msra.mxu0 0
      %1427 = vmatprep.mubr.bf16.mxu0 0
      %1428 = vmatmul.mubr.bf16.gmra.mxu0 %v1390
      %v1429 = vpop.f32.mrf.mxu0
      %v1430 = vadd.f32 0.0, %v1429
      %v1431 = vpop.f32.mrf.mxu0
      %v1432 = vpop.f32.mrf.mxu0
      %v1433 = vadd.f32 0.0, %v1432
      %v1434 = vpop.f32.mrf.mxu0
      %1435 = vdwg.mxu0
      %s1436 = scalar_lea.vmem %s7, 16
      %v1437 = vld [vmem:[%s1436] sm:$0xff]
      %v1438 = vld [vmem:[%s1436 + $0x8] sm:$0xff]
      %v1439 = vld [vmem:[%s1436 + $0x40] sm:$0xff]
      %v1440 = vld [vmem:[%s1436 + $0x48] sm:$0xff]
      %v1441 = vld [vmem:[%s1436 + $0x80] sm:$0xff]
      %v1442 = vld [vmem:[%s1436 + $0x88] sm:$0xff]
      %v1443 = vld [vmem:[%s1436 + $0xc0] sm:$0xff]
      %v1444 = vld [vmem:[%s1436 + $0xc8] sm:$0xff]
      %v1445 = vadd.f32 %v1271, %v1437
      %v1446 = vadd.f32 %v1274, %v1438
      %v1447 = vadd.f32 %v1324, %v1439
      %v1448 = vadd.f32 %v1327, %v1440
      %v1449 = vadd.f32 %v1377, %v1441
      %v1450 = vadd.f32 %v1380, %v1442
      %v1451 = vadd.f32 %v1430, %v1443
      %v1452 = vadd.f32 %v1433, %v1444
      %v1453 = vsel %vm955, %v1445, -inf
      %1454 = vmax.xlane.f32.xlu0 %v1453
      %v1455 = vpop.xlane.xlu0 %1454
      %v1456 = vsel %vm955, %v1446, -inf
      %1457 = vmax.xlane.f32.xlu0 %v1456
      %v1458 = vpop.xlane.xlu0 %1457
      %v1459 = vsel %vm955, %v1447, -inf
      %1460 = vmax.xlane.f32.xlu0 %v1459
      %v1461 = vpop.xlane.xlu0 %1460
      %v1462 = vsel %vm955, %v1448, -inf
      %1463 = vmax.xlane.f32.xlu0 %v1462
      %v1464 = vpop.xlane.xlu0 %1463
      %v1465 = vsel %vm955, %v1449, -inf
      %1466 = vmax.xlane.f32.xlu0 %v1465
      %v1467 = vpop.xlane.xlu0 %1466
      %v1468 = vsel %vm955, %v1450, -inf
      %1469 = vmax.xlane.f32.xlu0 %v1468
      %v1470 = vpop.xlane.xlu0 %1469
      %v1471 = vsel %vm955, %v1451, -inf
      %1472 = vmax.xlane.f32.xlu0 %v1471
      %v1473 = vpop.xlane.xlu0 %1472
      %v1474 = vsel %vm955, %v1452, -inf
      %1475 = vmax.xlane.f32.xlu0 %v1474
      %v1476 = vpop.xlane.xlu0 %1475
      %v1477 = vsub.f32 %v1445, %v1455
      %v1478 = vsub.f32 %v1446, %v1458
      %v1479 = vsub.f32 %v1447, %v1461
      %v1480 = vsub.f32 %v1448, %v1464
      %v1481 = vsub.f32 %v1449, %v1467
      %v1482 = vsub.f32 %v1450, %v1470
      %v1483 = vsub.f32 %v1451, %v1473
      %v1484 = vsub.f32 %v1452, %v1476
      %v1485 = vmul.f32 %v1477, 1.442695
      %v1486 = vpow.pop %v1485
      %v1487 = vmul.f32 %v1478, 1.442695
      %v1488 = vpow.pop %v1487
      %v1489 = vmul.f32 %v1479, 1.442695
      %v1490 = vpow.pop %v1489
      %v1491 = vmul.f32 %v1480, 1.442695
      %v1492 = vpow.pop %v1491
      %v1493 = vmul.f32 %v1481, 1.442695
      %v1494 = vpow.pop %v1493
      %v1495 = vmul.f32 %v1482, 1.442695
      %v1496 = vpow.pop %v1495
      %v1497 = vmul.f32 %v1483, 1.442695
      %v1498 = vpow.pop %v1497
      %v1499 = vmul.f32 %v1484, 1.442695
      %v1500 = vpow.pop %v1499
      %v1501 = vsel %vm955, %v1486, 0.0
      %1502 = vadd.xlane.f32.xlu0 %v1501
      %v1503 = vpop.xlane.xlu0 %1502
      %v1504 = vsel %vm955, %v1488, 0.0
      %1505 = vadd.xlane.f32.xlu0 %v1504
      %v1506 = vpop.xlane.xlu0 %1505
      %v1507 = vsel %vm955, %v1490, 0.0
      %1508 = vadd.xlane.f32.xlu0 %v1507
      %v1509 = vpop.xlane.xlu0 %1508
      %v1510 = vsel %vm955, %v1492, 0.0
      %1511 = vadd.xlane.f32.xlu0 %v1510
      %v1512 = vpop.xlane.xlu0 %1511
      %v1513 = vsel %vm955, %v1494, 0.0
      %1514 = vadd.xlane.f32.xlu0 %v1513
      %v1515 = vpop.xlane.xlu0 %1514
      %v1516 = vsel %vm955, %v1496, 0.0
      %1517 = vadd.xlane.f32.xlu0 %v1516
      %v1518 = vpop.xlane.xlu0 %1517
      %v1519 = vsel %vm955, %v1498, 0.0
      %1520 = vadd.xlane.f32.xlu0 %v1519
      %v1521 = vpop.xlane.xlu0 %1520
      %v1522 = vsel %vm955, %v1500, 0.0
      %1523 = vadd.xlane.f32.xlu0 %v1522
      %v1524 = vpop.xlane.xlu0 %1523
      %v1525 = vpack.c.bf16 %v1488, %v1486
      %v1526 = vpack.c.bf16 %v1492, %v1490
      %v1527 = vpack.c.bf16 %v1496, %v1494
      %v1528 = vpack.c.bf16 %v1500, %v1498
      %1530 = vrot.lane.b32.xlu0 %v746, 120
      %v1531 = vpop.permute.xlu0 %1530
      %v1534 = vsel %vm955, %v1525, 0
      %1536 = vmatprep.subr.bf16.mxu0 0
      %1537 = vmatpush1.bf16.msra.mxu0 0
      %1538 = vmatprep.subr.bf16.mxu0 0
      %1539 = vmatpush1.bf16.msra.mxu0 0
      %1540 = vmatprep.subr.bf16.mxu0 0
      %1541 = vmatpush1.bf16.msra.mxu0 0
      %1542 = vmatprep.subr.bf16.mxu0 0
      %1543 = vmatpush1.bf16.msra.mxu0 0
      %1544 = vmatprep.subr.bf16.mxu0 0
      %1545 = vmatpush1.bf16.msra.mxu0 0
      %1546 = vmatprep.subr.bf16.mxu0 0
      %1547 = vmatpush1.bf16.msra.mxu0 0
      %1548 = vmatprep.subr.bf16.mxu0 0
      %1549 = vmatpush1.bf16.msra.mxu0 0
      %1550 = vmatprep.subr.bf16.mxu0 0
      %1551 = vmatpush1.bf16.msra.mxu0 %v1531
      %1552 = vmatprep.subr.bf16.mxu0 0
      %1553 = vmatpush2.bf16.msra.mxu0 0
      %1554 = vmatprep.subr.bf16.mxu0 0
      %1555 = vmatpush2.bf16.msra.mxu0 0
      %1556 = vmatprep.subr.bf16.mxu0 0
      %1557 = vmatpush2.bf16.msra.mxu0 0
      %1558 = vmatprep.subr.bf16.mxu0 0
      %1559 = vmatpush2.bf16.msra.mxu0 0
      %1560 = vmatprep.subr.bf16.mxu0 0
      %1561 = vmatpush2.bf16.msra.mxu0 0
      %1562 = vmatprep.subr.bf16.mxu0 0
      %1563 = vmatpush2.bf16.msra.mxu0 0
      %1564 = vmatprep.subr.bf16.mxu0 0
      %1565 = vmatpush2.bf16.msra.mxu0 0
      %1566 = vmatprep.subr.bf16.mxu0 0
      %1567 = vmatpush2.bf16.msra.mxu0 0
      %1568 = vmatprep.mubr.bf16.mxu0 0
      %1569 = vmatmul.mubr.bf16.gmra.mxu0 %v1534
      %v1570 = vpop.f32.mrf.mxu0
      %v1571 = vadd.f32 0.0, %v1570
      %v1572 = vpop.f32.mrf.mxu0
      %v1573 = vpop.f32.mrf.mxu0
      %v1574 = vadd.f32 0.0, %v1573
      %v1575 = vpop.f32.mrf.mxu0
      %1576 = vdwg.mxu0
      %1578 = vrot.lane.b32.xlu0 %v747, 120
      %v1579 = vpop.permute.xlu0 %1578
      %v1582 = vsel %vm955, %v1526, 0
      %1584 = vmatprep.subr.bf16.mxu0 0
      %1585 = vmatpush1.bf16.msra.mxu0 0
      %1586 = vmatprep.subr.bf16.mxu0 0
      %1587 = vmatpush1.bf16.msra.mxu0 0
      %1588 = vmatprep.subr.bf16.mxu0 0
      %1589 = vmatpush1.bf16.msra.mxu0 0
      %1590 = vmatprep.subr.bf16.mxu0 0
      %1591 = vmatpush1.bf16.msra.mxu0 0
      %1592 = vmatprep.subr.bf16.mxu0 0
      %1593 = vmatpush1.bf16.msra.mxu0 0
      %1594 = vmatprep.subr.bf16.mxu0 0
      %1595 = vmatpush1.bf16.msra.mxu0 0
      %1596 = vmatprep.subr.bf16.mxu0 0
      %1597 = vmatpush1.bf16.msra.mxu0 0
      %1598 = vmatprep.subr.bf16.mxu0 0
      %1599 = vmatpush1.bf16.msra.mxu0 %v1579
      %1600 = vmatprep.subr.bf16.mxu0 0
      %1601 = vmatpush2.bf16.msra.mxu0 0
      %1602 = vmatprep.subr.bf16.mxu0 0
      %1603 = vmatpush2.bf16.msra.mxu0 0
      %1604 = vmatprep.subr.bf16.mxu0 0
      %1605 = vmatpush2.bf16.msra.mxu0 0
      %1606 = vmatprep.subr.bf16.mxu0 0
      %1607 = vmatpush2.bf16.msra.mxu0 0
      %1608 = vmatprep.subr.bf16.mxu0 0
      %1609 = vmatpush2.bf16.msra.mxu0 0
      %1610 = vmatprep.subr.bf16.mxu0 0
      %1611 = vmatpush2.bf16.msra.mxu0 0
      %1612 = vmatprep.subr.bf16.mxu0 0
      %1613 = vmatpush2.bf16.msra.mxu0 0
      %1614 = vmatprep.subr.bf16.mxu0 0
      %1615 = vmatpush2.bf16.msra.mxu0 0
      %1616 = vmatprep.mubr.bf16.mxu0 0
      %1617 = vmatmul.mubr.bf16.gmra.mxu0 %v1582
      %v1618 = vpop.f32.mrf.mxu0
      %v1619 = vadd.f32 0.0, %v1618
      %v1620 = vpop.f32.mrf.mxu0
      %v1621 = vpop.f32.mrf.mxu0
      %v1622 = vadd.f32 0.0, %v1621
      %v1623 = vpop.f32.mrf.mxu0
      %1624 = vdwg.mxu0
      %1626 = vrot.lane.b32.xlu0 %v748, 120
      %v1627 = vpop.permute.xlu0 %1626
      %v1630 = vsel %vm955, %v1527, 0
      %1632 = vmatprep.subr.bf16.mxu0 0
      %1633 = vmatpush1.bf16.msra.mxu0 0
      %1634 = vmatprep.subr.bf16.mxu0 0
      %1635 = vmatpush1.bf16.msra.mxu0 0
      %1636 = vmatprep.subr.bf16.mxu0 0
      %1637 = vmatpush1.bf16.msra.mxu0 0
      %1638 = vmatprep.subr.bf16.mxu0 0
      %1639 = vmatpush1.bf16.msra.mxu0 0
      %1640 = vmatprep.subr.bf16.mxu0 0
      %1641 = vmatpush1.bf16.msra.mxu0 0
      %1642 = vmatprep.subr.bf16.mxu0 0
      %1643 = vmatpush1.bf16.msra.mxu0 0
      %1644 = vmatprep.subr.bf16.mxu0 0
      %1645 = vmatpush1.bf16.msra.mxu0 0
      %1646 = vmatprep.subr.bf16.mxu0 0
      %1647 = vmatpush1.bf16.msra.mxu0 %v1627
      %1648 = vmatprep.subr.bf16.mxu0 0
      %1649 = vmatpush2.bf16.msra.mxu0 0
      %1650 = vmatprep.subr.bf16.mxu0 0
      %1651 = vmatpush2.bf16.msra.mxu0 0
      %1652 = vmatprep.subr.bf16.mxu0 0
      %1653 = vmatpush2.bf16.msra.mxu0 0
      %1654 = vmatprep.subr.bf16.mxu0 0
      %1655 = vmatpush2.bf16.msra.mxu0 0
      %1656 = vmatprep.subr.bf16.mxu0 0
      %1657 = vmatpush2.bf16.msra.mxu0 0
      %1658 = vmatprep.subr.bf16.mxu0 0
      %1659 = vmatpush2.bf16.msra.mxu0 0
      %1660 = vmatprep.subr.bf16.mxu0 0
      %1661 = vmatpush2.bf16.msra.mxu0 0
      %1662 = vmatprep.subr.bf16.mxu0 0
      %1663 = vmatpush2.bf16.msra.mxu0 0
      %1664 = vmatprep.mubr.bf16.mxu0 0
      %1665 = vmatmul.mubr.bf16.gmra.mxu0 %v1630
      %v1666 = vpop.f32.mrf.mxu0
      %v1667 = vadd.f32 0.0, %v1666
      %v1668 = vpop.f32.mrf.mxu0
      %v1669 = vpop.f32.mrf.mxu0
      %v1670 = vadd.f32 0.0, %v1669
      %v1671 = vpop.f32.mrf.mxu0
      %1672 = vdwg.mxu0
      %1674 = vrot.lane.b32.xlu0 %v749, 120
      %v1675 = vpop.permute.xlu0 %1674
      %v1678 = vsel %vm955, %v1528, 0
      %1680 = vmatprep.subr.bf16.mxu0 0
      %1681 = vmatpush1.bf16.msra.mxu0 0
      %1682 = vmatprep.subr.bf16.mxu0 0
      %1683 = vmatpush1.bf16.msra.mxu0 0
      %1684 = vmatprep.subr.bf16.mxu0 0
      %1685 = vmatpush1.bf16.msra.mxu0 0
      %1686 = vmatprep.subr.bf16.mxu0 0
      %1687 = vmatpush1.bf16.msra.mxu0 0
      %1688 = vmatprep.subr.bf16.mxu0 0
      %1689 = vmatpush1.bf16.msra.mxu0 0
      %1690 = vmatprep.subr.bf16.mxu0 0
      %1691 = vmatpush1.bf16.msra.mxu0 0
      %1692 = vmatprep.subr.bf16.mxu0 0
      %1693 = vmatpush1.bf16.msra.mxu0 0
      %1694 = vmatprep.subr.bf16.mxu0 0
      %1695 = vmatpush1.bf16.msra.mxu0 %v1675
      %1696 = vmatprep.subr.bf16.mxu0 0
      %1697 = vmatpush2.bf16.msra.mxu0 0
      %1698 = vmatprep.subr.bf16.mxu0 0
      %1699 = vmatpush2.bf16.msra.mxu0 0
      %1700 = vmatprep.subr.bf16.mxu0 0
      %1701 = vmatpush2.bf16.msra.mxu0 0
      %1702 = vmatprep.subr.bf16.mxu0 0
      %1703 = vmatpush2.bf16.msra.mxu0 0
      %1704 = vmatprep.subr.bf16.mxu0 0
      %1705 = vmatpush2.bf16.msra.mxu0 0
      %1706 = vmatprep.subr.bf16.mxu0 0
      %1707 = vmatpush2.bf16.msra.mxu0 0
      %1708 = vmatprep.subr.bf16.mxu0 0
      %1709 = vmatpush2.bf16.msra.mxu0 0
      %1710 = vmatprep.subr.bf16.mxu0 0
      %1711 = vmatpush2.bf16.msra.mxu0 0
      %1712 = vmatprep.mubr.bf16.mxu0 0
      %1713 = vmatmul.mubr.bf16.gmra.mxu0 %v1678
      %v1714 = vpop.f32.mrf.mxu0
      %v1715 = vadd.f32 0.0, %v1714
      %v1716 = vpop.f32.mrf.mxu0
      %v1717 = vpop.f32.mrf.mxu0
      %v1718 = vadd.f32 0.0, %v1717
      %v1719 = vpop.f32.mrf.mxu0
      %1720 = vdwg.mxu0
      %v1721 = vrcp.pop %v1503
      %v1722 = vrcp.pop %v1506
      %v1723 = vrcp.pop %v1509
      %v1724 = vrcp.pop %v1512
      %v1725 = vrcp.pop %v1515
      %v1726 = vrcp.pop %v1518
      %v1727 = vrcp.pop %v1521
      %v1728 = vrcp.pop %v1524
      %v1729 = vmul.f32 %v1571, %v1721
      %v1730 = vmul.f32 %v1574, %v1722
      %v1731 = vmul.f32 %v1619, %v1723
      %v1732 = vmul.f32 %v1622, %v1724
      %v1733 = vmul.f32 %v1667, %v1725
      %v1734 = vmul.f32 %v1670, %v1726
      %v1735 = vmul.f32 %v1715, %v1727
      %v1736 = vmul.f32 %v1718, %v1728
      %1737 = vrot.lane.b32.xlu0 %v738, 112
      %v1738 = vpop.permute.xlu0 %1737
      %1739 = vrot.lane.b32.xlu0 %v742, 112
      %v1740 = vpop.permute.xlu0 %1739
      %v1742 = vsel %vm750, %v1738, 0
      %v1745 = vsel %vm750, %v1740, 0
      %1747 = vmatprep.subr.bf16.mxu0 0
      %1748 = vmatpush1.bf16.xpose.msra.mxu0 0
      %1749 = vmatprep.subr.bf16.mxu0 0
      %1750 = vmatpush1.bf16.xpose.msra.mxu0 0
      %1751 = vmatprep.subr.bf16.mxu0 0
      %1752 = vmatpush1.bf16.xpose.msra.mxu0 0
      %1753 = vmatprep.subr.bf16.mxu0 0
      %1754 = vmatpush1.bf16.xpose.msra.mxu0 0
      %1755 = vmatprep.subr.bf16.mxu0 0
      %1756 = vmatpush1.bf16.xpose.msra.mxu0 0
      %1757 = vmatprep.subr.bf16.mxu0 0
      %1758 = vmatpush1.bf16.xpose.msra.mxu0 0
      %1759 = vmatprep.subr.bf16.mxu0 0
      %1760 = vmatpush1.bf16.xpose.msra.mxu0 0
      %1761 = vmatprep.subr.bf16.mxu0 0
      %1762 = vmatpush1.bf16.xpose.msra.mxu0 %v1745
      %1763 = vmatprep.subr.bf16.mxu0 0
      %1764 = vmatpush2.bf16.xpose.msra.mxu0 0
      %1765 = vmatprep.subr.bf16.mxu0 0
      %1766 = vmatpush2.bf16.xpose.msra.mxu0 0
      %1767 = vmatprep.subr.bf16.mxu0 0
      %1768 = vmatpush2.bf16.xpose.msra.mxu0 0
      %1769 = vmatprep.subr.bf16.mxu0 0
      %1770 = vmatpush2.bf16.xpose.msra.mxu0 0
      %1771 = vmatprep.subr.bf16.mxu0 0
      %1772 = vmatpush2.bf16.xpose.msra.mxu0 0
      %1773 = vmatprep.subr.bf16.mxu0 0
      %1774 = vmatpush2.bf16.xpose.msra.mxu0 0
      %1775 = vmatprep.subr.bf16.mxu0 0
      %1776 = vmatpush2.bf16.xpose.msra.mxu0 0
      %1777 = vmatprep.subr.bf16.mxu0 0
      %1778 = vmatpush2.bf16.xpose.msra.mxu0 0
      %1779 = vmatprep.mubr.bf16.mxu0 0
      %1780 = vmatmul.mubr.bf16.gmra.mxu0 %v1742
      %v1781 = vpop.f32.mrf.mxu0
      %v1782 = vadd.f32 0.0, %v1781
      %v1783 = vpop.f32.mrf.mxu0
      %v1784 = vpop.f32.mrf.mxu0
      %v1785 = vadd.f32 0.0, %v1784
      %v1786 = vpop.f32.mrf.mxu0
      %1787 = vdwg.mxu0
      %1788 = vrot.lane.b32.xlu0 %v739, 112
      %v1789 = vpop.permute.xlu0 %1788
      %1790 = vrot.lane.b32.xlu0 %v743, 112
      %v1791 = vpop.permute.xlu0 %1790
      %v1793 = vsel %vm750, %v1789, 0
      %v1796 = vsel %vm750, %v1791, 0
      %1798 = vmatprep.subr.bf16.mxu0 0
      %1799 = vmatpush1.bf16.xpose.msra.mxu0 0
      %1800 = vmatprep.subr.bf16.mxu0 0
      %1801 = vmatpush1.bf16.xpose.msra.mxu0 0
      %1802 = vmatprep.subr.bf16.mxu0 0
      %1803 = vmatpush1.bf16.xpose.msra.mxu0 0
      %1804 = vmatprep.subr.bf16.mxu0 0
      %1805 = vmatpush1.bf16.xpose.msra.mxu0 0
      %1806 = vmatprep.subr.bf16.mxu0 0
      %1807 = vmatpush1.bf16.xpose.msra.mxu0 0
      %1808 = vmatprep.subr.bf16.mxu0 0
      %1809 = vmatpush1.bf16.xpose.msra.mxu0 0
      %1810 = vmatprep.subr.bf16.mxu0 0
      %1811 = vmatpush1.bf16.xpose.msra.mxu0 0
      %1812 = vmatprep.subr.bf16.mxu0 0
      %1813 = vmatpush1.bf16.xpose.msra.mxu0 %v1796
      %1814 = vmatprep.subr.bf16.mxu0 0
      %1815 = vmatpush2.bf16.xpose.msra.mxu0 0
      %1816 = vmatprep.subr.bf16.mxu0 0
      %1817 = vmatpush2.bf16.xpose.msra.mxu0 0
      %1818 = vmatprep.subr.bf16.mxu0 0
      %1819 = vmatpush2.bf16.xpose.msra.mxu0 0
      %1820 = vmatprep.subr.bf16.mxu0 0
      %1821 = vmatpush2.bf16.xpose.msra.mxu0 0
      %1822 = vmatprep.subr.bf16.mxu0 0
      %1823 = vmatpush2.bf16.xpose.msra.mxu0 0
      %1824 = vmatprep.subr.bf16.mxu0 0
      %1825 = vmatpush2.bf16.xpose.msra.mxu0 0
      %1826 = vmatprep.subr.bf16.mxu0 0
      %1827 = vmatpush2.bf16.xpose.msra.mxu0 0
      %1828 = vmatprep.subr.bf16.mxu0 0
      %1829 = vmatpush2.bf16.xpose.msra.mxu0 0
      %1830 = vmatprep.mubr.bf16.mxu0 0
      %1831 = vmatmul.mubr.bf16.gmra.mxu0 %v1793
      %v1832 = vpop.f32.mrf.mxu0
      %v1833 = vadd.f32 0.0, %v1832
      %v1834 = vpop.f32.mrf.mxu0
      %v1835 = vpop.f32.mrf.mxu0
      %v1836 = vadd.f32 0.0, %v1835
      %v1837 = vpop.f32.mrf.mxu0
      %1838 = vdwg.mxu0
      %1839 = vrot.lane.b32.xlu0 %v740, 112
      %v1840 = vpop.permute.xlu0 %1839
      %1841 = vrot.lane.b32.xlu0 %v744, 112
      %v1842 = vpop.permute.xlu0 %1841
      %v1844 = vsel %vm750, %v1840, 0
      %v1847 = vsel %vm750, %v1842, 0
      %1849 = vmatprep.subr.bf16.mxu0 0
      %1850 = vmatpush1.bf16.xpose.msra.mxu0 0
      %1851 = vmatprep.subr.bf16.mxu0 0
      %1852 = vmatpush1.bf16.xpose.msra.mxu0 0
      %1853 = vmatprep.subr.bf16.mxu0 0
      %1854 = vmatpush1.bf16.xpose.msra.mxu0 0
      %1855 = vmatprep.subr.bf16.mxu0 0
      %1856 = vmatpush1.bf16.xpose.msra.mxu0 0
      %1857 = vmatprep.subr.bf16.mxu0 0
      %1858 = vmatpush1.bf16.xpose.msra.mxu0 0
      %1859 = vmatprep.subr.bf16.mxu0 0
      %1860 = vmatpush1.bf16.xpose.msra.mxu0 0
      %1861 = vmatprep.subr.bf16.mxu0 0
      %1862 = vmatpush1.bf16.xpose.msra.mxu0 0
      %1863 = vmatprep.subr.bf16.mxu0 0
      %1864 = vmatpush1.bf16.xpose.msra.mxu0 %v1847
      %1865 = vmatprep.subr.bf16.mxu0 0
      %1866 = vmatpush2.bf16.xpose.msra.mxu0 0
      %1867 = vmatprep.subr.bf16.mxu0 0
      %1868 = vmatpush2.bf16.xpose.msra.mxu0 0
      %1869 = vmatprep.subr.bf16.mxu0 0
      %1870 = vmatpush2.bf16.xpose.msra.mxu0 0
      %1871 = vmatprep.subr.bf16.mxu0 0
      %1872 = vmatpush2.bf16.xpose.msra.mxu0 0
      %1873 = vmatprep.subr.bf16.mxu0 0
      %1874 = vmatpush2.bf16.xpose.msra.mxu0 0
      %1875 = vmatprep.subr.bf16.mxu0 0
      %1876 = vmatpush2.bf16.xpose.msra.mxu0 0
      %1877 = vmatprep.subr.bf16.mxu0 0
      %1878 = vmatpush2.bf16.xpose.msra.mxu0 0
      %1879 = vmatprep.subr.bf16.mxu0 0
      %1880 = vmatpush2.bf16.xpose.msra.mxu0 0
      %1881 = vmatprep.mubr.bf16.mxu0 0
      %1882 = vmatmul.mubr.bf16.gmra.mxu0 %v1844
      %v1883 = vpop.f32.mrf.mxu0
      %v1884 = vadd.f32 0.0, %v1883
      %v1885 = vpop.f32.mrf.mxu0
      %v1886 = vpop.f32.mrf.mxu0
      %v1887 = vadd.f32 0.0, %v1886
      %v1888 = vpop.f32.mrf.mxu0
      %1889 = vdwg.mxu0
      %1890 = vrot.lane.b32.xlu0 %v741, 112
      %v1891 = vpop.permute.xlu0 %1890
      %1892 = vrot.lane.b32.xlu0 %v745, 112
      %v1893 = vpop.permute.xlu0 %1892
      %v1895 = vsel %vm750, %v1891, 0
      %v1898 = vsel %vm750, %v1893, 0
      %1900 = vmatprep.subr.bf16.mxu0 0
      %1901 = vmatpush1.bf16.xpose.msra.mxu0 0
      %1902 = vmatprep.subr.bf16.mxu0 0
      %1903 = vmatpush1.bf16.xpose.msra.mxu0 0
      %1904 = vmatprep.subr.bf16.mxu0 0
      %1905 = vmatpush1.bf16.xpose.msra.mxu0 0
      %1906 = vmatprep.subr.bf16.mxu0 0
      %1907 = vmatpush1.bf16.xpose.msra.mxu0 0
      %1908 = vmatprep.subr.bf16.mxu0 0
      %1909 = vmatpush1.bf16.xpose.msra.mxu0 0
      %1910 = vmatprep.subr.bf16.mxu0 0
      %1911 = vmatpush1.bf16.xpose.msra.mxu0 0
      %1912 = vmatprep.subr.bf16.mxu0 0
      %1913 = vmatpush1.bf16.xpose.msra.mxu0 0
      %1914 = vmatprep.subr.bf16.mxu0 0
      %1915 = vmatpush1.bf16.xpose.msra.mxu0 %v1898
      %1916 = vmatprep.subr.bf16.mxu0 0
      %1917 = vmatpush2.bf16.xpose.msra.mxu0 0
      %1918 = vmatprep.subr.bf16.mxu0 0
      %1919 = vmatpush2.bf16.xpose.msra.mxu0 0
      %1920 = vmatprep.subr.bf16.mxu0 0
      %1921 = vmatpush2.bf16.xpose.msra.mxu0 0
      %1922 = vmatprep.subr.bf16.mxu0 0
      %1923 = vmatpush2.bf16.xpose.msra.mxu0 0
      %1924 = vmatprep.subr.bf16.mxu0 0
      %1925 = vmatpush2.bf16.xpose.msra.mxu0 0
      %1926 = vmatprep.subr.bf16.mxu0 0
      %1927 = vmatpush2.bf16.xpose.msra.mxu0 0
      %1928 = vmatprep.subr.bf16.mxu0 0
      %1929 = vmatpush2.bf16.xpose.msra.mxu0 0
      %1930 = vmatprep.subr.bf16.mxu0 0
      %1931 = vmatpush2.bf16.xpose.msra.mxu0 0
      %1932 = vmatprep.mubr.bf16.mxu0 0
      %1933 = vmatmul.mubr.bf16.gmra.mxu0 %v1895
      %v1934 = vpop.f32.mrf.mxu0
      %v1935 = vadd.f32 0.0, %v1934
      %v1936 = vpop.f32.mrf.mxu0
      %v1937 = vpop.f32.mrf.mxu0
      %v1938 = vadd.f32 0.0, %v1937
      %v1939 = vpop.f32.mrf.mxu0
      %1940 = vdwg.mxu0
      %s1941 = scalar_lea.vmem %s7, 32
      %v1942 = vld [vmem:[%s1941] sm:$0xff]
      %v1943 = vld [vmem:[%s1941 + $0x8] sm:$0xff]
      %v1944 = vld [vmem:[%s1941 + $0x40] sm:$0xff]
      %v1945 = vld [vmem:[%s1941 + $0x48] sm:$0xff]
      %v1946 = vld [vmem:[%s1941 + $0x80] sm:$0xff]
      %v1947 = vld [vmem:[%s1941 + $0x88] sm:$0xff]
      %v1948 = vld [vmem:[%s1941 + $0xc0] sm:$0xff]
      %v1949 = vld [vmem:[%s1941 + $0xc8] sm:$0xff]
      %v1950 = vadd.f32 %v1782, %v1942
      %v1951 = vadd.f32 %v1785, %v1943
      %v1952 = vadd.f32 %v1833, %v1944
      %v1953 = vadd.f32 %v1836, %v1945
      %v1954 = vadd.f32 %v1884, %v1946
      %v1955 = vadd.f32 %v1887, %v1947
      %v1956 = vadd.f32 %v1935, %v1948
      %v1957 = vadd.f32 %v1938, %v1949
      %v1958 = vsel %vm955, %v1950, -inf
      %1959 = vmax.xlane.f32.xlu0 %v1958
      %v1960 = vpop.xlane.xlu0 %1959
      %v1961 = vsel %vm955, %v1951, -inf
      %1962 = vmax.xlane.f32.xlu0 %v1961
      %v1963 = vpop.xlane.xlu0 %1962
      %v1964 = vsel %vm955, %v1952, -inf
      %1965 = vmax.xlane.f32.xlu0 %v1964
      %v1966 = vpop.xlane.xlu0 %1965
      %v1967 = vsel %vm955, %v1953, -inf
      %1968 = vmax.xlane.f32.xlu0 %v1967
      %v1969 = vpop.xlane.xlu0 %1968
      %v1970 = vsel %vm955, %v1954, -inf
      %1971 = vmax.xlane.f32.xlu0 %v1970
      %v1972 = vpop.xlane.xlu0 %1971
      %v1973 = vsel %vm955, %v1955, -inf
      %1974 = vmax.xlane.f32.xlu0 %v1973
      %v1975 = vpop.xlane.xlu0 %1974
      %v1976 = vsel %vm955, %v1956, -inf
      %1977 = vmax.xlane.f32.xlu0 %v1976
      %v1978 = vpop.xlane.xlu0 %1977
      %v1979 = vsel %vm955, %v1957, -inf
      %1980 = vmax.xlane.f32.xlu0 %v1979
      %v1981 = vpop.xlane.xlu0 %1980
      %v1982 = vsub.f32 %v1950, %v1960
      %v1983 = vsub.f32 %v1951, %v1963
      %v1984 = vsub.f32 %v1952, %v1966
      %v1985 = vsub.f32 %v1953, %v1969
      %v1986 = vsub.f32 %v1954, %v1972
      %v1987 = vsub.f32 %v1955, %v1975
      %v1988 = vsub.f32 %v1956, %v1978
      %v1989 = vsub.f32 %v1957, %v1981
      %v1990 = vmul.f32 %v1982, 1.442695
      %v1991 = vpow.pop %v1990
      %v1992 = vmul.f32 %v1983, 1.442695
      %v1993 = vpow.pop %v1992
      %v1994 = vmul.f32 %v1984, 1.442695
      %v1995 = vpow.pop %v1994
      %v1996 = vmul.f32 %v1985, 1.442695
      %v1997 = vpow.pop %v1996
      %v1998 = vmul.f32 %v1986, 1.442695
      %v1999 = vpow.pop %v1998
      %v2000 = vmul.f32 %v1987, 1.442695
      %v2001 = vpow.pop %v2000
      %v2002 = vmul.f32 %v1988, 1.442695
      %v2003 = vpow.pop %v2002
      %v2004 = vmul.f32 %v1989, 1.442695
      %v2005 = vpow.pop %v2004
      %v2006 = vsel %vm955, %v1991, 0.0
      %2007 = vadd.xlane.f32.xlu0 %v2006
      %v2008 = vpop.xlane.xlu0 %2007
      %v2009 = vsel %vm955, %v1993, 0.0
      %2010 = vadd.xlane.f32.xlu0 %v2009
      %v2011 = vpop.xlane.xlu0 %2010
      %v2012 = vsel %vm955, %v1995, 0.0
      %2013 = vadd.xlane.f32.xlu0 %v2012
      %v2014 = vpop.xlane.xlu0 %2013
      %v2015 = vsel %vm955, %v1997, 0.0
      %2016 = vadd.xlane.f32.xlu0 %v2015
      %v2017 = vpop.xlane.xlu0 %2016
      %v2018 = vsel %vm955, %v1999, 0.0
      %2019 = vadd.xlane.f32.xlu0 %v2018
      %v2020 = vpop.xlane.xlu0 %2019
      %v2021 = vsel %vm955, %v2001, 0.0
      %2022 = vadd.xlane.f32.xlu0 %v2021
      %v2023 = vpop.xlane.xlu0 %2022
      %v2024 = vsel %vm955, %v2003, 0.0
      %2025 = vadd.xlane.f32.xlu0 %v2024
      %v2026 = vpop.xlane.xlu0 %2025
      %v2027 = vsel %vm955, %v2005, 0.0
      %2028 = vadd.xlane.f32.xlu0 %v2027
      %v2029 = vpop.xlane.xlu0 %2028
      %v2030 = vpack.c.bf16 %v1993, %v1991
      %v2031 = vpack.c.bf16 %v1997, %v1995
      %v2032 = vpack.c.bf16 %v2001, %v1999
      %v2033 = vpack.c.bf16 %v2005, %v2003
      %2034 = vrot.lane.b32.xlu0 %v746, 112
      %v2035 = vpop.permute.xlu0 %2034
      %v2038 = vsel %vm955, %v2030, 0
      %2040 = vmatprep.subr.bf16.mxu0 0
      %2041 = vmatpush1.bf16.msra.mxu0 0
      %2042 = vmatprep.subr.bf16.mxu0 0
      %2043 = vmatpush1.bf16.msra.mxu0 0
      %2044 = vmatprep.subr.bf16.mxu0 0
      %2045 = vmatpush1.bf16.msra.mxu0 0
      %2046 = vmatprep.subr.bf16.mxu0 0
      %2047 = vmatpush1.bf16.msra.mxu0 0
      %2048 = vmatprep.subr.bf16.mxu0 0
      %2049 = vmatpush1.bf16.msra.mxu0 0
      %2050 = vmatprep.subr.bf16.mxu0 0
      %2051 = vmatpush1.bf16.msra.mxu0 0
      %2052 = vmatprep.subr.bf16.mxu0 0
      %2053 = vmatpush1.bf16.msra.mxu0 0
      %2054 = vmatprep.subr.bf16.mxu0 0
      %2055 = vmatpush1.bf16.msra.mxu0 %v2035
      %2056 = vmatprep.subr.bf16.mxu0 0
      %2057 = vmatpush2.bf16.msra.mxu0 0
      %2058 = vmatprep.subr.bf16.mxu0 0
      %2059 = vmatpush2.bf16.msra.mxu0 0
      %2060 = vmatprep.subr.bf16.mxu0 0
      %2061 = vmatpush2.bf16.msra.mxu0 0
      %2062 = vmatprep.subr.bf16.mxu0 0
      %2063 = vmatpush2.bf16.msra.mxu0 0
      %2064 = vmatprep.subr.bf16.mxu0 0
      %2065 = vmatpush2.bf16.msra.mxu0 0
      %2066 = vmatprep.subr.bf16.mxu0 0
      %2067 = vmatpush2.bf16.msra.mxu0 0
      %2068 = vmatprep.subr.bf16.mxu0 0
      %2069 = vmatpush2.bf16.msra.mxu0 0
      %2070 = vmatprep.subr.bf16.mxu0 0
      %2071 = vmatpush2.bf16.msra.mxu0 0
      %2072 = vmatprep.mubr.bf16.mxu0 0
      %2073 = vmatmul.mubr.bf16.gmra.mxu0 %v2038
      %v2074 = vpop.f32.mrf.mxu0
      %v2075 = vadd.f32 0.0, %v2074
      %v2076 = vpop.f32.mrf.mxu0
      %v2077 = vpop.f32.mrf.mxu0
      %v2078 = vadd.f32 0.0, %v2077
      %v2079 = vpop.f32.mrf.mxu0
      %2080 = vdwg.mxu0
      %2081 = vrot.lane.b32.xlu0 %v747, 112
      %v2082 = vpop.permute.xlu0 %2081
      %v2085 = vsel %vm955, %v2031, 0
      %2087 = vmatprep.subr.bf16.mxu0 0
      %2088 = vmatpush1.bf16.msra.mxu0 0
      %2089 = vmatprep.subr.bf16.mxu0 0
      %2090 = vmatpush1.bf16.msra.mxu0 0
      %2091 = vmatprep.subr.bf16.mxu0 0
      %2092 = vmatpush1.bf16.msra.mxu0 0
      %2093 = vmatprep.subr.bf16.mxu0 0
      %2094 = vmatpush1.bf16.msra.mxu0 0
      %2095 = vmatprep.subr.bf16.mxu0 0
      %2096 = vmatpush1.bf16.msra.mxu0 0
      %2097 = vmatprep.subr.bf16.mxu0 0
      %2098 = vmatpush1.bf16.msra.mxu0 0
      %2099 = vmatprep.subr.bf16.mxu0 0
      %2100 = vmatpush1.bf16.msra.mxu0 0
      %2101 = vmatprep.subr.bf16.mxu0 0
      %2102 = vmatpush1.bf16.msra.mxu0 %v2082
      %2103 = vmatprep.subr.bf16.mxu0 0
      %2104 = vmatpush2.bf16.msra.mxu0 0
      %2105 = vmatprep.subr.bf16.mxu0 0
      %2106 = vmatpush2.bf16.msra.mxu0 0
      %2107 = vmatprep.subr.bf16.mxu0 0
      %2108 = vmatpush2.bf16.msra.mxu0 0
      %2109 = vmatprep.subr.bf16.mxu0 0
      %2110 = vmatpush2.bf16.msra.mxu0 0
      %2111 = vmatprep.subr.bf16.mxu0 0
      %2112 = vmatpush2.bf16.msra.mxu0 0
      %2113 = vmatprep.subr.bf16.mxu0 0
      %2114 = vmatpush2.bf16.msra.mxu0 0
      %2115 = vmatprep.subr.bf16.mxu0 0
      %2116 = vmatpush2.bf16.msra.mxu0 0
      %2117 = vmatprep.subr.bf16.mxu0 0
      %2118 = vmatpush2.bf16.msra.mxu0 0
      %2119 = vmatprep.mubr.bf16.mxu0 0
      %2120 = vmatmul.mubr.bf16.gmra.mxu0 %v2085
      %v2121 = vpop.f32.mrf.mxu0
      %v2122 = vadd.f32 0.0, %v2121
      %v2123 = vpop.f32.mrf.mxu0
      %v2124 = vpop.f32.mrf.mxu0
      %v2125 = vadd.f32 0.0, %v2124
      %v2126 = vpop.f32.mrf.mxu0
      %2127 = vdwg.mxu0
      %2128 = vrot.lane.b32.xlu0 %v748, 112
      %v2129 = vpop.permute.xlu0 %2128
      %v2132 = vsel %vm955, %v2032, 0
      %2134 = vmatprep.subr.bf16.mxu0 0
      %2135 = vmatpush1.bf16.msra.mxu0 0
      %2136 = vmatprep.subr.bf16.mxu0 0
      %2137 = vmatpush1.bf16.msra.mxu0 0
      %2138 = vmatprep.subr.bf16.mxu0 0
      %2139 = vmatpush1.bf16.msra.mxu0 0
      %2140 = vmatprep.subr.bf16.mxu0 0
      %2141 = vmatpush1.bf16.msra.mxu0 0
      %2142 = vmatprep.subr.bf16.mxu0 0
      %2143 = vmatpush1.bf16.msra.mxu0 0
      %2144 = vmatprep.subr.bf16.mxu0 0
      %2145 = vmatpush1.bf16.msra.mxu0 0
      %2146 = vmatprep.subr.bf16.mxu0 0
      %2147 = vmatpush1.bf16.msra.mxu0 0
      %2148 = vmatprep.subr.bf16.mxu0 0
      %2149 = vmatpush1.bf16.msra.mxu0 %v2129
      %2150 = vmatprep.subr.bf16.mxu0 0
      %2151 = vmatpush2.bf16.msra.mxu0 0
      %2152 = vmatprep.subr.bf16.mxu0 0
      %2153 = vmatpush2.bf16.msra.mxu0 0
      %2154 = vmatprep.subr.bf16.mxu0 0
      %2155 = vmatpush2.bf16.msra.mxu0 0
      %2156 = vmatprep.subr.bf16.mxu0 0
      %2157 = vmatpush2.bf16.msra.mxu0 0
      %2158 = vmatprep.subr.bf16.mxu0 0
      %2159 = vmatpush2.bf16.msra.mxu0 0
      %2160 = vmatprep.subr.bf16.mxu0 0
      %2161 = vmatpush2.bf16.msra.mxu0 0
      %2162 = vmatprep.subr.bf16.mxu0 0
      %2163 = vmatpush2.bf16.msra.mxu0 0
      %2164 = vmatprep.subr.bf16.mxu0 0
      %2165 = vmatpush2.bf16.msra.mxu0 0
      %2166 = vmatprep.mubr.bf16.mxu0 0
      %2167 = vmatmul.mubr.bf16.gmra.mxu0 %v2132
      %v2168 = vpop.f32.mrf.mxu0
      %v2169 = vadd.f32 0.0, %v2168
      %v2170 = vpop.f32.mrf.mxu0
      %v2171 = vpop.f32.mrf.mxu0
      %v2172 = vadd.f32 0.0, %v2171
      %v2173 = vpop.f32.mrf.mxu0
      %2174 = vdwg.mxu0
      %2175 = vrot.lane.b32.xlu0 %v749, 112
      %v2176 = vpop.permute.xlu0 %2175
      %v2179 = vsel %vm955, %v2033, 0
      %2181 = vmatprep.subr.bf16.mxu0 0
      %2182 = vmatpush1.bf16.msra.mxu0 0
      %2183 = vmatprep.subr.bf16.mxu0 0
      %2184 = vmatpush1.bf16.msra.mxu0 0
      %2185 = vmatprep.subr.bf16.mxu0 0
      %2186 = vmatpush1.bf16.msra.mxu0 0
      %2187 = vmatprep.subr.bf16.mxu0 0
      %2188 = vmatpush1.bf16.msra.mxu0 0
      %2189 = vmatprep.subr.bf16.mxu0 0
      %2190 = vmatpush1.bf16.msra.mxu0 0
      %2191 = vmatprep.subr.bf16.mxu0 0
      %2192 = vmatpush1.bf16.msra.mxu0 0
      %2193 = vmatprep.subr.bf16.mxu0 0
      %2194 = vmatpush1.bf16.msra.mxu0 0
      %2195 = vmatprep.subr.bf16.mxu0 0
      %2196 = vmatpush1.bf16.msra.mxu0 %v2176
      %2197 = vmatprep.subr.bf16.mxu0 0
      %2198 = vmatpush2.bf16.msra.mxu0 0
      %2199 = vmatprep.subr.bf16.mxu0 0
      %2200 = vmatpush2.bf16.msra.mxu0 0
      %2201 = vmatprep.subr.bf16.mxu0 0
      %2202 = vmatpush2.bf16.msra.mxu0 0
      %2203 = vmatprep.subr.bf16.mxu0 0
      %2204 = vmatpush2.bf16.msra.mxu0 0
      %2205 = vmatprep.subr.bf16.mxu0 0
      %2206 = vmatpush2.bf16.msra.mxu0 0
      %2207 = vmatprep.subr.bf16.mxu0 0
      %2208 = vmatpush2.bf16.msra.mxu0 0
      %2209 = vmatprep.subr.bf16.mxu0 0
      %2210 = vmatpush2.bf16.msra.mxu0 0
      %2211 = vmatprep.subr.bf16.mxu0 0
      %2212 = vmatpush2.bf16.msra.mxu0 0
      %2213 = vmatprep.mubr.bf16.mxu0 0
      %2214 = vmatmul.mubr.bf16.gmra.mxu0 %v2179
      %v2215 = vpop.f32.mrf.mxu0
      %v2216 = vadd.f32 0.0, %v2215
      %v2217 = vpop.f32.mrf.mxu0
      %v2218 = vpop.f32.mrf.mxu0
      %v2219 = vadd.f32 0.0, %v2218
      %v2220 = vpop.f32.mrf.mxu0
      %2221 = vdwg.mxu0
      %v2222 = vrcp.pop %v2008
      %v2223 = vrcp.pop %v2011
      %v2224 = vrcp.pop %v2014
      %v2225 = vrcp.pop %v2017
      %v2226 = vrcp.pop %v2020
      %v2227 = vrcp.pop %v2023
      %v2228 = vrcp.pop %v2026
      %v2229 = vrcp.pop %v2029
      %v2230 = vmul.f32 %v2075, %v2222
      %v2231 = vmul.f32 %v2078, %v2223
      %v2232 = vmul.f32 %v2122, %v2224
      %v2233 = vmul.f32 %v2125, %v2225
      %v2234 = vmul.f32 %v2169, %v2226
      %v2235 = vmul.f32 %v2172, %v2227
      %v2236 = vmul.f32 %v2216, %v2228
      %v2237 = vmul.f32 %v2219, %v2229
      %2238 = vrot.lane.b32.xlu0 %v738, 104
      %v2239 = vpop.permute.xlu0 %2238
      %2240 = vrot.lane.b32.xlu0 %v742, 104
      %v2241 = vpop.permute.xlu0 %2240
      %v2243 = vsel %vm750, %v2239, 0
      %v2246 = vsel %vm750, %v2241, 0
      %2248 = vmatprep.subr.bf16.mxu0 0
      %2249 = vmatpush1.bf16.xpose.msra.mxu0 0
      %2250 = vmatprep.subr.bf16.mxu0 0
      %2251 = vmatpush1.bf16.xpose.msra.mxu0 0
      %2252 = vmatprep.subr.bf16.mxu0 0
      %2253 = vmatpush1.bf16.xpose.msra.mxu0 0
      %2254 = vmatprep.subr.bf16.mxu0 0
      %2255 = vmatpush1.bf16.xpose.msra.mxu0 0
      %2256 = vmatprep.subr.bf16.mxu0 0
      %2257 = vmatpush1.bf16.xpose.msra.mxu0 0
      %2258 = vmatprep.subr.bf16.mxu0 0
      %2259 = vmatpush1.bf16.xpose.msra.mxu0 0
      %2260 = vmatprep.subr.bf16.mxu0 0
      %2261 = vmatpush1.bf16.xpose.msra.mxu0 0
      %2262 = vmatprep.subr.bf16.mxu0 0
      %2263 = vmatpush1.bf16.xpose.msra.mxu0 %v2246
      %2264 = vmatprep.subr.bf16.mxu0 0
      %2265 = vmatpush2.bf16.xpose.msra.mxu0 0
      %2266 = vmatprep.subr.bf16.mxu0 0
      %2267 = vmatpush2.bf16.xpose.msra.mxu0 0
      %2268 = vmatprep.subr.bf16.mxu0 0
      %2269 = vmatpush2.bf16.xpose.msra.mxu0 0
      %2270 = vmatprep.subr.bf16.mxu0 0
      %2271 = vmatpush2.bf16.xpose.msra.mxu0 0
      %2272 = vmatprep.subr.bf16.mxu0 0
      %2273 = vmatpush2.bf16.xpose.msra.mxu0 0
      %2274 = vmatprep.subr.bf16.mxu0 0
      %2275 = vmatpush2.bf16.xpose.msra.mxu0 0
      %2276 = vmatprep.subr.bf16.mxu0 0
      %2277 = vmatpush2.bf16.xpose.msra.mxu0 0
      %2278 = vmatprep.subr.bf16.mxu0 0
      %2279 = vmatpush2.bf16.xpose.msra.mxu0 0
      %2280 = vmatprep.mubr.bf16.mxu0 0
      %2281 = vmatmul.mubr.bf16.gmra.mxu0 %v2243
      %v2282 = vpop.f32.mrf.mxu0
      %v2283 = vadd.f32 0.0, %v2282
      %v2284 = vpop.f32.mrf.mxu0
      %v2285 = vpop.f32.mrf.mxu0
      %v2286 = vadd.f32 0.0, %v2285
      %v2287 = vpop.f32.mrf.mxu0
      %2288 = vdwg.mxu0
      %2289 = vrot.lane.b32.xlu0 %v739, 104
      %v2290 = vpop.permute.xlu0 %2289
      %2291 = vrot.lane.b32.xlu0 %v743, 104
      %v2292 = vpop.permute.xlu0 %2291
      %v2294 = vsel %vm750, %v2290, 0
      %v2297 = vsel %vm750, %v2292, 0
      %2299 = vmatprep.subr.bf16.mxu0 0
      %2300 = vmatpush1.bf16.xpose.msra.mxu0 0
      %2301 = vmatprep.subr.bf16.mxu0 0
      %2302 = vmatpush1.bf16.xpose.msra.mxu0 0
      %2303 = vmatprep.subr.bf16.mxu0 0
      %2304 = vmatpush1.bf16.xpose.msra.mxu0 0
      %2305 = vmatprep.subr.bf16.mxu0 0
      %2306 = vmatpush1.bf16.xpose.msra.mxu0 0
      %2307 = vmatprep.subr.bf16.mxu0 0
      %2308 = vmatpush1.bf16.xpose.msra.mxu0 0
      %2309 = vmatprep.subr.bf16.mxu0 0
      %2310 = vmatpush1.bf16.xpose.msra.mxu0 0
      %2311 = vmatprep.subr.bf16.mxu0 0
      %2312 = vmatpush1.bf16.xpose.msra.mxu0 0
      %2313 = vmatprep.subr.bf16.mxu0 0
      %2314 = vmatpush1.bf16.xpose.msra.mxu0 %v2297
      %2315 = vmatprep.subr.bf16.mxu0 0
      %2316 = vmatpush2.bf16.xpose.msra.mxu0 0
      %2317 = vmatprep.subr.bf16.mxu0 0
      %2318 = vmatpush2.bf16.xpose.msra.mxu0 0
      %2319 = vmatprep.subr.bf16.mxu0 0
      %2320 = vmatpush2.bf16.xpose.msra.mxu0 0
      %2321 = vmatprep.subr.bf16.mxu0 0
      %2322 = vmatpush2.bf16.xpose.msra.mxu0 0
      %2323 = vmatprep.subr.bf16.mxu0 0
      %2324 = vmatpush2.bf16.xpose.msra.mxu0 0
      %2325 = vmatprep.subr.bf16.mxu0 0
      %2326 = vmatpush2.bf16.xpose.msra.mxu0 0
      %2327 = vmatprep.subr.bf16.mxu0 0
      %2328 = vmatpush2.bf16.xpose.msra.mxu0 0
      %2329 = vmatprep.subr.bf16.mxu0 0
      %2330 = vmatpush2.bf16.xpose.msra.mxu0 0
      %2331 = vmatprep.mubr.bf16.mxu0 0
      %2332 = vmatmul.mubr.bf16.gmra.mxu0 %v2294
      %v2333 = vpop.f32.mrf.mxu0
      %v2334 = vadd.f32 0.0, %v2333
      %v2335 = vpop.f32.mrf.mxu0
      %v2336 = vpop.f32.mrf.mxu0
      %v2337 = vadd.f32 0.0, %v2336
      %v2338 = vpop.f32.mrf.mxu0
      %2339 = vdwg.mxu0
      %2340 = vrot.lane.b32.xlu0 %v740, 104
      %v2341 = vpop.permute.xlu0 %2340
      %2342 = vrot.lane.b32.xlu0 %v744, 104
      %v2343 = vpop.permute.xlu0 %2342
      %v2345 = vsel %vm750, %v2341, 0
      %v2348 = vsel %vm750, %v2343, 0
      %2350 = vmatprep.subr.bf16.mxu0 0
      %2351 = vmatpush1.bf16.xpose.msra.mxu0 0
      %2352 = vmatprep.subr.bf16.mxu0 0
      %2353 = vmatpush1.bf16.xpose.msra.mxu0 0
      %2354 = vmatprep.subr.bf16.mxu0 0
      %2355 = vmatpush1.bf16.xpose.msra.mxu0 0
      %2356 = vmatprep.subr.bf16.mxu0 0
      %2357 = vmatpush1.bf16.xpose.msra.mxu0 0
      %2358 = vmatprep.subr.bf16.mxu0 0
      %2359 = vmatpush1.bf16.xpose.msra.mxu0 0
      %2360 = vmatprep.subr.bf16.mxu0 0
      %2361 = vmatpush1.bf16.xpose.msra.mxu0 0
      %2362 = vmatprep.subr.bf16.mxu0 0
      %2363 = vmatpush1.bf16.xpose.msra.mxu0 0
      %2364 = vmatprep.subr.bf16.mxu0 0
      %2365 = vmatpush1.bf16.xpose.msra.mxu0 %v2348
      %2366 = vmatprep.subr.bf16.mxu0 0
      %2367 = vmatpush2.bf16.xpose.msra.mxu0 0
      %2368 = vmatprep.subr.bf16.mxu0 0
      %2369 = vmatpush2.bf16.xpose.msra.mxu0 0
      %2370 = vmatprep.subr.bf16.mxu0 0
      %2371 = vmatpush2.bf16.xpose.msra.mxu0 0
      %2372 = vmatprep.subr.bf16.mxu0 0
      %2373 = vmatpush2.bf16.xpose.msra.mxu0 0
      %2374 = vmatprep.subr.bf16.mxu0 0
      %2375 = vmatpush2.bf16.xpose.msra.mxu0 0
      %2376 = vmatprep.subr.bf16.mxu0 0
      %2377 = vmatpush2.bf16.xpose.msra.mxu0 0
      %2378 = vmatprep.subr.bf16.mxu0 0
      %2379 = vmatpush2.bf16.xpose.msra.mxu0 0
      %2380 = vmatprep.subr.bf16.mxu0 0
      %2381 = vmatpush2.bf16.xpose.msra.mxu0 0
      %2382 = vmatprep.mubr.bf16.mxu0 0
      %2383 = vmatmul.mubr.bf16.gmra.mxu0 %v2345
      %v2384 = vpop.f32.mrf.mxu0
      %v2385 = vadd.f32 0.0, %v2384
      %v2386 = vpop.f32.mrf.mxu0
      %v2387 = vpop.f32.mrf.mxu0
      %v2388 = vadd.f32 0.0, %v2387
      %v2389 = vpop.f32.mrf.mxu0
      %2390 = vdwg.mxu0
      %2391 = vrot.lane.b32.xlu0 %v741, 104
      %v2392 = vpop.permute.xlu0 %2391
      %2393 = vrot.lane.b32.xlu0 %v745, 104
      %v2394 = vpop.permute.xlu0 %2393
      %v2396 = vsel %vm750, %v2392, 0
      %v2399 = vsel %vm750, %v2394, 0
      %2401 = vmatprep.subr.bf16.mxu0 0
      %2402 = vmatpush1.bf16.xpose.msra.mxu0 0
      %2403 = vmatprep.subr.bf16.mxu0 0
      %2404 = vmatpush1.bf16.xpose.msra.mxu0 0
      %2405 = vmatprep.subr.bf16.mxu0 0
      %2406 = vmatpush1.bf16.xpose.msra.mxu0 0
      %2407 = vmatprep.subr.bf16.mxu0 0
      %2408 = vmatpush1.bf16.xpose.msra.mxu0 0
      %2409 = vmatprep.subr.bf16.mxu0 0
      %2410 = vmatpush1.bf16.xpose.msra.mxu0 0
      %2411 = vmatprep.subr.bf16.mxu0 0
      %2412 = vmatpush1.bf16.xpose.msra.mxu0 0
      %2413 = vmatprep.subr.bf16.mxu0 0
      %2414 = vmatpush1.bf16.xpose.msra.mxu0 0
      %2415 = vmatprep.subr.bf16.mxu0 0
      %2416 = vmatpush1.bf16.xpose.msra.mxu0 %v2399
      %2417 = vmatprep.subr.bf16.mxu0 0
      %2418 = vmatpush2.bf16.xpose.msra.mxu0 0
      %2419 = vmatprep.subr.bf16.mxu0 0
      %2420 = vmatpush2.bf16.xpose.msra.mxu0 0
      %2421 = vmatprep.subr.bf16.mxu0 0
      %2422 = vmatpush2.bf16.xpose.msra.mxu0 0
      %2423 = vmatprep.subr.bf16.mxu0 0
      %2424 = vmatpush2.bf16.xpose.msra.mxu0 0
      %2425 = vmatprep.subr.bf16.mxu0 0
      %2426 = vmatpush2.bf16.xpose.msra.mxu0 0
      %2427 = vmatprep.subr.bf16.mxu0 0
      %2428 = vmatpush2.bf16.xpose.msra.mxu0 0
      %2429 = vmatprep.subr.bf16.mxu0 0
      %2430 = vmatpush2.bf16.xpose.msra.mxu0 0
      %2431 = vmatprep.subr.bf16.mxu0 0
      %2432 = vmatpush2.bf16.xpose.msra.mxu0 0
      %2433 = vmatprep.mubr.bf16.mxu0 0
      %2434 = vmatmul.mubr.bf16.gmra.mxu0 %v2396
      %v2435 = vpop.f32.mrf.mxu0
      %v2436 = vadd.f32 0.0, %v2435
      %v2437 = vpop.f32.mrf.mxu0
      %v2438 = vpop.f32.mrf.mxu0
      %v2439 = vadd.f32 0.0, %v2438
      %v2440 = vpop.f32.mrf.mxu0
      %2441 = vdwg.mxu0
      %s2442 = scalar_lea.vmem %s7, 48
      %v2443 = vld [vmem:[%s2442] sm:$0xff]
      %v2444 = vld [vmem:[%s2442 + $0x8] sm:$0xff]
      %v2445 = vld [vmem:[%s2442 + $0x40] sm:$0xff]
      %v2446 = vld [vmem:[%s2442 + $0x48] sm:$0xff]
      %v2447 = vld [vmem:[%s2442 + $0x80] sm:$0xff]
      %v2448 = vld [vmem:[%s2442 + $0x88] sm:$0xff]
      %v2449 = vld [vmem:[%s2442 + $0xc0] sm:$0xff]
      %v2450 = vld [vmem:[%s2442 + $0xc8] sm:$0xff]
      %v2451 = vadd.f32 %v2283, %v2443
      %v2452 = vadd.f32 %v2286, %v2444
      %v2453 = vadd.f32 %v2334, %v2445
      %v2454 = vadd.f32 %v2337, %v2446
      %v2455 = vadd.f32 %v2385, %v2447
      %v2456 = vadd.f32 %v2388, %v2448
      %v2457 = vadd.f32 %v2436, %v2449
      %v2458 = vadd.f32 %v2439, %v2450
      %v2459 = vsel %vm955, %v2451, -inf
      %2460 = vmax.xlane.f32.xlu0 %v2459
      %v2461 = vpop.xlane.xlu0 %2460
      %v2462 = vsel %vm955, %v2452, -inf
      %2463 = vmax.xlane.f32.xlu0 %v2462
      %v2464 = vpop.xlane.xlu0 %2463
      %v2465 = vsel %vm955, %v2453, -inf
      %2466 = vmax.xlane.f32.xlu0 %v2465
      %v2467 = vpop.xlane.xlu0 %2466
      %v2468 = vsel %vm955, %v2454, -inf
      %2469 = vmax.xlane.f32.xlu0 %v2468
      %v2470 = vpop.xlane.xlu0 %2469
      %v2471 = vsel %vm955, %v2455, -inf
      %2472 = vmax.xlane.f32.xlu0 %v2471
      %v2473 = vpop.xlane.xlu0 %2472
      %v2474 = vsel %vm955, %v2456, -inf
      %2475 = vmax.xlane.f32.xlu0 %v2474
      %v2476 = vpop.xlane.xlu0 %2475
      %v2477 = vsel %vm955, %v2457, -inf
      %2478 = vmax.xlane.f32.xlu0 %v2477
      %v2479 = vpop.xlane.xlu0 %2478
      %v2480 = vsel %vm955, %v2458, -inf
      %2481 = vmax.xlane.f32.xlu0 %v2480
      %v2482 = vpop.xlane.xlu0 %2481
      %v2483 = vsub.f32 %v2451, %v2461
      %v2484 = vsub.f32 %v2452, %v2464
      %v2485 = vsub.f32 %v2453, %v2467
      %v2486 = vsub.f32 %v2454, %v2470
      %v2487 = vsub.f32 %v2455, %v2473
      %v2488 = vsub.f32 %v2456, %v2476
      %v2489 = vsub.f32 %v2457, %v2479
      %v2490 = vsub.f32 %v2458, %v2482
      %v2491 = vmul.f32 %v2483, 1.442695
      %v2492 = vpow.pop %v2491
      %v2493 = vmul.f32 %v2484, 1.442695
      %v2494 = vpow.pop %v2493
      %v2495 = vmul.f32 %v2485, 1.442695
      %v2496 = vpow.pop %v2495
      %v2497 = vmul.f32 %v2486, 1.442695
      %v2498 = vpow.pop %v2497
      %v2499 = vmul.f32 %v2487, 1.442695
      %v2500 = vpow.pop %v2499
      %v2501 = vmul.f32 %v2488, 1.442695
      %v2502 = vpow.pop %v2501
      %v2503 = vmul.f32 %v2489, 1.442695
      %v2504 = vpow.pop %v2503
      %v2505 = vmul.f32 %v2490, 1.442695
      %v2506 = vpow.pop %v2505
      %v2507 = vsel %vm955, %v2492, 0.0
      %2508 = vadd.xlane.f32.xlu0 %v2507
      %v2509 = vpop.xlane.xlu0 %2508
      %v2510 = vsel %vm955, %v2494, 0.0
      %2511 = vadd.xlane.f32.xlu0 %v2510
      %v2512 = vpop.xlane.xlu0 %2511
      %v2513 = vsel %vm955, %v2496, 0.0
      %2514 = vadd.xlane.f32.xlu0 %v2513
      %v2515 = vpop.xlane.xlu0 %2514
      %v2516 = vsel %vm955, %v2498, 0.0
      %2517 = vadd.xlane.f32.xlu0 %v2516
      %v2518 = vpop.xlane.xlu0 %2517
      %v2519 = vsel %vm955, %v2500, 0.0
      %2520 = vadd.xlane.f32.xlu0 %v2519
      %v2521 = vpop.xlane.xlu0 %2520
      %v2522 = vsel %vm955, %v2502, 0.0
      %2523 = vadd.xlane.f32.xlu0 %v2522
      %v2524 = vpop.xlane.xlu0 %2523
      %v2525 = vsel %vm955, %v2504, 0.0
      %2526 = vadd.xlane.f32.xlu0 %v2525
      %v2527 = vpop.xlane.xlu0 %2526
      %v2528 = vsel %vm955, %v2506, 0.0
      %2529 = vadd.xlane.f32.xlu0 %v2528
      %v2530 = vpop.xlane.xlu0 %2529
      %v2531 = vpack.c.bf16 %v2494, %v2492
      %v2532 = vpack.c.bf16 %v2498, %v2496
      %v2533 = vpack.c.bf16 %v2502, %v2500
      %v2534 = vpack.c.bf16 %v2506, %v2504
      %2535 = vrot.lane.b32.xlu0 %v746, 104
      %v2536 = vpop.permute.xlu0 %2535
      %v2539 = vsel %vm955, %v2531, 0
      %2541 = vmatprep.subr.bf16.mxu0 0
      %2542 = vmatpush1.bf16.msra.mxu0 0
      %2543 = vmatprep.subr.bf16.mxu0 0
      %2544 = vmatpush1.bf16.msra.mxu0 0
      %2545 = vmatprep.subr.bf16.mxu0 0
      %2546 = vmatpush1.bf16.msra.mxu0 0
      %2547 = vmatprep.subr.bf16.mxu0 0
      %2548 = vmatpush1.bf16.msra.mxu0 0
      %2549 = vmatprep.subr.bf16.mxu0 0
      %2550 = vmatpush1.bf16.msra.mxu0 0
      %2551 = vmatprep.subr.bf16.mxu0 0
      %2552 = vmatpush1.bf16.msra.mxu0 0
      %2553 = vmatprep.subr.bf16.mxu0 0
      %2554 = vmatpush1.bf16.msra.mxu0 0
      %2555 = vmatprep.subr.bf16.mxu0 0
      %2556 = vmatpush1.bf16.msra.mxu0 %v2536
      %2557 = vmatprep.subr.bf16.mxu0 0
      %2558 = vmatpush2.bf16.msra.mxu0 0
      %2559 = vmatprep.subr.bf16.mxu0 0
      %2560 = vmatpush2.bf16.msra.mxu0 0
      %2561 = vmatprep.subr.bf16.mxu0 0
      %2562 = vmatpush2.bf16.msra.mxu0 0
      %2563 = vmatprep.subr.bf16.mxu0 0
      %2564 = vmatpush2.bf16.msra.mxu0 0
      %2565 = vmatprep.subr.bf16.mxu0 0
      %2566 = vmatpush2.bf16.msra.mxu0 0
      %2567 = vmatprep.subr.bf16.mxu0 0
      %2568 = vmatpush2.bf16.msra.mxu0 0
      %2569 = vmatprep.subr.bf16.mxu0 0
      %2570 = vmatpush2.bf16.msra.mxu0 0
      %2571 = vmatprep.subr.bf16.mxu0 0
      %2572 = vmatpush2.bf16.msra.mxu0 0
      %2573 = vmatprep.mubr.bf16.mxu0 0
      %2574 = vmatmul.mubr.bf16.gmra.mxu0 %v2539
      %v2575 = vpop.f32.mrf.mxu0
      %v2576 = vadd.f32 0.0, %v2575
      %v2577 = vpop.f32.mrf.mxu0
      %v2578 = vpop.f32.mrf.mxu0
      %v2579 = vadd.f32 0.0, %v2578
      %v2580 = vpop.f32.mrf.mxu0
      %2581 = vdwg.mxu0
      %2582 = vrot.lane.b32.xlu0 %v747, 104
      %v2583 = vpop.permute.xlu0 %2582
      %v2586 = vsel %vm955, %v2532, 0
      %2588 = vmatprep.subr.bf16.mxu0 0
      %2589 = vmatpush1.bf16.msra.mxu0 0
      %2590 = vmatprep.subr.bf16.mxu0 0
      %2591 = vmatpush1.bf16.msra.mxu0 0
      %2592 = vmatprep.subr.bf16.mxu0 0
      %2593 = vmatpush1.bf16.msra.mxu0 0
      %2594 = vmatprep.subr.bf16.mxu0 0
      %2595 = vmatpush1.bf16.msra.mxu0 0
      %2596 = vmatprep.subr.bf16.mxu0 0
      %2597 = vmatpush1.bf16.msra.mxu0 0
      %2598 = vmatprep.subr.bf16.mxu0 0
      %2599 = vmatpush1.bf16.msra.mxu0 0
      %2600 = vmatprep.subr.bf16.mxu0 0
      %2601 = vmatpush1.bf16.msra.mxu0 0
      %2602 = vmatprep.subr.bf16.mxu0 0
      %2603 = vmatpush1.bf16.msra.mxu0 %v2583
      %2604 = vmatprep.subr.bf16.mxu0 0
      %2605 = vmatpush2.bf16.msra.mxu0 0
      %2606 = vmatprep.subr.bf16.mxu0 0
      %2607 = vmatpush2.bf16.msra.mxu0 0
      %2608 = vmatprep.subr.bf16.mxu0 0
      %2609 = vmatpush2.bf16.msra.mxu0 0
      %2610 = vmatprep.subr.bf16.mxu0 0
      %2611 = vmatpush2.bf16.msra.mxu0 0
      %2612 = vmatprep.subr.bf16.mxu0 0
      %2613 = vmatpush2.bf16.msra.mxu0 0
      %2614 = vmatprep.subr.bf16.mxu0 0
      %2615 = vmatpush2.bf16.msra.mxu0 0
      %2616 = vmatprep.subr.bf16.mxu0 0
      %2617 = vmatpush2.bf16.msra.mxu0 0
      %2618 = vmatprep.subr.bf16.mxu0 0
      %2619 = vmatpush2.bf16.msra.mxu0 0
      %2620 = vmatprep.mubr.bf16.mxu0 0
      %2621 = vmatmul.mubr.bf16.gmra.mxu0 %v2586
      %v2622 = vpop.f32.mrf.mxu0
      %v2623 = vadd.f32 0.0, %v2622
      %v2624 = vpop.f32.mrf.mxu0
      %v2625 = vpop.f32.mrf.mxu0
      %v2626 = vadd.f32 0.0, %v2625
      %v2627 = vpop.f32.mrf.mxu0
      %2628 = vdwg.mxu0
      %2629 = vrot.lane.b32.xlu0 %v748, 104
      %v2630 = vpop.permute.xlu0 %2629
      %v2633 = vsel %vm955, %v2533, 0
      %2635 = vmatprep.subr.bf16.mxu0 0
      %2636 = vmatpush1.bf16.msra.mxu0 0
      %2637 = vmatprep.subr.bf16.mxu0 0
      %2638 = vmatpush1.bf16.msra.mxu0 0
      %2639 = vmatprep.subr.bf16.mxu0 0
      %2640 = vmatpush1.bf16.msra.mxu0 0
      %2641 = vmatprep.subr.bf16.mxu0 0
      %2642 = vmatpush1.bf16.msra.mxu0 0
      %2643 = vmatprep.subr.bf16.mxu0 0
      %2644 = vmatpush1.bf16.msra.mxu0 0
      %2645 = vmatprep.subr.bf16.mxu0 0
      %2646 = vmatpush1.bf16.msra.mxu0 0
      %2647 = vmatprep.subr.bf16.mxu0 0
      %2648 = vmatpush1.bf16.msra.mxu0 0
      %2649 = vmatprep.subr.bf16.mxu0 0
      %2650 = vmatpush1.bf16.msra.mxu0 %v2630
      %2651 = vmatprep.subr.bf16.mxu0 0
      %2652 = vmatpush2.bf16.msra.mxu0 0
      %2653 = vmatprep.subr.bf16.mxu0 0
      %2654 = vmatpush2.bf16.msra.mxu0 0
      %2655 = vmatprep.subr.bf16.mxu0 0
      %2656 = vmatpush2.bf16.msra.mxu0 0
      %2657 = vmatprep.subr.bf16.mxu0 0
      %2658 = vmatpush2.bf16.msra.mxu0 0
      %2659 = vmatprep.subr.bf16.mxu0 0
      %2660 = vmatpush2.bf16.msra.mxu0 0
      %2661 = vmatprep.subr.bf16.mxu0 0
      %2662 = vmatpush2.bf16.msra.mxu0 0
      %2663 = vmatprep.subr.bf16.mxu0 0
      %2664 = vmatpush2.bf16.msra.mxu0 0
      %2665 = vmatprep.subr.bf16.mxu0 0
      %2666 = vmatpush2.bf16.msra.mxu0 0
      %2667 = vmatprep.mubr.bf16.mxu0 0
      %2668 = vmatmul.mubr.bf16.gmra.mxu0 %v2633
      %v2669 = vpop.f32.mrf.mxu0
      %v2670 = vadd.f32 0.0, %v2669
      %v2671 = vpop.f32.mrf.mxu0
      %v2672 = vpop.f32.mrf.mxu0
      %v2673 = vadd.f32 0.0, %v2672
      %v2674 = vpop.f32.mrf.mxu0
      %2675 = vdwg.mxu0
      %2676 = vrot.lane.b32.xlu0 %v749, 104
      %v2677 = vpop.permute.xlu0 %2676
      %v2680 = vsel %vm955, %v2534, 0
      %2682 = vmatprep.subr.bf16.mxu0 0
      %2683 = vmatpush1.bf16.msra.mxu0 0
      %2684 = vmatprep.subr.bf16.mxu0 0
      %2685 = vmatpush1.bf16.msra.mxu0 0
      %2686 = vmatprep.subr.bf16.mxu0 0
      %2687 = vmatpush1.bf16.msra.mxu0 0
      %2688 = vmatprep.subr.bf16.mxu0 0
      %2689 = vmatpush1.bf16.msra.mxu0 0
      %2690 = vmatprep.subr.bf16.mxu0 0
      %2691 = vmatpush1.bf16.msra.mxu0 0
      %2692 = vmatprep.subr.bf16.mxu0 0
      %2693 = vmatpush1.bf16.msra.mxu0 0
      %2694 = vmatprep.subr.bf16.mxu0 0
      %2695 = vmatpush1.bf16.msra.mxu0 0
      %2696 = vmatprep.subr.bf16.mxu0 0
      %2697 = vmatpush1.bf16.msra.mxu0 %v2677
      %2698 = vmatprep.subr.bf16.mxu0 0
      %2699 = vmatpush2.bf16.msra.mxu0 0
      %2700 = vmatprep.subr.bf16.mxu0 0
      %2701 = vmatpush2.bf16.msra.mxu0 0
      %2702 = vmatprep.subr.bf16.mxu0 0
      %2703 = vmatpush2.bf16.msra.mxu0 0
      %2704 = vmatprep.subr.bf16.mxu0 0
      %2705 = vmatpush2.bf16.msra.mxu0 0
      %2706 = vmatprep.subr.bf16.mxu0 0
      %2707 = vmatpush2.bf16.msra.mxu0 0
      %2708 = vmatprep.subr.bf16.mxu0 0
      %2709 = vmatpush2.bf16.msra.mxu0 0
      %2710 = vmatprep.subr.bf16.mxu0 0
      %2711 = vmatpush2.bf16.msra.mxu0 0
      %2712 = vmatprep.subr.bf16.mxu0 0
      %2713 = vmatpush2.bf16.msra.mxu0 0
      %2714 = vmatprep.mubr.bf16.mxu0 0
      %2715 = vmatmul.mubr.bf16.gmra.mxu0 %v2680
      %v2716 = vpop.f32.mrf.mxu0
      %v2717 = vadd.f32 0.0, %v2716
      %v2718 = vpop.f32.mrf.mxu0
      %v2719 = vpop.f32.mrf.mxu0
      %v2720 = vadd.f32 0.0, %v2719
      %v2721 = vpop.f32.mrf.mxu0
      %2722 = vdwg.mxu0
      %v2723 = vrcp.pop %v2509
      %v2724 = vrcp.pop %v2512
      %v2725 = vrcp.pop %v2515
      %v2726 = vrcp.pop %v2518
      %v2727 = vrcp.pop %v2521
      %v2728 = vrcp.pop %v2524
      %v2729 = vrcp.pop %v2527
      %v2730 = vrcp.pop %v2530
      %v2731 = vmul.f32 %v2576, %v2723
      %v2732 = vmul.f32 %v2579, %v2724
      %v2733 = vmul.f32 %v2623, %v2725
      %v2734 = vmul.f32 %v2626, %v2726
      %v2735 = vmul.f32 %v2670, %v2727
      %v2736 = vmul.f32 %v2673, %v2728
      %v2737 = vmul.f32 %v2717, %v2729
      %v2738 = vmul.f32 %v2720, %v2730
      %2747 = vrot.lane.b32.xlu0 %v1729, 8
      %v2748 = vpop.permute.xlu0 %2747
      %2749 = vrot.lane.b32.xlu0 %v1730, 8
      %v2750 = vpop.permute.xlu0 %2749
      %2751 = vrot.lane.b32.xlu0 %v1731, 8
      %v2752 = vpop.permute.xlu0 %2751
      %2753 = vrot.lane.b32.xlu0 %v1732, 8
      %v2754 = vpop.permute.xlu0 %2753
      %2755 = vrot.lane.b32.xlu0 %v1733, 8
      %v2756 = vpop.permute.xlu0 %2755
      %2757 = vrot.lane.b32.xlu0 %v1734, 8
      %v2758 = vpop.permute.xlu0 %2757
      %2759 = vrot.lane.b32.xlu0 %v1735, 8
      %v2760 = vpop.permute.xlu0 %2759
      %2761 = vrot.lane.b32.xlu0 %v1736, 8
      %v2762 = vpop.permute.xlu0 %2761
      %2779 = vrot.lane.b32.xlu0 %v2230, 16
      %v2780 = vpop.permute.xlu0 %2779
      %2781 = vrot.lane.b32.xlu0 %v2231, 16
      %v2782 = vpop.permute.xlu0 %2781
      %2783 = vrot.lane.b32.xlu0 %v2232, 16
      %v2784 = vpop.permute.xlu0 %2783
      %2785 = vrot.lane.b32.xlu0 %v2233, 16
      %v2786 = vpop.permute.xlu0 %2785
      %2787 = vrot.lane.b32.xlu0 %v2234, 16
      %v2788 = vpop.permute.xlu0 %2787
      %2789 = vrot.lane.b32.xlu0 %v2235, 16
      %v2790 = vpop.permute.xlu0 %2789
      %2791 = vrot.lane.b32.xlu0 %v2236, 16
      %v2792 = vpop.permute.xlu0 %2791
      %2793 = vrot.lane.b32.xlu0 %v2237, 16
      %v2794 = vpop.permute.xlu0 %2793
      %2811 = vrot.lane.b32.xlu0 %v2731, 24
      %v2812 = vpop.permute.xlu0 %2811
      %2813 = vrot.lane.b32.xlu0 %v2732, 24
      %v2814 = vpop.permute.xlu0 %2813
      %2815 = vrot.lane.b32.xlu0 %v2733, 24
      %v2816 = vpop.permute.xlu0 %2815
      %2817 = vrot.lane.b32.xlu0 %v2734, 24
      %v2818 = vpop.permute.xlu0 %2817
      %2819 = vrot.lane.b32.xlu0 %v2735, 24
      %v2820 = vpop.permute.xlu0 %2819
      %2821 = vrot.lane.b32.xlu0 %v2736, 24
      %v2822 = vpop.permute.xlu0 %2821
      %2823 = vrot.lane.b32.xlu0 %v2737, 24
      %v2824 = vpop.permute.xlu0 %2823
      %2825 = vrot.lane.b32.xlu0 %v2738, 24
      %v2826 = vpop.permute.xlu0 %2825
      %v2835 = vsel %vm750, %v1216, %v2748
      %v2836 = vsel %vm750, %v1217, %v2750
      %v2837 = vsel %vm750, %v1218, %v2752
      %v2838 = vsel %vm750, %v1219, %v2754
      %v2839 = vsel %vm750, %v1220, %v2756
      %v2840 = vsel %vm750, %v1221, %v2758
      %v2841 = vsel %vm750, %v1222, %v2760
      %v2842 = vsel %vm750, %v1223, %v2762
      %v2843 = vsel %vm955, %v2835, %v2780
      %v2844 = vsel %vm955, %v2836, %v2782
      %v2845 = vsel %vm955, %v2837, %v2784
      %v2846 = vsel %vm955, %v2838, %v2786
      %v2847 = vsel %vm955, %v2839, %v2788
      %v2848 = vsel %vm955, %v2840, %v2790
      %v2849 = vsel %vm955, %v2841, %v2792
      %v2850 = vsel %vm955, %v2842, %v2794
      %vm2851 = vcmask 195584
      %v2852 = vsel %vm2851, %v2843, %v2812
      %v2853 = vsel %vm2851, %v2844, %v2814
      %v2854 = vsel %vm2851, %v2845, %v2816
      %v2855 = vsel %vm2851, %v2846, %v2818
      %v2856 = vsel %vm2851, %v2847, %v2820
      %v2857 = vsel %vm2851, %v2848, %v2822
      %v2858 = vsel %vm2851, %v2849, %v2824
      %v2859 = vsel %vm2851, %v2850, %v2826
      %v2860 = vpack.c.bf16 %v2853, %v2852
      %v2861 = vpack.c.bf16 %v2855, %v2854
      %v2862 = vpack.c.bf16 %v2857, %v2856
      %v2863 = vpack.c.bf16 %v2859, %v2858
      %v2864 = vld [vmem:[%s5] sm:$0xf]
      %v2865 = vld [vmem:[%s5 + $0x4] sm:$0xf]
      %v2866 = vld [vmem:[%s5 + $0x8] sm:$0xf]
      %v2867 = vld [vmem:[%s5 + $0xc] sm:$0xf]
      %v2872 = vunpack.c.l.b16 %v2864
      %v2873 = vunpack.c.l.b16 %v2865
      %v2874 = vunpack.c.l.b16 %v2866
      %v2875 = vunpack.c.l.b16 %v2867
      %v2876 = vpack.c.b16 %v2873, %v2872
      %v2877 = vpack.c.b16 %v2875, %v2874
      %v2881 = vsel %vm318, %v2860, 0
      %v2884 = vsel %vm318, %v2861, 0
      %v2887 = vsel %vm318, %v2862, 0
      %v2890 = vsel %vm318, %v2863, 0
      %2892 = vmatprep.subr.bf16.mxu0 0
      %2893 = vmatpush1.bf16.msra.mxu0 0
      %2894 = vmatprep.subr.bf16.mxu0 0
      %2895 = vmatpush1.bf16.msra.mxu0 0
      %2896 = vmatprep.subr.bf16.mxu0 0
      %2897 = vmatpush1.bf16.msra.mxu0 0
      %2898 = vmatprep.subr.bf16.mxu0 0
      %2899 = vmatpush1.bf16.msra.mxu0 0
      %2900 = vmatprep.subr.bf16.mxu0 0
      %2901 = vmatpush1.bf16.msra.mxu0 0
      %2902 = vmatprep.subr.bf16.mxu0 0
      %2903 = vmatpush1.bf16.msra.mxu0 0
      %2904 = vmatprep.subr.bf16.mxu0 0
      %2905 = vmatpush1.bf16.msra.mxu0 %v2877
      %2906 = vmatprep.subr.bf16.mxu0 0
      %2907 = vmatpush1.bf16.msra.mxu0 %v2876
      %2908 = vmatprep.subr.bf16.mxu0 0
      %2909 = vmatpush2.bf16.msra.mxu0 0
      %2910 = vmatprep.subr.bf16.mxu0 0
      %2911 = vmatpush2.bf16.msra.mxu0 0
      %2912 = vmatprep.subr.bf16.mxu0 0
      %2913 = vmatpush2.bf16.msra.mxu0 0
      %2914 = vmatprep.subr.bf16.mxu0 0
      %2915 = vmatpush2.bf16.msra.mxu0 0
      %2916 = vmatprep.subr.bf16.mxu0 0
      %2917 = vmatpush2.bf16.msra.mxu0 0
      %2918 = vmatprep.subr.bf16.mxu0 0
      %2919 = vmatpush2.bf16.msra.mxu0 0
      %2920 = vmatprep.subr.bf16.mxu0 0
      %2921 = vmatpush2.bf16.msra.mxu0 0
      %2922 = vmatprep.subr.bf16.mxu0 0
      %2923 = vmatpush2.bf16.msra.mxu0 0
      %2924 = vmatprep.mubr.bf16.mxu0 0
      %2925 = vmatmul.mubr.bf16.gmra.mxu0 %v2881
      %v2926 = vpop.f32.mrf.mxu0
      %v2927 = vadd.f32 0.0, %v2926
      %v2928 = vpop.f32.mrf.mxu0
      %v2929 = vpop.f32.mrf.mxu0
      %v2930 = vadd.f32 0.0, %v2929
      %v2931 = vpop.f32.mrf.mxu0
      %2932 = vmatprep.mubr.bf16.mxu0 0
      %2933 = vmatmul.mubr.bf16.gmra.mxu0 %v2884
      %v2934 = vpop.f32.mrf.mxu0
      %v2935 = vadd.f32 0.0, %v2934
      %v2936 = vpop.f32.mrf.mxu0
      %v2937 = vpop.f32.mrf.mxu0
      %v2938 = vadd.f32 0.0, %v2937
      %v2939 = vpop.f32.mrf.mxu0
      %2940 = vmatprep.mubr.bf16.mxu0 0
      %2941 = vmatmul.mubr.bf16.gmra.mxu0 %v2887
      %v2942 = vpop.f32.mrf.mxu0
      %v2943 = vadd.f32 0.0, %v2942
      %v2944 = vpop.f32.mrf.mxu0
      %v2945 = vpop.f32.mrf.mxu0
      %v2946 = vadd.f32 0.0, %v2945
      %v2947 = vpop.f32.mrf.mxu0
      %2948 = vmatprep.mubr.bf16.mxu0 0
      %2949 = vmatmul.mubr.bf16.gmra.mxu0 %v2890
      %v2950 = vpop.f32.mrf.mxu0
      %v2951 = vadd.f32 0.0, %v2950
      %v2952 = vpop.f32.mrf.mxu0
      %v2953 = vpop.f32.mrf.mxu0
      %v2954 = vadd.f32 0.0, %v2953
      %v2955 = vpop.f32.mrf.mxu0
      %2956 = vdwg.mxu0
      %v2957 = vadd.f32 %v310, %v2927
      %v2958 = vadd.f32 %v311, %v2930
      %v2959 = vadd.f32 %v312, %v2935
      %v2960 = vadd.f32 %v313, %v2938
      %v2961 = vadd.f32 %v314, %v2943
      %v2962 = vadd.f32 %v315, %v2946
      %v2963 = vadd.f32 %v316, %v2951
      %v2964 = vadd.f32 %v317, %v2954
      %v2965 = vld [vmem:[%s6] sm:$0x1]
      %v2967 = vlaneseq
      %v2968 = vshrl.u32 %v2967, 7
      %v2969 = vsub.s32 0, %v2968
      %v2970 = vrot.slane %v2965, %v2969
      %v2972 = vadd.f32 %v2957, %v2970
      %v2973 = vadd.f32 %v2958, %v2970
      %v2974 = vadd.f32 %v2959, %v2970
      %v2975 = vadd.f32 %v2960, %v2970
      %v2976 = vadd.f32 %v2961, %v2970
      %v2977 = vadd.f32 %v2962, %v2970
      %v2978 = vadd.f32 %v2963, %v2970
      %v2979 = vadd.f32 %v2964, %v2970
      %2980 = vst.msk [vmem:[%s307] sm:$0xff] %vm318, %v2972
      %2981 = vst.msk [vmem:[%s307 + $0x8] sm:$0xff] %vm318, %v2973
      %2982 = vst.msk [vmem:[%s307 + $0x10] sm:$0xff] %vm318, %v2974
      %2983 = vst.msk [vmem:[%s307 + $0x18] sm:$0xff] %vm318, %v2975
      %2984 = vst.msk [vmem:[%s307 + $0x20] sm:$0xff] %vm318, %v2976
      %2985 = vst.msk [vmem:[%s307 + $0x28] sm:$0xff] %vm318, %v2977
      %2986 = vst.msk [vmem:[%s307 + $0x30] sm:$0xff] %vm318, %v2978
      %2987 = vst.msk [vmem:[%s307 + $0x38] sm:$0xff] %vm318, %v2979
      %s2988 = smul.u32 8, %s19
      %p2989 = scmp.lt.s32.totalorder %s2988, 15
      %s2990 = scalar_select %p2989, %s2988, 15
      %s2991 = smul.addr %s2990, 8
      %s2992 = scalar_lea.vmem %s8, %s2991
      // Predicated region
      $region53: #{forward.6} parent=51 // pred_check
        %p2993 = pneg %p210
      $region54: #{forward.6} parent=51 // pred_check_branch
        %2995 = sbr.rel (%p2993) target = $region56
      $region55: #{forward.6} parent=51 // pred_region
        %s2996 = smul.u32 8, %s19
      $region56: #{forward.6} parent=51 // pred_fallthru
        _
    $region52: #{forward.6} parent=5 // pred_fallthru
      _
    %p2997 = scmp.le.s32.totalorder 2, %s14
    // Predicated region
    $region57: #{forward.6} parent=5 // pred_check
      %p2998 = pneg %p2997
    $region58: #{forward.6} parent=5 // pred_check_branch
      %3000 = sbr.rel (%p2998) target = $region60
    $region59: #{forward.6} parent=5 // pred_region
      %s3001 = ssub.s32 %s14, 2
      // Predicated region
      $region61: #{forward.6} parent=59 // pred_check
        %p3002 = pneg %p216
      $region62: #{forward.6} parent=59 // pred_check_branch
        %3004 = sbr.rel (%p3002) target = $region64
      $region63: #{forward.6} parent=59 // pred_region
        %s3005 = smul.u32 8, %s20
        %p3006 = scmp.lt.s32.totalorder %s3005, 15
        %s3007 = scalar_select %p3006, %s3005, 15
        %s3008 = smul.addr %s3007, 8
        %s3009 = scalar_lea.vmem %s8, %s3008
      $region64: #{forward.6} parent=59 // pred_fallthru
        _
    $region60: #{forward.6} parent=5 // pred_fallthru
      _
  $region6: #{forward.6} parent=0 // loop_footer
    %s18 = sadd.s32 1, %s14
  $region7: #{forward.6} parent=0 // loop_footer_branch
    %13 = sbr.rel target = $region3
  $region8: #{forward.6} parent=0 // loop_exit
    _

</llo_original>
